<compile_context>
chip_gen: v5e
topology: v5e:2x2
jax: 0.10.0
libtpu: 0.0.40
codegen_flags: <defaults>
</compile_context>

<pallas_src>
import jax
import jax.numpy as jnp
from jax.experimental import pallas as pl
from jax.experimental.pallas import tpu as pltpu

IN_FEATURES = 32 * 32 * 3   # 3072 (fixed by the module)
HIDDEN = 512
OUT_FEATURES = 10
OUT_PAD = 128               # lane-dense padded layer-3 / output width


def mlp_kernel(x_ref, w1_ref, b1_ref, w2_ref, b2_ref, w3_ref, b3_ref, o_ref):
    # x arrives f32; the VPU cast to bf16 hides under the x-tile DMA.
    x = x_ref[...].astype(jnp.bfloat16)

    # Layer 1: (TM, 3072) @ (3072, 512), f32 accumulation on the MXU.
    h1 = jnp.dot(x, w1_ref[...], preferred_element_type=jnp.float32)
    h1 = jnp.maximum(h1 + b1_ref[...], 0.0).astype(jnp.bfloat16)

    # Layer 2: (TM, 512) @ (512, 512) + bias, ReLU.
    h2 = jnp.dot(h1, w2_ref[...], preferred_element_type=jnp.float32)
    h2 = jnp.maximum(h2 + b2_ref[...], 0.0).astype(jnp.bfloat16)

    # Layer 3: (TM, 512) @ (512, 128) + bias (N zero-padded to 128; cols 10..127 are zero).
    logits = jnp.dot(h2, w3_ref[...], preferred_element_type=jnp.float32)
    o_ref[...] = (logits + b3_ref[...]).astype(o_ref.dtype)


@jax.jit
def _forward(x_nchw, w1b, b1f, w2b, b2f, w3b, b3f):
    """x_nchw: (B, 3, 32, 32) float32; weights pre-cast/padded (see prepare_params)."""
    B = x_nchw.shape[0]
    # nn.Flatten(): row-major flatten of (C, H, W) per example.
    x = x_nchw.reshape(B, -1).astype(jnp.float32)

    # Tile height: 256 rows for large batches (full-height v6e/v7x MXU passes),
    # 128 otherwise (v5e MXU width / small-batch padding waste).
    TM = 256 if B >= 256 else 128
    B_pad = pl.cdiv(B, TM) * TM
    if B_pad != B:
        # Padded rows produce nonzero logits (bias through ReLU); they only feed
        # output rows that are sliced off below.
        x = jnp.pad(x, ((0, B_pad - B), (0, 0)))

    def resident(shape):
        # Constant index_map => DMA'd once per call, VMEM-resident across batch tiles.
        return pl.BlockSpec(shape, lambda m: (0, 0))

    out = pl.pallas_call(
        mlp_kernel,
        out_shape=jax.ShapeDtypeStruct((B_pad, OUT_PAD), jnp.float32),
        grid_spec=pltpu.PrefetchScalarGridSpec(
            num_scalar_prefetch=0,
            grid=(B_pad // TM,),
            in_specs=[
                pl.BlockSpec((TM, IN_FEATURES), lambda m: (m, 0)),   # x tile (f32)
                resident((IN_FEATURES, HIDDEN)),                     # W1 (bf16, resident)
                resident((1, HIDDEN)),                               # b1
                resident((HIDDEN, HIDDEN)),                          # W2 (bf16, resident)
                resident((1, HIDDEN)),                               # b2
                resident((HIDDEN, OUT_PAD)),                         # W3 padded (bf16, resident)
                resident((1, OUT_PAD)),                              # b3 padded
            ],
            out_specs=pl.BlockSpec((TM, OUT_PAD), lambda m: (m, 0)),
        ),
        compiler_params=pltpu.CompilerParams(
            dimension_semantics=("parallel",),
            vmem_limit_bytes=32 << 20,
        ),
    )(x, w1b, b1f, w2b, b2f, w3b, b3f)

    # Drop batch padding and the zero-padded logit columns.
    return out[:B, :OUT_FEATURES]


def prepare_params(params):
    """One-time prep (outside the per-call path): bf16 weight casts + layer-3 N padding."""
    w1, b1, w2, b2, w3, b3 = params
    w3p = jnp.zeros((HIDDEN, OUT_PAD), jnp.float32).at[:, :OUT_FEATURES].set(w3)
    b3p = jnp.zeros((1, OUT_PAD), jnp.float32).at[:, :OUT_FEATURES].set(b3.reshape(1, -1))
    return (
        w1.astype(jnp.bfloat16),
        b1.reshape(1, -1).astype(jnp.float32),
        w2.astype(jnp.bfloat16),
        b2.reshape(1, -1).astype(jnp.float32),
        w3p.astype(jnp.bfloat16),
        b3p,
    )


def neural_network_forward(x_nchw, prepared_params):
    return _forward(x_nchw, *prepared_params)


def init_params(key):
    """Deterministic init mirroring torch.nn.Linear default (uniform +-1/sqrt(fan_in)).

    Weights are stored transposed relative to torch: (in_features, out_features),
    so y = x @ W + b equals torch's y = x @ W_t.T + b.
    """
    ks = jax.random.split(key, 6)

    def linear(kw, kb, fan_in, fan_out):
        bound = 1.0 / jnp.sqrt(jnp.float32(fan_in))
        w = jax.random.uniform(kw, (fan_in, fan_out), jnp.float32, -bound, bound)
        b = jax.random.uniform(kb, (1, fan_out), jnp.float32, -bound, bound)
        return w, b

    w1, b1 = linear(ks[0], ks[1], IN_FEATURES, HIDDEN)
    w2, b2 = linear(ks[2], ks[3], HIDDEN, HIDDEN)
    w3, b3 = linear(ks[4], ks[5], HIDDEN, OUT_FEATURES)
    return (w1, b1, w2, b2, w3, b3)


if __name__ == "__main__":
    key = jax.random.PRNGKey(0)
    k_params, k_x = jax.random.split(key)

    params = init_params(k_params)
    prepared = prepare_params(params)

    # Batch of 8 CIFAR-like images, NCHW (flattened feature count fixed at 3*32*32 by the module).
    x = jax.random.normal(k_x, (8, 3, 32, 32), dtype=jnp.float32)

    logits = neural_network_forward(x, prepared)
    jax.block_until_ready(logits)

    # Reference in plain JAX with the same bf16 operand quantization (f32 math).
    w1, b1, w2, b2, w3, b3 = params
    bf = lambda a: a.astype(jnp.bfloat16).astype(jnp.float32)
    xf = bf(x.reshape(x.shape[0], -1))
    h1 = jnp.maximum(xf @ bf(w1) + b1, 0.0)
    h2 = jnp.maximum(bf(h1) @ bf(w2) + b2, 0.0)
    ref = bf(h2) @ bf(w3) + b3

    assert logits.shape == (8, 10)
    assert jnp.allclose(logits, ref, atol=1e-2, rtol=1e-2), (
        float(jnp.max(jnp.abs(logits - ref))))

    print("KERNEL_OK")
</pallas_src>

<mosaic_0001>
module attributes {stable_mosaic.version = 11 : i64} {
  func.func @mlp_kernel(%arg0: i32, %arg1: memref<128x3072xf32, #tpu.memory_space<vmem>>, %arg2: memref<3072x512xbf16, #tpu.memory_space<vmem>>, %arg3: memref<1x512xf32, #tpu.memory_space<vmem>>, %arg4: memref<512x512xbf16, #tpu.memory_space<vmem>>, %arg5: memref<1x512xf32, #tpu.memory_space<vmem>>, %arg6: memref<512x128xbf16, #tpu.memory_space<vmem>>, %arg7: memref<1x128xf32, #tpu.memory_space<vmem>>, %arg8: memref<128x128xf32, #tpu.memory_space<vmem>>) attributes {dimension_semantics = [#tpu.dimension_semantics<parallel>], iteration_bounds = array<i64: 1>, scalar_prefetch = 0 : i64, scratch_operands = 0 : i64, tpu.core_type = #tpu.core_type<tc>, window_params = [{transform_indices = @transform_0, window_bounds = array<i64: 128, 3072>}, {pipeline_mode = #tpu.pipeline_mode<synchronous>, transform_indices = @transform_1, window_bounds = array<i64: 3072, 512>}, {pipeline_mode = #tpu.pipeline_mode<synchronous>, transform_indices = @transform_2, window_bounds = array<i64: 1, 512>}, {pipeline_mode = #tpu.pipeline_mode<synchronous>, transform_indices = @transform_3, window_bounds = array<i64: 512, 512>}, {pipeline_mode = #tpu.pipeline_mode<synchronous>, transform_indices = @transform_4, window_bounds = array<i64: 1, 512>}, {pipeline_mode = #tpu.pipeline_mode<synchronous>, transform_indices = @transform_5, window_bounds = array<i64: 512, 128>}, {pipeline_mode = #tpu.pipeline_mode<synchronous>, transform_indices = @transform_6, window_bounds = array<i64: 1, 128>}, {transform_indices = @transform_7, window_bounds = array<i64: 128, 128>}]} {
    %c0 = arith.constant 0 : index
    %c0_0 = arith.constant 0 : index
    %0 = vector.load %arg1[%c0, %c0_0] : memref<128x3072xf32, #tpu.memory_space<vmem>>, vector<128x3072xf32>
    %1 = arith.truncf %0 : vector<128x3072xf32> to vector<128x3072xbf16>
    %c0_1 = arith.constant 0 : index
    %c0_2 = arith.constant 0 : index
    %2 = vector.load %arg2[%c0_1, %c0_2] : memref<3072x512xbf16, #tpu.memory_space<vmem>>, vector<3072x512xbf16>
    %cst = arith.constant dense<0.000000e+00> : vector<128x512xf32>
    %3 = tpu.matmul %1, %2, %cst {dimension_numbers = #tpu.dot_dimension_numbers<[1], [0], [0], [1], [0, 0, 1, 1], [], []>} : vector<128x3072xbf16>, vector<3072x512xbf16>, vector<128x512xf32> -> vector<128x512xf32>
    %c0_3 = arith.constant 0 : index
    %c0_4 = arith.constant 0 : index
    %4 = vector.load %arg3[%c0_3, %c0_4] : memref<1x512xf32, #tpu.memory_space<vmem>>, vector<1x512xf32>
    %5 = vector.broadcast %4 : vector<1x512xf32> to vector<128x512xf32>
    %6 = arith.addf %3, %5 : vector<128x512xf32>
    %cst_5 = arith.constant 0.000000e+00 : f32
    %7 = vector.broadcast %cst_5 : f32 to vector<128x512xf32>
    %8 = arith.maximumf %6, %7 : vector<128x512xf32>
    %9 = arith.truncf %8 : vector<128x512xf32> to vector<128x512xbf16>
    %c0_6 = arith.constant 0 : index
    %c0_7 = arith.constant 0 : index
    %10 = vector.load %arg4[%c0_6, %c0_7] : memref<512x512xbf16, #tpu.memory_space<vmem>>, vector<512x512xbf16>
    %cst_8 = arith.constant dense<0.000000e+00> : vector<128x512xf32>
    %11 = tpu.matmul %9, %10, %cst_8 {dimension_numbers = #tpu.dot_dimension_numbers<[1], [0], [0], [1], [0, 0, 1, 1], [], []>} : vector<128x512xbf16>, vector<512x512xbf16>, vector<128x512xf32> -> vector<128x512xf32>
    %c0_9 = arith.constant 0 : index
    %c0_10 = arith.constant 0 : index
    %12 = vector.load %arg5[%c0_9, %c0_10] : memref<1x512xf32, #tpu.memory_space<vmem>>, vector<1x512xf32>
    %13 = vector.broadcast %12 : vector<1x512xf32> to vector<128x512xf32>
    %14 = arith.addf %11, %13 : vector<128x512xf32>
    %cst_11 = arith.constant 0.000000e+00 : f32
    %15 = vector.broadcast %cst_11 : f32 to vector<128x512xf32>
    %16 = arith.maximumf %14, %15 : vector<128x512xf32>
    %17 = arith.truncf %16 : vector<128x512xf32> to vector<128x512xbf16>
    %c0_12 = arith.constant 0 : index
    %c0_13 = arith.constant 0 : index
    %18 = vector.load %arg6[%c0_12, %c0_13] : memref<512x128xbf16, #tpu.memory_space<vmem>>, vector<512x128xbf16>
    %cst_14 = arith.constant dense<0.000000e+00> : vector<128x128xf32>
    %19 = tpu.matmul %17, %18, %cst_14 {dimension_numbers = #tpu.dot_dimension_numbers<[1], [0], [0], [1], [0, 0, 1, 1], [], []>} : vector<128x512xbf16>, vector<512x128xbf16>, vector<128x128xf32> -> vector<128x128xf32>
    %c0_15 = arith.constant 0 : index
    %c0_16 = arith.constant 0 : index
    %20 = vector.load %arg7[%c0_15, %c0_16] : memref<1x128xf32, #tpu.memory_space<vmem>>, vector<1x128xf32>
    %21 = vector.broadcast %20 : vector<1x128xf32> to vector<128x128xf32>
    %22 = arith.addf %19, %21 : vector<128x128xf32>
    %c0_17 = arith.constant 0 : index
    %c0_18 = arith.constant 0 : index
    %23 = vector.load %arg8[%c0_17, %c0_18] : memref<128x128xf32, #tpu.memory_space<vmem>>, vector<128x128xf32>
    tpu.vector_store %arg8[%c0_17, %c0_18], %22 {strides = array<i32>} : memref<128x128xf32, #tpu.memory_space<vmem>>, vector<128x128xf32>,
    return
  }
  func.func @transform_0(%arg0: i32) -> (i32, i32) {
    %c0_i32 = arith.constant 0 : i32
    %c0_i32_0 = arith.constant 0 : i32
    return %arg0, %c0_i32 : i32, i32
  }
  func.func @transform_1(%arg0: i32) -> (i32, i32) {
    %c0_i32 = arith.constant 0 : i32
    %c0_i32_0 = arith.constant 0 : i32
    %c0_i32_1 = arith.constant 0 : i32
    return %c0_i32, %c0_i32_0 : i32, i32
  }
  func.func @transform_2(%arg0: i32) -> (i32, i32) {
    %c0_i32 = arith.constant 0 : i32
    %c0_i32_0 = arith.constant 0 : i32
    %c0_i32_1 = arith.constant 0 : i32
    return %c0_i32, %c0_i32_0 : i32, i32
  }
  func.func @transform_3(%arg0: i32) -> (i32, i32) {
    %c0_i32 = arith.constant 0 : i32
    %c0_i32_0 = arith.constant 0 : i32
    %c0_i32_1 = arith.constant 0 : i32
    return %c0_i32, %c0_i32_0 : i32, i32
  }
  func.func @transform_4(%arg0: i32) -> (i32, i32) {
    %c0_i32 = arith.constant 0 : i32
    %c0_i32_0 = arith.constant 0 : i32
    %c0_i32_1 = arith.constant 0 : i32
    return %c0_i32, %c0_i32_0 : i32, i32
  }
  func.func @transform_5(%arg0: i32) -> (i32, i32) {
    %c0_i32 = arith.constant 0 : i32
    %c0_i32_0 = arith.constant 0 : i32
    %c0_i32_1 = arith.constant 0 : i32
    return %c0_i32, %c0_i32_0 : i32, i32
  }
  func.func @transform_6(%arg0: i32) -> (i32, i32) {
    %c0_i32 = arith.constant 0 : i32
    %c0_i32_0 = arith.constant 0 : i32
    %c0_i32_1 = arith.constant 0 : i32
    return %c0_i32, %c0_i32_0 : i32, i32
  }
  func.func @transform_7(%arg0: i32) -> (i32, i32) {
    %c0_i32 = arith.constant 0 : i32
    %c0_i32_0 = arith.constant 0 : i32
    return %arg0, %c0_i32 : i32, i32
  }
}

</mosaic_0001>

<llo_original>
// kernel: _forward.1
$region0: #{_forward.1}
  #allocation0 [shape = 'u32[]', space=smem, size = 0x4, offset = 0x4, fixed_abs, tag = 'smem constant byte address 0x4 - core index']
  #allocation1 [shape = 'u32[72,128]{1,0:T(1,128)}', space=vmem, size = 0x9000, scoped, tag = 'internal scratch']
  %s0 = inlined_call_operand.vmem [shape: f32[128,3072], index: 0, kind: input, shape index: {}]
  %s1 = inlined_call_operand.hbm [shape: bf16[3072,512], index: 1, kind: input, shape index: {}]
  %s2 = inlined_call_operand.hbm [shape: f32[1,512], index: 2, kind: input, shape index: {}]
  %s3 = inlined_call_operand.hbm [shape: bf16[512,512], index: 3, kind: input, shape index: {}]
  %s4 = inlined_call_operand.hbm [shape: f32[1,512], index: 4, kind: input, shape index: {}]
  %s5 = inlined_call_operand.hbm [shape: bf16[512,128], index: 5, kind: input, shape index: {}]
  %s6 = inlined_call_operand.hbm [shape: f32[1,128], index: 6, kind: input, shape index: {}]
  %s7 = inlined_call_operand.vmem [shape: f32[128,128], index: 7, kind: output, shape index: {}]
  %s8 = sld [smem:[#allocation0]]
  $region62: #{_forward.1} parent=0
    _
  %s10 = ssub.s32 1, %s8
  %s11 = scalar_select 0, %s10, %s8
  $region1: #{_forward.1} parent=0
    #allocation2 [shape = 'u8[3145728]{0}', space=vmem, size = 0x300000, scoped, tag = 'input window, operand 1, single buffered']
    #allocation3 [shape = 's32[1]{0}', space=sflag, size = 0x4, scoped, tag = 'scoped memory for _forward.1']
    #allocation4 [shape = 'u8[2048]{0}', space=vmem, size = 0x800, scoped, tag = 'input window, operand 2, single buffered']
    #allocation5 [shape = 's32[1]{0}', space=sflag, size = 0x4, scoped, tag = 'scoped memory for _forward.1']
    #allocation6 [shape = 'u8[524288]{0}', space=vmem, size = 0x80000, scoped, tag = 'input window, operand 3, single buffered']
    #allocation7 [shape = 'u8[2048]{0}', space=vmem, size = 0x800, scoped, tag = 'input window, operand 4, single buffered']
    #allocation8 [shape = 's32[1]{0}', space=sflag, size = 0x4, scoped, tag = 'scoped memory for _forward.1']
    #allocation9 [shape = 'u8[131072]{0}', space=vmem, size = 0x20000, scoped, tag = 'input window, operand 5, single buffered']
    #allocation10 [shape = 'u8[512]{0}', space=vmem, size = 0x400, scoped, tag = 'input window, operand 6, single buffered']
    #allocation11 [shape = 's32[1]{0}', space=sflag, size = 0x4, scoped, tag = 'scoped memory for _forward.1']
    %12 = vsyncpa [#allocation3], 0
    %13 = vsyncpa [#allocation5], 0
    %14 = vsyncpa [#allocation8], 0
    %15 = vsyncpa [#allocation11], 0
    // Predicated region
    $region2: #{_forward.1} parent=1 // pred_check
      _
    $region3: #{_forward.1} parent=1 // pred_check_branch
      %17 = sbr.rel (0) target = $region5
    $region4: #{_forward.1} parent=1 // pred_region
      _
    $region5: #{_forward.1} parent=1 // pred_fallthru
      _
    // Predicated region
    $region6: #{_forward.1} parent=1 // pred_check
      _
    $region7: #{_forward.1} parent=1 // pred_check_branch
      %19 = sbr.rel (0) target = $region9
    $region8: #{_forward.1} parent=1 // pred_region
      %21 = vsyncadd [#allocation3], 0
      %s22 = sshll.u32 %s1, 4
      %s23 = int_to_ptr.hbm [resolvable:$true] %s22
      %s24 = sshll.u32 [#allocation2], 4
      %s25 = int_to_ptr.vmem [resolvable:$true] %s24
      %30 = dma.hbm_to_vmem [thread:$0]  %s23, 98304, %s25, [#allocation3], 256, 256, 16
    $region9: #{_forward.1} parent=1 // pred_fallthru
      _
    // Predicated region
    $region10: #{_forward.1} parent=1 // pred_check
      _
    $region11: #{_forward.1} parent=1 // pred_check_branch
      %32 = sbr.rel (0) target = $region13
    $region12: #{_forward.1} parent=1 // pred_region
      %34 = vsyncadd [#allocation5], 0
      %s36 = sshll.u32 %s2, 4
      %s37 = int_to_ptr.hbm [resolvable:$true] %s36
      %s38 = sshll.u32 [#allocation4], 4
      %s39 = int_to_ptr.vmem [resolvable:$true] %s38
      %41 = dma.hbm_to_vmem [thread:$0]  %s37, 64, %s39, [#allocation5]
    $region13: #{_forward.1} parent=1 // pred_fallthru
      _
    // Predicated region
    $region14: #{_forward.1} parent=1 // pred_check
      _
    $region15: #{_forward.1} parent=1 // pred_check_branch
      %43 = sbr.rel (0) target = $region17
    $region16: #{_forward.1} parent=1 // pred_region
      %45 = vsyncadd [#allocation5], 0
      %s46 = sshll.u32 %s3, 4
      %s47 = int_to_ptr.hbm [resolvable:$true] %s46
      %s48 = sshll.u32 [#allocation6], 4
      %s49 = int_to_ptr.vmem [resolvable:$true] %s48
      %54 = dma.hbm_to_vmem [thread:$0]  %s47, 16384, %s49, [#allocation5], 256, 256, 16
    $region17: #{_forward.1} parent=1 // pred_fallthru
      _
    // Predicated region
    $region18: #{_forward.1} parent=1 // pred_check
      _
    $region19: #{_forward.1} parent=1 // pred_check_branch
      %56 = sbr.rel (0) target = $region21
    $region20: #{_forward.1} parent=1 // pred_region
      %58 = vsyncadd [#allocation8], 0
      %s60 = sshll.u32 %s4, 4
      %s61 = int_to_ptr.hbm [resolvable:$true] %s60
      %s62 = sshll.u32 [#allocation7], 4
      %s63 = int_to_ptr.vmem [resolvable:$true] %s62
      %65 = dma.hbm_to_vmem [thread:$0]  %s61, 64, %s63, [#allocation8]
    $region21: #{_forward.1} parent=1 // pred_fallthru
      _
    // Predicated region
    $region22: #{_forward.1} parent=1 // pred_check
      _
    $region23: #{_forward.1} parent=1 // pred_check_branch
      %67 = sbr.rel (0) target = $region25
    $region24: #{_forward.1} parent=1 // pred_region
      %69 = vsyncadd [#allocation8], 0
      %s70 = sshll.u32 %s5, 4
      %s71 = int_to_ptr.hbm [resolvable:$true] %s70
      %s72 = sshll.u32 [#allocation9], 4
      %s73 = int_to_ptr.vmem [resolvable:$true] %s72
      %78 = dma.hbm_to_vmem [thread:$0]  %s71, 4096, %s73, [#allocation8], 64, 64, 4
    $region25: #{_forward.1} parent=1 // pred_fallthru
      _
    // Predicated region
    $region26: #{_forward.1} parent=1 // pred_check
      _
    $region27: #{_forward.1} parent=1 // pred_check_branch
      %80 = sbr.rel (0) target = $region29
    $region28: #{_forward.1} parent=1 // pred_region
      %82 = vsyncadd [#allocation11], 0
      %s84 = sshll.u32 %s6, 4
      %s85 = int_to_ptr.hbm [resolvable:$true] %s84
      %s86 = sshll.u32 [#allocation10], 4
      %s87 = int_to_ptr.vmem [resolvable:$true] %s86
      %89 = dma.hbm_to_vmem [thread:$0]  %s85, 16, %s87, [#allocation11]
    $region29: #{_forward.1} parent=1 // pred_fallthru
      _
    // Predicated region
    $region30: #{_forward.1} parent=1 // pred_check
      _
    $region31: #{_forward.1} parent=1 // pred_check_branch
      %91 = sbr.rel (0) target = $region33
    $region32: #{_forward.1} parent=1 // pred_region
      %93 = dma.done [#allocation3], 98304
    $region33: #{_forward.1} parent=1 // pred_fallthru
      _
    // Predicated region
    $region34: #{_forward.1} parent=1 // pred_check
      _
    $region35: #{_forward.1} parent=1 // pred_check_branch
      %95 = sbr.rel (0) target = $region37
    $region36: #{_forward.1} parent=1 // pred_region
      %97 = dma.done [#allocation5], 64
    $region37: #{_forward.1} parent=1 // pred_fallthru
      _
    // Predicated region
    $region38: #{_forward.1} parent=1 // pred_check
      _
    $region39: #{_forward.1} parent=1 // pred_check_branch
      %99 = sbr.rel (0) target = $region41
    $region40: #{_forward.1} parent=1 // pred_region
      %101 = dma.done [#allocation5], 16384
    $region41: #{_forward.1} parent=1 // pred_fallthru
      _
    // Predicated region
    $region42: #{_forward.1} parent=1 // pred_check
      _
    $region43: #{_forward.1} parent=1 // pred_check_branch
      %103 = sbr.rel (0) target = $region45
    $region44: #{_forward.1} parent=1 // pred_region
      %105 = dma.done [#allocation8], 64
    $region45: #{_forward.1} parent=1 // pred_fallthru
      _
    // Predicated region
    $region46: #{_forward.1} parent=1 // pred_check
      _
    $region47: #{_forward.1} parent=1 // pred_check_branch
      %107 = sbr.rel (0) target = $region49
    $region48: #{_forward.1} parent=1 // pred_region
      %109 = dma.done [#allocation8], 4096
    $region49: #{_forward.1} parent=1 // pred_fallthru
      _
    // Predicated region
    $region50: #{_forward.1} parent=1 // pred_check
      _
    $region51: #{_forward.1} parent=1 // pred_check_branch
      %111 = sbr.rel (0) target = $region53
    $region52: #{_forward.1} parent=1 // pred_region
      %113 = dma.done [#allocation11], 16
    $region53: #{_forward.1} parent=1 // pred_fallthru
      _
    %v114 = vld [vmem:[%s0] sm:$0xff]
    %v115 = vld [vmem:[%s0 + $0x8] sm:$0xff]
    %v116 = vld [vmem:[%s0 + $0x10] sm:$0xff]
    %v117 = vld [vmem:[%s0 + $0x18] sm:$0xff]
    %v118 = vld [vmem:[%s0 + $0x20] sm:$0xff]
    %v119 = vld [vmem:[%s0 + $0x28] sm:$0xff]
    %v120 = vld [vmem:[%s0 + $0x30] sm:$0xff]
    %v121 = vld [vmem:[%s0 + $0x38] sm:$0xff]
    %v122 = vld [vmem:[%s0 + $0x40] sm:$0xff]
    %v123 = vld [vmem:[%s0 + $0x48] sm:$0xff]
    %v124 = vld [vmem:[%s0 + $0x50] sm:$0xff]
    %v125 = vld [vmem:[%s0 + $0x58] sm:$0xff]
    %v126 = vld [vmem:[%s0 + $0x60] sm:$0xff]
    %v127 = vld [vmem:[%s0 + $0x68] sm:$0xff]
    %v128 = vld [vmem:[%s0 + $0x70] sm:$0xff]
    %v129 = vld [vmem:[%s0 + $0x78] sm:$0xff]
    %v130 = vld [vmem:[%s0 + $0x80] sm:$0xff]
    %v131 = vld [vmem:[%s0 + $0x88] sm:$0xff]
    %v132 = vld [vmem:[%s0 + $0x90] sm:$0xff]
    %v133 = vld [vmem:[%s0 + $0x98] sm:$0xff]
    %v134 = vld [vmem:[%s0 + $0xa0] sm:$0xff]
    %v135 = vld [vmem:[%s0 + $0xa8] sm:$0xff]
    %v136 = vld [vmem:[%s0 + $0xb0] sm:$0xff]
    %v137 = vld [vmem:[%s0 + $0xb8] sm:$0xff]
    %v138 = vld [vmem:[%s0 + $0xc0] sm:$0xff]
    %v139 = vld [vmem:[%s0 + $0xc8] sm:$0xff]
    %v140 = vld [vmem:[%s0 + $0xd0] sm:$0xff]
    %v141 = vld [vmem:[%s0 + $0xd8] sm:$0xff]
    %v142 = vld [vmem:[%s0 + $0xe0] sm:$0xff]
    %v143 = vld [vmem:[%s0 + $0xe8] sm:$0xff]
    %v144 = vld [vmem:[%s0 + $0xf0] sm:$0xff]
    %v145 = vld [vmem:[%s0 + $0xf8] sm:$0xff]
    %v146 = vld [vmem:[%s0 + $0x100] sm:$0xff]
    %v147 = vld [vmem:[%s0 + $0x108] sm:$0xff]
    %v148 = vld [vmem:[%s0 + $0x110] sm:$0xff]
    %v149 = vld [vmem:[%s0 + $0x118] sm:$0xff]
    %v150 = vld [vmem:[%s0 + $0x120] sm:$0xff]
    %v151 = vld [vmem:[%s0 + $0x128] sm:$0xff]
    %v152 = vld [vmem:[%s0 + $0x130] sm:$0xff]
    %v153 = vld [vmem:[%s0 + $0x138] sm:$0xff]
    %v154 = vld [vmem:[%s0 + $0x140] sm:$0xff]
    %v155 = vld [vmem:[%s0 + $0x148] sm:$0xff]
    %v156 = vld [vmem:[%s0 + $0x150] sm:$0xff]
    %v157 = vld [vmem:[%s0 + $0x158] sm:$0xff]
    %v158 = vld [vmem:[%s0 + $0x160] sm:$0xff]
    %v159 = vld [vmem:[%s0 + $0x168] sm:$0xff]
    %v160 = vld [vmem:[%s0 + $0x170] sm:$0xff]
    %v161 = vld [vmem:[%s0 + $0x178] sm:$0xff]
    %v162 = vld [vmem:[%s0 + $0x180] sm:$0xff]
    %v163 = vld [vmem:[%s0 + $0x188] sm:$0xff]
    %v164 = vld [vmem:[%s0 + $0x190] sm:$0xff]
    %v165 = vld [vmem:[%s0 + $0x198] sm:$0xff]
    %v166 = vld [vmem:[%s0 + $0x1a0] sm:$0xff]
    %v167 = vld [vmem:[%s0 + $0x1a8] sm:$0xff]
    %v168 = vld [vmem:[%s0 + $0x1b0] sm:$0xff]
    %v169 = vld [vmem:[%s0 + $0x1b8] sm:$0xff]
    %v170 = vld [vmem:[%s0 + $0x1c0] sm:$0xff]
    %v171 = vld [vmem:[%s0 + $0x1c8] sm:$0xff]
    %v172 = vld [vmem:[%s0 + $0x1d0] sm:$0xff]
    %v173 = vld [vmem:[%s0 + $0x1d8] sm:$0xff]
    %v174 = vld [vmem:[%s0 + $0x1e0] sm:$0xff]
    %v175 = vld [vmem:[%s0 + $0x1e8] sm:$0xff]
    %v176 = vld [vmem:[%s0 + $0x1f0] sm:$0xff]
    %v177 = vld [vmem:[%s0 + $0x1f8] sm:$0xff]
    %v178 = vld [vmem:[%s0 + $0x200] sm:$0xff]
    %v179 = vld [vmem:[%s0 + $0x208] sm:$0xff]
    %v180 = vld [vmem:[%s0 + $0x210] sm:$0xff]
    %v181 = vld [vmem:[%s0 + $0x218] sm:$0xff]
    %v182 = vld [vmem:[%s0 + $0x220] sm:$0xff]
    %v183 = vld [vmem:[%s0 + $0x228] sm:$0xff]
    %v184 = vld [vmem:[%s0 + $0x230] sm:$0xff]
    %v185 = vld [vmem:[%s0 + $0x238] sm:$0xff]
    %v186 = vld [vmem:[%s0 + $0x240] sm:$0xff]
    %v187 = vld [vmem:[%s0 + $0x248] sm:$0xff]
    %v188 = vld [vmem:[%s0 + $0x250] sm:$0xff]
    %v189 = vld [vmem:[%s0 + $0x258] sm:$0xff]
    %v190 = vld [vmem:[%s0 + $0x260] sm:$0xff]
    %v191 = vld [vmem:[%s0 + $0x268] sm:$0xff]
    %v192 = vld [vmem:[%s0 + $0x270] sm:$0xff]
    %v193 = vld [vmem:[%s0 + $0x278] sm:$0xff]
    %v194 = vld [vmem:[%s0 + $0x280] sm:$0xff]
    %v195 = vld [vmem:[%s0 + $0x288] sm:$0xff]
    %v196 = vld [vmem:[%s0 + $0x290] sm:$0xff]
    %v197 = vld [vmem:[%s0 + $0x298] sm:$0xff]
    %v198 = vld [vmem:[%s0 + $0x2a0] sm:$0xff]
    %v199 = vld [vmem:[%s0 + $0x2a8] sm:$0xff]
    %v200 = vld [vmem:[%s0 + $0x2b0] sm:$0xff]
    %v201 = vld [vmem:[%s0 + $0x2b8] sm:$0xff]
    %v202 = vld [vmem:[%s0 + $0x2c0] sm:$0xff]
    %v203 = vld [vmem:[%s0 + $0x2c8] sm:$0xff]
    %v204 = vld [vmem:[%s0 + $0x2d0] sm:$0xff]
    %v205 = vld [vmem:[%s0 + $0x2d8] sm:$0xff]
    %v206 = vld [vmem:[%s0 + $0x2e0] sm:$0xff]
    %v207 = vld [vmem:[%s0 + $0x2e8] sm:$0xff]
    %v208 = vld [vmem:[%s0 + $0x2f0] sm:$0xff]
    %v209 = vld [vmem:[%s0 + $0x2f8] sm:$0xff]
    %v210 = vld [vmem:[%s0 + $0x300] sm:$0xff]
    %v211 = vld [vmem:[%s0 + $0x308] sm:$0xff]
    %v212 = vld [vmem:[%s0 + $0x310] sm:$0xff]
    %v213 = vld [vmem:[%s0 + $0x318] sm:$0xff]
    %v214 = vld [vmem:[%s0 + $0x320] sm:$0xff]
    %v215 = vld [vmem:[%s0 + $0x328] sm:$0xff]
    %v216 = vld [vmem:[%s0 + $0x330] sm:$0xff]
    %v217 = vld [vmem:[%s0 + $0x338] sm:$0xff]
    %v218 = vld [vmem:[%s0 + $0x340] sm:$0xff]
    %v219 = vld [vmem:[%s0 + $0x348] sm:$0xff]
    %v220 = vld [vmem:[%s0 + $0x350] sm:$0xff]
    %v221 = vld [vmem:[%s0 + $0x358] sm:$0xff]
    %v222 = vld [vmem:[%s0 + $0x360] sm:$0xff]
    %v223 = vld [vmem:[%s0 + $0x368] sm:$0xff]
    %v224 = vld [vmem:[%s0 + $0x370] sm:$0xff]
    %v225 = vld [vmem:[%s0 + $0x378] sm:$0xff]
    %v226 = vld [vmem:[%s0 + $0x380] sm:$0xff]
    %v227 = vld [vmem:[%s0 + $0x388] sm:$0xff]
    %v228 = vld [vmem:[%s0 + $0x390] sm:$0xff]
    %v229 = vld [vmem:[%s0 + $0x398] sm:$0xff]
    %v230 = vld [vmem:[%s0 + $0x3a0] sm:$0xff]
    %v231 = vld [vmem:[%s0 + $0x3a8] sm:$0xff]
    %v232 = vld [vmem:[%s0 + $0x3b0] sm:$0xff]
    %v233 = vld [vmem:[%s0 + $0x3b8] sm:$0xff]
    %v234 = vld [vmem:[%s0 + $0x3c0] sm:$0xff]
    %v235 = vld [vmem:[%s0 + $0x3c8] sm:$0xff]
    %v236 = vld [vmem:[%s0 + $0x3d0] sm:$0xff]
    %v237 = vld [vmem:[%s0 + $0x3d8] sm:$0xff]
    %v238 = vld [vmem:[%s0 + $0x3e0] sm:$0xff]
    %v239 = vld [vmem:[%s0 + $0x3e8] sm:$0xff]
    %v240 = vld [vmem:[%s0 + $0x3f0] sm:$0xff]
    %v241 = vld [vmem:[%s0 + $0x3f8] sm:$0xff]
    %v242 = vld [vmem:[%s0 + $0x400] sm:$0xff]
    %v243 = vld [vmem:[%s0 + $0x408] sm:$0xff]
    %v244 = vld [vmem:[%s0 + $0x410] sm:$0xff]
    %v245 = vld [vmem:[%s0 + $0x418] sm:$0xff]
    %v246 = vld [vmem:[%s0 + $0x420] sm:$0xff]
    %v247 = vld [vmem:[%s0 + $0x428] sm:$0xff]
    %v248 = vld [vmem:[%s0 + $0x430] sm:$0xff]
    %v249 = vld [vmem:[%s0 + $0x438] sm:$0xff]
    %v250 = vld [vmem:[%s0 + $0x440] sm:$0xff]
    %v251 = vld [vmem:[%s0 + $0x448] sm:$0xff]
    %v252 = vld [vmem:[%s0 + $0x450] sm:$0xff]
    %v253 = vld [vmem:[%s0 + $0x458] sm:$0xff]
    %v254 = vld [vmem:[%s0 + $0x460] sm:$0xff]
    %v255 = vld [vmem:[%s0 + $0x468] sm:$0xff]
    %v256 = vld [vmem:[%s0 + $0x470] sm:$0xff]
    %v257 = vld [vmem:[%s0 + $0x478] sm:$0xff]
    %v258 = vld [vmem:[%s0 + $0x480] sm:$0xff]
    %v259 = vld [vmem:[%s0 + $0x488] sm:$0xff]
    %v260 = vld [vmem:[%s0 + $0x490] sm:$0xff]
    %v261 = vld [vmem:[%s0 + $0x498] sm:$0xff]
    %v262 = vld [vmem:[%s0 + $0x4a0] sm:$0xff]
    %v263 = vld [vmem:[%s0 + $0x4a8] sm:$0xff]
    %v264 = vld [vmem:[%s0 + $0x4b0] sm:$0xff]
    %v265 = vld [vmem:[%s0 + $0x4b8] sm:$0xff]
    %v266 = vld [vmem:[%s0 + $0x4c0] sm:$0xff]
    %v267 = vld [vmem:[%s0 + $0x4c8] sm:$0xff]
    %v268 = vld [vmem:[%s0 + $0x4d0] sm:$0xff]
    %v269 = vld [vmem:[%s0 + $0x4d8] sm:$0xff]
    %v270 = vld [vmem:[%s0 + $0x4e0] sm:$0xff]
    %v271 = vld [vmem:[%s0 + $0x4e8] sm:$0xff]
    %v272 = vld [vmem:[%s0 + $0x4f0] sm:$0xff]
    %v273 = vld [vmem:[%s0 + $0x4f8] sm:$0xff]
    %v274 = vld [vmem:[%s0 + $0x500] sm:$0xff]
    %v275 = vld [vmem:[%s0 + $0x508] sm:$0xff]
    %v276 = vld [vmem:[%s0 + $0x510] sm:$0xff]
    %v277 = vld [vmem:[%s0 + $0x518] sm:$0xff]
    %v278 = vld [vmem:[%s0 + $0x520] sm:$0xff]
    %v279 = vld [vmem:[%s0 + $0x528] sm:$0xff]
    %v280 = vld [vmem:[%s0 + $0x530] sm:$0xff]
    %v281 = vld [vmem:[%s0 + $0x538] sm:$0xff]
    %v282 = vld [vmem:[%s0 + $0x540] sm:$0xff]
    %v283 = vld [vmem:[%s0 + $0x548] sm:$0xff]
    %v284 = vld [vmem:[%s0 + $0x550] sm:$0xff]
    %v285 = vld [vmem:[%s0 + $0x558] sm:$0xff]
    %v286 = vld [vmem:[%s0 + $0x560] sm:$0xff]
    %v287 = vld [vmem:[%s0 + $0x568] sm:$0xff]
    %v288 = vld [vmem:[%s0 + $0x570] sm:$0xff]
    %v289 = vld [vmem:[%s0 + $0x578] sm:$0xff]
    %v290 = vld [vmem:[%s0 + $0x580] sm:$0xff]
    %v291 = vld [vmem:[%s0 + $0x588] sm:$0xff]
    %v292 = vld [vmem:[%s0 + $0x590] sm:$0xff]
    %v293 = vld [vmem:[%s0 + $0x598] sm:$0xff]
    %v294 = vld [vmem:[%s0 + $0x5a0] sm:$0xff]
    %v295 = vld [vmem:[%s0 + $0x5a8] sm:$0xff]
    %v296 = vld [vmem:[%s0 + $0x5b0] sm:$0xff]
    %v297 = vld [vmem:[%s0 + $0x5b8] sm:$0xff]
    %v298 = vld [vmem:[%s0 + $0x5c0] sm:$0xff]
    %v299 = vld [vmem:[%s0 + $0x5c8] sm:$0xff]
    %v300 = vld [vmem:[%s0 + $0x5d0] sm:$0xff]
    %v301 = vld [vmem:[%s0 + $0x5d8] sm:$0xff]
    %v302 = vld [vmem:[%s0 + $0x5e0] sm:$0xff]
    %v303 = vld [vmem:[%s0 + $0x5e8] sm:$0xff]
    %v304 = vld [vmem:[%s0 + $0x5f0] sm:$0xff]
    %v305 = vld [vmem:[%s0 + $0x5f8] sm:$0xff]
    %v306 = vld [vmem:[%s0 + $0x600] sm:$0xff]
    %v307 = vld [vmem:[%s0 + $0x608] sm:$0xff]
    %v308 = vld [vmem:[%s0 + $0x610] sm:$0xff]
    %v309 = vld [vmem:[%s0 + $0x618] sm:$0xff]
    %v310 = vld [vmem:[%s0 + $0x620] sm:$0xff]
    %v311 = vld [vmem:[%s0 + $0x628] sm:$0xff]
    %v312 = vld [vmem:[%s0 + $0x630] sm:$0xff]
    %v313 = vld [vmem:[%s0 + $0x638] sm:$0xff]
    %v314 = vld [vmem:[%s0 + $0x640] sm:$0xff]
    %v315 = vld [vmem:[%s0 + $0x648] sm:$0xff]
    %v316 = vld [vmem:[%s0 + $0x650] sm:$0xff]
    %v317 = vld [vmem:[%s0 + $0x658] sm:$0xff]
    %v318 = vld [vmem:[%s0 + $0x660] sm:$0xff]
    %v319 = vld [vmem:[%s0 + $0x668] sm:$0xff]
    %v320 = vld [vmem:[%s0 + $0x670] sm:$0xff]
    %v321 = vld [vmem:[%s0 + $0x678] sm:$0xff]
    %v322 = vld [vmem:[%s0 + $0x680] sm:$0xff]
    %v323 = vld [vmem:[%s0 + $0x688] sm:$0xff]
    %v324 = vld [vmem:[%s0 + $0x690] sm:$0xff]
    %v325 = vld [vmem:[%s0 + $0x698] sm:$0xff]
    %v326 = vld [vmem:[%s0 + $0x6a0] sm:$0xff]
    %v327 = vld [vmem:[%s0 + $0x6a8] sm:$0xff]
    %v328 = vld [vmem:[%s0 + $0x6b0] sm:$0xff]
    %v329 = vld [vmem:[%s0 + $0x6b8] sm:$0xff]
    %v330 = vld [vmem:[%s0 + $0x6c0] sm:$0xff]
    %v331 = vld [vmem:[%s0 + $0x6c8] sm:$0xff]
    %v332 = vld [vmem:[%s0 + $0x6d0] sm:$0xff]
    %v333 = vld [vmem:[%s0 + $0x6d8] sm:$0xff]
    %v334 = vld [vmem:[%s0 + $0x6e0] sm:$0xff]
    %v335 = vld [vmem:[%s0 + $0x6e8] sm:$0xff]
    %v336 = vld [vmem:[%s0 + $0x6f0] sm:$0xff]
    %v337 = vld [vmem:[%s0 + $0x6f8] sm:$0xff]
    %v338 = vld [vmem:[%s0 + $0x700] sm:$0xff]
    %v339 = vld [vmem:[%s0 + $0x708] sm:$0xff]
    %v340 = vld [vmem:[%s0 + $0x710] sm:$0xff]
    %v341 = vld [vmem:[%s0 + $0x718] sm:$0xff]
    %v342 = vld [vmem:[%s0 + $0x720] sm:$0xff]
    %v343 = vld [vmem:[%s0 + $0x728] sm:$0xff]
    %v344 = vld [vmem:[%s0 + $0x730] sm:$0xff]
    %v345 = vld [vmem:[%s0 + $0x738] sm:$0xff]
    %v346 = vld [vmem:[%s0 + $0x740] sm:$0xff]
    %v347 = vld [vmem:[%s0 + $0x748] sm:$0xff]
    %v348 = vld [vmem:[%s0 + $0x750] sm:$0xff]
    %v349 = vld [vmem:[%s0 + $0x758] sm:$0xff]
    %v350 = vld [vmem:[%s0 + $0x760] sm:$0xff]
    %v351 = vld [vmem:[%s0 + $0x768] sm:$0xff]
    %v352 = vld [vmem:[%s0 + $0x770] sm:$0xff]
    %v353 = vld [vmem:[%s0 + $0x778] sm:$0xff]
    %v354 = vld [vmem:[%s0 + $0x780] sm:$0xff]
    %v355 = vld [vmem:[%s0 + $0x788] sm:$0xff]
    %v356 = vld [vmem:[%s0 + $0x790] sm:$0xff]
    %v357 = vld [vmem:[%s0 + $0x798] sm:$0xff]
    %v358 = vld [vmem:[%s0 + $0x7a0] sm:$0xff]
    %v359 = vld [vmem:[%s0 + $0x7a8] sm:$0xff]
    %v360 = vld [vmem:[%s0 + $0x7b0] sm:$0xff]
    %v361 = vld [vmem:[%s0 + $0x7b8] sm:$0xff]
    %v362 = vld [vmem:[%s0 + $0x7c0] sm:$0xff]
    %v363 = vld [vmem:[%s0 + $0x7c8] sm:$0xff]
    %v364 = vld [vmem:[%s0 + $0x7d0] sm:$0xff]
    %v365 = vld [vmem:[%s0 + $0x7d8] sm:$0xff]
    %v366 = vld [vmem:[%s0 + $0x7e0] sm:$0xff]
    %v367 = vld [vmem:[%s0 + $0x7e8] sm:$0xff]
    %v368 = vld [vmem:[%s0 + $0x7f0] sm:$0xff]
    %v369 = vld [vmem:[%s0 + $0x7f8] sm:$0xff]
    %v370 = vld [vmem:[%s0 + $0x800] sm:$0xff]
    %v371 = vld [vmem:[%s0 + $0x808] sm:$0xff]
    %v372 = vld [vmem:[%s0 + $0x810] sm:$0xff]
    %v373 = vld [vmem:[%s0 + $0x818] sm:$0xff]
    %v374 = vld [vmem:[%s0 + $0x820] sm:$0xff]
    %v375 = vld [vmem:[%s0 + $0x828] sm:$0xff]
    %v376 = vld [vmem:[%s0 + $0x830] sm:$0xff]
    %v377 = vld [vmem:[%s0 + $0x838] sm:$0xff]
    %v378 = vld [vmem:[%s0 + $0x840] sm:$0xff]
    %v379 = vld [vmem:[%s0 + $0x848] sm:$0xff]
    %v380 = vld [vmem:[%s0 + $0x850] sm:$0xff]
    %v381 = vld [vmem:[%s0 + $0x858] sm:$0xff]
    %v382 = vld [vmem:[%s0 + $0x860] sm:$0xff]
    %v383 = vld [vmem:[%s0 + $0x868] sm:$0xff]
    %v384 = vld [vmem:[%s0 + $0x870] sm:$0xff]
    %v385 = vld [vmem:[%s0 + $0x878] sm:$0xff]
    %v386 = vld [vmem:[%s0 + $0x880] sm:$0xff]
    %v387 = vld [vmem:[%s0 + $0x888] sm:$0xff]
    %v388 = vld [vmem:[%s0 + $0x890] sm:$0xff]
    %v389 = vld [vmem:[%s0 + $0x898] sm:$0xff]
    %v390 = vld [vmem:[%s0 + $0x8a0] sm:$0xff]
    %v391 = vld [vmem:[%s0 + $0x8a8] sm:$0xff]
    %v392 = vld [vmem:[%s0 + $0x8b0] sm:$0xff]
    %v393 = vld [vmem:[%s0 + $0x8b8] sm:$0xff]
    %v394 = vld [vmem:[%s0 + $0x8c0] sm:$0xff]
    %v395 = vld [vmem:[%s0 + $0x8c8] sm:$0xff]
    %v396 = vld [vmem:[%s0 + $0x8d0] sm:$0xff]
    %v397 = vld [vmem:[%s0 + $0x8d8] sm:$0xff]
    %v398 = vld [vmem:[%s0 + $0x8e0] sm:$0xff]
    %v399 = vld [vmem:[%s0 + $0x8e8] sm:$0xff]
    %v400 = vld [vmem:[%s0 + $0x8f0] sm:$0xff]
    %v401 = vld [vmem:[%s0 + $0x8f8] sm:$0xff]
    %v402 = vld [vmem:[%s0 + $0x900] sm:$0xff]
    %v403 = vld [vmem:[%s0 + $0x908] sm:$0xff]
    %v404 = vld [vmem:[%s0 + $0x910] sm:$0xff]
    %v405 = vld [vmem:[%s0 + $0x918] sm:$0xff]
    %v406 = vld [vmem:[%s0 + $0x920] sm:$0xff]
    %v407 = vld [vmem:[%s0 + $0x928] sm:$0xff]
    %v408 = vld [vmem:[%s0 + $0x930] sm:$0xff]
    %v409 = vld [vmem:[%s0 + $0x938] sm:$0xff]
    %v410 = vld [vmem:[%s0 + $0x940] sm:$0xff]
    %v411 = vld [vmem:[%s0 + $0x948] sm:$0xff]
    %v412 = vld [vmem:[%s0 + $0x950] sm:$0xff]
    %v413 = vld [vmem:[%s0 + $0x958] sm:$0xff]
    %v414 = vld [vmem:[%s0 + $0x960] sm:$0xff]
    %v415 = vld [vmem:[%s0 + $0x968] sm:$0xff]
    %v416 = vld [vmem:[%s0 + $0x970] sm:$0xff]
    %v417 = vld [vmem:[%s0 + $0x978] sm:$0xff]
    %v418 = vld [vmem:[%s0 + $0x980] sm:$0xff]
    %v419 = vld [vmem:[%s0 + $0x988] sm:$0xff]
    %v420 = vld [vmem:[%s0 + $0x990] sm:$0xff]
    %v421 = vld [vmem:[%s0 + $0x998] sm:$0xff]
    %v422 = vld [vmem:[%s0 + $0x9a0] sm:$0xff]
    %v423 = vld [vmem:[%s0 + $0x9a8] sm:$0xff]
    %v424 = vld [vmem:[%s0 + $0x9b0] sm:$0xff]
    %v425 = vld [vmem:[%s0 + $0x9b8] sm:$0xff]
    %v426 = vld [vmem:[%s0 + $0x9c0] sm:$0xff]
    %v427 = vld [vmem:[%s0 + $0x9c8] sm:$0xff]
    %v428 = vld [vmem:[%s0 + $0x9d0] sm:$0xff]
    %v429 = vld [vmem:[%s0 + $0x9d8] sm:$0xff]
    %v430 = vld [vmem:[%s0 + $0x9e0] sm:$0xff]
    %v431 = vld [vmem:[%s0 + $0x9e8] sm:$0xff]
    %v432 = vld [vmem:[%s0 + $0x9f0] sm:$0xff]
    %v433 = vld [vmem:[%s0 + $0x9f8] sm:$0xff]
    %v434 = vld [vmem:[%s0 + $0xa00] sm:$0xff]
    %v435 = vld [vmem:[%s0 + $0xa08] sm:$0xff]
    %v436 = vld [vmem:[%s0 + $0xa10] sm:$0xff]
    %v437 = vld [vmem:[%s0 + $0xa18] sm:$0xff]
    %v438 = vld [vmem:[%s0 + $0xa20] sm:$0xff]
    %v439 = vld [vmem:[%s0 + $0xa28] sm:$0xff]
    %v440 = vld [vmem:[%s0 + $0xa30] sm:$0xff]
    %v441 = vld [vmem:[%s0 + $0xa38] sm:$0xff]
    %v442 = vld [vmem:[%s0 + $0xa40] sm:$0xff]
    %v443 = vld [vmem:[%s0 + $0xa48] sm:$0xff]
    %v444 = vld [vmem:[%s0 + $0xa50] sm:$0xff]
    %v445 = vld [vmem:[%s0 + $0xa58] sm:$0xff]
    %v446 = vld [vmem:[%s0 + $0xa60] sm:$0xff]
    %v447 = vld [vmem:[%s0 + $0xa68] sm:$0xff]
    %v448 = vld [vmem:[%s0 + $0xa70] sm:$0xff]
    %v449 = vld [vmem:[%s0 + $0xa78] sm:$0xff]
    %v450 = vld [vmem:[%s0 + $0xa80] sm:$0xff]
    %v451 = vld [vmem:[%s0 + $0xa88] sm:$0xff]
    %v452 = vld [vmem:[%s0 + $0xa90] sm:$0xff]
    %v453 = vld [vmem:[%s0 + $0xa98] sm:$0xff]
    %v454 = vld [vmem:[%s0 + $0xaa0] sm:$0xff]
    %v455 = vld [vmem:[%s0 + $0xaa8] sm:$0xff]
    %v456 = vld [vmem:[%s0 + $0xab0] sm:$0xff]
    %v457 = vld [vmem:[%s0 + $0xab8] sm:$0xff]
    %v458 = vld [vmem:[%s0 + $0xac0] sm:$0xff]
    %v459 = vld [vmem:[%s0 + $0xac8] sm:$0xff]
    %v460 = vld [vmem:[%s0 + $0xad0] sm:$0xff]
    %v461 = vld [vmem:[%s0 + $0xad8] sm:$0xff]
    %v462 = vld [vmem:[%s0 + $0xae0] sm:$0xff]
    %v463 = vld [vmem:[%s0 + $0xae8] sm:$0xff]
    %v464 = vld [vmem:[%s0 + $0xaf0] sm:$0xff]
    %v465 = vld [vmem:[%s0 + $0xaf8] sm:$0xff]
    %v466 = vld [vmem:[%s0 + $0xb00] sm:$0xff]
    %v467 = vld [vmem:[%s0 + $0xb08] sm:$0xff]
    %v468 = vld [vmem:[%s0 + $0xb10] sm:$0xff]
    %v469 = vld [vmem:[%s0 + $0xb18] sm:$0xff]
    %v470 = vld [vmem:[%s0 + $0xb20] sm:$0xff]
    %v471 = vld [vmem:[%s0 + $0xb28] sm:$0xff]
    %v472 = vld [vmem:[%s0 + $0xb30] sm:$0xff]
    %v473 = vld [vmem:[%s0 + $0xb38] sm:$0xff]
    %v474 = vld [vmem:[%s0 + $0xb40] sm:$0xff]
    %v475 = vld [vmem:[%s0 + $0xb48] sm:$0xff]
    %v476 = vld [vmem:[%s0 + $0xb50] sm:$0xff]
    %v477 = vld [vmem:[%s0 + $0xb58] sm:$0xff]
    %v478 = vld [vmem:[%s0 + $0xb60] sm:$0xff]
    %v479 = vld [vmem:[%s0 + $0xb68] sm:$0xff]
    %v480 = vld [vmem:[%s0 + $0xb70] sm:$0xff]
    %v481 = vld [vmem:[%s0 + $0xb78] sm:$0xff]
    %v482 = vld [vmem:[%s0 + $0xb80] sm:$0xff]
    %v483 = vld [vmem:[%s0 + $0xb88] sm:$0xff]
    %v484 = vld [vmem:[%s0 + $0xb90] sm:$0xff]
    %v485 = vld [vmem:[%s0 + $0xb98] sm:$0xff]
    %v486 = vld [vmem:[%s0 + $0xba0] sm:$0xff]
    %v487 = vld [vmem:[%s0 + $0xba8] sm:$0xff]
    %v488 = vld [vmem:[%s0 + $0xbb0] sm:$0xff]
    %v489 = vld [vmem:[%s0 + $0xbb8] sm:$0xff]
    %v490 = vld [vmem:[%s0 + $0xbc0] sm:$0xff]
    %v491 = vld [vmem:[%s0 + $0xbc8] sm:$0xff]
    %v492 = vld [vmem:[%s0 + $0xbd0] sm:$0xff]
    %v493 = vld [vmem:[%s0 + $0xbd8] sm:$0xff]
    %v494 = vld [vmem:[%s0 + $0xbe0] sm:$0xff]
    %v495 = vld [vmem:[%s0 + $0xbe8] sm:$0xff]
    %v496 = vld [vmem:[%s0 + $0xbf0] sm:$0xff]
    %v497 = vld [vmem:[%s0 + $0xbf8] sm:$0xff]
    %v498 = vpack.c.bf16 %v138, %v114
    %v499 = vpack.c.bf16 %v139, %v115
    %v500 = vpack.c.bf16 %v140, %v116
    %v501 = vpack.c.bf16 %v141, %v117
    %v502 = vpack.c.bf16 %v142, %v118
    %v503 = vpack.c.bf16 %v143, %v119
    %v504 = vpack.c.bf16 %v144, %v120
    %v505 = vpack.c.bf16 %v145, %v121
    %v506 = vpack.c.bf16 %v146, %v122
    %v507 = vpack.c.bf16 %v147, %v123
    %v508 = vpack.c.bf16 %v148, %v124
    %v509 = vpack.c.bf16 %v149, %v125
    %v510 = vpack.c.bf16 %v150, %v126
    %v511 = vpack.c.bf16 %v151, %v127
    %v512 = vpack.c.bf16 %v152, %v128
    %v513 = vpack.c.bf16 %v153, %v129
    %v514 = vpack.c.bf16 %v154, %v130
    %v515 = vpack.c.bf16 %v155, %v131
    %v516 = vpack.c.bf16 %v156, %v132
    %v517 = vpack.c.bf16 %v157, %v133
    %v518 = vpack.c.bf16 %v158, %v134
    %v519 = vpack.c.bf16 %v159, %v135
    %v520 = vpack.c.bf16 %v160, %v136
    %v521 = vpack.c.bf16 %v161, %v137
    %v522 = vpack.c.bf16 %v186, %v162
    %v523 = vpack.c.bf16 %v187, %v163
    %v524 = vpack.c.bf16 %v188, %v164
    %v525 = vpack.c.bf16 %v189, %v165
    %v526 = vpack.c.bf16 %v190, %v166
    %v527 = vpack.c.bf16 %v191, %v167
    %v528 = vpack.c.bf16 %v192, %v168
    %v529 = vpack.c.bf16 %v193, %v169
    %v530 = vpack.c.bf16 %v194, %v170
    %v531 = vpack.c.bf16 %v195, %v171
    %v532 = vpack.c.bf16 %v196, %v172
    %v533 = vpack.c.bf16 %v197, %v173
    %v534 = vpack.c.bf16 %v198, %v174
    %v535 = vpack.c.bf16 %v199, %v175
    %v536 = vpack.c.bf16 %v200, %v176
    %v537 = vpack.c.bf16 %v201, %v177
    %v538 = vpack.c.bf16 %v202, %v178
    %v539 = vpack.c.bf16 %v203, %v179
    %v540 = vpack.c.bf16 %v204, %v180
    %v541 = vpack.c.bf16 %v205, %v181
    %v542 = vpack.c.bf16 %v206, %v182
    %v543 = vpack.c.bf16 %v207, %v183
    %v544 = vpack.c.bf16 %v208, %v184
    %v545 = vpack.c.bf16 %v209, %v185
    %v546 = vpack.c.bf16 %v234, %v210
    %v547 = vpack.c.bf16 %v235, %v211
    %v548 = vpack.c.bf16 %v236, %v212
    %v549 = vpack.c.bf16 %v237, %v213
    %v550 = vpack.c.bf16 %v238, %v214
    %v551 = vpack.c.bf16 %v239, %v215
    %v552 = vpack.c.bf16 %v240, %v216
    %v553 = vpack.c.bf16 %v241, %v217
    %v554 = vpack.c.bf16 %v242, %v218
    %v555 = vpack.c.bf16 %v243, %v219
    %v556 = vpack.c.bf16 %v244, %v220
    %v557 = vpack.c.bf16 %v245, %v221
    %v558 = vpack.c.bf16 %v246, %v222
    %v559 = vpack.c.bf16 %v247, %v223
    %v560 = vpack.c.bf16 %v248, %v224
    %v561 = vpack.c.bf16 %v249, %v225
    %v562 = vpack.c.bf16 %v250, %v226
    %v563 = vpack.c.bf16 %v251, %v227
    %v564 = vpack.c.bf16 %v252, %v228
    %v565 = vpack.c.bf16 %v253, %v229
    %v566 = vpack.c.bf16 %v254, %v230
    %v567 = vpack.c.bf16 %v255, %v231
    %v568 = vpack.c.bf16 %v256, %v232
    %v569 = vpack.c.bf16 %v257, %v233
    %v570 = vpack.c.bf16 %v282, %v258
    %v571 = vpack.c.bf16 %v283, %v259
    %v572 = vpack.c.bf16 %v284, %v260
    %v573 = vpack.c.bf16 %v285, %v261
    %v574 = vpack.c.bf16 %v286, %v262
    %v575 = vpack.c.bf16 %v287, %v263
    %v576 = vpack.c.bf16 %v288, %v264
    %v577 = vpack.c.bf16 %v289, %v265
    %v578 = vpack.c.bf16 %v290, %v266
    %v579 = vpack.c.bf16 %v291, %v267
    %v580 = vpack.c.bf16 %v292, %v268
    %v581 = vpack.c.bf16 %v293, %v269
    %v582 = vpack.c.bf16 %v294, %v270
    %v583 = vpack.c.bf16 %v295, %v271
    %v584 = vpack.c.bf16 %v296, %v272
    %v585 = vpack.c.bf16 %v297, %v273
    %v586 = vpack.c.bf16 %v298, %v274
    %v587 = vpack.c.bf16 %v299, %v275
    %v588 = vpack.c.bf16 %v300, %v276
    %v589 = vpack.c.bf16 %v301, %v277
    %v590 = vpack.c.bf16 %v302, %v278
    %v591 = vpack.c.bf16 %v303, %v279
    %v592 = vpack.c.bf16 %v304, %v280
    %v593 = vpack.c.bf16 %v305, %v281
    %v594 = vpack.c.bf16 %v330, %v306
    %v595 = vpack.c.bf16 %v331, %v307
    %v596 = vpack.c.bf16 %v332, %v308
    %v597 = vpack.c.bf16 %v333, %v309
    %v598 = vpack.c.bf16 %v334, %v310
    %v599 = vpack.c.bf16 %v335, %v311
    %v600 = vpack.c.bf16 %v336, %v312
    %v601 = vpack.c.bf16 %v337, %v313
    %v602 = vpack.c.bf16 %v338, %v314
    %v603 = vpack.c.bf16 %v339, %v315
    %v604 = vpack.c.bf16 %v340, %v316
    %v605 = vpack.c.bf16 %v341, %v317
    %v606 = vpack.c.bf16 %v342, %v318
    %v607 = vpack.c.bf16 %v343, %v319
    %v608 = vpack.c.bf16 %v344, %v320
    %v609 = vpack.c.bf16 %v345, %v321
    %v610 = vpack.c.bf16 %v346, %v322
    %v611 = vpack.c.bf16 %v347, %v323
    %v612 = vpack.c.bf16 %v348, %v324
    %v613 = vpack.c.bf16 %v349, %v325
    %v614 = vpack.c.bf16 %v350, %v326
    %v615 = vpack.c.bf16 %v351, %v327
    %v616 = vpack.c.bf16 %v352, %v328
    %v617 = vpack.c.bf16 %v353, %v329
    %v618 = vpack.c.bf16 %v378, %v354
    %v619 = vpack.c.bf16 %v379, %v355
    %v620 = vpack.c.bf16 %v380, %v356
    %v621 = vpack.c.bf16 %v381, %v357
    %v622 = vpack.c.bf16 %v382, %v358
    %v623 = vpack.c.bf16 %v383, %v359
    %v624 = vpack.c.bf16 %v384, %v360
    %v625 = vpack.c.bf16 %v385, %v361
    %v626 = vpack.c.bf16 %v386, %v362
    %v627 = vpack.c.bf16 %v387, %v363
    %v628 = vpack.c.bf16 %v388, %v364
    %v629 = vpack.c.bf16 %v389, %v365
    %v630 = vpack.c.bf16 %v390, %v366
    %v631 = vpack.c.bf16 %v391, %v367
    %v632 = vpack.c.bf16 %v392, %v368
    %v633 = vpack.c.bf16 %v393, %v369
    %v634 = vpack.c.bf16 %v394, %v370
    %v635 = vpack.c.bf16 %v395, %v371
    %v636 = vpack.c.bf16 %v396, %v372
    %v637 = vpack.c.bf16 %v397, %v373
    %v638 = vpack.c.bf16 %v398, %v374
    %v639 = vpack.c.bf16 %v399, %v375
    %v640 = vpack.c.bf16 %v400, %v376
    %v641 = vpack.c.bf16 %v401, %v377
    %v642 = vpack.c.bf16 %v426, %v402
    %v643 = vpack.c.bf16 %v427, %v403
    %v644 = vpack.c.bf16 %v428, %v404
    %v645 = vpack.c.bf16 %v429, %v405
    %v646 = vpack.c.bf16 %v430, %v406
    %v647 = vpack.c.bf16 %v431, %v407
    %v648 = vpack.c.bf16 %v432, %v408
    %v649 = vpack.c.bf16 %v433, %v409
    %v650 = vpack.c.bf16 %v434, %v410
    %v651 = vpack.c.bf16 %v435, %v411
    %v652 = vpack.c.bf16 %v436, %v412
    %v653 = vpack.c.bf16 %v437, %v413
    %v654 = vpack.c.bf16 %v438, %v414
    %v655 = vpack.c.bf16 %v439, %v415
    %v656 = vpack.c.bf16 %v440, %v416
    %v657 = vpack.c.bf16 %v441, %v417
    %v658 = vpack.c.bf16 %v442, %v418
    %v659 = vpack.c.bf16 %v443, %v419
    %v660 = vpack.c.bf16 %v444, %v420
    %v661 = vpack.c.bf16 %v445, %v421
    %v662 = vpack.c.bf16 %v446, %v422
    %v663 = vpack.c.bf16 %v447, %v423
    %v664 = vpack.c.bf16 %v448, %v424
    %v665 = vpack.c.bf16 %v449, %v425
    %v666 = vpack.c.bf16 %v474, %v450
    %v667 = vpack.c.bf16 %v475, %v451
    %v668 = vpack.c.bf16 %v476, %v452
    %v669 = vpack.c.bf16 %v477, %v453
    %v670 = vpack.c.bf16 %v478, %v454
    %v671 = vpack.c.bf16 %v479, %v455
    %v672 = vpack.c.bf16 %v480, %v456
    %v673 = vpack.c.bf16 %v481, %v457
    %v674 = vpack.c.bf16 %v482, %v458
    %v675 = vpack.c.bf16 %v483, %v459
    %v676 = vpack.c.bf16 %v484, %v460
    %v677 = vpack.c.bf16 %v485, %v461
    %v678 = vpack.c.bf16 %v486, %v462
    %v679 = vpack.c.bf16 %v487, %v463
    %v680 = vpack.c.bf16 %v488, %v464
    %v681 = vpack.c.bf16 %v489, %v465
    %v682 = vpack.c.bf16 %v490, %v466
    %v683 = vpack.c.bf16 %v491, %v467
    %v684 = vpack.c.bf16 %v492, %v468
    %v685 = vpack.c.bf16 %v493, %v469
    %v686 = vpack.c.bf16 %v494, %v470
    %v687 = vpack.c.bf16 %v495, %v471
    %v688 = vpack.c.bf16 %v496, %v472
    %v689 = vpack.c.bf16 %v497, %v473
    %v690 = vld [vmem:[#allocation2] sm:$0xff]
    %v691 = vld [vmem:[#allocation2 + $0x8] sm:$0xff]
    %v692 = vld [vmem:[#allocation2 + $0x10] sm:$0xff]
    %v693 = vld [vmem:[#allocation2 + $0x18] sm:$0xff]
    %v694 = vld [vmem:[#allocation2 + $0x20] sm:$0xff]
    %v695 = vld [vmem:[#allocation2 + $0x28] sm:$0xff]
    %v696 = vld [vmem:[#allocation2 + $0x30] sm:$0xff]
    %v697 = vld [vmem:[#allocation2 + $0x38] sm:$0xff]
    %v698 = vld [vmem:[#allocation2 + $0x40] sm:$0xff]
    %v699 = vld [vmem:[#allocation2 + $0x48] sm:$0xff]
    %v700 = vld [vmem:[#allocation2 + $0x50] sm:$0xff]
    %v701 = vld [vmem:[#allocation2 + $0x58] sm:$0xff]
    %v702 = vld [vmem:[#allocation2 + $0x60] sm:$0xff]
    %v703 = vld [vmem:[#allocation2 + $0x68] sm:$0xff]
    %v704 = vld [vmem:[#allocation2 + $0x70] sm:$0xff]
    %v705 = vld [vmem:[#allocation2 + $0x78] sm:$0xff]
    %v706 = vld [vmem:[#allocation2 + $0x80] sm:$0xff]
    %v707 = vld [vmem:[#allocation2 + $0x88] sm:$0xff]
    %v708 = vld [vmem:[#allocation2 + $0x90] sm:$0xff]
    %v709 = vld [vmem:[#allocation2 + $0x98] sm:$0xff]
    %v710 = vld [vmem:[#allocation2 + $0xa0] sm:$0xff]
    %v711 = vld [vmem:[#allocation2 + $0xa8] sm:$0xff]
    %v712 = vld [vmem:[#allocation2 + $0xb0] sm:$0xff]
    %v713 = vld [vmem:[#allocation2 + $0xb8] sm:$0xff]
    %v714 = vld [vmem:[#allocation2 + $0xc0] sm:$0xff]
    %v715 = vld [vmem:[#allocation2 + $0xc8] sm:$0xff]
    %v716 = vld [vmem:[#allocation2 + $0xd0] sm:$0xff]
    %v717 = vld [vmem:[#allocation2 + $0xd8] sm:$0xff]
    %v718 = vld [vmem:[#allocation2 + $0xe0] sm:$0xff]
    %v719 = vld [vmem:[#allocation2 + $0xe8] sm:$0xff]
    %v720 = vld [vmem:[#allocation2 + $0xf0] sm:$0xff]
    %v721 = vld [vmem:[#allocation2 + $0xf8] sm:$0xff]
    %v722 = vld [vmem:[#allocation2 + $0x100] sm:$0xff]
    %v723 = vld [vmem:[#allocation2 + $0x108] sm:$0xff]
    %v724 = vld [vmem:[#allocation2 + $0x110] sm:$0xff]
    %v725 = vld [vmem:[#allocation2 + $0x118] sm:$0xff]
    %v726 = vld [vmem:[#allocation2 + $0x120] sm:$0xff]
    %v727 = vld [vmem:[#allocation2 + $0x128] sm:$0xff]
    %v728 = vld [vmem:[#allocation2 + $0x130] sm:$0xff]
    %v729 = vld [vmem:[#allocation2 + $0x138] sm:$0xff]
    %v730 = vld [vmem:[#allocation2 + $0x140] sm:$0xff]
    %v731 = vld [vmem:[#allocation2 + $0x148] sm:$0xff]
    %v732 = vld [vmem:[#allocation2 + $0x150] sm:$0xff]
    %v733 = vld [vmem:[#allocation2 + $0x158] sm:$0xff]
    %v734 = vld [vmem:[#allocation2 + $0x160] sm:$0xff]
    %v735 = vld [vmem:[#allocation2 + $0x168] sm:$0xff]
    %v736 = vld [vmem:[#allocation2 + $0x170] sm:$0xff]
    %v737 = vld [vmem:[#allocation2 + $0x178] sm:$0xff]
    %v738 = vld [vmem:[#allocation2 + $0x180] sm:$0xff]
    %v739 = vld [vmem:[#allocation2 + $0x188] sm:$0xff]
    %v740 = vld [vmem:[#allocation2 + $0x190] sm:$0xff]
    %v741 = vld [vmem:[#allocation2 + $0x198] sm:$0xff]
    %v742 = vld [vmem:[#allocation2 + $0x1a0] sm:$0xff]
    %v743 = vld [vmem:[#allocation2 + $0x1a8] sm:$0xff]
    %v744 = vld [vmem:[#allocation2 + $0x1b0] sm:$0xff]
    %v745 = vld [vmem:[#allocation2 + $0x1b8] sm:$0xff]
    %v746 = vld [vmem:[#allocation2 + $0x1c0] sm:$0xff]
    %v747 = vld [vmem:[#allocation2 + $0x1c8] sm:$0xff]
    %v748 = vld [vmem:[#allocation2 + $0x1d0] sm:$0xff]
    %v749 = vld [vmem:[#allocation2 + $0x1d8] sm:$0xff]
    %v750 = vld [vmem:[#allocation2 + $0x1e0] sm:$0xff]
    %v751 = vld [vmem:[#allocation2 + $0x1e8] sm:$0xff]
    %v752 = vld [vmem:[#allocation2 + $0x1f0] sm:$0xff]
    %v753 = vld [vmem:[#allocation2 + $0x1f8] sm:$0xff]
    %v754 = vld [vmem:[#allocation2 + $0x200] sm:$0xff]
    %v755 = vld [vmem:[#allocation2 + $0x208] sm:$0xff]
    %v756 = vld [vmem:[#allocation2 + $0x210] sm:$0xff]
    %v757 = vld [vmem:[#allocation2 + $0x218] sm:$0xff]
    %v758 = vld [vmem:[#allocation2 + $0x220] sm:$0xff]
    %v759 = vld [vmem:[#allocation2 + $0x228] sm:$0xff]
    %v760 = vld [vmem:[#allocation2 + $0x230] sm:$0xff]
    %v761 = vld [vmem:[#allocation2 + $0x238] sm:$0xff]
    %v762 = vld [vmem:[#allocation2 + $0x240] sm:$0xff]
    %v763 = vld [vmem:[#allocation2 + $0x248] sm:$0xff]
    %v764 = vld [vmem:[#allocation2 + $0x250] sm:$0xff]
    %v765 = vld [vmem:[#allocation2 + $0x258] sm:$0xff]
    %v766 = vld [vmem:[#allocation2 + $0x260] sm:$0xff]
    %v767 = vld [vmem:[#allocation2 + $0x268] sm:$0xff]
    %v768 = vld [vmem:[#allocation2 + $0x270] sm:$0xff]
    %v769 = vld [vmem:[#allocation2 + $0x278] sm:$0xff]
    %v770 = vld [vmem:[#allocation2 + $0x280] sm:$0xff]
    %v771 = vld [vmem:[#allocation2 + $0x288] sm:$0xff]
    %v772 = vld [vmem:[#allocation2 + $0x290] sm:$0xff]
    %v773 = vld [vmem:[#allocation2 + $0x298] sm:$0xff]
    %v774 = vld [vmem:[#allocation2 + $0x2a0] sm:$0xff]
    %v775 = vld [vmem:[#allocation2 + $0x2a8] sm:$0xff]
    %v776 = vld [vmem:[#allocation2 + $0x2b0] sm:$0xff]
    %v777 = vld [vmem:[#allocation2 + $0x2b8] sm:$0xff]
    %v778 = vld [vmem:[#allocation2 + $0x2c0] sm:$0xff]
    %v779 = vld [vmem:[#allocation2 + $0x2c8] sm:$0xff]
    %v780 = vld [vmem:[#allocation2 + $0x2d0] sm:$0xff]
    %v781 = vld [vmem:[#allocation2 + $0x2d8] sm:$0xff]
    %v782 = vld [vmem:[#allocation2 + $0x2e0] sm:$0xff]
    %v783 = vld [vmem:[#allocation2 + $0x2e8] sm:$0xff]
    %v784 = vld [vmem:[#allocation2 + $0x2f0] sm:$0xff]
    %v785 = vld [vmem:[#allocation2 + $0x2f8] sm:$0xff]
    %v786 = vld [vmem:[#allocation2 + $0x300] sm:$0xff]
    %v787 = vld [vmem:[#allocation2 + $0x308] sm:$0xff]
    %v788 = vld [vmem:[#allocation2 + $0x310] sm:$0xff]
    %v789 = vld [vmem:[#allocation2 + $0x318] sm:$0xff]
    %v790 = vld [vmem:[#allocation2 + $0x320] sm:$0xff]
    %v791 = vld [vmem:[#allocation2 + $0x328] sm:$0xff]
    %v792 = vld [vmem:[#allocation2 + $0x330] sm:$0xff]
    %v793 = vld [vmem:[#allocation2 + $0x338] sm:$0xff]
    %v794 = vld [vmem:[#allocation2 + $0x340] sm:$0xff]
    %v795 = vld [vmem:[#allocation2 + $0x348] sm:$0xff]
    %v796 = vld [vmem:[#allocation2 + $0x350] sm:$0xff]
    %v797 = vld [vmem:[#allocation2 + $0x358] sm:$0xff]
    %v798 = vld [vmem:[#allocation2 + $0x360] sm:$0xff]
    %v799 = vld [vmem:[#allocation2 + $0x368] sm:$0xff]
    %v800 = vld [vmem:[#allocation2 + $0x370] sm:$0xff]
    %v801 = vld [vmem:[#allocation2 + $0x378] sm:$0xff]
    %v802 = vld [vmem:[#allocation2 + $0x380] sm:$0xff]
    %v803 = vld [vmem:[#allocation2 + $0x388] sm:$0xff]
    %v804 = vld [vmem:[#allocation2 + $0x390] sm:$0xff]
    %v805 = vld [vmem:[#allocation2 + $0x398] sm:$0xff]
    %v806 = vld [vmem:[#allocation2 + $0x3a0] sm:$0xff]
    %v807 = vld [vmem:[#allocation2 + $0x3a8] sm:$0xff]
    %v808 = vld [vmem:[#allocation2 + $0x3b0] sm:$0xff]
    %v809 = vld [vmem:[#allocation2 + $0x3b8] sm:$0xff]
    %v810 = vld [vmem:[#allocation2 + $0x3c0] sm:$0xff]
    %v811 = vld [vmem:[#allocation2 + $0x3c8] sm:$0xff]
    %v812 = vld [vmem:[#allocation2 + $0x3d0] sm:$0xff]
    %v813 = vld [vmem:[#allocation2 + $0x3d8] sm:$0xff]
    %v814 = vld [vmem:[#allocation2 + $0x3e0] sm:$0xff]
    %v815 = vld [vmem:[#allocation2 + $0x3e8] sm:$0xff]
    %v816 = vld [vmem:[#allocation2 + $0x3f0] sm:$0xff]
    %v817 = vld [vmem:[#allocation2 + $0x3f8] sm:$0xff]
    %v818 = vld [vmem:[#allocation2 + $0x400] sm:$0xff]
    %v819 = vld [vmem:[#allocation2 + $0x408] sm:$0xff]
    %v820 = vld [vmem:[#allocation2 + $0x410] sm:$0xff]
    %v821 = vld [vmem:[#allocation2 + $0x418] sm:$0xff]
    %v822 = vld [vmem:[#allocation2 + $0x420] sm:$0xff]
    %v823 = vld [vmem:[#allocation2 + $0x428] sm:$0xff]
    %v824 = vld [vmem:[#allocation2 + $0x430] sm:$0xff]
    %v825 = vld [vmem:[#allocation2 + $0x438] sm:$0xff]
    %v826 = vld [vmem:[#allocation2 + $0x440] sm:$0xff]
    %v827 = vld [vmem:[#allocation2 + $0x448] sm:$0xff]
    %v828 = vld [vmem:[#allocation2 + $0x450] sm:$0xff]
    %v829 = vld [vmem:[#allocation2 + $0x458] sm:$0xff]
    %v830 = vld [vmem:[#allocation2 + $0x460] sm:$0xff]
    %v831 = vld [vmem:[#allocation2 + $0x468] sm:$0xff]
    %v832 = vld [vmem:[#allocation2 + $0x470] sm:$0xff]
    %v833 = vld [vmem:[#allocation2 + $0x478] sm:$0xff]
    %v834 = vld [vmem:[#allocation2 + $0x480] sm:$0xff]
    %v835 = vld [vmem:[#allocation2 + $0x488] sm:$0xff]
    %v836 = vld [vmem:[#allocation2 + $0x490] sm:$0xff]
    %v837 = vld [vmem:[#allocation2 + $0x498] sm:$0xff]
    %v838 = vld [vmem:[#allocation2 + $0x4a0] sm:$0xff]
    %v839 = vld [vmem:[#allocation2 + $0x4a8] sm:$0xff]
    %v840 = vld [vmem:[#allocation2 + $0x4b0] sm:$0xff]
    %v841 = vld [vmem:[#allocation2 + $0x4b8] sm:$0xff]
    %v842 = vld [vmem:[#allocation2 + $0x4c0] sm:$0xff]
    %v843 = vld [vmem:[#allocation2 + $0x4c8] sm:$0xff]
    %v844 = vld [vmem:[#allocation2 + $0x4d0] sm:$0xff]
    %v845 = vld [vmem:[#allocation2 + $0x4d8] sm:$0xff]
    %v846 = vld [vmem:[#allocation2 + $0x4e0] sm:$0xff]
    %v847 = vld [vmem:[#allocation2 + $0x4e8] sm:$0xff]
    %v848 = vld [vmem:[#allocation2 + $0x4f0] sm:$0xff]
    %v849 = vld [vmem:[#allocation2 + $0x4f8] sm:$0xff]
    %v850 = vld [vmem:[#allocation2 + $0x500] sm:$0xff]
    %v851 = vld [vmem:[#allocation2 + $0x508] sm:$0xff]
    %v852 = vld [vmem:[#allocation2 + $0x510] sm:$0xff]
    %v853 = vld [vmem:[#allocation2 + $0x518] sm:$0xff]
    %v854 = vld [vmem:[#allocation2 + $0x520] sm:$0xff]
    %v855 = vld [vmem:[#allocation2 + $0x528] sm:$0xff]
    %v856 = vld [vmem:[#allocation2 + $0x530] sm:$0xff]
    %v857 = vld [vmem:[#allocation2 + $0x538] sm:$0xff]
    %v858 = vld [vmem:[#allocation2 + $0x540] sm:$0xff]
    %v859 = vld [vmem:[#allocation2 + $0x548] sm:$0xff]
    %v860 = vld [vmem:[#allocation2 + $0x550] sm:$0xff]
    %v861 = vld [vmem:[#allocation2 + $0x558] sm:$0xff]
    %v862 = vld [vmem:[#allocation2 + $0x560] sm:$0xff]
    %v863 = vld [vmem:[#allocation2 + $0x568] sm:$0xff]
    %v864 = vld [vmem:[#allocation2 + $0x570] sm:$0xff]
    %v865 = vld [vmem:[#allocation2 + $0x578] sm:$0xff]
    %v866 = vld [vmem:[#allocation2 + $0x580] sm:$0xff]
    %v867 = vld [vmem:[#allocation2 + $0x588] sm:$0xff]
    %v868 = vld [vmem:[#allocation2 + $0x590] sm:$0xff]
    %v869 = vld [vmem:[#allocation2 + $0x598] sm:$0xff]
    %v870 = vld [vmem:[#allocation2 + $0x5a0] sm:$0xff]
    %v871 = vld [vmem:[#allocation2 + $0x5a8] sm:$0xff]
    %v872 = vld [vmem:[#allocation2 + $0x5b0] sm:$0xff]
    %v873 = vld [vmem:[#allocation2 + $0x5b8] sm:$0xff]
    %v874 = vld [vmem:[#allocation2 + $0x5c0] sm:$0xff]
    %v875 = vld [vmem:[#allocation2 + $0x5c8] sm:$0xff]
    %v876 = vld [vmem:[#allocation2 + $0x5d0] sm:$0xff]
    %v877 = vld [vmem:[#allocation2 + $0x5d8] sm:$0xff]
    %v878 = vld [vmem:[#allocation2 + $0x5e0] sm:$0xff]
    %v879 = vld [vmem:[#allocation2 + $0x5e8] sm:$0xff]
    %v880 = vld [vmem:[#allocation2 + $0x5f0] sm:$0xff]
    %v881 = vld [vmem:[#allocation2 + $0x5f8] sm:$0xff]
    %v882 = vld [vmem:[#allocation2 + $0x600] sm:$0xff]
    %v883 = vld [vmem:[#allocation2 + $0x608] sm:$0xff]
    %v884 = vld [vmem:[#allocation2 + $0x610] sm:$0xff]
    %v885 = vld [vmem:[#allocation2 + $0x618] sm:$0xff]
    %v886 = vld [vmem:[#allocation2 + $0x620] sm:$0xff]
    %v887 = vld [vmem:[#allocation2 + $0x628] sm:$0xff]
    %v888 = vld [vmem:[#allocation2 + $0x630] sm:$0xff]
    %v889 = vld [vmem:[#allocation2 + $0x638] sm:$0xff]
    %v890 = vld [vmem:[#allocation2 + $0x640] sm:$0xff]
    %v891 = vld [vmem:[#allocation2 + $0x648] sm:$0xff]
    %v892 = vld [vmem:[#allocation2 + $0x650] sm:$0xff]
    %v893 = vld [vmem:[#allocation2 + $0x658] sm:$0xff]
    %v894 = vld [vmem:[#allocation2 + $0x660] sm:$0xff]
    %v895 = vld [vmem:[#allocation2 + $0x668] sm:$0xff]
    %v896 = vld [vmem:[#allocation2 + $0x670] sm:$0xff]
    %v897 = vld [vmem:[#allocation2 + $0x678] sm:$0xff]
    %v898 = vld [vmem:[#allocation2 + $0x680] sm:$0xff]
    %v899 = vld [vmem:[#allocation2 + $0x688] sm:$0xff]
    %v900 = vld [vmem:[#allocation2 + $0x690] sm:$0xff]
    %v901 = vld [vmem:[#allocation2 + $0x698] sm:$0xff]
    %v902 = vld [vmem:[#allocation2 + $0x6a0] sm:$0xff]
    %v903 = vld [vmem:[#allocation2 + $0x6a8] sm:$0xff]
    %v904 = vld [vmem:[#allocation2 + $0x6b0] sm:$0xff]
    %v905 = vld [vmem:[#allocation2 + $0x6b8] sm:$0xff]
    %v906 = vld [vmem:[#allocation2 + $0x6c0] sm:$0xff]
    %v907 = vld [vmem:[#allocation2 + $0x6c8] sm:$0xff]
    %v908 = vld [vmem:[#allocation2 + $0x6d0] sm:$0xff]
    %v909 = vld [vmem:[#allocation2 + $0x6d8] sm:$0xff]
    %v910 = vld [vmem:[#allocation2 + $0x6e0] sm:$0xff]
    %v911 = vld [vmem:[#allocation2 + $0x6e8] sm:$0xff]
    %v912 = vld [vmem:[#allocation2 + $0x6f0] sm:$0xff]
    %v913 = vld [vmem:[#allocation2 + $0x6f8] sm:$0xff]
    %v914 = vld [vmem:[#allocation2 + $0x700] sm:$0xff]
    %v915 = vld [vmem:[#allocation2 + $0x708] sm:$0xff]
    %v916 = vld [vmem:[#allocation2 + $0x710] sm:$0xff]
    %v917 = vld [vmem:[#allocation2 + $0x718] sm:$0xff]
    %v918 = vld [vmem:[#allocation2 + $0x720] sm:$0xff]
    %v919 = vld [vmem:[#allocation2 + $0x728] sm:$0xff]
    %v920 = vld [vmem:[#allocation2 + $0x730] sm:$0xff]
    %v921 = vld [vmem:[#allocation2 + $0x738] sm:$0xff]
    %v922 = vld [vmem:[#allocation2 + $0x740] sm:$0xff]
    %v923 = vld [vmem:[#allocation2 + $0x748] sm:$0xff]
    %v924 = vld [vmem:[#allocation2 + $0x750] sm:$0xff]
    %v925 = vld [vmem:[#allocation2 + $0x758] sm:$0xff]
    %v926 = vld [vmem:[#allocation2 + $0x760] sm:$0xff]
    %v927 = vld [vmem:[#allocation2 + $0x768] sm:$0xff]
    %v928 = vld [vmem:[#allocation2 + $0x770] sm:$0xff]
    %v929 = vld [vmem:[#allocation2 + $0x778] sm:$0xff]
    %v930 = vld [vmem:[#allocation2 + $0x780] sm:$0xff]
    %v931 = vld [vmem:[#allocation2 + $0x788] sm:$0xff]
    %v932 = vld [vmem:[#allocation2 + $0x790] sm:$0xff]
    %v933 = vld [vmem:[#allocation2 + $0x798] sm:$0xff]
    %v934 = vld [vmem:[#allocation2 + $0x7a0] sm:$0xff]
    %v935 = vld [vmem:[#allocation2 + $0x7a8] sm:$0xff]
    %v936 = vld [vmem:[#allocation2 + $0x7b0] sm:$0xff]
    %v937 = vld [vmem:[#allocation2 + $0x7b8] sm:$0xff]
    %v938 = vld [vmem:[#allocation2 + $0x7c0] sm:$0xff]
    %v939 = vld [vmem:[#allocation2 + $0x7c8] sm:$0xff]
    %v940 = vld [vmem:[#allocation2 + $0x7d0] sm:$0xff]
    %v941 = vld [vmem:[#allocation2 + $0x7d8] sm:$0xff]
    %v942 = vld [vmem:[#allocation2 + $0x7e0] sm:$0xff]
    %v943 = vld [vmem:[#allocation2 + $0x7e8] sm:$0xff]
    %v944 = vld [vmem:[#allocation2 + $0x7f0] sm:$0xff]
    %v945 = vld [vmem:[#allocation2 + $0x7f8] sm:$0xff]
    %v946 = vld [vmem:[#allocation2 + $0x800] sm:$0xff]
    %v947 = vld [vmem:[#allocation2 + $0x808] sm:$0xff]
    %v948 = vld [vmem:[#allocation2 + $0x810] sm:$0xff]
    %v949 = vld [vmem:[#allocation2 + $0x818] sm:$0xff]
    %v950 = vld [vmem:[#allocation2 + $0x820] sm:$0xff]
    %v951 = vld [vmem:[#allocation2 + $0x828] sm:$0xff]
    %v952 = vld [vmem:[#allocation2 + $0x830] sm:$0xff]
    %v953 = vld [vmem:[#allocation2 + $0x838] sm:$0xff]
    %v954 = vld [vmem:[#allocation2 + $0x840] sm:$0xff]
    %v955 = vld [vmem:[#allocation2 + $0x848] sm:$0xff]
    %v956 = vld [vmem:[#allocation2 + $0x850] sm:$0xff]
    %v957 = vld [vmem:[#allocation2 + $0x858] sm:$0xff]
    %v958 = vld [vmem:[#allocation2 + $0x860] sm:$0xff]
    %v959 = vld [vmem:[#allocation2 + $0x868] sm:$0xff]
    %v960 = vld [vmem:[#allocation2 + $0x870] sm:$0xff]
    %v961 = vld [vmem:[#allocation2 + $0x878] sm:$0xff]
    %v962 = vld [vmem:[#allocation2 + $0x880] sm:$0xff]
    %v963 = vld [vmem:[#allocation2 + $0x888] sm:$0xff]
    %v964 = vld [vmem:[#allocation2 + $0x890] sm:$0xff]
    %v965 = vld [vmem:[#allocation2 + $0x898] sm:$0xff]
    %v966 = vld [vmem:[#allocation2 + $0x8a0] sm:$0xff]
    %v967 = vld [vmem:[#allocation2 + $0x8a8] sm:$0xff]
    %v968 = vld [vmem:[#allocation2 + $0x8b0] sm:$0xff]
    %v969 = vld [vmem:[#allocation2 + $0x8b8] sm:$0xff]
    %v970 = vld [vmem:[#allocation2 + $0x8c0] sm:$0xff]
    %v971 = vld [vmem:[#allocation2 + $0x8c8] sm:$0xff]
    %v972 = vld [vmem:[#allocation2 + $0x8d0] sm:$0xff]
    %v973 = vld [vmem:[#allocation2 + $0x8d8] sm:$0xff]
    %v974 = vld [vmem:[#allocation2 + $0x8e0] sm:$0xff]
    %v975 = vld [vmem:[#allocation2 + $0x8e8] sm:$0xff]
    %v976 = vld [vmem:[#allocation2 + $0x8f0] sm:$0xff]
    %v977 = vld [vmem:[#allocation2 + $0x8f8] sm:$0xff]
    %v978 = vld [vmem:[#allocation2 + $0x900] sm:$0xff]
    %v979 = vld [vmem:[#allocation2 + $0x908] sm:$0xff]
    %v980 = vld [vmem:[#allocation2 + $0x910] sm:$0xff]
    %v981 = vld [vmem:[#allocation2 + $0x918] sm:$0xff]
    %v982 = vld [vmem:[#allocation2 + $0x920] sm:$0xff]
    %v983 = vld [vmem:[#allocation2 + $0x928] sm:$0xff]
    %v984 = vld [vmem:[#allocation2 + $0x930] sm:$0xff]
    %v985 = vld [vmem:[#allocation2 + $0x938] sm:$0xff]
    %v986 = vld [vmem:[#allocation2 + $0x940] sm:$0xff]
    %v987 = vld [vmem:[#allocation2 + $0x948] sm:$0xff]
    %v988 = vld [vmem:[#allocation2 + $0x950] sm:$0xff]
    %v989 = vld [vmem:[#allocation2 + $0x958] sm:$0xff]
    %v990 = vld [vmem:[#allocation2 + $0x960] sm:$0xff]
    %v991 = vld [vmem:[#allocation2 + $0x968] sm:$0xff]
    %v992 = vld [vmem:[#allocation2 + $0x970] sm:$0xff]
    %v993 = vld [vmem:[#allocation2 + $0x978] sm:$0xff]
    %v994 = vld [vmem:[#allocation2 + $0x980] sm:$0xff]
    %v995 = vld [vmem:[#allocation2 + $0x988] sm:$0xff]
    %v996 = vld [vmem:[#allocation2 + $0x990] sm:$0xff]
    %v997 = vld [vmem:[#allocation2 + $0x998] sm:$0xff]
    %v998 = vld [vmem:[#allocation2 + $0x9a0] sm:$0xff]
    %v999 = vld [vmem:[#allocation2 + $0x9a8] sm:$0xff]
    %v1000 = vld [vmem:[#allocation2 + $0x9b0] sm:$0xff]
    %v1001 = vld [vmem:[#allocation2 + $0x9b8] sm:$0xff]
    %v1002 = vld [vmem:[#allocation2 + $0x9c0] sm:$0xff]
    %v1003 = vld [vmem:[#allocation2 + $0x9c8] sm:$0xff]
    %v1004 = vld [vmem:[#allocation2 + $0x9d0] sm:$0xff]
    %v1005 = vld [vmem:[#allocation2 + $0x9d8] sm:$0xff]
    %v1006 = vld [vmem:[#allocation2 + $0x9e0] sm:$0xff]
    %v1007 = vld [vmem:[#allocation2 + $0x9e8] sm:$0xff]
    %v1008 = vld [vmem:[#allocation2 + $0x9f0] sm:$0xff]
    %v1009 = vld [vmem:[#allocation2 + $0x9f8] sm:$0xff]
    %v1010 = vld [vmem:[#allocation2 + $0xa00] sm:$0xff]
    %v1011 = vld [vmem:[#allocation2 + $0xa08] sm:$0xff]
    %v1012 = vld [vmem:[#allocation2 + $0xa10] sm:$0xff]
    %v1013 = vld [vmem:[#allocation2 + $0xa18] sm:$0xff]
    %v1014 = vld [vmem:[#allocation2 + $0xa20] sm:$0xff]
    %v1015 = vld [vmem:[#allocation2 + $0xa28] sm:$0xff]
    %v1016 = vld [vmem:[#allocation2 + $0xa30] sm:$0xff]
    %v1017 = vld [vmem:[#allocation2 + $0xa38] sm:$0xff]
    %v1018 = vld [vmem:[#allocation2 + $0xa40] sm:$0xff]
    %v1019 = vld [vmem:[#allocation2 + $0xa48] sm:$0xff]
    %v1020 = vld [vmem:[#allocation2 + $0xa50] sm:$0xff]
    %v1021 = vld [vmem:[#allocation2 + $0xa58] sm:$0xff]
    %v1022 = vld [vmem:[#allocation2 + $0xa60] sm:$0xff]
    %v1023 = vld [vmem:[#allocation2 + $0xa68] sm:$0xff]
    %v1024 = vld [vmem:[#allocation2 + $0xa70] sm:$0xff]
    %v1025 = vld [vmem:[#allocation2 + $0xa78] sm:$0xff]
    %v1026 = vld [vmem:[#allocation2 + $0xa80] sm:$0xff]
    %v1027 = vld [vmem:[#allocation2 + $0xa88] sm:$0xff]
    %v1028 = vld [vmem:[#allocation2 + $0xa90] sm:$0xff]
    %v1029 = vld [vmem:[#allocation2 + $0xa98] sm:$0xff]
    %v1030 = vld [vmem:[#allocation2 + $0xaa0] sm:$0xff]
    %v1031 = vld [vmem:[#allocation2 + $0xaa8] sm:$0xff]
    %v1032 = vld [vmem:[#allocation2 + $0xab0] sm:$0xff]
    %v1033 = vld [vmem:[#allocation2 + $0xab8] sm:$0xff]
    %v1034 = vld [vmem:[#allocation2 + $0xac0] sm:$0xff]
    %v1035 = vld [vmem:[#allocation2 + $0xac8] sm:$0xff]
    %v1036 = vld [vmem:[#allocation2 + $0xad0] sm:$0xff]
    %v1037 = vld [vmem:[#allocation2 + $0xad8] sm:$0xff]
    %v1038 = vld [vmem:[#allocation2 + $0xae0] sm:$0xff]
    %v1039 = vld [vmem:[#allocation2 + $0xae8] sm:$0xff]
    %v1040 = vld [vmem:[#allocation2 + $0xaf0] sm:$0xff]
    %v1041 = vld [vmem:[#allocation2 + $0xaf8] sm:$0xff]
    %v1042 = vld [vmem:[#allocation2 + $0xb00] sm:$0xff]
    %v1043 = vld [vmem:[#allocation2 + $0xb08] sm:$0xff]
    %v1044 = vld [vmem:[#allocation2 + $0xb10] sm:$0xff]
    %v1045 = vld [vmem:[#allocation2 + $0xb18] sm:$0xff]
    %v1046 = vld [vmem:[#allocation2 + $0xb20] sm:$0xff]
    %v1047 = vld [vmem:[#allocation2 + $0xb28] sm:$0xff]
    %v1048 = vld [vmem:[#allocation2 + $0xb30] sm:$0xff]
    %v1049 = vld [vmem:[#allocation2 + $0xb38] sm:$0xff]
    %v1050 = vld [vmem:[#allocation2 + $0xb40] sm:$0xff]
    %v1051 = vld [vmem:[#allocation2 + $0xb48] sm:$0xff]
    %v1052 = vld [vmem:[#allocation2 + $0xb50] sm:$0xff]
    %v1053 = vld [vmem:[#allocation2 + $0xb58] sm:$0xff]
    %v1054 = vld [vmem:[#allocation2 + $0xb60] sm:$0xff]
    %v1055 = vld [vmem:[#allocation2 + $0xb68] sm:$0xff]
    %v1056 = vld [vmem:[#allocation2 + $0xb70] sm:$0xff]
    %v1057 = vld [vmem:[#allocation2 + $0xb78] sm:$0xff]
    %v1058 = vld [vmem:[#allocation2 + $0xb80] sm:$0xff]
    %v1059 = vld [vmem:[#allocation2 + $0xb88] sm:$0xff]
    %v1060 = vld [vmem:[#allocation2 + $0xb90] sm:$0xff]
    %v1061 = vld [vmem:[#allocation2 + $0xb98] sm:$0xff]
    %v1062 = vld [vmem:[#allocation2 + $0xba0] sm:$0xff]
    %v1063 = vld [vmem:[#allocation2 + $0xba8] sm:$0xff]
    %v1064 = vld [vmem:[#allocation2 + $0xbb0] sm:$0xff]
    %v1065 = vld [vmem:[#allocation2 + $0xbb8] sm:$0xff]
    %v1066 = vld [vmem:[#allocation2 + $0xbc0] sm:$0xff]
    %v1067 = vld [vmem:[#allocation2 + $0xbc8] sm:$0xff]
    %v1068 = vld [vmem:[#allocation2 + $0xbd0] sm:$0xff]
    %v1069 = vld [vmem:[#allocation2 + $0xbd8] sm:$0xff]
    %v1070 = vld [vmem:[#allocation2 + $0xbe0] sm:$0xff]
    %v1071 = vld [vmem:[#allocation2 + $0xbe8] sm:$0xff]
    %v1072 = vld [vmem:[#allocation2 + $0xbf0] sm:$0xff]
    %v1073 = vld [vmem:[#allocation2 + $0xbf8] sm:$0xff]
    %v1074 = vld [vmem:[#allocation2 + $0xc00] sm:$0xff]
    %v1075 = vld [vmem:[#allocation2 + $0xc08] sm:$0xff]
    %v1076 = vld [vmem:[#allocation2 + $0xc10] sm:$0xff]
    %v1077 = vld [vmem:[#allocation2 + $0xc18] sm:$0xff]
    %v1078 = vld [vmem:[#allocation2 + $0xc20] sm:$0xff]
    %v1079 = vld [vmem:[#allocation2 + $0xc28] sm:$0xff]
    %v1080 = vld [vmem:[#allocation2 + $0xc30] sm:$0xff]
    %v1081 = vld [vmem:[#allocation2 + $0xc38] sm:$0xff]
    %v1082 = vld [vmem:[#allocation2 + $0xc40] sm:$0xff]
    %v1083 = vld [vmem:[#allocation2 + $0xc48] sm:$0xff]
    %v1084 = vld [vmem:[#allocation2 + $0xc50] sm:$0xff]
    %v1085 = vld [vmem:[#allocation2 + $0xc58] sm:$0xff]
    %v1086 = vld [vmem:[#allocation2 + $0xc60] sm:$0xff]
    %v1087 = vld [vmem:[#allocation2 + $0xc68] sm:$0xff]
    %v1088 = vld [vmem:[#allocation2 + $0xc70] sm:$0xff]
    %v1089 = vld [vmem:[#allocation2 + $0xc78] sm:$0xff]
    %v1090 = vld [vmem:[#allocation2 + $0xc80] sm:$0xff]
    %v1091 = vld [vmem:[#allocation2 + $0xc88] sm:$0xff]
    %v1092 = vld [vmem:[#allocation2 + $0xc90] sm:$0xff]
    %v1093 = vld [vmem:[#allocation2 + $0xc98] sm:$0xff]
    %v1094 = vld [vmem:[#allocation2 + $0xca0] sm:$0xff]
    %v1095 = vld [vmem:[#allocation2 + $0xca8] sm:$0xff]
    %v1096 = vld [vmem:[#allocation2 + $0xcb0] sm:$0xff]
    %v1097 = vld [vmem:[#allocation2 + $0xcb8] sm:$0xff]
    %v1098 = vld [vmem:[#allocation2 + $0xcc0] sm:$0xff]
    %v1099 = vld [vmem:[#allocation2 + $0xcc8] sm:$0xff]
    %v1100 = vld [vmem:[#allocation2 + $0xcd0] sm:$0xff]
    %v1101 = vld [vmem:[#allocation2 + $0xcd8] sm:$0xff]
    %v1102 = vld [vmem:[#allocation2 + $0xce0] sm:$0xff]
    %v1103 = vld [vmem:[#allocation2 + $0xce8] sm:$0xff]
    %v1104 = vld [vmem:[#allocation2 + $0xcf0] sm:$0xff]
    %v1105 = vld [vmem:[#allocation2 + $0xcf8] sm:$0xff]
    %v1106 = vld [vmem:[#allocation2 + $0xd00] sm:$0xff]
    %v1107 = vld [vmem:[#allocation2 + $0xd08] sm:$0xff]
    %v1108 = vld [vmem:[#allocation2 + $0xd10] sm:$0xff]
    %v1109 = vld [vmem:[#allocation2 + $0xd18] sm:$0xff]
    %v1110 = vld [vmem:[#allocation2 + $0xd20] sm:$0xff]
    %v1111 = vld [vmem:[#allocation2 + $0xd28] sm:$0xff]
    %v1112 = vld [vmem:[#allocation2 + $0xd30] sm:$0xff]
    %v1113 = vld [vmem:[#allocation2 + $0xd38] sm:$0xff]
    %v1114 = vld [vmem:[#allocation2 + $0xd40] sm:$0xff]
    %v1115 = vld [vmem:[#allocation2 + $0xd48] sm:$0xff]
    %v1116 = vld [vmem:[#allocation2 + $0xd50] sm:$0xff]
    %v1117 = vld [vmem:[#allocation2 + $0xd58] sm:$0xff]
    %v1118 = vld [vmem:[#allocation2 + $0xd60] sm:$0xff]
    %v1119 = vld [vmem:[#allocation2 + $0xd68] sm:$0xff]
    %v1120 = vld [vmem:[#allocation2 + $0xd70] sm:$0xff]
    %v1121 = vld [vmem:[#allocation2 + $0xd78] sm:$0xff]
    %v1122 = vld [vmem:[#allocation2 + $0xd80] sm:$0xff]
    %v1123 = vld [vmem:[#allocation2 + $0xd88] sm:$0xff]
    %v1124 = vld [vmem:[#allocation2 + $0xd90] sm:$0xff]
    %v1125 = vld [vmem:[#allocation2 + $0xd98] sm:$0xff]
    %v1126 = vld [vmem:[#allocation2 + $0xda0] sm:$0xff]
    %v1127 = vld [vmem:[#allocation2 + $0xda8] sm:$0xff]
    %v1128 = vld [vmem:[#allocation2 + $0xdb0] sm:$0xff]
    %v1129 = vld [vmem:[#allocation2 + $0xdb8] sm:$0xff]
    %v1130 = vld [vmem:[#allocation2 + $0xdc0] sm:$0xff]
    %v1131 = vld [vmem:[#allocation2 + $0xdc8] sm:$0xff]
    %v1132 = vld [vmem:[#allocation2 + $0xdd0] sm:$0xff]
    %v1133 = vld [vmem:[#allocation2 + $0xdd8] sm:$0xff]
    %v1134 = vld [vmem:[#allocation2 + $0xde0] sm:$0xff]
    %v1135 = vld [vmem:[#allocation2 + $0xde8] sm:$0xff]
    %v1136 = vld [vmem:[#allocation2 + $0xdf0] sm:$0xff]
    %v1137 = vld [vmem:[#allocation2 + $0xdf8] sm:$0xff]
    %v1138 = vld [vmem:[#allocation2 + $0xe00] sm:$0xff]
    %v1139 = vld [vmem:[#allocation2 + $0xe08] sm:$0xff]
    %v1140 = vld [vmem:[#allocation2 + $0xe10] sm:$0xff]
    %v1141 = vld [vmem:[#allocation2 + $0xe18] sm:$0xff]
    %v1142 = vld [vmem:[#allocation2 + $0xe20] sm:$0xff]
    %v1143 = vld [vmem:[#allocation2 + $0xe28] sm:$0xff]
    %v1144 = vld [vmem:[#allocation2 + $0xe30] sm:$0xff]
    %v1145 = vld [vmem:[#allocation2 + $0xe38] sm:$0xff]
    %v1146 = vld [vmem:[#allocation2 + $0xe40] sm:$0xff]
    %v1147 = vld [vmem:[#allocation2 + $0xe48] sm:$0xff]
    %v1148 = vld [vmem:[#allocation2 + $0xe50] sm:$0xff]
    %v1149 = vld [vmem:[#allocation2 + $0xe58] sm:$0xff]
    %v1150 = vld [vmem:[#allocation2 + $0xe60] sm:$0xff]
    %v1151 = vld [vmem:[#allocation2 + $0xe68] sm:$0xff]
    %v1152 = vld [vmem:[#allocation2 + $0xe70] sm:$0xff]
    %v1153 = vld [vmem:[#allocation2 + $0xe78] sm:$0xff]
    %v1154 = vld [vmem:[#allocation2 + $0xe80] sm:$0xff]
    %v1155 = vld [vmem:[#allocation2 + $0xe88] sm:$0xff]
    %v1156 = vld [vmem:[#allocation2 + $0xe90] sm:$0xff]
    %v1157 = vld [vmem:[#allocation2 + $0xe98] sm:$0xff]
    %v1158 = vld [vmem:[#allocation2 + $0xea0] sm:$0xff]
    %v1159 = vld [vmem:[#allocation2 + $0xea8] sm:$0xff]
    %v1160 = vld [vmem:[#allocation2 + $0xeb0] sm:$0xff]
    %v1161 = vld [vmem:[#allocation2 + $0xeb8] sm:$0xff]
    %v1162 = vld [vmem:[#allocation2 + $0xec0] sm:$0xff]
    %v1163 = vld [vmem:[#allocation2 + $0xec8] sm:$0xff]
    %v1164 = vld [vmem:[#allocation2 + $0xed0] sm:$0xff]
    %v1165 = vld [vmem:[#allocation2 + $0xed8] sm:$0xff]
    %v1166 = vld [vmem:[#allocation2 + $0xee0] sm:$0xff]
    %v1167 = vld [vmem:[#allocation2 + $0xee8] sm:$0xff]
    %v1168 = vld [vmem:[#allocation2 + $0xef0] sm:$0xff]
    %v1169 = vld [vmem:[#allocation2 + $0xef8] sm:$0xff]
    %v1170 = vld [vmem:[#allocation2 + $0xf00] sm:$0xff]
    %v1171 = vld [vmem:[#allocation2 + $0xf08] sm:$0xff]
    %v1172 = vld [vmem:[#allocation2 + $0xf10] sm:$0xff]
    %v1173 = vld [vmem:[#allocation2 + $0xf18] sm:$0xff]
    %v1174 = vld [vmem:[#allocation2 + $0xf20] sm:$0xff]
    %v1175 = vld [vmem:[#allocation2 + $0xf28] sm:$0xff]
    %v1176 = vld [vmem:[#allocation2 + $0xf30] sm:$0xff]
    %v1177 = vld [vmem:[#allocation2 + $0xf38] sm:$0xff]
    %v1178 = vld [vmem:[#allocation2 + $0xf40] sm:$0xff]
    %v1179 = vld [vmem:[#allocation2 + $0xf48] sm:$0xff]
    %v1180 = vld [vmem:[#allocation2 + $0xf50] sm:$0xff]
    %v1181 = vld [vmem:[#allocation2 + $0xf58] sm:$0xff]
    %v1182 = vld [vmem:[#allocation2 + $0xf60] sm:$0xff]
    %v1183 = vld [vmem:[#allocation2 + $0xf68] sm:$0xff]
    %v1184 = vld [vmem:[#allocation2 + $0xf70] sm:$0xff]
    %v1185 = vld [vmem:[#allocation2 + $0xf78] sm:$0xff]
    %v1186 = vld [vmem:[#allocation2 + $0xf80] sm:$0xff]
    %v1187 = vld [vmem:[#allocation2 + $0xf88] sm:$0xff]
    %v1188 = vld [vmem:[#allocation2 + $0xf90] sm:$0xff]
    %v1189 = vld [vmem:[#allocation2 + $0xf98] sm:$0xff]
    %v1190 = vld [vmem:[#allocation2 + $0xfa0] sm:$0xff]
    %v1191 = vld [vmem:[#allocation2 + $0xfa8] sm:$0xff]
    %v1192 = vld [vmem:[#allocation2 + $0xfb0] sm:$0xff]
    %v1193 = vld [vmem:[#allocation2 + $0xfb8] sm:$0xff]
    %v1194 = vld [vmem:[#allocation2 + $0xfc0] sm:$0xff]
    %v1195 = vld [vmem:[#allocation2 + $0xfc8] sm:$0xff]
    %v1196 = vld [vmem:[#allocation2 + $0xfd0] sm:$0xff]
    %v1197 = vld [vmem:[#allocation2 + $0xfd8] sm:$0xff]
    %v1198 = vld [vmem:[#allocation2 + $0xfe0] sm:$0xff]
    %v1199 = vld [vmem:[#allocation2 + $0xfe8] sm:$0xff]
    %v1200 = vld [vmem:[#allocation2 + $0xff0] sm:$0xff]
    %v1201 = vld [vmem:[#allocation2 + $0xff8] sm:$0xff]
    %v1202 = vld [vmem:[#allocation2 + $0x1000] sm:$0xff]
    %v1203 = vld [vmem:[#allocation2 + $0x1008] sm:$0xff]
    %v1204 = vld [vmem:[#allocation2 + $0x1010] sm:$0xff]
    %v1205 = vld [vmem:[#allocation2 + $0x1018] sm:$0xff]
    %v1206 = vld [vmem:[#allocation2 + $0x1020] sm:$0xff]
    %v1207 = vld [vmem:[#allocation2 + $0x1028] sm:$0xff]
    %v1208 = vld [vmem:[#allocation2 + $0x1030] sm:$0xff]
    %v1209 = vld [vmem:[#allocation2 + $0x1038] sm:$0xff]
    %v1210 = vld [vmem:[#allocation2 + $0x1040] sm:$0xff]
    %v1211 = vld [vmem:[#allocation2 + $0x1048] sm:$0xff]
    %v1212 = vld [vmem:[#allocation2 + $0x1050] sm:$0xff]
    %v1213 = vld [vmem:[#allocation2 + $0x1058] sm:$0xff]
    %v1214 = vld [vmem:[#allocation2 + $0x1060] sm:$0xff]
    %v1215 = vld [vmem:[#allocation2 + $0x1068] sm:$0xff]
    %v1216 = vld [vmem:[#allocation2 + $0x1070] sm:$0xff]
    %v1217 = vld [vmem:[#allocation2 + $0x1078] sm:$0xff]
    %v1218 = vld [vmem:[#allocation2 + $0x1080] sm:$0xff]
    %v1219 = vld [vmem:[#allocation2 + $0x1088] sm:$0xff]
    %v1220 = vld [vmem:[#allocation2 + $0x1090] sm:$0xff]
    %v1221 = vld [vmem:[#allocation2 + $0x1098] sm:$0xff]
    %v1222 = vld [vmem:[#allocation2 + $0x10a0] sm:$0xff]
    %v1223 = vld [vmem:[#allocation2 + $0x10a8] sm:$0xff]
    %v1224 = vld [vmem:[#allocation2 + $0x10b0] sm:$0xff]
    %v1225 = vld [vmem:[#allocation2 + $0x10b8] sm:$0xff]
    %v1226 = vld [vmem:[#allocation2 + $0x10c0] sm:$0xff]
    %v1227 = vld [vmem:[#allocation2 + $0x10c8] sm:$0xff]
    %v1228 = vld [vmem:[#allocation2 + $0x10d0] sm:$0xff]
    %v1229 = vld [vmem:[#allocation2 + $0x10d8] sm:$0xff]
    %v1230 = vld [vmem:[#allocation2 + $0x10e0] sm:$0xff]
    %v1231 = vld [vmem:[#allocation2 + $0x10e8] sm:$0xff]
    %v1232 = vld [vmem:[#allocation2 + $0x10f0] sm:$0xff]
    %v1233 = vld [vmem:[#allocation2 + $0x10f8] sm:$0xff]
    %v1234 = vld [vmem:[#allocation2 + $0x1100] sm:$0xff]
    %v1235 = vld [vmem:[#allocation2 + $0x1108] sm:$0xff]
    %v1236 = vld [vmem:[#allocation2 + $0x1110] sm:$0xff]
    %v1237 = vld [vmem:[#allocation2 + $0x1118] sm:$0xff]
    %v1238 = vld [vmem:[#allocation2 + $0x1120] sm:$0xff]
    %v1239 = vld [vmem:[#allocation2 + $0x1128] sm:$0xff]
    %v1240 = vld [vmem:[#allocation2 + $0x1130] sm:$0xff]
    %v1241 = vld [vmem:[#allocation2 + $0x1138] sm:$0xff]
    %v1242 = vld [vmem:[#allocation2 + $0x1140] sm:$0xff]
    %v1243 = vld [vmem:[#allocation2 + $0x1148] sm:$0xff]
    %v1244 = vld [vmem:[#allocation2 + $0x1150] sm:$0xff]
    %v1245 = vld [vmem:[#allocation2 + $0x1158] sm:$0xff]
    %v1246 = vld [vmem:[#allocation2 + $0x1160] sm:$0xff]
    %v1247 = vld [vmem:[#allocation2 + $0x1168] sm:$0xff]
    %v1248 = vld [vmem:[#allocation2 + $0x1170] sm:$0xff]
    %v1249 = vld [vmem:[#allocation2 + $0x1178] sm:$0xff]
    %v1250 = vld [vmem:[#allocation2 + $0x1180] sm:$0xff]
    %v1251 = vld [vmem:[#allocation2 + $0x1188] sm:$0xff]
    %v1252 = vld [vmem:[#allocation2 + $0x1190] sm:$0xff]
    %v1253 = vld [vmem:[#allocation2 + $0x1198] sm:$0xff]
    %v1254 = vld [vmem:[#allocation2 + $0x11a0] sm:$0xff]
    %v1255 = vld [vmem:[#allocation2 + $0x11a8] sm:$0xff]
    %v1256 = vld [vmem:[#allocation2 + $0x11b0] sm:$0xff]
    %v1257 = vld [vmem:[#allocation2 + $0x11b8] sm:$0xff]
    %v1258 = vld [vmem:[#allocation2 + $0x11c0] sm:$0xff]
    %v1259 = vld [vmem:[#allocation2 + $0x11c8] sm:$0xff]
    %v1260 = vld [vmem:[#allocation2 + $0x11d0] sm:$0xff]
    %v1261 = vld [vmem:[#allocation2 + $0x11d8] sm:$0xff]
    %v1262 = vld [vmem:[#allocation2 + $0x11e0] sm:$0xff]
    %v1263 = vld [vmem:[#allocation2 + $0x11e8] sm:$0xff]
    %v1264 = vld [vmem:[#allocation2 + $0x11f0] sm:$0xff]
    %v1265 = vld [vmem:[#allocation2 + $0x11f8] sm:$0xff]
    %v1266 = vld [vmem:[#allocation2 + $0x1200] sm:$0xff]
    %v1267 = vld [vmem:[#allocation2 + $0x1208] sm:$0xff]
    %v1268 = vld [vmem:[#allocation2 + $0x1210] sm:$0xff]
    %v1269 = vld [vmem:[#allocation2 + $0x1218] sm:$0xff]
    %v1270 = vld [vmem:[#allocation2 + $0x1220] sm:$0xff]
    %v1271 = vld [vmem:[#allocation2 + $0x1228] sm:$0xff]
    %v1272 = vld [vmem:[#allocation2 + $0x1230] sm:$0xff]
    %v1273 = vld [vmem:[#allocation2 + $0x1238] sm:$0xff]
    %v1274 = vld [vmem:[#allocation2 + $0x1240] sm:$0xff]
    %v1275 = vld [vmem:[#allocation2 + $0x1248] sm:$0xff]
    %v1276 = vld [vmem:[#allocation2 + $0x1250] sm:$0xff]
    %v1277 = vld [vmem:[#allocation2 + $0x1258] sm:$0xff]
    %v1278 = vld [vmem:[#allocation2 + $0x1260] sm:$0xff]
    %v1279 = vld [vmem:[#allocation2 + $0x1268] sm:$0xff]
    %v1280 = vld [vmem:[#allocation2 + $0x1270] sm:$0xff]
    %v1281 = vld [vmem:[#allocation2 + $0x1278] sm:$0xff]
    %v1282 = vld [vmem:[#allocation2 + $0x1280] sm:$0xff]
    %v1283 = vld [vmem:[#allocation2 + $0x1288] sm:$0xff]
    %v1284 = vld [vmem:[#allocation2 + $0x1290] sm:$0xff]
    %v1285 = vld [vmem:[#allocation2 + $0x1298] sm:$0xff]
    %v1286 = vld [vmem:[#allocation2 + $0x12a0] sm:$0xff]
    %v1287 = vld [vmem:[#allocation2 + $0x12a8] sm:$0xff]
    %v1288 = vld [vmem:[#allocation2 + $0x12b0] sm:$0xff]
    %v1289 = vld [vmem:[#allocation2 + $0x12b8] sm:$0xff]
    %v1290 = vld [vmem:[#allocation2 + $0x12c0] sm:$0xff]
    %v1291 = vld [vmem:[#allocation2 + $0x12c8] sm:$0xff]
    %v1292 = vld [vmem:[#allocation2 + $0x12d0] sm:$0xff]
    %v1293 = vld [vmem:[#allocation2 + $0x12d8] sm:$0xff]
    %v1294 = vld [vmem:[#allocation2 + $0x12e0] sm:$0xff]
    %v1295 = vld [vmem:[#allocation2 + $0x12e8] sm:$0xff]
    %v1296 = vld [vmem:[#allocation2 + $0x12f0] sm:$0xff]
    %v1297 = vld [vmem:[#allocation2 + $0x12f8] sm:$0xff]
    %v1298 = vld [vmem:[#allocation2 + $0x1300] sm:$0xff]
    %v1299 = vld [vmem:[#allocation2 + $0x1308] sm:$0xff]
    %v1300 = vld [vmem:[#allocation2 + $0x1310] sm:$0xff]
    %v1301 = vld [vmem:[#allocation2 + $0x1318] sm:$0xff]
    %v1302 = vld [vmem:[#allocation2 + $0x1320] sm:$0xff]
    %v1303 = vld [vmem:[#allocation2 + $0x1328] sm:$0xff]
    %v1304 = vld [vmem:[#allocation2 + $0x1330] sm:$0xff]
    %v1305 = vld [vmem:[#allocation2 + $0x1338] sm:$0xff]
    %v1306 = vld [vmem:[#allocation2 + $0x1340] sm:$0xff]
    %v1307 = vld [vmem:[#allocation2 + $0x1348] sm:$0xff]
    %v1308 = vld [vmem:[#allocation2 + $0x1350] sm:$0xff]
    %v1309 = vld [vmem:[#allocation2 + $0x1358] sm:$0xff]
    %v1310 = vld [vmem:[#allocation2 + $0x1360] sm:$0xff]
    %v1311 = vld [vmem:[#allocation2 + $0x1368] sm:$0xff]
    %v1312 = vld [vmem:[#allocation2 + $0x1370] sm:$0xff]
    %v1313 = vld [vmem:[#allocation2 + $0x1378] sm:$0xff]
    %v1314 = vld [vmem:[#allocation2 + $0x1380] sm:$0xff]
    %v1315 = vld [vmem:[#allocation2 + $0x1388] sm:$0xff]
    %v1316 = vld [vmem:[#allocation2 + $0x1390] sm:$0xff]
    %v1317 = vld [vmem:[#allocation2 + $0x1398] sm:$0xff]
    %v1318 = vld [vmem:[#allocation2 + $0x13a0] sm:$0xff]
    %v1319 = vld [vmem:[#allocation2 + $0x13a8] sm:$0xff]
    %v1320 = vld [vmem:[#allocation2 + $0x13b0] sm:$0xff]
    %v1321 = vld [vmem:[#allocation2 + $0x13b8] sm:$0xff]
    %v1322 = vld [vmem:[#allocation2 + $0x13c0] sm:$0xff]
    %v1323 = vld [vmem:[#allocation2 + $0x13c8] sm:$0xff]
    %v1324 = vld [vmem:[#allocation2 + $0x13d0] sm:$0xff]
    %v1325 = vld [vmem:[#allocation2 + $0x13d8] sm:$0xff]
    %v1326 = vld [vmem:[#allocation2 + $0x13e0] sm:$0xff]
    %v1327 = vld [vmem:[#allocation2 + $0x13e8] sm:$0xff]
    %v1328 = vld [vmem:[#allocation2 + $0x13f0] sm:$0xff]
    %v1329 = vld [vmem:[#allocation2 + $0x13f8] sm:$0xff]
    %v1330 = vld [vmem:[#allocation2 + $0x1400] sm:$0xff]
    %v1331 = vld [vmem:[#allocation2 + $0x1408] sm:$0xff]
    %v1332 = vld [vmem:[#allocation2 + $0x1410] sm:$0xff]
    %v1333 = vld [vmem:[#allocation2 + $0x1418] sm:$0xff]
    %v1334 = vld [vmem:[#allocation2 + $0x1420] sm:$0xff]
    %v1335 = vld [vmem:[#allocation2 + $0x1428] sm:$0xff]
    %v1336 = vld [vmem:[#allocation2 + $0x1430] sm:$0xff]
    %v1337 = vld [vmem:[#allocation2 + $0x1438] sm:$0xff]
    %v1338 = vld [vmem:[#allocation2 + $0x1440] sm:$0xff]
    %v1339 = vld [vmem:[#allocation2 + $0x1448] sm:$0xff]
    %v1340 = vld [vmem:[#allocation2 + $0x1450] sm:$0xff]
    %v1341 = vld [vmem:[#allocation2 + $0x1458] sm:$0xff]
    %v1342 = vld [vmem:[#allocation2 + $0x1460] sm:$0xff]
    %v1343 = vld [vmem:[#allocation2 + $0x1468] sm:$0xff]
    %v1344 = vld [vmem:[#allocation2 + $0x1470] sm:$0xff]
    %v1345 = vld [vmem:[#allocation2 + $0x1478] sm:$0xff]
    %v1346 = vld [vmem:[#allocation2 + $0x1480] sm:$0xff]
    %v1347 = vld [vmem:[#allocation2 + $0x1488] sm:$0xff]
    %v1348 = vld [vmem:[#allocation2 + $0x1490] sm:$0xff]
    %v1349 = vld [vmem:[#allocation2 + $0x1498] sm:$0xff]
    %v1350 = vld [vmem:[#allocation2 + $0x14a0] sm:$0xff]
    %v1351 = vld [vmem:[#allocation2 + $0x14a8] sm:$0xff]
    %v1352 = vld [vmem:[#allocation2 + $0x14b0] sm:$0xff]
    %v1353 = vld [vmem:[#allocation2 + $0x14b8] sm:$0xff]
    %v1354 = vld [vmem:[#allocation2 + $0x14c0] sm:$0xff]
    %v1355 = vld [vmem:[#allocation2 + $0x14c8] sm:$0xff]
    %v1356 = vld [vmem:[#allocation2 + $0x14d0] sm:$0xff]
    %v1357 = vld [vmem:[#allocation2 + $0x14d8] sm:$0xff]
    %v1358 = vld [vmem:[#allocation2 + $0x14e0] sm:$0xff]
    %v1359 = vld [vmem:[#allocation2 + $0x14e8] sm:$0xff]
    %v1360 = vld [vmem:[#allocation2 + $0x14f0] sm:$0xff]
    %v1361 = vld [vmem:[#allocation2 + $0x14f8] sm:$0xff]
    %v1362 = vld [vmem:[#allocation2 + $0x1500] sm:$0xff]
    %v1363 = vld [vmem:[#allocation2 + $0x1508] sm:$0xff]
    %v1364 = vld [vmem:[#allocation2 + $0x1510] sm:$0xff]
    %v1365 = vld [vmem:[#allocation2 + $0x1518] sm:$0xff]
    %v1366 = vld [vmem:[#allocation2 + $0x1520] sm:$0xff]
    %v1367 = vld [vmem:[#allocation2 + $0x1528] sm:$0xff]
    %v1368 = vld [vmem:[#allocation2 + $0x1530] sm:$0xff]
    %v1369 = vld [vmem:[#allocation2 + $0x1538] sm:$0xff]
    %v1370 = vld [vmem:[#allocation2 + $0x1540] sm:$0xff]
    %v1371 = vld [vmem:[#allocation2 + $0x1548] sm:$0xff]
    %v1372 = vld [vmem:[#allocation2 + $0x1550] sm:$0xff]
    %v1373 = vld [vmem:[#allocation2 + $0x1558] sm:$0xff]
    %v1374 = vld [vmem:[#allocation2 + $0x1560] sm:$0xff]
    %v1375 = vld [vmem:[#allocation2 + $0x1568] sm:$0xff]
    %v1376 = vld [vmem:[#allocation2 + $0x1570] sm:$0xff]
    %v1377 = vld [vmem:[#allocation2 + $0x1578] sm:$0xff]
    %v1378 = vld [vmem:[#allocation2 + $0x1580] sm:$0xff]
    %v1379 = vld [vmem:[#allocation2 + $0x1588] sm:$0xff]
    %v1380 = vld [vmem:[#allocation2 + $0x1590] sm:$0xff]
    %v1381 = vld [vmem:[#allocation2 + $0x1598] sm:$0xff]
    %v1382 = vld [vmem:[#allocation2 + $0x15a0] sm:$0xff]
    %v1383 = vld [vmem:[#allocation2 + $0x15a8] sm:$0xff]
    %v1384 = vld [vmem:[#allocation2 + $0x15b0] sm:$0xff]
    %v1385 = vld [vmem:[#allocation2 + $0x15b8] sm:$0xff]
    %v1386 = vld [vmem:[#allocation2 + $0x15c0] sm:$0xff]
    %v1387 = vld [vmem:[#allocation2 + $0x15c8] sm:$0xff]
    %v1388 = vld [vmem:[#allocation2 + $0x15d0] sm:$0xff]
    %v1389 = vld [vmem:[#allocation2 + $0x15d8] sm:$0xff]
    %v1390 = vld [vmem:[#allocation2 + $0x15e0] sm:$0xff]
    %v1391 = vld [vmem:[#allocation2 + $0x15e8] sm:$0xff]
    %v1392 = vld [vmem:[#allocation2 + $0x15f0] sm:$0xff]
    %v1393 = vld [vmem:[#allocation2 + $0x15f8] sm:$0xff]
    %v1394 = vld [vmem:[#allocation2 + $0x1600] sm:$0xff]
    %v1395 = vld [vmem:[#allocation2 + $0x1608] sm:$0xff]
    %v1396 = vld [vmem:[#allocation2 + $0x1610] sm:$0xff]
    %v1397 = vld [vmem:[#allocation2 + $0x1618] sm:$0xff]
    %v1398 = vld [vmem:[#allocation2 + $0x1620] sm:$0xff]
    %v1399 = vld [vmem:[#allocation2 + $0x1628] sm:$0xff]
    %v1400 = vld [vmem:[#allocation2 + $0x1630] sm:$0xff]
    %v1401 = vld [vmem:[#allocation2 + $0x1638] sm:$0xff]
    %v1402 = vld [vmem:[#allocation2 + $0x1640] sm:$0xff]
    %v1403 = vld [vmem:[#allocation2 + $0x1648] sm:$0xff]
    %v1404 = vld [vmem:[#allocation2 + $0x1650] sm:$0xff]
    %v1405 = vld [vmem:[#allocation2 + $0x1658] sm:$0xff]
    %v1406 = vld [vmem:[#allocation2 + $0x1660] sm:$0xff]
    %v1407 = vld [vmem:[#allocation2 + $0x1668] sm:$0xff]
    %v1408 = vld [vmem:[#allocation2 + $0x1670] sm:$0xff]
    %v1409 = vld [vmem:[#allocation2 + $0x1678] sm:$0xff]
    %v1410 = vld [vmem:[#allocation2 + $0x1680] sm:$0xff]
    %v1411 = vld [vmem:[#allocation2 + $0x1688] sm:$0xff]
    %v1412 = vld [vmem:[#allocation2 + $0x1690] sm:$0xff]
    %v1413 = vld [vmem:[#allocation2 + $0x1698] sm:$0xff]
    %v1414 = vld [vmem:[#allocation2 + $0x16a0] sm:$0xff]
    %v1415 = vld [vmem:[#allocation2 + $0x16a8] sm:$0xff]
    %v1416 = vld [vmem:[#allocation2 + $0x16b0] sm:$0xff]
    %v1417 = vld [vmem:[#allocation2 + $0x16b8] sm:$0xff]
    %v1418 = vld [vmem:[#allocation2 + $0x16c0] sm:$0xff]
    %v1419 = vld [vmem:[#allocation2 + $0x16c8] sm:$0xff]
    %v1420 = vld [vmem:[#allocation2 + $0x16d0] sm:$0xff]
    %v1421 = vld [vmem:[#allocation2 + $0x16d8] sm:$0xff]
    %v1422 = vld [vmem:[#allocation2 + $0x16e0] sm:$0xff]
    %v1423 = vld [vmem:[#allocation2 + $0x16e8] sm:$0xff]
    %v1424 = vld [vmem:[#allocation2 + $0x16f0] sm:$0xff]
    %v1425 = vld [vmem:[#allocation2 + $0x16f8] sm:$0xff]
    %v1426 = vld [vmem:[#allocation2 + $0x1700] sm:$0xff]
    %v1427 = vld [vmem:[#allocation2 + $0x1708] sm:$0xff]
    %v1428 = vld [vmem:[#allocation2 + $0x1710] sm:$0xff]
    %v1429 = vld [vmem:[#allocation2 + $0x1718] sm:$0xff]
    %v1430 = vld [vmem:[#allocation2 + $0x1720] sm:$0xff]
    %v1431 = vld [vmem:[#allocation2 + $0x1728] sm:$0xff]
    %v1432 = vld [vmem:[#allocation2 + $0x1730] sm:$0xff]
    %v1433 = vld [vmem:[#allocation2 + $0x1738] sm:$0xff]
    %v1434 = vld [vmem:[#allocation2 + $0x1740] sm:$0xff]
    %v1435 = vld [vmem:[#allocation2 + $0x1748] sm:$0xff]
    %v1436 = vld [vmem:[#allocation2 + $0x1750] sm:$0xff]
    %v1437 = vld [vmem:[#allocation2 + $0x1758] sm:$0xff]
    %v1438 = vld [vmem:[#allocation2 + $0x1760] sm:$0xff]
    %v1439 = vld [vmem:[#allocation2 + $0x1768] sm:$0xff]
    %v1440 = vld [vmem:[#allocation2 + $0x1770] sm:$0xff]
    %v1441 = vld [vmem:[#allocation2 + $0x1778] sm:$0xff]
    %v1442 = vld [vmem:[#allocation2 + $0x1780] sm:$0xff]
    %v1443 = vld [vmem:[#allocation2 + $0x1788] sm:$0xff]
    %v1444 = vld [vmem:[#allocation2 + $0x1790] sm:$0xff]
    %v1445 = vld [vmem:[#allocation2 + $0x1798] sm:$0xff]
    %v1446 = vld [vmem:[#allocation2 + $0x17a0] sm:$0xff]
    %v1447 = vld [vmem:[#allocation2 + $0x17a8] sm:$0xff]
    %v1448 = vld [vmem:[#allocation2 + $0x17b0] sm:$0xff]
    %v1449 = vld [vmem:[#allocation2 + $0x17b8] sm:$0xff]
    %v1450 = vld [vmem:[#allocation2 + $0x17c0] sm:$0xff]
    %v1451 = vld [vmem:[#allocation2 + $0x17c8] sm:$0xff]
    %v1452 = vld [vmem:[#allocation2 + $0x17d0] sm:$0xff]
    %v1453 = vld [vmem:[#allocation2 + $0x17d8] sm:$0xff]
    %v1454 = vld [vmem:[#allocation2 + $0x17e0] sm:$0xff]
    %v1455 = vld [vmem:[#allocation2 + $0x17e8] sm:$0xff]
    %v1456 = vld [vmem:[#allocation2 + $0x17f0] sm:$0xff]
    %v1457 = vld [vmem:[#allocation2 + $0x17f8] sm:$0xff]
    %v1458 = vld [vmem:[#allocation4] sm:$0xf]
    %v1460 = vperm.slane %v1458, 0
    %v1461 = vperm.slane %v1458, 1
    %v1462 = vperm.slane %v1458, 2
    %v1463 = vperm.slane %v1458, 3
    %v2236 = vunpack.c.l.b16 %v690
    %v2237 = vunpack.c.h.b16 %v690
    %v2238 = vunpack.c.l.b16 %v691
    %v2239 = vunpack.c.h.b16 %v691
    %v2240 = vunpack.c.l.b16 %v692
    %v2241 = vunpack.c.h.b16 %v692
    %v2242 = vunpack.c.l.b16 %v693
    %v2243 = vunpack.c.h.b16 %v693
    %v2244 = vunpack.c.l.b16 %v694
    %v2245 = vunpack.c.h.b16 %v694
    %v2246 = vunpack.c.l.b16 %v695
    %v2247 = vunpack.c.h.b16 %v695
    %v2248 = vunpack.c.l.b16 %v696
    %v2249 = vunpack.c.h.b16 %v696
    %v2250 = vunpack.c.l.b16 %v697
    %v2251 = vunpack.c.h.b16 %v697
    %v2252 = vunpack.c.l.b16 %v698
    %v2253 = vunpack.c.h.b16 %v698
    %v2254 = vunpack.c.l.b16 %v699
    %v2255 = vunpack.c.h.b16 %v699
    %v2256 = vunpack.c.l.b16 %v700
    %v2257 = vunpack.c.h.b16 %v700
    %v2258 = vunpack.c.l.b16 %v701
    %v2259 = vunpack.c.h.b16 %v701
    %v2260 = vunpack.c.l.b16 %v702
    %v2261 = vunpack.c.h.b16 %v702
    %v2262 = vunpack.c.l.b16 %v703
    %v2263 = vunpack.c.h.b16 %v703
    %v2264 = vunpack.c.l.b16 %v704
    %v2265 = vunpack.c.h.b16 %v704
    %v2266 = vunpack.c.l.b16 %v705
    %v2267 = vunpack.c.h.b16 %v705
    %v2268 = vunpack.c.l.b16 %v706
    %v2269 = vunpack.c.h.b16 %v706
    %v2270 = vunpack.c.l.b16 %v707
    %v2271 = vunpack.c.h.b16 %v707
    %v2272 = vunpack.c.l.b16 %v708
    %v2273 = vunpack.c.h.b16 %v708
    %v2274 = vunpack.c.l.b16 %v709
    %v2275 = vunpack.c.h.b16 %v709
    %v2276 = vunpack.c.l.b16 %v710
    %v2277 = vunpack.c.h.b16 %v710
    %v2278 = vunpack.c.l.b16 %v711
    %v2279 = vunpack.c.h.b16 %v711
    %v2280 = vunpack.c.l.b16 %v712
    %v2281 = vunpack.c.h.b16 %v712
    %v2282 = vunpack.c.l.b16 %v713
    %v2283 = vunpack.c.h.b16 %v713
    %v2284 = vunpack.c.l.b16 %v714
    %v2285 = vunpack.c.h.b16 %v714
    %v2286 = vunpack.c.l.b16 %v715
    %v2287 = vunpack.c.h.b16 %v715
    %v2288 = vunpack.c.l.b16 %v716
    %v2289 = vunpack.c.h.b16 %v716
    %v2290 = vunpack.c.l.b16 %v717
    %v2291 = vunpack.c.h.b16 %v717
    %v2292 = vunpack.c.l.b16 %v718
    %v2293 = vunpack.c.h.b16 %v718
    %v2294 = vunpack.c.l.b16 %v719
    %v2295 = vunpack.c.h.b16 %v719
    %v2296 = vunpack.c.l.b16 %v720
    %v2297 = vunpack.c.h.b16 %v720
    %v2298 = vunpack.c.l.b16 %v721
    %v2299 = vunpack.c.h.b16 %v721
    %v2300 = vunpack.c.l.b16 %v722
    %v2301 = vunpack.c.h.b16 %v722
    %v2302 = vunpack.c.l.b16 %v723
    %v2303 = vunpack.c.h.b16 %v723
    %v2304 = vunpack.c.l.b16 %v724
    %v2305 = vunpack.c.h.b16 %v724
    %v2306 = vunpack.c.l.b16 %v725
    %v2307 = vunpack.c.h.b16 %v725
    %v2308 = vunpack.c.l.b16 %v726
    %v2309 = vunpack.c.h.b16 %v726
    %v2310 = vunpack.c.l.b16 %v727
    %v2311 = vunpack.c.h.b16 %v727
    %v2312 = vunpack.c.l.b16 %v728
    %v2313 = vunpack.c.h.b16 %v728
    %v2314 = vunpack.c.l.b16 %v729
    %v2315 = vunpack.c.h.b16 %v729
    %v2316 = vunpack.c.l.b16 %v730
    %v2317 = vunpack.c.h.b16 %v730
    %v2318 = vunpack.c.l.b16 %v731
    %v2319 = vunpack.c.h.b16 %v731
    %v2320 = vunpack.c.l.b16 %v732
    %v2321 = vunpack.c.h.b16 %v732
    %v2322 = vunpack.c.l.b16 %v733
    %v2323 = vunpack.c.h.b16 %v733
    %v2324 = vunpack.c.l.b16 %v734
    %v2325 = vunpack.c.h.b16 %v734
    %v2326 = vunpack.c.l.b16 %v735
    %v2327 = vunpack.c.h.b16 %v735
    %v2328 = vunpack.c.l.b16 %v736
    %v2329 = vunpack.c.h.b16 %v736
    %v2330 = vunpack.c.l.b16 %v737
    %v2331 = vunpack.c.h.b16 %v737
    %v2332 = vunpack.c.l.b16 %v738
    %v2333 = vunpack.c.h.b16 %v738
    %v2334 = vunpack.c.l.b16 %v739
    %v2335 = vunpack.c.h.b16 %v739
    %v2336 = vunpack.c.l.b16 %v740
    %v2337 = vunpack.c.h.b16 %v740
    %v2338 = vunpack.c.l.b16 %v741
    %v2339 = vunpack.c.h.b16 %v741
    %v2340 = vunpack.c.l.b16 %v742
    %v2341 = vunpack.c.h.b16 %v742
    %v2342 = vunpack.c.l.b16 %v743
    %v2343 = vunpack.c.h.b16 %v743
    %v2344 = vunpack.c.l.b16 %v744
    %v2345 = vunpack.c.h.b16 %v744
    %v2346 = vunpack.c.l.b16 %v745
    %v2347 = vunpack.c.h.b16 %v745
    %v2348 = vunpack.c.l.b16 %v746
    %v2349 = vunpack.c.h.b16 %v746
    %v2350 = vunpack.c.l.b16 %v747
    %v2351 = vunpack.c.h.b16 %v747
    %v2352 = vunpack.c.l.b16 %v748
    %v2353 = vunpack.c.h.b16 %v748
    %v2354 = vunpack.c.l.b16 %v749
    %v2355 = vunpack.c.h.b16 %v749
    %v2356 = vunpack.c.l.b16 %v750
    %v2357 = vunpack.c.h.b16 %v750
    %v2358 = vunpack.c.l.b16 %v751
    %v2359 = vunpack.c.h.b16 %v751
    %v2360 = vunpack.c.l.b16 %v752
    %v2361 = vunpack.c.h.b16 %v752
    %v2362 = vunpack.c.l.b16 %v753
    %v2363 = vunpack.c.h.b16 %v753
    %v2364 = vunpack.c.l.b16 %v754
    %v2365 = vunpack.c.h.b16 %v754
    %v2366 = vunpack.c.l.b16 %v755
    %v2367 = vunpack.c.h.b16 %v755
    %v2368 = vunpack.c.l.b16 %v756
    %v2369 = vunpack.c.h.b16 %v756
    %v2370 = vunpack.c.l.b16 %v757
    %v2371 = vunpack.c.h.b16 %v757
    %v2372 = vunpack.c.l.b16 %v758
    %v2373 = vunpack.c.h.b16 %v758
    %v2374 = vunpack.c.l.b16 %v759
    %v2375 = vunpack.c.h.b16 %v759
    %v2376 = vunpack.c.l.b16 %v760
    %v2377 = vunpack.c.h.b16 %v760
    %v2378 = vunpack.c.l.b16 %v761
    %v2379 = vunpack.c.h.b16 %v761
    %v2380 = vunpack.c.l.b16 %v762
    %v2381 = vunpack.c.h.b16 %v762
    %v2382 = vunpack.c.l.b16 %v763
    %v2383 = vunpack.c.h.b16 %v763
    %v2384 = vunpack.c.l.b16 %v764
    %v2385 = vunpack.c.h.b16 %v764
    %v2386 = vunpack.c.l.b16 %v765
    %v2387 = vunpack.c.h.b16 %v765
    %v2388 = vunpack.c.l.b16 %v766
    %v2389 = vunpack.c.h.b16 %v766
    %v2390 = vunpack.c.l.b16 %v767
    %v2391 = vunpack.c.h.b16 %v767
    %v2392 = vunpack.c.l.b16 %v768
    %v2393 = vunpack.c.h.b16 %v768
    %v2394 = vunpack.c.l.b16 %v769
    %v2395 = vunpack.c.h.b16 %v769
    %v2396 = vunpack.c.l.b16 %v770
    %v2397 = vunpack.c.h.b16 %v770
    %v2398 = vunpack.c.l.b16 %v771
    %v2399 = vunpack.c.h.b16 %v771
    %v2400 = vunpack.c.l.b16 %v772
    %v2401 = vunpack.c.h.b16 %v772
    %v2402 = vunpack.c.l.b16 %v773
    %v2403 = vunpack.c.h.b16 %v773
    %v2404 = vunpack.c.l.b16 %v774
    %v2405 = vunpack.c.h.b16 %v774
    %v2406 = vunpack.c.l.b16 %v775
    %v2407 = vunpack.c.h.b16 %v775
    %v2408 = vunpack.c.l.b16 %v776
    %v2409 = vunpack.c.h.b16 %v776
    %v2410 = vunpack.c.l.b16 %v777
    %v2411 = vunpack.c.h.b16 %v777
    %v2412 = vunpack.c.l.b16 %v778
    %v2413 = vunpack.c.h.b16 %v778
    %v2414 = vunpack.c.l.b16 %v779
    %v2415 = vunpack.c.h.b16 %v779
    %v2416 = vunpack.c.l.b16 %v780
    %v2417 = vunpack.c.h.b16 %v780
    %v2418 = vunpack.c.l.b16 %v781
    %v2419 = vunpack.c.h.b16 %v781
    %v2420 = vunpack.c.l.b16 %v782
    %v2421 = vunpack.c.h.b16 %v782
    %v2422 = vunpack.c.l.b16 %v783
    %v2423 = vunpack.c.h.b16 %v783
    %v2424 = vunpack.c.l.b16 %v784
    %v2425 = vunpack.c.h.b16 %v784
    %v2426 = vunpack.c.l.b16 %v785
    %v2427 = vunpack.c.h.b16 %v785
    %v2428 = vunpack.c.l.b16 %v786
    %v2429 = vunpack.c.h.b16 %v786
    %v2430 = vunpack.c.l.b16 %v787
    %v2431 = vunpack.c.h.b16 %v787
    %v2432 = vunpack.c.l.b16 %v788
    %v2433 = vunpack.c.h.b16 %v788
    %v2434 = vunpack.c.l.b16 %v789
    %v2435 = vunpack.c.h.b16 %v789
    %v2436 = vunpack.c.l.b16 %v790
    %v2437 = vunpack.c.h.b16 %v790
    %v2438 = vunpack.c.l.b16 %v791
    %v2439 = vunpack.c.h.b16 %v791
    %v2440 = vunpack.c.l.b16 %v792
    %v2441 = vunpack.c.h.b16 %v792
    %v2442 = vunpack.c.l.b16 %v793
    %v2443 = vunpack.c.h.b16 %v793
    %v2444 = vunpack.c.l.b16 %v794
    %v2445 = vunpack.c.h.b16 %v794
    %v2446 = vunpack.c.l.b16 %v795
    %v2447 = vunpack.c.h.b16 %v795
    %v2448 = vunpack.c.l.b16 %v796
    %v2449 = vunpack.c.h.b16 %v796
    %v2450 = vunpack.c.l.b16 %v797
    %v2451 = vunpack.c.h.b16 %v797
    %v2452 = vunpack.c.l.b16 %v798
    %v2453 = vunpack.c.h.b16 %v798
    %v2454 = vunpack.c.l.b16 %v799
    %v2455 = vunpack.c.h.b16 %v799
    %v2456 = vunpack.c.l.b16 %v800
    %v2457 = vunpack.c.h.b16 %v800
    %v2458 = vunpack.c.l.b16 %v801
    %v2459 = vunpack.c.h.b16 %v801
    %v2460 = vunpack.c.l.b16 %v802
    %v2461 = vunpack.c.h.b16 %v802
    %v2462 = vunpack.c.l.b16 %v803
    %v2463 = vunpack.c.h.b16 %v803
    %v2464 = vunpack.c.l.b16 %v804
    %v2465 = vunpack.c.h.b16 %v804
    %v2466 = vunpack.c.l.b16 %v805
    %v2467 = vunpack.c.h.b16 %v805
    %v2468 = vunpack.c.l.b16 %v806
    %v2469 = vunpack.c.h.b16 %v806
    %v2470 = vunpack.c.l.b16 %v807
    %v2471 = vunpack.c.h.b16 %v807
    %v2472 = vunpack.c.l.b16 %v808
    %v2473 = vunpack.c.h.b16 %v808
    %v2474 = vunpack.c.l.b16 %v809
    %v2475 = vunpack.c.h.b16 %v809
    %v2476 = vunpack.c.l.b16 %v810
    %v2477 = vunpack.c.h.b16 %v810
    %v2478 = vunpack.c.l.b16 %v811
    %v2479 = vunpack.c.h.b16 %v811
    %v2480 = vunpack.c.l.b16 %v812
    %v2481 = vunpack.c.h.b16 %v812
    %v2482 = vunpack.c.l.b16 %v813
    %v2483 = vunpack.c.h.b16 %v813
    %v2484 = vunpack.c.l.b16 %v814
    %v2485 = vunpack.c.h.b16 %v814
    %v2486 = vunpack.c.l.b16 %v815
    %v2487 = vunpack.c.h.b16 %v815
    %v2488 = vunpack.c.l.b16 %v816
    %v2489 = vunpack.c.h.b16 %v816
    %v2490 = vunpack.c.l.b16 %v817
    %v2491 = vunpack.c.h.b16 %v817
    %v2492 = vunpack.c.l.b16 %v818
    %v2493 = vunpack.c.h.b16 %v818
    %v2494 = vunpack.c.l.b16 %v819
    %v2495 = vunpack.c.h.b16 %v819
    %v2496 = vunpack.c.l.b16 %v820
    %v2497 = vunpack.c.h.b16 %v820
    %v2498 = vunpack.c.l.b16 %v821
    %v2499 = vunpack.c.h.b16 %v821
    %v2500 = vunpack.c.l.b16 %v822
    %v2501 = vunpack.c.h.b16 %v822
    %v2502 = vunpack.c.l.b16 %v823
    %v2503 = vunpack.c.h.b16 %v823
    %v2504 = vunpack.c.l.b16 %v824
    %v2505 = vunpack.c.h.b16 %v824
    %v2506 = vunpack.c.l.b16 %v825
    %v2507 = vunpack.c.h.b16 %v825
    %v2508 = vunpack.c.l.b16 %v826
    %v2509 = vunpack.c.h.b16 %v826
    %v2510 = vunpack.c.l.b16 %v827
    %v2511 = vunpack.c.h.b16 %v827
    %v2512 = vunpack.c.l.b16 %v828
    %v2513 = vunpack.c.h.b16 %v828
    %v2514 = vunpack.c.l.b16 %v829
    %v2515 = vunpack.c.h.b16 %v829
    %v2516 = vunpack.c.l.b16 %v830
    %v2517 = vunpack.c.h.b16 %v830
    %v2518 = vunpack.c.l.b16 %v831
    %v2519 = vunpack.c.h.b16 %v831
    %v2520 = vunpack.c.l.b16 %v832
    %v2521 = vunpack.c.h.b16 %v832
    %v2522 = vunpack.c.l.b16 %v833
    %v2523 = vunpack.c.h.b16 %v833
    %v2524 = vunpack.c.l.b16 %v834
    %v2525 = vunpack.c.h.b16 %v834
    %v2526 = vunpack.c.l.b16 %v835
    %v2527 = vunpack.c.h.b16 %v835
    %v2528 = vunpack.c.l.b16 %v836
    %v2529 = vunpack.c.h.b16 %v836
    %v2530 = vunpack.c.l.b16 %v837
    %v2531 = vunpack.c.h.b16 %v837
    %v2532 = vunpack.c.l.b16 %v838
    %v2533 = vunpack.c.h.b16 %v838
    %v2534 = vunpack.c.l.b16 %v839
    %v2535 = vunpack.c.h.b16 %v839
    %v2536 = vunpack.c.l.b16 %v840
    %v2537 = vunpack.c.h.b16 %v840
    %v2538 = vunpack.c.l.b16 %v841
    %v2539 = vunpack.c.h.b16 %v841
    %v2540 = vunpack.c.l.b16 %v842
    %v2541 = vunpack.c.h.b16 %v842
    %v2542 = vunpack.c.l.b16 %v843
    %v2543 = vunpack.c.h.b16 %v843
    %v2544 = vunpack.c.l.b16 %v844
    %v2545 = vunpack.c.h.b16 %v844
    %v2546 = vunpack.c.l.b16 %v845
    %v2547 = vunpack.c.h.b16 %v845
    %v2548 = vunpack.c.l.b16 %v846
    %v2549 = vunpack.c.h.b16 %v846
    %v2550 = vunpack.c.l.b16 %v847
    %v2551 = vunpack.c.h.b16 %v847
    %v2552 = vunpack.c.l.b16 %v848
    %v2553 = vunpack.c.h.b16 %v848
    %v2554 = vunpack.c.l.b16 %v849
    %v2555 = vunpack.c.h.b16 %v849
    %v2556 = vunpack.c.l.b16 %v850
    %v2557 = vunpack.c.h.b16 %v850
    %v2558 = vunpack.c.l.b16 %v851
    %v2559 = vunpack.c.h.b16 %v851
    %v2560 = vunpack.c.l.b16 %v852
    %v2561 = vunpack.c.h.b16 %v852
    %v2562 = vunpack.c.l.b16 %v853
    %v2563 = vunpack.c.h.b16 %v853
    %v2564 = vunpack.c.l.b16 %v854
    %v2565 = vunpack.c.h.b16 %v854
    %v2566 = vunpack.c.l.b16 %v855
    %v2567 = vunpack.c.h.b16 %v855
    %v2568 = vunpack.c.l.b16 %v856
    %v2569 = vunpack.c.h.b16 %v856
    %v2570 = vunpack.c.l.b16 %v857
    %v2571 = vunpack.c.h.b16 %v857
    %v2572 = vunpack.c.l.b16 %v858
    %v2573 = vunpack.c.h.b16 %v858
    %v2574 = vunpack.c.l.b16 %v859
    %v2575 = vunpack.c.h.b16 %v859
    %v2576 = vunpack.c.l.b16 %v860
    %v2577 = vunpack.c.h.b16 %v860
    %v2578 = vunpack.c.l.b16 %v861
    %v2579 = vunpack.c.h.b16 %v861
    %v2580 = vunpack.c.l.b16 %v862
    %v2581 = vunpack.c.h.b16 %v862
    %v2582 = vunpack.c.l.b16 %v863
    %v2583 = vunpack.c.h.b16 %v863
    %v2584 = vunpack.c.l.b16 %v864
    %v2585 = vunpack.c.h.b16 %v864
    %v2586 = vunpack.c.l.b16 %v865
    %v2587 = vunpack.c.h.b16 %v865
    %v2588 = vunpack.c.l.b16 %v866
    %v2589 = vunpack.c.h.b16 %v866
    %v2590 = vunpack.c.l.b16 %v867
    %v2591 = vunpack.c.h.b16 %v867
    %v2592 = vunpack.c.l.b16 %v868
    %v2593 = vunpack.c.h.b16 %v868
    %v2594 = vunpack.c.l.b16 %v869
    %v2595 = vunpack.c.h.b16 %v869
    %v2596 = vunpack.c.l.b16 %v870
    %v2597 = vunpack.c.h.b16 %v870
    %v2598 = vunpack.c.l.b16 %v871
    %v2599 = vunpack.c.h.b16 %v871
    %v2600 = vunpack.c.l.b16 %v872
    %v2601 = vunpack.c.h.b16 %v872
    %v2602 = vunpack.c.l.b16 %v873
    %v2603 = vunpack.c.h.b16 %v873
    %v2604 = vunpack.c.l.b16 %v874
    %v2605 = vunpack.c.h.b16 %v874
    %v2606 = vunpack.c.l.b16 %v875
    %v2607 = vunpack.c.h.b16 %v875
    %v2608 = vunpack.c.l.b16 %v876
    %v2609 = vunpack.c.h.b16 %v876
    %v2610 = vunpack.c.l.b16 %v877
    %v2611 = vunpack.c.h.b16 %v877
    %v2612 = vunpack.c.l.b16 %v878
    %v2613 = vunpack.c.h.b16 %v878
    %v2614 = vunpack.c.l.b16 %v879
    %v2615 = vunpack.c.h.b16 %v879
    %v2616 = vunpack.c.l.b16 %v880
    %v2617 = vunpack.c.h.b16 %v880
    %v2618 = vunpack.c.l.b16 %v881
    %v2619 = vunpack.c.h.b16 %v881
    %v2620 = vunpack.c.l.b16 %v882
    %v2621 = vunpack.c.h.b16 %v882
    %v2622 = vunpack.c.l.b16 %v883
    %v2623 = vunpack.c.h.b16 %v883
    %v2624 = vunpack.c.l.b16 %v884
    %v2625 = vunpack.c.h.b16 %v884
    %v2626 = vunpack.c.l.b16 %v885
    %v2627 = vunpack.c.h.b16 %v885
    %v2628 = vunpack.c.l.b16 %v886
    %v2629 = vunpack.c.h.b16 %v886
    %v2630 = vunpack.c.l.b16 %v887
    %v2631 = vunpack.c.h.b16 %v887
    %v2632 = vunpack.c.l.b16 %v888
    %v2633 = vunpack.c.h.b16 %v888
    %v2634 = vunpack.c.l.b16 %v889
    %v2635 = vunpack.c.h.b16 %v889
    %v2636 = vunpack.c.l.b16 %v890
    %v2637 = vunpack.c.h.b16 %v890
    %v2638 = vunpack.c.l.b16 %v891
    %v2639 = vunpack.c.h.b16 %v891
    %v2640 = vunpack.c.l.b16 %v892
    %v2641 = vunpack.c.h.b16 %v892
    %v2642 = vunpack.c.l.b16 %v893
    %v2643 = vunpack.c.h.b16 %v893
    %v2644 = vunpack.c.l.b16 %v894
    %v2645 = vunpack.c.h.b16 %v894
    %v2646 = vunpack.c.l.b16 %v895
    %v2647 = vunpack.c.h.b16 %v895
    %v2648 = vunpack.c.l.b16 %v896
    %v2649 = vunpack.c.h.b16 %v896
    %v2650 = vunpack.c.l.b16 %v897
    %v2651 = vunpack.c.h.b16 %v897
    %v2652 = vunpack.c.l.b16 %v898
    %v2653 = vunpack.c.h.b16 %v898
    %v2654 = vunpack.c.l.b16 %v899
    %v2655 = vunpack.c.h.b16 %v899
    %v2656 = vunpack.c.l.b16 %v900
    %v2657 = vunpack.c.h.b16 %v900
    %v2658 = vunpack.c.l.b16 %v901
    %v2659 = vunpack.c.h.b16 %v901
    %v2660 = vunpack.c.l.b16 %v902
    %v2661 = vunpack.c.h.b16 %v902
    %v2662 = vunpack.c.l.b16 %v903
    %v2663 = vunpack.c.h.b16 %v903
    %v2664 = vunpack.c.l.b16 %v904
    %v2665 = vunpack.c.h.b16 %v904
    %v2666 = vunpack.c.l.b16 %v905
    %v2667 = vunpack.c.h.b16 %v905
    %v2668 = vunpack.c.l.b16 %v906
    %v2669 = vunpack.c.h.b16 %v906
    %v2670 = vunpack.c.l.b16 %v907
    %v2671 = vunpack.c.h.b16 %v907
    %v2672 = vunpack.c.l.b16 %v908
    %v2673 = vunpack.c.h.b16 %v908
    %v2674 = vunpack.c.l.b16 %v909
    %v2675 = vunpack.c.h.b16 %v909
    %v2676 = vunpack.c.l.b16 %v910
    %v2677 = vunpack.c.h.b16 %v910
    %v2678 = vunpack.c.l.b16 %v911
    %v2679 = vunpack.c.h.b16 %v911
    %v2680 = vunpack.c.l.b16 %v912
    %v2681 = vunpack.c.h.b16 %v912
    %v2682 = vunpack.c.l.b16 %v913
    %v2683 = vunpack.c.h.b16 %v913
    %v2684 = vunpack.c.l.b16 %v914
    %v2685 = vunpack.c.h.b16 %v914
    %v2686 = vunpack.c.l.b16 %v915
    %v2687 = vunpack.c.h.b16 %v915
    %v2688 = vunpack.c.l.b16 %v916
    %v2689 = vunpack.c.h.b16 %v916
    %v2690 = vunpack.c.l.b16 %v917
    %v2691 = vunpack.c.h.b16 %v917
    %v2692 = vunpack.c.l.b16 %v918
    %v2693 = vunpack.c.h.b16 %v918
    %v2694 = vunpack.c.l.b16 %v919
    %v2695 = vunpack.c.h.b16 %v919
    %v2696 = vunpack.c.l.b16 %v920
    %v2697 = vunpack.c.h.b16 %v920
    %v2698 = vunpack.c.l.b16 %v921
    %v2699 = vunpack.c.h.b16 %v921
    %v2700 = vunpack.c.l.b16 %v922
    %v2701 = vunpack.c.h.b16 %v922
    %v2702 = vunpack.c.l.b16 %v923
    %v2703 = vunpack.c.h.b16 %v923
    %v2704 = vunpack.c.l.b16 %v924
    %v2705 = vunpack.c.h.b16 %v924
    %v2706 = vunpack.c.l.b16 %v925
    %v2707 = vunpack.c.h.b16 %v925
    %v2708 = vunpack.c.l.b16 %v926
    %v2709 = vunpack.c.h.b16 %v926
    %v2710 = vunpack.c.l.b16 %v927
    %v2711 = vunpack.c.h.b16 %v927
    %v2712 = vunpack.c.l.b16 %v928
    %v2713 = vunpack.c.h.b16 %v928
    %v2714 = vunpack.c.l.b16 %v929
    %v2715 = vunpack.c.h.b16 %v929
    %v2716 = vunpack.c.l.b16 %v930
    %v2717 = vunpack.c.h.b16 %v930
    %v2718 = vunpack.c.l.b16 %v931
    %v2719 = vunpack.c.h.b16 %v931
    %v2720 = vunpack.c.l.b16 %v932
    %v2721 = vunpack.c.h.b16 %v932
    %v2722 = vunpack.c.l.b16 %v933
    %v2723 = vunpack.c.h.b16 %v933
    %v2724 = vunpack.c.l.b16 %v934
    %v2725 = vunpack.c.h.b16 %v934
    %v2726 = vunpack.c.l.b16 %v935
    %v2727 = vunpack.c.h.b16 %v935
    %v2728 = vunpack.c.l.b16 %v936
    %v2729 = vunpack.c.h.b16 %v936
    %v2730 = vunpack.c.l.b16 %v937
    %v2731 = vunpack.c.h.b16 %v937
    %v2732 = vunpack.c.l.b16 %v938
    %v2733 = vunpack.c.h.b16 %v938
    %v2734 = vunpack.c.l.b16 %v939
    %v2735 = vunpack.c.h.b16 %v939
    %v2736 = vunpack.c.l.b16 %v940
    %v2737 = vunpack.c.h.b16 %v940
    %v2738 = vunpack.c.l.b16 %v941
    %v2739 = vunpack.c.h.b16 %v941
    %v2740 = vunpack.c.l.b16 %v942
    %v2741 = vunpack.c.h.b16 %v942
    %v2742 = vunpack.c.l.b16 %v943
    %v2743 = vunpack.c.h.b16 %v943
    %v2744 = vunpack.c.l.b16 %v944
    %v2745 = vunpack.c.h.b16 %v944
    %v2746 = vunpack.c.l.b16 %v945
    %v2747 = vunpack.c.h.b16 %v945
    %v2748 = vunpack.c.l.b16 %v946
    %v2749 = vunpack.c.h.b16 %v946
    %v2750 = vunpack.c.l.b16 %v947
    %v2751 = vunpack.c.h.b16 %v947
    %v2752 = vunpack.c.l.b16 %v948
    %v2753 = vunpack.c.h.b16 %v948
    %v2754 = vunpack.c.l.b16 %v949
    %v2755 = vunpack.c.h.b16 %v949
    %v2756 = vunpack.c.l.b16 %v950
    %v2757 = vunpack.c.h.b16 %v950
    %v2758 = vunpack.c.l.b16 %v951
    %v2759 = vunpack.c.h.b16 %v951
    %v2760 = vunpack.c.l.b16 %v952
    %v2761 = vunpack.c.h.b16 %v952
    %v2762 = vunpack.c.l.b16 %v953
    %v2763 = vunpack.c.h.b16 %v953
    %v2764 = vunpack.c.l.b16 %v954
    %v2765 = vunpack.c.h.b16 %v954
    %v2766 = vunpack.c.l.b16 %v955
    %v2767 = vunpack.c.h.b16 %v955
    %v2768 = vunpack.c.l.b16 %v956
    %v2769 = vunpack.c.h.b16 %v956
    %v2770 = vunpack.c.l.b16 %v957
    %v2771 = vunpack.c.h.b16 %v957
    %v2772 = vunpack.c.l.b16 %v958
    %v2773 = vunpack.c.h.b16 %v958
    %v2774 = vunpack.c.l.b16 %v959
    %v2775 = vunpack.c.h.b16 %v959
    %v2776 = vunpack.c.l.b16 %v960
    %v2777 = vunpack.c.h.b16 %v960
    %v2778 = vunpack.c.l.b16 %v961
    %v2779 = vunpack.c.h.b16 %v961
    %v2780 = vunpack.c.l.b16 %v962
    %v2781 = vunpack.c.h.b16 %v962
    %v2782 = vunpack.c.l.b16 %v963
    %v2783 = vunpack.c.h.b16 %v963
    %v2784 = vunpack.c.l.b16 %v964
    %v2785 = vunpack.c.h.b16 %v964
    %v2786 = vunpack.c.l.b16 %v965
    %v2787 = vunpack.c.h.b16 %v965
    %v2788 = vunpack.c.l.b16 %v966
    %v2789 = vunpack.c.h.b16 %v966
    %v2790 = vunpack.c.l.b16 %v967
    %v2791 = vunpack.c.h.b16 %v967
    %v2792 = vunpack.c.l.b16 %v968
    %v2793 = vunpack.c.h.b16 %v968
    %v2794 = vunpack.c.l.b16 %v969
    %v2795 = vunpack.c.h.b16 %v969
    %v2796 = vunpack.c.l.b16 %v970
    %v2797 = vunpack.c.h.b16 %v970
    %v2798 = vunpack.c.l.b16 %v971
    %v2799 = vunpack.c.h.b16 %v971
    %v2800 = vunpack.c.l.b16 %v972
    %v2801 = vunpack.c.h.b16 %v972
    %v2802 = vunpack.c.l.b16 %v973
    %v2803 = vunpack.c.h.b16 %v973
    %v2804 = vunpack.c.l.b16 %v974
    %v2805 = vunpack.c.h.b16 %v974
    %v2806 = vunpack.c.l.b16 %v975
    %v2807 = vunpack.c.h.b16 %v975
    %v2808 = vunpack.c.l.b16 %v976
    %v2809 = vunpack.c.h.b16 %v976
    %v2810 = vunpack.c.l.b16 %v977
    %v2811 = vunpack.c.h.b16 %v977
    %v2812 = vunpack.c.l.b16 %v978
    %v2813 = vunpack.c.h.b16 %v978
    %v2814 = vunpack.c.l.b16 %v979
    %v2815 = vunpack.c.h.b16 %v979
    %v2816 = vunpack.c.l.b16 %v980
    %v2817 = vunpack.c.h.b16 %v980
    %v2818 = vunpack.c.l.b16 %v981
    %v2819 = vunpack.c.h.b16 %v981
    %v2820 = vunpack.c.l.b16 %v982
    %v2821 = vunpack.c.h.b16 %v982
    %v2822 = vunpack.c.l.b16 %v983
    %v2823 = vunpack.c.h.b16 %v983
    %v2824 = vunpack.c.l.b16 %v984
    %v2825 = vunpack.c.h.b16 %v984
    %v2826 = vunpack.c.l.b16 %v985
    %v2827 = vunpack.c.h.b16 %v985
    %v2828 = vunpack.c.l.b16 %v986
    %v2829 = vunpack.c.h.b16 %v986
    %v2830 = vunpack.c.l.b16 %v987
    %v2831 = vunpack.c.h.b16 %v987
    %v2832 = vunpack.c.l.b16 %v988
    %v2833 = vunpack.c.h.b16 %v988
    %v2834 = vunpack.c.l.b16 %v989
    %v2835 = vunpack.c.h.b16 %v989
    %v2836 = vunpack.c.l.b16 %v990
    %v2837 = vunpack.c.h.b16 %v990
    %v2838 = vunpack.c.l.b16 %v991
    %v2839 = vunpack.c.h.b16 %v991
    %v2840 = vunpack.c.l.b16 %v992
    %v2841 = vunpack.c.h.b16 %v992
    %v2842 = vunpack.c.l.b16 %v993
    %v2843 = vunpack.c.h.b16 %v993
    %v2844 = vunpack.c.l.b16 %v994
    %v2845 = vunpack.c.h.b16 %v994
    %v2846 = vunpack.c.l.b16 %v995
    %v2847 = vunpack.c.h.b16 %v995
    %v2848 = vunpack.c.l.b16 %v996
    %v2849 = vunpack.c.h.b16 %v996
    %v2850 = vunpack.c.l.b16 %v997
    %v2851 = vunpack.c.h.b16 %v997
    %v2852 = vunpack.c.l.b16 %v998
    %v2853 = vunpack.c.h.b16 %v998
    %v2854 = vunpack.c.l.b16 %v999
    %v2855 = vunpack.c.h.b16 %v999
    %v2856 = vunpack.c.l.b16 %v1000
    %v2857 = vunpack.c.h.b16 %v1000
    %v2858 = vunpack.c.l.b16 %v1001
    %v2859 = vunpack.c.h.b16 %v1001
    %v2860 = vunpack.c.l.b16 %v1002
    %v2861 = vunpack.c.h.b16 %v1002
    %v2862 = vunpack.c.l.b16 %v1003
    %v2863 = vunpack.c.h.b16 %v1003
    %v2864 = vunpack.c.l.b16 %v1004
    %v2865 = vunpack.c.h.b16 %v1004
    %v2866 = vunpack.c.l.b16 %v1005
    %v2867 = vunpack.c.h.b16 %v1005
    %v2868 = vunpack.c.l.b16 %v1006
    %v2869 = vunpack.c.h.b16 %v1006
    %v2870 = vunpack.c.l.b16 %v1007
    %v2871 = vunpack.c.h.b16 %v1007
    %v2872 = vunpack.c.l.b16 %v1008
    %v2873 = vunpack.c.h.b16 %v1008
    %v2874 = vunpack.c.l.b16 %v1009
    %v2875 = vunpack.c.h.b16 %v1009
    %v2876 = vunpack.c.l.b16 %v1010
    %v2877 = vunpack.c.h.b16 %v1010
    %v2878 = vunpack.c.l.b16 %v1011
    %v2879 = vunpack.c.h.b16 %v1011
    %v2880 = vunpack.c.l.b16 %v1012
    %v2881 = vunpack.c.h.b16 %v1012
    %v2882 = vunpack.c.l.b16 %v1013
    %v2883 = vunpack.c.h.b16 %v1013
    %v2884 = vunpack.c.l.b16 %v1014
    %v2885 = vunpack.c.h.b16 %v1014
    %v2886 = vunpack.c.l.b16 %v1015
    %v2887 = vunpack.c.h.b16 %v1015
    %v2888 = vunpack.c.l.b16 %v1016
    %v2889 = vunpack.c.h.b16 %v1016
    %v2890 = vunpack.c.l.b16 %v1017
    %v2891 = vunpack.c.h.b16 %v1017
    %v2892 = vunpack.c.l.b16 %v1018
    %v2893 = vunpack.c.h.b16 %v1018
    %v2894 = vunpack.c.l.b16 %v1019
    %v2895 = vunpack.c.h.b16 %v1019
    %v2896 = vunpack.c.l.b16 %v1020
    %v2897 = vunpack.c.h.b16 %v1020
    %v2898 = vunpack.c.l.b16 %v1021
    %v2899 = vunpack.c.h.b16 %v1021
    %v2900 = vunpack.c.l.b16 %v1022
    %v2901 = vunpack.c.h.b16 %v1022
    %v2902 = vunpack.c.l.b16 %v1023
    %v2903 = vunpack.c.h.b16 %v1023
    %v2904 = vunpack.c.l.b16 %v1024
    %v2905 = vunpack.c.h.b16 %v1024
    %v2906 = vunpack.c.l.b16 %v1025
    %v2907 = vunpack.c.h.b16 %v1025
    %v2908 = vunpack.c.l.b16 %v1026
    %v2909 = vunpack.c.h.b16 %v1026
    %v2910 = vunpack.c.l.b16 %v1027
    %v2911 = vunpack.c.h.b16 %v1027
    %v2912 = vunpack.c.l.b16 %v1028
    %v2913 = vunpack.c.h.b16 %v1028
    %v2914 = vunpack.c.l.b16 %v1029
    %v2915 = vunpack.c.h.b16 %v1029
    %v2916 = vunpack.c.l.b16 %v1030
    %v2917 = vunpack.c.h.b16 %v1030
    %v2918 = vunpack.c.l.b16 %v1031
    %v2919 = vunpack.c.h.b16 %v1031
    %v2920 = vunpack.c.l.b16 %v1032
    %v2921 = vunpack.c.h.b16 %v1032
    %v2922 = vunpack.c.l.b16 %v1033
    %v2923 = vunpack.c.h.b16 %v1033
    %v2924 = vunpack.c.l.b16 %v1034
    %v2925 = vunpack.c.h.b16 %v1034
    %v2926 = vunpack.c.l.b16 %v1035
    %v2927 = vunpack.c.h.b16 %v1035
    %v2928 = vunpack.c.l.b16 %v1036
    %v2929 = vunpack.c.h.b16 %v1036
    %v2930 = vunpack.c.l.b16 %v1037
    %v2931 = vunpack.c.h.b16 %v1037
    %v2932 = vunpack.c.l.b16 %v1038
    %v2933 = vunpack.c.h.b16 %v1038
    %v2934 = vunpack.c.l.b16 %v1039
    %v2935 = vunpack.c.h.b16 %v1039
    %v2936 = vunpack.c.l.b16 %v1040
    %v2937 = vunpack.c.h.b16 %v1040
    %v2938 = vunpack.c.l.b16 %v1041
    %v2939 = vunpack.c.h.b16 %v1041
    %v2940 = vunpack.c.l.b16 %v1042
    %v2941 = vunpack.c.h.b16 %v1042
    %v2942 = vunpack.c.l.b16 %v1043
    %v2943 = vunpack.c.h.b16 %v1043
    %v2944 = vunpack.c.l.b16 %v1044
    %v2945 = vunpack.c.h.b16 %v1044
    %v2946 = vunpack.c.l.b16 %v1045
    %v2947 = vunpack.c.h.b16 %v1045
    %v2948 = vunpack.c.l.b16 %v1046
    %v2949 = vunpack.c.h.b16 %v1046
    %v2950 = vunpack.c.l.b16 %v1047
    %v2951 = vunpack.c.h.b16 %v1047
    %v2952 = vunpack.c.l.b16 %v1048
    %v2953 = vunpack.c.h.b16 %v1048
    %v2954 = vunpack.c.l.b16 %v1049
    %v2955 = vunpack.c.h.b16 %v1049
    %v2956 = vunpack.c.l.b16 %v1050
    %v2957 = vunpack.c.h.b16 %v1050
    %v2958 = vunpack.c.l.b16 %v1051
    %v2959 = vunpack.c.h.b16 %v1051
    %v2960 = vunpack.c.l.b16 %v1052
    %v2961 = vunpack.c.h.b16 %v1052
    %v2962 = vunpack.c.l.b16 %v1053
    %v2963 = vunpack.c.h.b16 %v1053
    %v2964 = vunpack.c.l.b16 %v1054
    %v2965 = vunpack.c.h.b16 %v1054
    %v2966 = vunpack.c.l.b16 %v1055
    %v2967 = vunpack.c.h.b16 %v1055
    %v2968 = vunpack.c.l.b16 %v1056
    %v2969 = vunpack.c.h.b16 %v1056
    %v2970 = vunpack.c.l.b16 %v1057
    %v2971 = vunpack.c.h.b16 %v1057
    %v2972 = vunpack.c.l.b16 %v1058
    %v2973 = vunpack.c.h.b16 %v1058
    %v2974 = vunpack.c.l.b16 %v1059
    %v2975 = vunpack.c.h.b16 %v1059
    %v2976 = vunpack.c.l.b16 %v1060
    %v2977 = vunpack.c.h.b16 %v1060
    %v2978 = vunpack.c.l.b16 %v1061
    %v2979 = vunpack.c.h.b16 %v1061
    %v2980 = vunpack.c.l.b16 %v1062
    %v2981 = vunpack.c.h.b16 %v1062
    %v2982 = vunpack.c.l.b16 %v1063
    %v2983 = vunpack.c.h.b16 %v1063
    %v2984 = vunpack.c.l.b16 %v1064
    %v2985 = vunpack.c.h.b16 %v1064
    %v2986 = vunpack.c.l.b16 %v1065
    %v2987 = vunpack.c.h.b16 %v1065
    %v2988 = vunpack.c.l.b16 %v1066
    %v2989 = vunpack.c.h.b16 %v1066
    %v2990 = vunpack.c.l.b16 %v1067
    %v2991 = vunpack.c.h.b16 %v1067
    %v2992 = vunpack.c.l.b16 %v1068
    %v2993 = vunpack.c.h.b16 %v1068
    %v2994 = vunpack.c.l.b16 %v1069
    %v2995 = vunpack.c.h.b16 %v1069
    %v2996 = vunpack.c.l.b16 %v1070
    %v2997 = vunpack.c.h.b16 %v1070
    %v2998 = vunpack.c.l.b16 %v1071
    %v2999 = vunpack.c.h.b16 %v1071
    %v3000 = vunpack.c.l.b16 %v1072
    %v3001 = vunpack.c.h.b16 %v1072
    %v3002 = vunpack.c.l.b16 %v1073
    %v3003 = vunpack.c.h.b16 %v1073
    %v3004 = vunpack.c.l.b16 %v1074
    %v3005 = vunpack.c.h.b16 %v1074
    %v3006 = vunpack.c.l.b16 %v1075
    %v3007 = vunpack.c.h.b16 %v1075
    %v3008 = vunpack.c.l.b16 %v1076
    %v3009 = vunpack.c.h.b16 %v1076
    %v3010 = vunpack.c.l.b16 %v1077
    %v3011 = vunpack.c.h.b16 %v1077
    %v3012 = vunpack.c.l.b16 %v1078
    %v3013 = vunpack.c.h.b16 %v1078
    %v3014 = vunpack.c.l.b16 %v1079
    %v3015 = vunpack.c.h.b16 %v1079
    %v3016 = vunpack.c.l.b16 %v1080
    %v3017 = vunpack.c.h.b16 %v1080
    %v3018 = vunpack.c.l.b16 %v1081
    %v3019 = vunpack.c.h.b16 %v1081
    %v3020 = vunpack.c.l.b16 %v1082
    %v3021 = vunpack.c.h.b16 %v1082
    %v3022 = vunpack.c.l.b16 %v1083
    %v3023 = vunpack.c.h.b16 %v1083
    %v3024 = vunpack.c.l.b16 %v1084
    %v3025 = vunpack.c.h.b16 %v1084
    %v3026 = vunpack.c.l.b16 %v1085
    %v3027 = vunpack.c.h.b16 %v1085
    %v3028 = vunpack.c.l.b16 %v1086
    %v3029 = vunpack.c.h.b16 %v1086
    %v3030 = vunpack.c.l.b16 %v1087
    %v3031 = vunpack.c.h.b16 %v1087
    %v3032 = vunpack.c.l.b16 %v1088
    %v3033 = vunpack.c.h.b16 %v1088
    %v3034 = vunpack.c.l.b16 %v1089
    %v3035 = vunpack.c.h.b16 %v1089
    %v3036 = vunpack.c.l.b16 %v1090
    %v3037 = vunpack.c.h.b16 %v1090
    %v3038 = vunpack.c.l.b16 %v1091
    %v3039 = vunpack.c.h.b16 %v1091
    %v3040 = vunpack.c.l.b16 %v1092
    %v3041 = vunpack.c.h.b16 %v1092
    %v3042 = vunpack.c.l.b16 %v1093
    %v3043 = vunpack.c.h.b16 %v1093
    %v3044 = vunpack.c.l.b16 %v1094
    %v3045 = vunpack.c.h.b16 %v1094
    %v3046 = vunpack.c.l.b16 %v1095
    %v3047 = vunpack.c.h.b16 %v1095
    %v3048 = vunpack.c.l.b16 %v1096
    %v3049 = vunpack.c.h.b16 %v1096
    %v3050 = vunpack.c.l.b16 %v1097
    %v3051 = vunpack.c.h.b16 %v1097
    %v3052 = vunpack.c.l.b16 %v1098
    %v3053 = vunpack.c.h.b16 %v1098
    %v3054 = vunpack.c.l.b16 %v1099
    %v3055 = vunpack.c.h.b16 %v1099
    %v3056 = vunpack.c.l.b16 %v1100
    %v3057 = vunpack.c.h.b16 %v1100
    %v3058 = vunpack.c.l.b16 %v1101
    %v3059 = vunpack.c.h.b16 %v1101
    %v3060 = vunpack.c.l.b16 %v1102
    %v3061 = vunpack.c.h.b16 %v1102
    %v3062 = vunpack.c.l.b16 %v1103
    %v3063 = vunpack.c.h.b16 %v1103
    %v3064 = vunpack.c.l.b16 %v1104
    %v3065 = vunpack.c.h.b16 %v1104
    %v3066 = vunpack.c.l.b16 %v1105
    %v3067 = vunpack.c.h.b16 %v1105
    %v3068 = vunpack.c.l.b16 %v1106
    %v3069 = vunpack.c.h.b16 %v1106
    %v3070 = vunpack.c.l.b16 %v1107
    %v3071 = vunpack.c.h.b16 %v1107
    %v3072 = vunpack.c.l.b16 %v1108
    %v3073 = vunpack.c.h.b16 %v1108
    %v3074 = vunpack.c.l.b16 %v1109
    %v3075 = vunpack.c.h.b16 %v1109
    %v3076 = vunpack.c.l.b16 %v1110
    %v3077 = vunpack.c.h.b16 %v1110
    %v3078 = vunpack.c.l.b16 %v1111
    %v3079 = vunpack.c.h.b16 %v1111
    %v3080 = vunpack.c.l.b16 %v1112
    %v3081 = vunpack.c.h.b16 %v1112
    %v3082 = vunpack.c.l.b16 %v1113
    %v3083 = vunpack.c.h.b16 %v1113
    %v3084 = vunpack.c.l.b16 %v1114
    %v3085 = vunpack.c.h.b16 %v1114
    %v3086 = vunpack.c.l.b16 %v1115
    %v3087 = vunpack.c.h.b16 %v1115
    %v3088 = vunpack.c.l.b16 %v1116
    %v3089 = vunpack.c.h.b16 %v1116
    %v3090 = vunpack.c.l.b16 %v1117
    %v3091 = vunpack.c.h.b16 %v1117
    %v3092 = vunpack.c.l.b16 %v1118
    %v3093 = vunpack.c.h.b16 %v1118
    %v3094 = vunpack.c.l.b16 %v1119
    %v3095 = vunpack.c.h.b16 %v1119
    %v3096 = vunpack.c.l.b16 %v1120
    %v3097 = vunpack.c.h.b16 %v1120
    %v3098 = vunpack.c.l.b16 %v1121
    %v3099 = vunpack.c.h.b16 %v1121
    %v3100 = vunpack.c.l.b16 %v1122
    %v3101 = vunpack.c.h.b16 %v1122
    %v3102 = vunpack.c.l.b16 %v1123
    %v3103 = vunpack.c.h.b16 %v1123
    %v3104 = vunpack.c.l.b16 %v1124
    %v3105 = vunpack.c.h.b16 %v1124
    %v3106 = vunpack.c.l.b16 %v1125
    %v3107 = vunpack.c.h.b16 %v1125
    %v3108 = vunpack.c.l.b16 %v1126
    %v3109 = vunpack.c.h.b16 %v1126
    %v3110 = vunpack.c.l.b16 %v1127
    %v3111 = vunpack.c.h.b16 %v1127
    %v3112 = vunpack.c.l.b16 %v1128
    %v3113 = vunpack.c.h.b16 %v1128
    %v3114 = vunpack.c.l.b16 %v1129
    %v3115 = vunpack.c.h.b16 %v1129
    %v3116 = vunpack.c.l.b16 %v1130
    %v3117 = vunpack.c.h.b16 %v1130
    %v3118 = vunpack.c.l.b16 %v1131
    %v3119 = vunpack.c.h.b16 %v1131
    %v3120 = vunpack.c.l.b16 %v1132
    %v3121 = vunpack.c.h.b16 %v1132
    %v3122 = vunpack.c.l.b16 %v1133
    %v3123 = vunpack.c.h.b16 %v1133
    %v3124 = vunpack.c.l.b16 %v1134
    %v3125 = vunpack.c.h.b16 %v1134
    %v3126 = vunpack.c.l.b16 %v1135
    %v3127 = vunpack.c.h.b16 %v1135
    %v3128 = vunpack.c.l.b16 %v1136
    %v3129 = vunpack.c.h.b16 %v1136
    %v3130 = vunpack.c.l.b16 %v1137
    %v3131 = vunpack.c.h.b16 %v1137
    %v3132 = vunpack.c.l.b16 %v1138
    %v3133 = vunpack.c.h.b16 %v1138
    %v3134 = vunpack.c.l.b16 %v1139
    %v3135 = vunpack.c.h.b16 %v1139
    %v3136 = vunpack.c.l.b16 %v1140
    %v3137 = vunpack.c.h.b16 %v1140
    %v3138 = vunpack.c.l.b16 %v1141
    %v3139 = vunpack.c.h.b16 %v1141
    %v3140 = vunpack.c.l.b16 %v1142
    %v3141 = vunpack.c.h.b16 %v1142
    %v3142 = vunpack.c.l.b16 %v1143
    %v3143 = vunpack.c.h.b16 %v1143
    %v3144 = vunpack.c.l.b16 %v1144
    %v3145 = vunpack.c.h.b16 %v1144
    %v3146 = vunpack.c.l.b16 %v1145
    %v3147 = vunpack.c.h.b16 %v1145
    %v3148 = vunpack.c.l.b16 %v1146
    %v3149 = vunpack.c.h.b16 %v1146
    %v3150 = vunpack.c.l.b16 %v1147
    %v3151 = vunpack.c.h.b16 %v1147
    %v3152 = vunpack.c.l.b16 %v1148
    %v3153 = vunpack.c.h.b16 %v1148
    %v3154 = vunpack.c.l.b16 %v1149
    %v3155 = vunpack.c.h.b16 %v1149
    %v3156 = vunpack.c.l.b16 %v1150
    %v3157 = vunpack.c.h.b16 %v1150
    %v3158 = vunpack.c.l.b16 %v1151
    %v3159 = vunpack.c.h.b16 %v1151
    %v3160 = vunpack.c.l.b16 %v1152
    %v3161 = vunpack.c.h.b16 %v1152
    %v3162 = vunpack.c.l.b16 %v1153
    %v3163 = vunpack.c.h.b16 %v1153
    %v3164 = vunpack.c.l.b16 %v1154
    %v3165 = vunpack.c.h.b16 %v1154
    %v3166 = vunpack.c.l.b16 %v1155
    %v3167 = vunpack.c.h.b16 %v1155
    %v3168 = vunpack.c.l.b16 %v1156
    %v3169 = vunpack.c.h.b16 %v1156
    %v3170 = vunpack.c.l.b16 %v1157
    %v3171 = vunpack.c.h.b16 %v1157
    %v3172 = vunpack.c.l.b16 %v1158
    %v3173 = vunpack.c.h.b16 %v1158
    %v3174 = vunpack.c.l.b16 %v1159
    %v3175 = vunpack.c.h.b16 %v1159
    %v3176 = vunpack.c.l.b16 %v1160
    %v3177 = vunpack.c.h.b16 %v1160
    %v3178 = vunpack.c.l.b16 %v1161
    %v3179 = vunpack.c.h.b16 %v1161
    %v3180 = vunpack.c.l.b16 %v1162
    %v3181 = vunpack.c.h.b16 %v1162
    %v3182 = vunpack.c.l.b16 %v1163
    %v3183 = vunpack.c.h.b16 %v1163
    %v3184 = vunpack.c.l.b16 %v1164
    %v3185 = vunpack.c.h.b16 %v1164
    %v3186 = vunpack.c.l.b16 %v1165
    %v3187 = vunpack.c.h.b16 %v1165
    %v3188 = vunpack.c.l.b16 %v1166
    %v3189 = vunpack.c.h.b16 %v1166
    %v3190 = vunpack.c.l.b16 %v1167
    %v3191 = vunpack.c.h.b16 %v1167
    %v3192 = vunpack.c.l.b16 %v1168
    %v3193 = vunpack.c.h.b16 %v1168
    %v3194 = vunpack.c.l.b16 %v1169
    %v3195 = vunpack.c.h.b16 %v1169
    %v3196 = vunpack.c.l.b16 %v1170
    %v3197 = vunpack.c.h.b16 %v1170
    %v3198 = vunpack.c.l.b16 %v1171
    %v3199 = vunpack.c.h.b16 %v1171
    %v3200 = vunpack.c.l.b16 %v1172
    %v3201 = vunpack.c.h.b16 %v1172
    %v3202 = vunpack.c.l.b16 %v1173
    %v3203 = vunpack.c.h.b16 %v1173
    %v3204 = vunpack.c.l.b16 %v1174
    %v3205 = vunpack.c.h.b16 %v1174
    %v3206 = vunpack.c.l.b16 %v1175
    %v3207 = vunpack.c.h.b16 %v1175
    %v3208 = vunpack.c.l.b16 %v1176
    %v3209 = vunpack.c.h.b16 %v1176
    %v3210 = vunpack.c.l.b16 %v1177
    %v3211 = vunpack.c.h.b16 %v1177
    %v3212 = vunpack.c.l.b16 %v1178
    %v3213 = vunpack.c.h.b16 %v1178
    %v3214 = vunpack.c.l.b16 %v1179
    %v3215 = vunpack.c.h.b16 %v1179
    %v3216 = vunpack.c.l.b16 %v1180
    %v3217 = vunpack.c.h.b16 %v1180
    %v3218 = vunpack.c.l.b16 %v1181
    %v3219 = vunpack.c.h.b16 %v1181
    %v3220 = vunpack.c.l.b16 %v1182
    %v3221 = vunpack.c.h.b16 %v1182
    %v3222 = vunpack.c.l.b16 %v1183
    %v3223 = vunpack.c.h.b16 %v1183
    %v3224 = vunpack.c.l.b16 %v1184
    %v3225 = vunpack.c.h.b16 %v1184
    %v3226 = vunpack.c.l.b16 %v1185
    %v3227 = vunpack.c.h.b16 %v1185
    %v3228 = vunpack.c.l.b16 %v1186
    %v3229 = vunpack.c.h.b16 %v1186
    %v3230 = vunpack.c.l.b16 %v1187
    %v3231 = vunpack.c.h.b16 %v1187
    %v3232 = vunpack.c.l.b16 %v1188
    %v3233 = vunpack.c.h.b16 %v1188
    %v3234 = vunpack.c.l.b16 %v1189
    %v3235 = vunpack.c.h.b16 %v1189
    %v3236 = vunpack.c.l.b16 %v1190
    %v3237 = vunpack.c.h.b16 %v1190
    %v3238 = vunpack.c.l.b16 %v1191
    %v3239 = vunpack.c.h.b16 %v1191
    %v3240 = vunpack.c.l.b16 %v1192
    %v3241 = vunpack.c.h.b16 %v1192
    %v3242 = vunpack.c.l.b16 %v1193
    %v3243 = vunpack.c.h.b16 %v1193
    %v3244 = vunpack.c.l.b16 %v1194
    %v3245 = vunpack.c.h.b16 %v1194
    %v3246 = vunpack.c.l.b16 %v1195
    %v3247 = vunpack.c.h.b16 %v1195
    %v3248 = vunpack.c.l.b16 %v1196
    %v3249 = vunpack.c.h.b16 %v1196
    %v3250 = vunpack.c.l.b16 %v1197
    %v3251 = vunpack.c.h.b16 %v1197
    %v3252 = vunpack.c.l.b16 %v1198
    %v3253 = vunpack.c.h.b16 %v1198
    %v3254 = vunpack.c.l.b16 %v1199
    %v3255 = vunpack.c.h.b16 %v1199
    %v3256 = vunpack.c.l.b16 %v1200
    %v3257 = vunpack.c.h.b16 %v1200
    %v3258 = vunpack.c.l.b16 %v1201
    %v3259 = vunpack.c.h.b16 %v1201
    %v3260 = vunpack.c.l.b16 %v1202
    %v3261 = vunpack.c.h.b16 %v1202
    %v3262 = vunpack.c.l.b16 %v1203
    %v3263 = vunpack.c.h.b16 %v1203
    %v3264 = vunpack.c.l.b16 %v1204
    %v3265 = vunpack.c.h.b16 %v1204
    %v3266 = vunpack.c.l.b16 %v1205
    %v3267 = vunpack.c.h.b16 %v1205
    %v3268 = vunpack.c.l.b16 %v1206
    %v3269 = vunpack.c.h.b16 %v1206
    %v3270 = vunpack.c.l.b16 %v1207
    %v3271 = vunpack.c.h.b16 %v1207
    %v3272 = vunpack.c.l.b16 %v1208
    %v3273 = vunpack.c.h.b16 %v1208
    %v3274 = vunpack.c.l.b16 %v1209
    %v3275 = vunpack.c.h.b16 %v1209
    %v3276 = vunpack.c.l.b16 %v1210
    %v3277 = vunpack.c.h.b16 %v1210
    %v3278 = vunpack.c.l.b16 %v1211
    %v3279 = vunpack.c.h.b16 %v1211
    %v3280 = vunpack.c.l.b16 %v1212
    %v3281 = vunpack.c.h.b16 %v1212
    %v3282 = vunpack.c.l.b16 %v1213
    %v3283 = vunpack.c.h.b16 %v1213
    %v3284 = vunpack.c.l.b16 %v1214
    %v3285 = vunpack.c.h.b16 %v1214
    %v3286 = vunpack.c.l.b16 %v1215
    %v3287 = vunpack.c.h.b16 %v1215
    %v3288 = vunpack.c.l.b16 %v1216
    %v3289 = vunpack.c.h.b16 %v1216
    %v3290 = vunpack.c.l.b16 %v1217
    %v3291 = vunpack.c.h.b16 %v1217
    %v3292 = vunpack.c.l.b16 %v1218
    %v3293 = vunpack.c.h.b16 %v1218
    %v3294 = vunpack.c.l.b16 %v1219
    %v3295 = vunpack.c.h.b16 %v1219
    %v3296 = vunpack.c.l.b16 %v1220
    %v3297 = vunpack.c.h.b16 %v1220
    %v3298 = vunpack.c.l.b16 %v1221
    %v3299 = vunpack.c.h.b16 %v1221
    %v3300 = vunpack.c.l.b16 %v1222
    %v3301 = vunpack.c.h.b16 %v1222
    %v3302 = vunpack.c.l.b16 %v1223
    %v3303 = vunpack.c.h.b16 %v1223
    %v3304 = vunpack.c.l.b16 %v1224
    %v3305 = vunpack.c.h.b16 %v1224
    %v3306 = vunpack.c.l.b16 %v1225
    %v3307 = vunpack.c.h.b16 %v1225
    %v3308 = vunpack.c.l.b16 %v1226
    %v3309 = vunpack.c.h.b16 %v1226
    %v3310 = vunpack.c.l.b16 %v1227
    %v3311 = vunpack.c.h.b16 %v1227
    %v3312 = vunpack.c.l.b16 %v1228
    %v3313 = vunpack.c.h.b16 %v1228
    %v3314 = vunpack.c.l.b16 %v1229
    %v3315 = vunpack.c.h.b16 %v1229
    %v3316 = vunpack.c.l.b16 %v1230
    %v3317 = vunpack.c.h.b16 %v1230
    %v3318 = vunpack.c.l.b16 %v1231
    %v3319 = vunpack.c.h.b16 %v1231
    %v3320 = vunpack.c.l.b16 %v1232
    %v3321 = vunpack.c.h.b16 %v1232
    %v3322 = vunpack.c.l.b16 %v1233
    %v3323 = vunpack.c.h.b16 %v1233
    %v3324 = vunpack.c.l.b16 %v1234
    %v3325 = vunpack.c.h.b16 %v1234
    %v3326 = vunpack.c.l.b16 %v1235
    %v3327 = vunpack.c.h.b16 %v1235
    %v3328 = vunpack.c.l.b16 %v1236
    %v3329 = vunpack.c.h.b16 %v1236
    %v3330 = vunpack.c.l.b16 %v1237
    %v3331 = vunpack.c.h.b16 %v1237
    %v3332 = vunpack.c.l.b16 %v1238
    %v3333 = vunpack.c.h.b16 %v1238
    %v3334 = vunpack.c.l.b16 %v1239
    %v3335 = vunpack.c.h.b16 %v1239
    %v3336 = vunpack.c.l.b16 %v1240
    %v3337 = vunpack.c.h.b16 %v1240
    %v3338 = vunpack.c.l.b16 %v1241
    %v3339 = vunpack.c.h.b16 %v1241
    %v3340 = vunpack.c.l.b16 %v1242
    %v3341 = vunpack.c.h.b16 %v1242
    %v3342 = vunpack.c.l.b16 %v1243
    %v3343 = vunpack.c.h.b16 %v1243
    %v3344 = vunpack.c.l.b16 %v1244
    %v3345 = vunpack.c.h.b16 %v1244
    %v3346 = vunpack.c.l.b16 %v1245
    %v3347 = vunpack.c.h.b16 %v1245
    %v3348 = vunpack.c.l.b16 %v1246
    %v3349 = vunpack.c.h.b16 %v1246
    %v3350 = vunpack.c.l.b16 %v1247
    %v3351 = vunpack.c.h.b16 %v1247
    %v3352 = vunpack.c.l.b16 %v1248
    %v3353 = vunpack.c.h.b16 %v1248
    %v3354 = vunpack.c.l.b16 %v1249
    %v3355 = vunpack.c.h.b16 %v1249
    %v3356 = vunpack.c.l.b16 %v1250
    %v3357 = vunpack.c.h.b16 %v1250
    %v3358 = vunpack.c.l.b16 %v1251
    %v3359 = vunpack.c.h.b16 %v1251
    %v3360 = vunpack.c.l.b16 %v1252
    %v3361 = vunpack.c.h.b16 %v1252
    %v3362 = vunpack.c.l.b16 %v1253
    %v3363 = vunpack.c.h.b16 %v1253
    %v3364 = vunpack.c.l.b16 %v1254
    %v3365 = vunpack.c.h.b16 %v1254
    %v3366 = vunpack.c.l.b16 %v1255
    %v3367 = vunpack.c.h.b16 %v1255
    %v3368 = vunpack.c.l.b16 %v1256
    %v3369 = vunpack.c.h.b16 %v1256
    %v3370 = vunpack.c.l.b16 %v1257
    %v3371 = vunpack.c.h.b16 %v1257
    %v3372 = vunpack.c.l.b16 %v1258
    %v3373 = vunpack.c.h.b16 %v1258
    %v3374 = vunpack.c.l.b16 %v1259
    %v3375 = vunpack.c.h.b16 %v1259
    %v3376 = vunpack.c.l.b16 %v1260
    %v3377 = vunpack.c.h.b16 %v1260
    %v3378 = vunpack.c.l.b16 %v1261
    %v3379 = vunpack.c.h.b16 %v1261
    %v3380 = vunpack.c.l.b16 %v1262
    %v3381 = vunpack.c.h.b16 %v1262
    %v3382 = vunpack.c.l.b16 %v1263
    %v3383 = vunpack.c.h.b16 %v1263
    %v3384 = vunpack.c.l.b16 %v1264
    %v3385 = vunpack.c.h.b16 %v1264
    %v3386 = vunpack.c.l.b16 %v1265
    %v3387 = vunpack.c.h.b16 %v1265
    %v3388 = vunpack.c.l.b16 %v1266
    %v3389 = vunpack.c.h.b16 %v1266
    %v3390 = vunpack.c.l.b16 %v1267
    %v3391 = vunpack.c.h.b16 %v1267
    %v3392 = vunpack.c.l.b16 %v1268
    %v3393 = vunpack.c.h.b16 %v1268
    %v3394 = vunpack.c.l.b16 %v1269
    %v3395 = vunpack.c.h.b16 %v1269
    %v3396 = vunpack.c.l.b16 %v1270
    %v3397 = vunpack.c.h.b16 %v1270
    %v3398 = vunpack.c.l.b16 %v1271
    %v3399 = vunpack.c.h.b16 %v1271
    %v3400 = vunpack.c.l.b16 %v1272
    %v3401 = vunpack.c.h.b16 %v1272
    %v3402 = vunpack.c.l.b16 %v1273
    %v3403 = vunpack.c.h.b16 %v1273
    %v3404 = vunpack.c.l.b16 %v1274
    %v3405 = vunpack.c.h.b16 %v1274
    %v3406 = vunpack.c.l.b16 %v1275
    %v3407 = vunpack.c.h.b16 %v1275
    %v3408 = vunpack.c.l.b16 %v1276
    %v3409 = vunpack.c.h.b16 %v1276
    %v3410 = vunpack.c.l.b16 %v1277
    %v3411 = vunpack.c.h.b16 %v1277
    %v3412 = vunpack.c.l.b16 %v1278
    %v3413 = vunpack.c.h.b16 %v1278
    %v3414 = vunpack.c.l.b16 %v1279
    %v3415 = vunpack.c.h.b16 %v1279
    %v3416 = vunpack.c.l.b16 %v1280
    %v3417 = vunpack.c.h.b16 %v1280
    %v3418 = vunpack.c.l.b16 %v1281
    %v3419 = vunpack.c.h.b16 %v1281
    %v3420 = vunpack.c.l.b16 %v1282
    %v3421 = vunpack.c.h.b16 %v1282
    %v3422 = vunpack.c.l.b16 %v1283
    %v3423 = vunpack.c.h.b16 %v1283
    %v3424 = vunpack.c.l.b16 %v1284
    %v3425 = vunpack.c.h.b16 %v1284
    %v3426 = vunpack.c.l.b16 %v1285
    %v3427 = vunpack.c.h.b16 %v1285
    %v3428 = vunpack.c.l.b16 %v1286
    %v3429 = vunpack.c.h.b16 %v1286
    %v3430 = vunpack.c.l.b16 %v1287
    %v3431 = vunpack.c.h.b16 %v1287
    %v3432 = vunpack.c.l.b16 %v1288
    %v3433 = vunpack.c.h.b16 %v1288
    %v3434 = vunpack.c.l.b16 %v1289
    %v3435 = vunpack.c.h.b16 %v1289
    %v3436 = vunpack.c.l.b16 %v1290
    %v3437 = vunpack.c.h.b16 %v1290
    %v3438 = vunpack.c.l.b16 %v1291
    %v3439 = vunpack.c.h.b16 %v1291
    %v3440 = vunpack.c.l.b16 %v1292
    %v3441 = vunpack.c.h.b16 %v1292
    %v3442 = vunpack.c.l.b16 %v1293
    %v3443 = vunpack.c.h.b16 %v1293
    %v3444 = vunpack.c.l.b16 %v1294
    %v3445 = vunpack.c.h.b16 %v1294
    %v3446 = vunpack.c.l.b16 %v1295
    %v3447 = vunpack.c.h.b16 %v1295
    %v3448 = vunpack.c.l.b16 %v1296
    %v3449 = vunpack.c.h.b16 %v1296
    %v3450 = vunpack.c.l.b16 %v1297
    %v3451 = vunpack.c.h.b16 %v1297
    %v3452 = vunpack.c.l.b16 %v1298
    %v3453 = vunpack.c.h.b16 %v1298
    %v3454 = vunpack.c.l.b16 %v1299
    %v3455 = vunpack.c.h.b16 %v1299
    %v3456 = vunpack.c.l.b16 %v1300
    %v3457 = vunpack.c.h.b16 %v1300
    %v3458 = vunpack.c.l.b16 %v1301
    %v3459 = vunpack.c.h.b16 %v1301
    %v3460 = vunpack.c.l.b16 %v1302
    %v3461 = vunpack.c.h.b16 %v1302
    %v3462 = vunpack.c.l.b16 %v1303
    %v3463 = vunpack.c.h.b16 %v1303
    %v3464 = vunpack.c.l.b16 %v1304
    %v3465 = vunpack.c.h.b16 %v1304
    %v3466 = vunpack.c.l.b16 %v1305
    %v3467 = vunpack.c.h.b16 %v1305
    %v3468 = vunpack.c.l.b16 %v1306
    %v3469 = vunpack.c.h.b16 %v1306
    %v3470 = vunpack.c.l.b16 %v1307
    %v3471 = vunpack.c.h.b16 %v1307
    %v3472 = vunpack.c.l.b16 %v1308
    %v3473 = vunpack.c.h.b16 %v1308
    %v3474 = vunpack.c.l.b16 %v1309
    %v3475 = vunpack.c.h.b16 %v1309
    %v3476 = vunpack.c.l.b16 %v1310
    %v3477 = vunpack.c.h.b16 %v1310
    %v3478 = vunpack.c.l.b16 %v1311
    %v3479 = vunpack.c.h.b16 %v1311
    %v3480 = vunpack.c.l.b16 %v1312
    %v3481 = vunpack.c.h.b16 %v1312
    %v3482 = vunpack.c.l.b16 %v1313
    %v3483 = vunpack.c.h.b16 %v1313
    %v3484 = vunpack.c.l.b16 %v1314
    %v3485 = vunpack.c.h.b16 %v1314
    %v3486 = vunpack.c.l.b16 %v1315
    %v3487 = vunpack.c.h.b16 %v1315
    %v3488 = vunpack.c.l.b16 %v1316
    %v3489 = vunpack.c.h.b16 %v1316
    %v3490 = vunpack.c.l.b16 %v1317
    %v3491 = vunpack.c.h.b16 %v1317
    %v3492 = vunpack.c.l.b16 %v1318
    %v3493 = vunpack.c.h.b16 %v1318
    %v3494 = vunpack.c.l.b16 %v1319
    %v3495 = vunpack.c.h.b16 %v1319
    %v3496 = vunpack.c.l.b16 %v1320
    %v3497 = vunpack.c.h.b16 %v1320
    %v3498 = vunpack.c.l.b16 %v1321
    %v3499 = vunpack.c.h.b16 %v1321
    %v3500 = vunpack.c.l.b16 %v1322
    %v3501 = vunpack.c.h.b16 %v1322
    %v3502 = vunpack.c.l.b16 %v1323
    %v3503 = vunpack.c.h.b16 %v1323
    %v3504 = vunpack.c.l.b16 %v1324
    %v3505 = vunpack.c.h.b16 %v1324
    %v3506 = vunpack.c.l.b16 %v1325
    %v3507 = vunpack.c.h.b16 %v1325
    %v3508 = vunpack.c.l.b16 %v1326
    %v3509 = vunpack.c.h.b16 %v1326
    %v3510 = vunpack.c.l.b16 %v1327
    %v3511 = vunpack.c.h.b16 %v1327
    %v3512 = vunpack.c.l.b16 %v1328
    %v3513 = vunpack.c.h.b16 %v1328
    %v3514 = vunpack.c.l.b16 %v1329
    %v3515 = vunpack.c.h.b16 %v1329
    %v3516 = vunpack.c.l.b16 %v1330
    %v3517 = vunpack.c.h.b16 %v1330
    %v3518 = vunpack.c.l.b16 %v1331
    %v3519 = vunpack.c.h.b16 %v1331
    %v3520 = vunpack.c.l.b16 %v1332
    %v3521 = vunpack.c.h.b16 %v1332
    %v3522 = vunpack.c.l.b16 %v1333
    %v3523 = vunpack.c.h.b16 %v1333
    %v3524 = vunpack.c.l.b16 %v1334
    %v3525 = vunpack.c.h.b16 %v1334
    %v3526 = vunpack.c.l.b16 %v1335
    %v3527 = vunpack.c.h.b16 %v1335
    %v3528 = vunpack.c.l.b16 %v1336
    %v3529 = vunpack.c.h.b16 %v1336
    %v3530 = vunpack.c.l.b16 %v1337
    %v3531 = vunpack.c.h.b16 %v1337
    %v3532 = vunpack.c.l.b16 %v1338
    %v3533 = vunpack.c.h.b16 %v1338
    %v3534 = vunpack.c.l.b16 %v1339
    %v3535 = vunpack.c.h.b16 %v1339
    %v3536 = vunpack.c.l.b16 %v1340
    %v3537 = vunpack.c.h.b16 %v1340
    %v3538 = vunpack.c.l.b16 %v1341
    %v3539 = vunpack.c.h.b16 %v1341
    %v3540 = vunpack.c.l.b16 %v1342
    %v3541 = vunpack.c.h.b16 %v1342
    %v3542 = vunpack.c.l.b16 %v1343
    %v3543 = vunpack.c.h.b16 %v1343
    %v3544 = vunpack.c.l.b16 %v1344
    %v3545 = vunpack.c.h.b16 %v1344
    %v3546 = vunpack.c.l.b16 %v1345
    %v3547 = vunpack.c.h.b16 %v1345
    %v3548 = vunpack.c.l.b16 %v1346
    %v3549 = vunpack.c.h.b16 %v1346
    %v3550 = vunpack.c.l.b16 %v1347
    %v3551 = vunpack.c.h.b16 %v1347
    %v3552 = vunpack.c.l.b16 %v1348
    %v3553 = vunpack.c.h.b16 %v1348
    %v3554 = vunpack.c.l.b16 %v1349
    %v3555 = vunpack.c.h.b16 %v1349
    %v3556 = vunpack.c.l.b16 %v1350
    %v3557 = vunpack.c.h.b16 %v1350
    %v3558 = vunpack.c.l.b16 %v1351
    %v3559 = vunpack.c.h.b16 %v1351
    %v3560 = vunpack.c.l.b16 %v1352
    %v3561 = vunpack.c.h.b16 %v1352
    %v3562 = vunpack.c.l.b16 %v1353
    %v3563 = vunpack.c.h.b16 %v1353
    %v3564 = vunpack.c.l.b16 %v1354
    %v3565 = vunpack.c.h.b16 %v1354
    %v3566 = vunpack.c.l.b16 %v1355
    %v3567 = vunpack.c.h.b16 %v1355
    %v3568 = vunpack.c.l.b16 %v1356
    %v3569 = vunpack.c.h.b16 %v1356
    %v3570 = vunpack.c.l.b16 %v1357
    %v3571 = vunpack.c.h.b16 %v1357
    %v3572 = vunpack.c.l.b16 %v1358
    %v3573 = vunpack.c.h.b16 %v1358
    %v3574 = vunpack.c.l.b16 %v1359
    %v3575 = vunpack.c.h.b16 %v1359
    %v3576 = vunpack.c.l.b16 %v1360
    %v3577 = vunpack.c.h.b16 %v1360
    %v3578 = vunpack.c.l.b16 %v1361
    %v3579 = vunpack.c.h.b16 %v1361
    %v3580 = vunpack.c.l.b16 %v1362
    %v3581 = vunpack.c.h.b16 %v1362
    %v3582 = vunpack.c.l.b16 %v1363
    %v3583 = vunpack.c.h.b16 %v1363
    %v3584 = vunpack.c.l.b16 %v1364
    %v3585 = vunpack.c.h.b16 %v1364
    %v3586 = vunpack.c.l.b16 %v1365
    %v3587 = vunpack.c.h.b16 %v1365
    %v3588 = vunpack.c.l.b16 %v1366
    %v3589 = vunpack.c.h.b16 %v1366
    %v3590 = vunpack.c.l.b16 %v1367
    %v3591 = vunpack.c.h.b16 %v1367
    %v3592 = vunpack.c.l.b16 %v1368
    %v3593 = vunpack.c.h.b16 %v1368
    %v3594 = vunpack.c.l.b16 %v1369
    %v3595 = vunpack.c.h.b16 %v1369
    %v3596 = vunpack.c.l.b16 %v1370
    %v3597 = vunpack.c.h.b16 %v1370
    %v3598 = vunpack.c.l.b16 %v1371
    %v3599 = vunpack.c.h.b16 %v1371
    %v3600 = vunpack.c.l.b16 %v1372
    %v3601 = vunpack.c.h.b16 %v1372
    %v3602 = vunpack.c.l.b16 %v1373
    %v3603 = vunpack.c.h.b16 %v1373
    %v3604 = vunpack.c.l.b16 %v1374
    %v3605 = vunpack.c.h.b16 %v1374
    %v3606 = vunpack.c.l.b16 %v1375
    %v3607 = vunpack.c.h.b16 %v1375
    %v3608 = vunpack.c.l.b16 %v1376
    %v3609 = vunpack.c.h.b16 %v1376
    %v3610 = vunpack.c.l.b16 %v1377
    %v3611 = vunpack.c.h.b16 %v1377
    %v3612 = vunpack.c.l.b16 %v1378
    %v3613 = vunpack.c.h.b16 %v1378
    %v3614 = vunpack.c.l.b16 %v1379
    %v3615 = vunpack.c.h.b16 %v1379
    %v3616 = vunpack.c.l.b16 %v1380
    %v3617 = vunpack.c.h.b16 %v1380
    %v3618 = vunpack.c.l.b16 %v1381
    %v3619 = vunpack.c.h.b16 %v1381
    %v3620 = vunpack.c.l.b16 %v1382
    %v3621 = vunpack.c.h.b16 %v1382
    %v3622 = vunpack.c.l.b16 %v1383
    %v3623 = vunpack.c.h.b16 %v1383
    %v3624 = vunpack.c.l.b16 %v1384
    %v3625 = vunpack.c.h.b16 %v1384
    %v3626 = vunpack.c.l.b16 %v1385
    %v3627 = vunpack.c.h.b16 %v1385
    %v3628 = vunpack.c.l.b16 %v1386
    %v3629 = vunpack.c.h.b16 %v1386
    %v3630 = vunpack.c.l.b16 %v1387
    %v3631 = vunpack.c.h.b16 %v1387
    %v3632 = vunpack.c.l.b16 %v1388
    %v3633 = vunpack.c.h.b16 %v1388
    %v3634 = vunpack.c.l.b16 %v1389
    %v3635 = vunpack.c.h.b16 %v1389
    %v3636 = vunpack.c.l.b16 %v1390
    %v3637 = vunpack.c.h.b16 %v1390
    %v3638 = vunpack.c.l.b16 %v1391
    %v3639 = vunpack.c.h.b16 %v1391
    %v3640 = vunpack.c.l.b16 %v1392
    %v3641 = vunpack.c.h.b16 %v1392
    %v3642 = vunpack.c.l.b16 %v1393
    %v3643 = vunpack.c.h.b16 %v1393
    %v3644 = vunpack.c.l.b16 %v1394
    %v3645 = vunpack.c.h.b16 %v1394
    %v3646 = vunpack.c.l.b16 %v1395
    %v3647 = vunpack.c.h.b16 %v1395
    %v3648 = vunpack.c.l.b16 %v1396
    %v3649 = vunpack.c.h.b16 %v1396
    %v3650 = vunpack.c.l.b16 %v1397
    %v3651 = vunpack.c.h.b16 %v1397
    %v3652 = vunpack.c.l.b16 %v1398
    %v3653 = vunpack.c.h.b16 %v1398
    %v3654 = vunpack.c.l.b16 %v1399
    %v3655 = vunpack.c.h.b16 %v1399
    %v3656 = vunpack.c.l.b16 %v1400
    %v3657 = vunpack.c.h.b16 %v1400
    %v3658 = vunpack.c.l.b16 %v1401
    %v3659 = vunpack.c.h.b16 %v1401
    %v3660 = vunpack.c.l.b16 %v1402
    %v3661 = vunpack.c.h.b16 %v1402
    %v3662 = vunpack.c.l.b16 %v1403
    %v3663 = vunpack.c.h.b16 %v1403
    %v3664 = vunpack.c.l.b16 %v1404
    %v3665 = vunpack.c.h.b16 %v1404
    %v3666 = vunpack.c.l.b16 %v1405
    %v3667 = vunpack.c.h.b16 %v1405
    %v3668 = vunpack.c.l.b16 %v1406
    %v3669 = vunpack.c.h.b16 %v1406
    %v3670 = vunpack.c.l.b16 %v1407
    %v3671 = vunpack.c.h.b16 %v1407
    %v3672 = vunpack.c.l.b16 %v1408
    %v3673 = vunpack.c.h.b16 %v1408
    %v3674 = vunpack.c.l.b16 %v1409
    %v3675 = vunpack.c.h.b16 %v1409
    %v3676 = vunpack.c.l.b16 %v1410
    %v3677 = vunpack.c.h.b16 %v1410
    %v3678 = vunpack.c.l.b16 %v1411
    %v3679 = vunpack.c.h.b16 %v1411
    %v3680 = vunpack.c.l.b16 %v1412
    %v3681 = vunpack.c.h.b16 %v1412
    %v3682 = vunpack.c.l.b16 %v1413
    %v3683 = vunpack.c.h.b16 %v1413
    %v3684 = vunpack.c.l.b16 %v1414
    %v3685 = vunpack.c.h.b16 %v1414
    %v3686 = vunpack.c.l.b16 %v1415
    %v3687 = vunpack.c.h.b16 %v1415
    %v3688 = vunpack.c.l.b16 %v1416
    %v3689 = vunpack.c.h.b16 %v1416
    %v3690 = vunpack.c.l.b16 %v1417
    %v3691 = vunpack.c.h.b16 %v1417
    %v3692 = vunpack.c.l.b16 %v1418
    %v3693 = vunpack.c.h.b16 %v1418
    %v3694 = vunpack.c.l.b16 %v1419
    %v3695 = vunpack.c.h.b16 %v1419
    %v3696 = vunpack.c.l.b16 %v1420
    %v3697 = vunpack.c.h.b16 %v1420
    %v3698 = vunpack.c.l.b16 %v1421
    %v3699 = vunpack.c.h.b16 %v1421
    %v3700 = vunpack.c.l.b16 %v1422
    %v3701 = vunpack.c.h.b16 %v1422
    %v3702 = vunpack.c.l.b16 %v1423
    %v3703 = vunpack.c.h.b16 %v1423
    %v3704 = vunpack.c.l.b16 %v1424
    %v3705 = vunpack.c.h.b16 %v1424
    %v3706 = vunpack.c.l.b16 %v1425
    %v3707 = vunpack.c.h.b16 %v1425
    %v3708 = vunpack.c.l.b16 %v1426
    %v3709 = vunpack.c.h.b16 %v1426
    %v3710 = vunpack.c.l.b16 %v1427
    %v3711 = vunpack.c.h.b16 %v1427
    %v3712 = vunpack.c.l.b16 %v1428
    %v3713 = vunpack.c.h.b16 %v1428
    %v3714 = vunpack.c.l.b16 %v1429
    %v3715 = vunpack.c.h.b16 %v1429
    %v3716 = vunpack.c.l.b16 %v1430
    %v3717 = vunpack.c.h.b16 %v1430
    %v3718 = vunpack.c.l.b16 %v1431
    %v3719 = vunpack.c.h.b16 %v1431
    %v3720 = vunpack.c.l.b16 %v1432
    %v3721 = vunpack.c.h.b16 %v1432
    %v3722 = vunpack.c.l.b16 %v1433
    %v3723 = vunpack.c.h.b16 %v1433
    %v3724 = vunpack.c.l.b16 %v1434
    %v3725 = vunpack.c.h.b16 %v1434
    %v3726 = vunpack.c.l.b16 %v1435
    %v3727 = vunpack.c.h.b16 %v1435
    %v3728 = vunpack.c.l.b16 %v1436
    %v3729 = vunpack.c.h.b16 %v1436
    %v3730 = vunpack.c.l.b16 %v1437
    %v3731 = vunpack.c.h.b16 %v1437
    %v3732 = vunpack.c.l.b16 %v1438
    %v3733 = vunpack.c.h.b16 %v1438
    %v3734 = vunpack.c.l.b16 %v1439
    %v3735 = vunpack.c.h.b16 %v1439
    %v3736 = vunpack.c.l.b16 %v1440
    %v3737 = vunpack.c.h.b16 %v1440
    %v3738 = vunpack.c.l.b16 %v1441
    %v3739 = vunpack.c.h.b16 %v1441
    %v3740 = vunpack.c.l.b16 %v1442
    %v3741 = vunpack.c.h.b16 %v1442
    %v3742 = vunpack.c.l.b16 %v1443
    %v3743 = vunpack.c.h.b16 %v1443
    %v3744 = vunpack.c.l.b16 %v1444
    %v3745 = vunpack.c.h.b16 %v1444
    %v3746 = vunpack.c.l.b16 %v1445
    %v3747 = vunpack.c.h.b16 %v1445
    %v3748 = vunpack.c.l.b16 %v1446
    %v3749 = vunpack.c.h.b16 %v1446
    %v3750 = vunpack.c.l.b16 %v1447
    %v3751 = vunpack.c.h.b16 %v1447
    %v3752 = vunpack.c.l.b16 %v1448
    %v3753 = vunpack.c.h.b16 %v1448
    %v3754 = vunpack.c.l.b16 %v1449
    %v3755 = vunpack.c.h.b16 %v1449
    %v3756 = vunpack.c.l.b16 %v1450
    %v3757 = vunpack.c.h.b16 %v1450
    %v3758 = vunpack.c.l.b16 %v1451
    %v3759 = vunpack.c.h.b16 %v1451
    %v3760 = vunpack.c.l.b16 %v1452
    %v3761 = vunpack.c.h.b16 %v1452
    %v3762 = vunpack.c.l.b16 %v1453
    %v3763 = vunpack.c.h.b16 %v1453
    %v3764 = vunpack.c.l.b16 %v1454
    %v3765 = vunpack.c.h.b16 %v1454
    %v3766 = vunpack.c.l.b16 %v1455
    %v3767 = vunpack.c.h.b16 %v1455
    %v3768 = vunpack.c.l.b16 %v1456
    %v3769 = vunpack.c.h.b16 %v1456
    %v3770 = vunpack.c.l.b16 %v1457
    %v3771 = vunpack.c.h.b16 %v1457
    %v3772 = vpack.c.b16 %v2240, %v2236
    %v3773 = vpack.c.b16 %v2241, %v2237
    %v3774 = vpack.c.b16 %v2242, %v2238
    %v3775 = vpack.c.b16 %v2243, %v2239
    %v3776 = vpack.c.b16 %v2248, %v2244
    %v3777 = vpack.c.b16 %v2249, %v2245
    %v3778 = vpack.c.b16 %v2250, %v2246
    %v3779 = vpack.c.b16 %v2251, %v2247
    %v3780 = vpack.c.b16 %v2256, %v2252
    %v3781 = vpack.c.b16 %v2257, %v2253
    %v3782 = vpack.c.b16 %v2258, %v2254
    %v3783 = vpack.c.b16 %v2259, %v2255
    %v3784 = vpack.c.b16 %v2264, %v2260
    %v3785 = vpack.c.b16 %v2265, %v2261
    %v3786 = vpack.c.b16 %v2266, %v2262
    %v3787 = vpack.c.b16 %v2267, %v2263
    %v3788 = vpack.c.b16 %v2272, %v2268
    %v3789 = vpack.c.b16 %v2273, %v2269
    %v3790 = vpack.c.b16 %v2274, %v2270
    %v3791 = vpack.c.b16 %v2275, %v2271
    %v3792 = vpack.c.b16 %v2280, %v2276
    %v3793 = vpack.c.b16 %v2281, %v2277
    %v3794 = vpack.c.b16 %v2282, %v2278
    %v3795 = vpack.c.b16 %v2283, %v2279
    %v3796 = vpack.c.b16 %v2288, %v2284
    %v3797 = vpack.c.b16 %v2289, %v2285
    %v3798 = vpack.c.b16 %v2290, %v2286
    %v3799 = vpack.c.b16 %v2291, %v2287
    %v3800 = vpack.c.b16 %v2296, %v2292
    %v3801 = vpack.c.b16 %v2297, %v2293
    %v3802 = vpack.c.b16 %v2298, %v2294
    %v3803 = vpack.c.b16 %v2299, %v2295
    %v3804 = vpack.c.b16 %v2304, %v2300
    %v3805 = vpack.c.b16 %v2305, %v2301
    %v3806 = vpack.c.b16 %v2306, %v2302
    %v3807 = vpack.c.b16 %v2307, %v2303
    %v3808 = vpack.c.b16 %v2312, %v2308
    %v3809 = vpack.c.b16 %v2313, %v2309
    %v3810 = vpack.c.b16 %v2314, %v2310
    %v3811 = vpack.c.b16 %v2315, %v2311
    %v3812 = vpack.c.b16 %v2320, %v2316
    %v3813 = vpack.c.b16 %v2321, %v2317
    %v3814 = vpack.c.b16 %v2322, %v2318
    %v3815 = vpack.c.b16 %v2323, %v2319
    %v3816 = vpack.c.b16 %v2328, %v2324
    %v3817 = vpack.c.b16 %v2329, %v2325
    %v3818 = vpack.c.b16 %v2330, %v2326
    %v3819 = vpack.c.b16 %v2331, %v2327
    %v3820 = vpack.c.b16 %v2336, %v2332
    %v3821 = vpack.c.b16 %v2337, %v2333
    %v3822 = vpack.c.b16 %v2338, %v2334
    %v3823 = vpack.c.b16 %v2339, %v2335
    %v3824 = vpack.c.b16 %v2344, %v2340
    %v3825 = vpack.c.b16 %v2345, %v2341
    %v3826 = vpack.c.b16 %v2346, %v2342
    %v3827 = vpack.c.b16 %v2347, %v2343
    %v3828 = vpack.c.b16 %v2352, %v2348
    %v3829 = vpack.c.b16 %v2353, %v2349
    %v3830 = vpack.c.b16 %v2354, %v2350
    %v3831 = vpack.c.b16 %v2355, %v2351
    %v3832 = vpack.c.b16 %v2360, %v2356
    %v3833 = vpack.c.b16 %v2361, %v2357
    %v3834 = vpack.c.b16 %v2362, %v2358
    %v3835 = vpack.c.b16 %v2363, %v2359
    %v3836 = vpack.c.b16 %v2368, %v2364
    %v3837 = vpack.c.b16 %v2369, %v2365
    %v3838 = vpack.c.b16 %v2370, %v2366
    %v3839 = vpack.c.b16 %v2371, %v2367
    %v3840 = vpack.c.b16 %v2376, %v2372
    %v3841 = vpack.c.b16 %v2377, %v2373
    %v3842 = vpack.c.b16 %v2378, %v2374
    %v3843 = vpack.c.b16 %v2379, %v2375
    %v3844 = vpack.c.b16 %v2384, %v2380
    %v3845 = vpack.c.b16 %v2385, %v2381
    %v3846 = vpack.c.b16 %v2386, %v2382
    %v3847 = vpack.c.b16 %v2387, %v2383
    %v3848 = vpack.c.b16 %v2392, %v2388
    %v3849 = vpack.c.b16 %v2393, %v2389
    %v3850 = vpack.c.b16 %v2394, %v2390
    %v3851 = vpack.c.b16 %v2395, %v2391
    %v3852 = vpack.c.b16 %v2400, %v2396
    %v3853 = vpack.c.b16 %v2401, %v2397
    %v3854 = vpack.c.b16 %v2402, %v2398
    %v3855 = vpack.c.b16 %v2403, %v2399
    %v3856 = vpack.c.b16 %v2408, %v2404
    %v3857 = vpack.c.b16 %v2409, %v2405
    %v3858 = vpack.c.b16 %v2410, %v2406
    %v3859 = vpack.c.b16 %v2411, %v2407
    %v3860 = vpack.c.b16 %v2416, %v2412
    %v3861 = vpack.c.b16 %v2417, %v2413
    %v3862 = vpack.c.b16 %v2418, %v2414
    %v3863 = vpack.c.b16 %v2419, %v2415
    %v3864 = vpack.c.b16 %v2424, %v2420
    %v3865 = vpack.c.b16 %v2425, %v2421
    %v3866 = vpack.c.b16 %v2426, %v2422
    %v3867 = vpack.c.b16 %v2427, %v2423
    %v3868 = vpack.c.b16 %v2432, %v2428
    %v3869 = vpack.c.b16 %v2433, %v2429
    %v3870 = vpack.c.b16 %v2434, %v2430
    %v3871 = vpack.c.b16 %v2435, %v2431
    %v3872 = vpack.c.b16 %v2440, %v2436
    %v3873 = vpack.c.b16 %v2441, %v2437
    %v3874 = vpack.c.b16 %v2442, %v2438
    %v3875 = vpack.c.b16 %v2443, %v2439
    %v3876 = vpack.c.b16 %v2448, %v2444
    %v3877 = vpack.c.b16 %v2449, %v2445
    %v3878 = vpack.c.b16 %v2450, %v2446
    %v3879 = vpack.c.b16 %v2451, %v2447
    %v3880 = vpack.c.b16 %v2456, %v2452
    %v3881 = vpack.c.b16 %v2457, %v2453
    %v3882 = vpack.c.b16 %v2458, %v2454
    %v3883 = vpack.c.b16 %v2459, %v2455
    %v3884 = vpack.c.b16 %v2464, %v2460
    %v3885 = vpack.c.b16 %v2465, %v2461
    %v3886 = vpack.c.b16 %v2466, %v2462
    %v3887 = vpack.c.b16 %v2467, %v2463
    %v3888 = vpack.c.b16 %v2472, %v2468
    %v3889 = vpack.c.b16 %v2473, %v2469
    %v3890 = vpack.c.b16 %v2474, %v2470
    %v3891 = vpack.c.b16 %v2475, %v2471
    %v3892 = vpack.c.b16 %v2480, %v2476
    %v3893 = vpack.c.b16 %v2481, %v2477
    %v3894 = vpack.c.b16 %v2482, %v2478
    %v3895 = vpack.c.b16 %v2483, %v2479
    %v3896 = vpack.c.b16 %v2488, %v2484
    %v3897 = vpack.c.b16 %v2489, %v2485
    %v3898 = vpack.c.b16 %v2490, %v2486
    %v3899 = vpack.c.b16 %v2491, %v2487
    %v3900 = vpack.c.b16 %v2496, %v2492
    %v3901 = vpack.c.b16 %v2497, %v2493
    %v3902 = vpack.c.b16 %v2498, %v2494
    %v3903 = vpack.c.b16 %v2499, %v2495
    %v3904 = vpack.c.b16 %v2504, %v2500
    %v3905 = vpack.c.b16 %v2505, %v2501
    %v3906 = vpack.c.b16 %v2506, %v2502
    %v3907 = vpack.c.b16 %v2507, %v2503
    %v3908 = vpack.c.b16 %v2512, %v2508
    %v3909 = vpack.c.b16 %v2513, %v2509
    %v3910 = vpack.c.b16 %v2514, %v2510
    %v3911 = vpack.c.b16 %v2515, %v2511
    %v3912 = vpack.c.b16 %v2520, %v2516
    %v3913 = vpack.c.b16 %v2521, %v2517
    %v3914 = vpack.c.b16 %v2522, %v2518
    %v3915 = vpack.c.b16 %v2523, %v2519
    %v3916 = vpack.c.b16 %v2528, %v2524
    %v3917 = vpack.c.b16 %v2529, %v2525
    %v3918 = vpack.c.b16 %v2530, %v2526
    %v3919 = vpack.c.b16 %v2531, %v2527
    %v3920 = vpack.c.b16 %v2536, %v2532
    %v3921 = vpack.c.b16 %v2537, %v2533
    %v3922 = vpack.c.b16 %v2538, %v2534
    %v3923 = vpack.c.b16 %v2539, %v2535
    %v3924 = vpack.c.b16 %v2544, %v2540
    %v3925 = vpack.c.b16 %v2545, %v2541
    %v3926 = vpack.c.b16 %v2546, %v2542
    %v3927 = vpack.c.b16 %v2547, %v2543
    %v3928 = vpack.c.b16 %v2552, %v2548
    %v3929 = vpack.c.b16 %v2553, %v2549
    %v3930 = vpack.c.b16 %v2554, %v2550
    %v3931 = vpack.c.b16 %v2555, %v2551
    %v3932 = vpack.c.b16 %v2560, %v2556
    %v3933 = vpack.c.b16 %v2561, %v2557
    %v3934 = vpack.c.b16 %v2562, %v2558
    %v3935 = vpack.c.b16 %v2563, %v2559
    %v3936 = vpack.c.b16 %v2568, %v2564
    %v3937 = vpack.c.b16 %v2569, %v2565
    %v3938 = vpack.c.b16 %v2570, %v2566
    %v3939 = vpack.c.b16 %v2571, %v2567
    %v3940 = vpack.c.b16 %v2576, %v2572
    %v3941 = vpack.c.b16 %v2577, %v2573
    %v3942 = vpack.c.b16 %v2578, %v2574
    %v3943 = vpack.c.b16 %v2579, %v2575
    %v3944 = vpack.c.b16 %v2584, %v2580
    %v3945 = vpack.c.b16 %v2585, %v2581
    %v3946 = vpack.c.b16 %v2586, %v2582
    %v3947 = vpack.c.b16 %v2587, %v2583
    %v3948 = vpack.c.b16 %v2592, %v2588
    %v3949 = vpack.c.b16 %v2593, %v2589
    %v3950 = vpack.c.b16 %v2594, %v2590
    %v3951 = vpack.c.b16 %v2595, %v2591
    %v3952 = vpack.c.b16 %v2600, %v2596
    %v3953 = vpack.c.b16 %v2601, %v2597
    %v3954 = vpack.c.b16 %v2602, %v2598
    %v3955 = vpack.c.b16 %v2603, %v2599
    %v3956 = vpack.c.b16 %v2608, %v2604
    %v3957 = vpack.c.b16 %v2609, %v2605
    %v3958 = vpack.c.b16 %v2610, %v2606
    %v3959 = vpack.c.b16 %v2611, %v2607
    %v3960 = vpack.c.b16 %v2616, %v2612
    %v3961 = vpack.c.b16 %v2617, %v2613
    %v3962 = vpack.c.b16 %v2618, %v2614
    %v3963 = vpack.c.b16 %v2619, %v2615
    %v3964 = vpack.c.b16 %v2624, %v2620
    %v3965 = vpack.c.b16 %v2625, %v2621
    %v3966 = vpack.c.b16 %v2626, %v2622
    %v3967 = vpack.c.b16 %v2627, %v2623
    %v3968 = vpack.c.b16 %v2632, %v2628
    %v3969 = vpack.c.b16 %v2633, %v2629
    %v3970 = vpack.c.b16 %v2634, %v2630
    %v3971 = vpack.c.b16 %v2635, %v2631
    %v3972 = vpack.c.b16 %v2640, %v2636
    %v3973 = vpack.c.b16 %v2641, %v2637
    %v3974 = vpack.c.b16 %v2642, %v2638
    %v3975 = vpack.c.b16 %v2643, %v2639
    %v3976 = vpack.c.b16 %v2648, %v2644
    %v3977 = vpack.c.b16 %v2649, %v2645
    %v3978 = vpack.c.b16 %v2650, %v2646
    %v3979 = vpack.c.b16 %v2651, %v2647
    %v3980 = vpack.c.b16 %v2656, %v2652
    %v3981 = vpack.c.b16 %v2657, %v2653
    %v3982 = vpack.c.b16 %v2658, %v2654
    %v3983 = vpack.c.b16 %v2659, %v2655
    %v3984 = vpack.c.b16 %v2664, %v2660
    %v3985 = vpack.c.b16 %v2665, %v2661
    %v3986 = vpack.c.b16 %v2666, %v2662
    %v3987 = vpack.c.b16 %v2667, %v2663
    %v3988 = vpack.c.b16 %v2672, %v2668
    %v3989 = vpack.c.b16 %v2673, %v2669
    %v3990 = vpack.c.b16 %v2674, %v2670
    %v3991 = vpack.c.b16 %v2675, %v2671
    %v3992 = vpack.c.b16 %v2680, %v2676
    %v3993 = vpack.c.b16 %v2681, %v2677
    %v3994 = vpack.c.b16 %v2682, %v2678
    %v3995 = vpack.c.b16 %v2683, %v2679
    %v3996 = vpack.c.b16 %v2688, %v2684
    %v3997 = vpack.c.b16 %v2689, %v2685
    %v3998 = vpack.c.b16 %v2690, %v2686
    %v3999 = vpack.c.b16 %v2691, %v2687
    %v4000 = vpack.c.b16 %v2696, %v2692
    %v4001 = vpack.c.b16 %v2697, %v2693
    %v4002 = vpack.c.b16 %v2698, %v2694
    %v4003 = vpack.c.b16 %v2699, %v2695
    %v4004 = vpack.c.b16 %v2704, %v2700
    %v4005 = vpack.c.b16 %v2705, %v2701
    %v4006 = vpack.c.b16 %v2706, %v2702
    %v4007 = vpack.c.b16 %v2707, %v2703
    %v4008 = vpack.c.b16 %v2712, %v2708
    %v4009 = vpack.c.b16 %v2713, %v2709
    %v4010 = vpack.c.b16 %v2714, %v2710
    %v4011 = vpack.c.b16 %v2715, %v2711
    %v4012 = vpack.c.b16 %v2720, %v2716
    %v4013 = vpack.c.b16 %v2721, %v2717
    %v4014 = vpack.c.b16 %v2722, %v2718
    %v4015 = vpack.c.b16 %v2723, %v2719
    %v4016 = vpack.c.b16 %v2728, %v2724
    %v4017 = vpack.c.b16 %v2729, %v2725
    %v4018 = vpack.c.b16 %v2730, %v2726
    %v4019 = vpack.c.b16 %v2731, %v2727
    %v4020 = vpack.c.b16 %v2736, %v2732
    %v4021 = vpack.c.b16 %v2737, %v2733
    %v4022 = vpack.c.b16 %v2738, %v2734
    %v4023 = vpack.c.b16 %v2739, %v2735
    %v4024 = vpack.c.b16 %v2744, %v2740
    %v4025 = vpack.c.b16 %v2745, %v2741
    %v4026 = vpack.c.b16 %v2746, %v2742
    %v4027 = vpack.c.b16 %v2747, %v2743
    %v4028 = vpack.c.b16 %v2752, %v2748
    %v4029 = vpack.c.b16 %v2753, %v2749
    %v4030 = vpack.c.b16 %v2754, %v2750
    %v4031 = vpack.c.b16 %v2755, %v2751
    %v4032 = vpack.c.b16 %v2760, %v2756
    %v4033 = vpack.c.b16 %v2761, %v2757
    %v4034 = vpack.c.b16 %v2762, %v2758
    %v4035 = vpack.c.b16 %v2763, %v2759
    %v4036 = vpack.c.b16 %v2768, %v2764
    %v4037 = vpack.c.b16 %v2769, %v2765
    %v4038 = vpack.c.b16 %v2770, %v2766
    %v4039 = vpack.c.b16 %v2771, %v2767
    %v4040 = vpack.c.b16 %v2776, %v2772
    %v4041 = vpack.c.b16 %v2777, %v2773
    %v4042 = vpack.c.b16 %v2778, %v2774
    %v4043 = vpack.c.b16 %v2779, %v2775
    %v4044 = vpack.c.b16 %v2784, %v2780
    %v4045 = vpack.c.b16 %v2785, %v2781
    %v4046 = vpack.c.b16 %v2786, %v2782
    %v4047 = vpack.c.b16 %v2787, %v2783
    %v4048 = vpack.c.b16 %v2792, %v2788
    %v4049 = vpack.c.b16 %v2793, %v2789
    %v4050 = vpack.c.b16 %v2794, %v2790
    %v4051 = vpack.c.b16 %v2795, %v2791
    %v4052 = vpack.c.b16 %v2800, %v2796
    %v4053 = vpack.c.b16 %v2801, %v2797
    %v4054 = vpack.c.b16 %v2802, %v2798
    %v4055 = vpack.c.b16 %v2803, %v2799
    %v4056 = vpack.c.b16 %v2808, %v2804
    %v4057 = vpack.c.b16 %v2809, %v2805
    %v4058 = vpack.c.b16 %v2810, %v2806
    %v4059 = vpack.c.b16 %v2811, %v2807
    %v4060 = vpack.c.b16 %v2816, %v2812
    %v4061 = vpack.c.b16 %v2817, %v2813
    %v4062 = vpack.c.b16 %v2818, %v2814
    %v4063 = vpack.c.b16 %v2819, %v2815
    %v4064 = vpack.c.b16 %v2824, %v2820
    %v4065 = vpack.c.b16 %v2825, %v2821
    %v4066 = vpack.c.b16 %v2826, %v2822
    %v4067 = vpack.c.b16 %v2827, %v2823
    %v4068 = vpack.c.b16 %v2832, %v2828
    %v4069 = vpack.c.b16 %v2833, %v2829
    %v4070 = vpack.c.b16 %v2834, %v2830
    %v4071 = vpack.c.b16 %v2835, %v2831
    %v4072 = vpack.c.b16 %v2840, %v2836
    %v4073 = vpack.c.b16 %v2841, %v2837
    %v4074 = vpack.c.b16 %v2842, %v2838
    %v4075 = vpack.c.b16 %v2843, %v2839
    %v4076 = vpack.c.b16 %v2848, %v2844
    %v4077 = vpack.c.b16 %v2849, %v2845
    %v4078 = vpack.c.b16 %v2850, %v2846
    %v4079 = vpack.c.b16 %v2851, %v2847
    %v4080 = vpack.c.b16 %v2856, %v2852
    %v4081 = vpack.c.b16 %v2857, %v2853
    %v4082 = vpack.c.b16 %v2858, %v2854
    %v4083 = vpack.c.b16 %v2859, %v2855
    %v4084 = vpack.c.b16 %v2864, %v2860
    %v4085 = vpack.c.b16 %v2865, %v2861
    %v4086 = vpack.c.b16 %v2866, %v2862
    %v4087 = vpack.c.b16 %v2867, %v2863
    %v4088 = vpack.c.b16 %v2872, %v2868
    %v4089 = vpack.c.b16 %v2873, %v2869
    %v4090 = vpack.c.b16 %v2874, %v2870
    %v4091 = vpack.c.b16 %v2875, %v2871
    %v4092 = vpack.c.b16 %v2880, %v2876
    %v4093 = vpack.c.b16 %v2881, %v2877
    %v4094 = vpack.c.b16 %v2882, %v2878
    %v4095 = vpack.c.b16 %v2883, %v2879
    %v4096 = vpack.c.b16 %v2888, %v2884
    %v4097 = vpack.c.b16 %v2889, %v2885
    %v4098 = vpack.c.b16 %v2890, %v2886
    %v4099 = vpack.c.b16 %v2891, %v2887
    %v4100 = vpack.c.b16 %v2896, %v2892
    %v4101 = vpack.c.b16 %v2897, %v2893
    %v4102 = vpack.c.b16 %v2898, %v2894
    %v4103 = vpack.c.b16 %v2899, %v2895
    %v4104 = vpack.c.b16 %v2904, %v2900
    %v4105 = vpack.c.b16 %v2905, %v2901
    %v4106 = vpack.c.b16 %v2906, %v2902
    %v4107 = vpack.c.b16 %v2907, %v2903
    %v4108 = vpack.c.b16 %v2912, %v2908
    %v4109 = vpack.c.b16 %v2913, %v2909
    %v4110 = vpack.c.b16 %v2914, %v2910
    %v4111 = vpack.c.b16 %v2915, %v2911
    %v4112 = vpack.c.b16 %v2920, %v2916
    %v4113 = vpack.c.b16 %v2921, %v2917
    %v4114 = vpack.c.b16 %v2922, %v2918
    %v4115 = vpack.c.b16 %v2923, %v2919
    %v4116 = vpack.c.b16 %v2928, %v2924
    %v4117 = vpack.c.b16 %v2929, %v2925
    %v4118 = vpack.c.b16 %v2930, %v2926
    %v4119 = vpack.c.b16 %v2931, %v2927
    %v4120 = vpack.c.b16 %v2936, %v2932
    %v4121 = vpack.c.b16 %v2937, %v2933
    %v4122 = vpack.c.b16 %v2938, %v2934
    %v4123 = vpack.c.b16 %v2939, %v2935
    %v4124 = vpack.c.b16 %v2944, %v2940
    %v4125 = vpack.c.b16 %v2945, %v2941
    %v4126 = vpack.c.b16 %v2946, %v2942
    %v4127 = vpack.c.b16 %v2947, %v2943
    %v4128 = vpack.c.b16 %v2952, %v2948
    %v4129 = vpack.c.b16 %v2953, %v2949
    %v4130 = vpack.c.b16 %v2954, %v2950
    %v4131 = vpack.c.b16 %v2955, %v2951
    %v4132 = vpack.c.b16 %v2960, %v2956
    %v4133 = vpack.c.b16 %v2961, %v2957
    %v4134 = vpack.c.b16 %v2962, %v2958
    %v4135 = vpack.c.b16 %v2963, %v2959
    %v4136 = vpack.c.b16 %v2968, %v2964
    %v4137 = vpack.c.b16 %v2969, %v2965
    %v4138 = vpack.c.b16 %v2970, %v2966
    %v4139 = vpack.c.b16 %v2971, %v2967
    %v4140 = vpack.c.b16 %v2976, %v2972
    %v4141 = vpack.c.b16 %v2977, %v2973
    %v4142 = vpack.c.b16 %v2978, %v2974
    %v4143 = vpack.c.b16 %v2979, %v2975
    %v4144 = vpack.c.b16 %v2984, %v2980
    %v4145 = vpack.c.b16 %v2985, %v2981
    %v4146 = vpack.c.b16 %v2986, %v2982
    %v4147 = vpack.c.b16 %v2987, %v2983
    %v4148 = vpack.c.b16 %v2992, %v2988
    %v4149 = vpack.c.b16 %v2993, %v2989
    %v4150 = vpack.c.b16 %v2994, %v2990
    %v4151 = vpack.c.b16 %v2995, %v2991
    %v4152 = vpack.c.b16 %v3000, %v2996
    %v4153 = vpack.c.b16 %v3001, %v2997
    %v4154 = vpack.c.b16 %v3002, %v2998
    %v4155 = vpack.c.b16 %v3003, %v2999
    %v4156 = vpack.c.b16 %v3008, %v3004
    %v4157 = vpack.c.b16 %v3009, %v3005
    %v4158 = vpack.c.b16 %v3010, %v3006
    %v4159 = vpack.c.b16 %v3011, %v3007
    %v4160 = vpack.c.b16 %v3016, %v3012
    %v4161 = vpack.c.b16 %v3017, %v3013
    %v4162 = vpack.c.b16 %v3018, %v3014
    %v4163 = vpack.c.b16 %v3019, %v3015
    %v4164 = vpack.c.b16 %v3024, %v3020
    %v4165 = vpack.c.b16 %v3025, %v3021
    %v4166 = vpack.c.b16 %v3026, %v3022
    %v4167 = vpack.c.b16 %v3027, %v3023
    %v4168 = vpack.c.b16 %v3032, %v3028
    %v4169 = vpack.c.b16 %v3033, %v3029
    %v4170 = vpack.c.b16 %v3034, %v3030
    %v4171 = vpack.c.b16 %v3035, %v3031
    %v4172 = vpack.c.b16 %v3040, %v3036
    %v4173 = vpack.c.b16 %v3041, %v3037
    %v4174 = vpack.c.b16 %v3042, %v3038
    %v4175 = vpack.c.b16 %v3043, %v3039
    %v4176 = vpack.c.b16 %v3048, %v3044
    %v4177 = vpack.c.b16 %v3049, %v3045
    %v4178 = vpack.c.b16 %v3050, %v3046
    %v4179 = vpack.c.b16 %v3051, %v3047
    %v4180 = vpack.c.b16 %v3056, %v3052
    %v4181 = vpack.c.b16 %v3057, %v3053
    %v4182 = vpack.c.b16 %v3058, %v3054
    %v4183 = vpack.c.b16 %v3059, %v3055
    %v4184 = vpack.c.b16 %v3064, %v3060
    %v4185 = vpack.c.b16 %v3065, %v3061
    %v4186 = vpack.c.b16 %v3066, %v3062
    %v4187 = vpack.c.b16 %v3067, %v3063
    %v4188 = vpack.c.b16 %v3072, %v3068
    %v4189 = vpack.c.b16 %v3073, %v3069
    %v4190 = vpack.c.b16 %v3074, %v3070
    %v4191 = vpack.c.b16 %v3075, %v3071
    %v4192 = vpack.c.b16 %v3080, %v3076
    %v4193 = vpack.c.b16 %v3081, %v3077
    %v4194 = vpack.c.b16 %v3082, %v3078
    %v4195 = vpack.c.b16 %v3083, %v3079
    %v4196 = vpack.c.b16 %v3088, %v3084
    %v4197 = vpack.c.b16 %v3089, %v3085
    %v4198 = vpack.c.b16 %v3090, %v3086
    %v4199 = vpack.c.b16 %v3091, %v3087
    %v4200 = vpack.c.b16 %v3096, %v3092
    %v4201 = vpack.c.b16 %v3097, %v3093
    %v4202 = vpack.c.b16 %v3098, %v3094
    %v4203 = vpack.c.b16 %v3099, %v3095
    %v4204 = vpack.c.b16 %v3104, %v3100
    %v4205 = vpack.c.b16 %v3105, %v3101
    %v4206 = vpack.c.b16 %v3106, %v3102
    %v4207 = vpack.c.b16 %v3107, %v3103
    %v4208 = vpack.c.b16 %v3112, %v3108
    %v4209 = vpack.c.b16 %v3113, %v3109
    %v4210 = vpack.c.b16 %v3114, %v3110
    %v4211 = vpack.c.b16 %v3115, %v3111
    %v4212 = vpack.c.b16 %v3120, %v3116
    %v4213 = vpack.c.b16 %v3121, %v3117
    %v4214 = vpack.c.b16 %v3122, %v3118
    %v4215 = vpack.c.b16 %v3123, %v3119
    %v4216 = vpack.c.b16 %v3128, %v3124
    %v4217 = vpack.c.b16 %v3129, %v3125
    %v4218 = vpack.c.b16 %v3130, %v3126
    %v4219 = vpack.c.b16 %v3131, %v3127
    %v4220 = vpack.c.b16 %v3136, %v3132
    %v4221 = vpack.c.b16 %v3137, %v3133
    %v4222 = vpack.c.b16 %v3138, %v3134
    %v4223 = vpack.c.b16 %v3139, %v3135
    %v4224 = vpack.c.b16 %v3144, %v3140
    %v4225 = vpack.c.b16 %v3145, %v3141
    %v4226 = vpack.c.b16 %v3146, %v3142
    %v4227 = vpack.c.b16 %v3147, %v3143
    %v4228 = vpack.c.b16 %v3152, %v3148
    %v4229 = vpack.c.b16 %v3153, %v3149
    %v4230 = vpack.c.b16 %v3154, %v3150
    %v4231 = vpack.c.b16 %v3155, %v3151
    %v4232 = vpack.c.b16 %v3160, %v3156
    %v4233 = vpack.c.b16 %v3161, %v3157
    %v4234 = vpack.c.b16 %v3162, %v3158
    %v4235 = vpack.c.b16 %v3163, %v3159
    %v4236 = vpack.c.b16 %v3168, %v3164
    %v4237 = vpack.c.b16 %v3169, %v3165
    %v4238 = vpack.c.b16 %v3170, %v3166
    %v4239 = vpack.c.b16 %v3171, %v3167
    %v4240 = vpack.c.b16 %v3176, %v3172
    %v4241 = vpack.c.b16 %v3177, %v3173
    %v4242 = vpack.c.b16 %v3178, %v3174
    %v4243 = vpack.c.b16 %v3179, %v3175
    %v4244 = vpack.c.b16 %v3184, %v3180
    %v4245 = vpack.c.b16 %v3185, %v3181
    %v4246 = vpack.c.b16 %v3186, %v3182
    %v4247 = vpack.c.b16 %v3187, %v3183
    %v4248 = vpack.c.b16 %v3192, %v3188
    %v4249 = vpack.c.b16 %v3193, %v3189
    %v4250 = vpack.c.b16 %v3194, %v3190
    %v4251 = vpack.c.b16 %v3195, %v3191
    %v4252 = vpack.c.b16 %v3200, %v3196
    %v4253 = vpack.c.b16 %v3201, %v3197
    %v4254 = vpack.c.b16 %v3202, %v3198
    %v4255 = vpack.c.b16 %v3203, %v3199
    %v4256 = vpack.c.b16 %v3208, %v3204
    %v4257 = vpack.c.b16 %v3209, %v3205
    %v4258 = vpack.c.b16 %v3210, %v3206
    %v4259 = vpack.c.b16 %v3211, %v3207
    %v4260 = vpack.c.b16 %v3216, %v3212
    %v4261 = vpack.c.b16 %v3217, %v3213
    %v4262 = vpack.c.b16 %v3218, %v3214
    %v4263 = vpack.c.b16 %v3219, %v3215
    %v4264 = vpack.c.b16 %v3224, %v3220
    %v4265 = vpack.c.b16 %v3225, %v3221
    %v4266 = vpack.c.b16 %v3226, %v3222
    %v4267 = vpack.c.b16 %v3227, %v3223
    %v4268 = vpack.c.b16 %v3232, %v3228
    %v4269 = vpack.c.b16 %v3233, %v3229
    %v4270 = vpack.c.b16 %v3234, %v3230
    %v4271 = vpack.c.b16 %v3235, %v3231
    %v4272 = vpack.c.b16 %v3240, %v3236
    %v4273 = vpack.c.b16 %v3241, %v3237
    %v4274 = vpack.c.b16 %v3242, %v3238
    %v4275 = vpack.c.b16 %v3243, %v3239
    %v4276 = vpack.c.b16 %v3248, %v3244
    %v4277 = vpack.c.b16 %v3249, %v3245
    %v4278 = vpack.c.b16 %v3250, %v3246
    %v4279 = vpack.c.b16 %v3251, %v3247
    %v4280 = vpack.c.b16 %v3256, %v3252
    %v4281 = vpack.c.b16 %v3257, %v3253
    %v4282 = vpack.c.b16 %v3258, %v3254
    %v4283 = vpack.c.b16 %v3259, %v3255
    %v4284 = vpack.c.b16 %v3264, %v3260
    %v4285 = vpack.c.b16 %v3265, %v3261
    %v4286 = vpack.c.b16 %v3266, %v3262
    %v4287 = vpack.c.b16 %v3267, %v3263
    %v4288 = vpack.c.b16 %v3272, %v3268
    %v4289 = vpack.c.b16 %v3273, %v3269
    %v4290 = vpack.c.b16 %v3274, %v3270
    %v4291 = vpack.c.b16 %v3275, %v3271
    %v4292 = vpack.c.b16 %v3280, %v3276
    %v4293 = vpack.c.b16 %v3281, %v3277
    %v4294 = vpack.c.b16 %v3282, %v3278
    %v4295 = vpack.c.b16 %v3283, %v3279
    %v4296 = vpack.c.b16 %v3288, %v3284
    %v4297 = vpack.c.b16 %v3289, %v3285
    %v4298 = vpack.c.b16 %v3290, %v3286
    %v4299 = vpack.c.b16 %v3291, %v3287
    %v4300 = vpack.c.b16 %v3296, %v3292
    %v4301 = vpack.c.b16 %v3297, %v3293
    %v4302 = vpack.c.b16 %v3298, %v3294
    %v4303 = vpack.c.b16 %v3299, %v3295
    %v4304 = vpack.c.b16 %v3304, %v3300
    %v4305 = vpack.c.b16 %v3305, %v3301
    %v4306 = vpack.c.b16 %v3306, %v3302
    %v4307 = vpack.c.b16 %v3307, %v3303
    %v4308 = vpack.c.b16 %v3312, %v3308
    %v4309 = vpack.c.b16 %v3313, %v3309
    %v4310 = vpack.c.b16 %v3314, %v3310
    %v4311 = vpack.c.b16 %v3315, %v3311
    %v4312 = vpack.c.b16 %v3320, %v3316
    %v4313 = vpack.c.b16 %v3321, %v3317
    %v4314 = vpack.c.b16 %v3322, %v3318
    %v4315 = vpack.c.b16 %v3323, %v3319
    %v4316 = vpack.c.b16 %v3328, %v3324
    %v4317 = vpack.c.b16 %v3329, %v3325
    %v4318 = vpack.c.b16 %v3330, %v3326
    %v4319 = vpack.c.b16 %v3331, %v3327
    %v4320 = vpack.c.b16 %v3336, %v3332
    %v4321 = vpack.c.b16 %v3337, %v3333
    %v4322 = vpack.c.b16 %v3338, %v3334
    %v4323 = vpack.c.b16 %v3339, %v3335
    %v4324 = vpack.c.b16 %v3344, %v3340
    %v4325 = vpack.c.b16 %v3345, %v3341
    %v4326 = vpack.c.b16 %v3346, %v3342
    %v4327 = vpack.c.b16 %v3347, %v3343
    %v4328 = vpack.c.b16 %v3352, %v3348
    %v4329 = vpack.c.b16 %v3353, %v3349
    %v4330 = vpack.c.b16 %v3354, %v3350
    %v4331 = vpack.c.b16 %v3355, %v3351
    %v4332 = vpack.c.b16 %v3360, %v3356
    %v4333 = vpack.c.b16 %v3361, %v3357
    %v4334 = vpack.c.b16 %v3362, %v3358
    %v4335 = vpack.c.b16 %v3363, %v3359
    %v4336 = vpack.c.b16 %v3368, %v3364
    %v4337 = vpack.c.b16 %v3369, %v3365
    %v4338 = vpack.c.b16 %v3370, %v3366
    %v4339 = vpack.c.b16 %v3371, %v3367
    %v4340 = vpack.c.b16 %v3376, %v3372
    %v4341 = vpack.c.b16 %v3377, %v3373
    %v4342 = vpack.c.b16 %v3378, %v3374
    %v4343 = vpack.c.b16 %v3379, %v3375
    %v4344 = vpack.c.b16 %v3384, %v3380
    %v4345 = vpack.c.b16 %v3385, %v3381
    %v4346 = vpack.c.b16 %v3386, %v3382
    %v4347 = vpack.c.b16 %v3387, %v3383
    %v4348 = vpack.c.b16 %v3392, %v3388
    %v4349 = vpack.c.b16 %v3393, %v3389
    %v4350 = vpack.c.b16 %v3394, %v3390
    %v4351 = vpack.c.b16 %v3395, %v3391
    %v4352 = vpack.c.b16 %v3400, %v3396
    %v4353 = vpack.c.b16 %v3401, %v3397
    %v4354 = vpack.c.b16 %v3402, %v3398
    %v4355 = vpack.c.b16 %v3403, %v3399
    %v4356 = vpack.c.b16 %v3408, %v3404
    %v4357 = vpack.c.b16 %v3409, %v3405
    %v4358 = vpack.c.b16 %v3410, %v3406
    %v4359 = vpack.c.b16 %v3411, %v3407
    %v4360 = vpack.c.b16 %v3416, %v3412
    %v4361 = vpack.c.b16 %v3417, %v3413
    %v4362 = vpack.c.b16 %v3418, %v3414
    %v4363 = vpack.c.b16 %v3419, %v3415
    %v4364 = vpack.c.b16 %v3424, %v3420
    %v4365 = vpack.c.b16 %v3425, %v3421
    %v4366 = vpack.c.b16 %v3426, %v3422
    %v4367 = vpack.c.b16 %v3427, %v3423
    %v4368 = vpack.c.b16 %v3432, %v3428
    %v4369 = vpack.c.b16 %v3433, %v3429
    %v4370 = vpack.c.b16 %v3434, %v3430
    %v4371 = vpack.c.b16 %v3435, %v3431
    %v4372 = vpack.c.b16 %v3440, %v3436
    %v4373 = vpack.c.b16 %v3441, %v3437
    %v4374 = vpack.c.b16 %v3442, %v3438
    %v4375 = vpack.c.b16 %v3443, %v3439
    %v4376 = vpack.c.b16 %v3448, %v3444
    %v4377 = vpack.c.b16 %v3449, %v3445
    %v4378 = vpack.c.b16 %v3450, %v3446
    %v4379 = vpack.c.b16 %v3451, %v3447
    %v4380 = vpack.c.b16 %v3456, %v3452
    %v4381 = vpack.c.b16 %v3457, %v3453
    %v4382 = vpack.c.b16 %v3458, %v3454
    %v4383 = vpack.c.b16 %v3459, %v3455
    %v4384 = vpack.c.b16 %v3464, %v3460
    %v4385 = vpack.c.b16 %v3465, %v3461
    %v4386 = vpack.c.b16 %v3466, %v3462
    %v4387 = vpack.c.b16 %v3467, %v3463
    %v4388 = vpack.c.b16 %v3472, %v3468
    %v4389 = vpack.c.b16 %v3473, %v3469
    %v4390 = vpack.c.b16 %v3474, %v3470
    %v4391 = vpack.c.b16 %v3475, %v3471
    %v4392 = vpack.c.b16 %v3480, %v3476
    %v4393 = vpack.c.b16 %v3481, %v3477
    %v4394 = vpack.c.b16 %v3482, %v3478
    %v4395 = vpack.c.b16 %v3483, %v3479
    %v4396 = vpack.c.b16 %v3488, %v3484
    %v4397 = vpack.c.b16 %v3489, %v3485
    %v4398 = vpack.c.b16 %v3490, %v3486
    %v4399 = vpack.c.b16 %v3491, %v3487
    %v4400 = vpack.c.b16 %v3496, %v3492
    %v4401 = vpack.c.b16 %v3497, %v3493
    %v4402 = vpack.c.b16 %v3498, %v3494
    %v4403 = vpack.c.b16 %v3499, %v3495
    %v4404 = vpack.c.b16 %v3504, %v3500
    %v4405 = vpack.c.b16 %v3505, %v3501
    %v4406 = vpack.c.b16 %v3506, %v3502
    %v4407 = vpack.c.b16 %v3507, %v3503
    %v4408 = vpack.c.b16 %v3512, %v3508
    %v4409 = vpack.c.b16 %v3513, %v3509
    %v4410 = vpack.c.b16 %v3514, %v3510
    %v4411 = vpack.c.b16 %v3515, %v3511
    %v4412 = vpack.c.b16 %v3520, %v3516
    %v4413 = vpack.c.b16 %v3521, %v3517
    %v4414 = vpack.c.b16 %v3522, %v3518
    %v4415 = vpack.c.b16 %v3523, %v3519
    %v4416 = vpack.c.b16 %v3528, %v3524
    %v4417 = vpack.c.b16 %v3529, %v3525
    %v4418 = vpack.c.b16 %v3530, %v3526
    %v4419 = vpack.c.b16 %v3531, %v3527
    %v4420 = vpack.c.b16 %v3536, %v3532
    %v4421 = vpack.c.b16 %v3537, %v3533
    %v4422 = vpack.c.b16 %v3538, %v3534
    %v4423 = vpack.c.b16 %v3539, %v3535
    %v4424 = vpack.c.b16 %v3544, %v3540
    %v4425 = vpack.c.b16 %v3545, %v3541
    %v4426 = vpack.c.b16 %v3546, %v3542
    %v4427 = vpack.c.b16 %v3547, %v3543
    %v4428 = vpack.c.b16 %v3552, %v3548
    %v4429 = vpack.c.b16 %v3553, %v3549
    %v4430 = vpack.c.b16 %v3554, %v3550
    %v4431 = vpack.c.b16 %v3555, %v3551
    %v4432 = vpack.c.b16 %v3560, %v3556
    %v4433 = vpack.c.b16 %v3561, %v3557
    %v4434 = vpack.c.b16 %v3562, %v3558
    %v4435 = vpack.c.b16 %v3563, %v3559
    %v4436 = vpack.c.b16 %v3568, %v3564
    %v4437 = vpack.c.b16 %v3569, %v3565
    %v4438 = vpack.c.b16 %v3570, %v3566
    %v4439 = vpack.c.b16 %v3571, %v3567
    %v4440 = vpack.c.b16 %v3576, %v3572
    %v4441 = vpack.c.b16 %v3577, %v3573
    %v4442 = vpack.c.b16 %v3578, %v3574
    %v4443 = vpack.c.b16 %v3579, %v3575
    %v4444 = vpack.c.b16 %v3584, %v3580
    %v4445 = vpack.c.b16 %v3585, %v3581
    %v4446 = vpack.c.b16 %v3586, %v3582
    %v4447 = vpack.c.b16 %v3587, %v3583
    %v4448 = vpack.c.b16 %v3592, %v3588
    %v4449 = vpack.c.b16 %v3593, %v3589
    %v4450 = vpack.c.b16 %v3594, %v3590
    %v4451 = vpack.c.b16 %v3595, %v3591
    %v4452 = vpack.c.b16 %v3600, %v3596
    %v4453 = vpack.c.b16 %v3601, %v3597
    %v4454 = vpack.c.b16 %v3602, %v3598
    %v4455 = vpack.c.b16 %v3603, %v3599
    %v4456 = vpack.c.b16 %v3608, %v3604
    %v4457 = vpack.c.b16 %v3609, %v3605
    %v4458 = vpack.c.b16 %v3610, %v3606
    %v4459 = vpack.c.b16 %v3611, %v3607
    %v4460 = vpack.c.b16 %v3616, %v3612
    %v4461 = vpack.c.b16 %v3617, %v3613
    %v4462 = vpack.c.b16 %v3618, %v3614
    %v4463 = vpack.c.b16 %v3619, %v3615
    %v4464 = vpack.c.b16 %v3624, %v3620
    %v4465 = vpack.c.b16 %v3625, %v3621
    %v4466 = vpack.c.b16 %v3626, %v3622
    %v4467 = vpack.c.b16 %v3627, %v3623
    %v4468 = vpack.c.b16 %v3632, %v3628
    %v4469 = vpack.c.b16 %v3633, %v3629
    %v4470 = vpack.c.b16 %v3634, %v3630
    %v4471 = vpack.c.b16 %v3635, %v3631
    %v4472 = vpack.c.b16 %v3640, %v3636
    %v4473 = vpack.c.b16 %v3641, %v3637
    %v4474 = vpack.c.b16 %v3642, %v3638
    %v4475 = vpack.c.b16 %v3643, %v3639
    %v4476 = vpack.c.b16 %v3648, %v3644
    %v4477 = vpack.c.b16 %v3649, %v3645
    %v4478 = vpack.c.b16 %v3650, %v3646
    %v4479 = vpack.c.b16 %v3651, %v3647
    %v4480 = vpack.c.b16 %v3656, %v3652
    %v4481 = vpack.c.b16 %v3657, %v3653
    %v4482 = vpack.c.b16 %v3658, %v3654
    %v4483 = vpack.c.b16 %v3659, %v3655
    %v4484 = vpack.c.b16 %v3664, %v3660
    %v4485 = vpack.c.b16 %v3665, %v3661
    %v4486 = vpack.c.b16 %v3666, %v3662
    %v4487 = vpack.c.b16 %v3667, %v3663
    %v4488 = vpack.c.b16 %v3672, %v3668
    %v4489 = vpack.c.b16 %v3673, %v3669
    %v4490 = vpack.c.b16 %v3674, %v3670
    %v4491 = vpack.c.b16 %v3675, %v3671
    %v4492 = vpack.c.b16 %v3680, %v3676
    %v4493 = vpack.c.b16 %v3681, %v3677
    %v4494 = vpack.c.b16 %v3682, %v3678
    %v4495 = vpack.c.b16 %v3683, %v3679
    %v4496 = vpack.c.b16 %v3688, %v3684
    %v4497 = vpack.c.b16 %v3689, %v3685
    %v4498 = vpack.c.b16 %v3690, %v3686
    %v4499 = vpack.c.b16 %v3691, %v3687
    %v4500 = vpack.c.b16 %v3696, %v3692
    %v4501 = vpack.c.b16 %v3697, %v3693
    %v4502 = vpack.c.b16 %v3698, %v3694
    %v4503 = vpack.c.b16 %v3699, %v3695
    %v4504 = vpack.c.b16 %v3704, %v3700
    %v4505 = vpack.c.b16 %v3705, %v3701
    %v4506 = vpack.c.b16 %v3706, %v3702
    %v4507 = vpack.c.b16 %v3707, %v3703
    %v4508 = vpack.c.b16 %v3712, %v3708
    %v4509 = vpack.c.b16 %v3713, %v3709
    %v4510 = vpack.c.b16 %v3714, %v3710
    %v4511 = vpack.c.b16 %v3715, %v3711
    %v4512 = vpack.c.b16 %v3720, %v3716
    %v4513 = vpack.c.b16 %v3721, %v3717
    %v4514 = vpack.c.b16 %v3722, %v3718
    %v4515 = vpack.c.b16 %v3723, %v3719
    %v4516 = vpack.c.b16 %v3728, %v3724
    %v4517 = vpack.c.b16 %v3729, %v3725
    %v4518 = vpack.c.b16 %v3730, %v3726
    %v4519 = vpack.c.b16 %v3731, %v3727
    %v4520 = vpack.c.b16 %v3736, %v3732
    %v4521 = vpack.c.b16 %v3737, %v3733
    %v4522 = vpack.c.b16 %v3738, %v3734
    %v4523 = vpack.c.b16 %v3739, %v3735
    %v4524 = vpack.c.b16 %v3744, %v3740
    %v4525 = vpack.c.b16 %v3745, %v3741
    %v4526 = vpack.c.b16 %v3746, %v3742
    %v4527 = vpack.c.b16 %v3747, %v3743
    %v4528 = vpack.c.b16 %v3752, %v3748
    %v4529 = vpack.c.b16 %v3753, %v3749
    %v4530 = vpack.c.b16 %v3754, %v3750
    %v4531 = vpack.c.b16 %v3755, %v3751
    %v4532 = vpack.c.b16 %v3760, %v3756
    %v4533 = vpack.c.b16 %v3761, %v3757
    %v4534 = vpack.c.b16 %v3762, %v3758
    %v4535 = vpack.c.b16 %v3763, %v3759
    %v4536 = vpack.c.b16 %v3768, %v3764
    %v4537 = vpack.c.b16 %v3769, %v3765
    %v4538 = vpack.c.b16 %v3770, %v3766
    %v4539 = vpack.c.b16 %v3771, %v3767
    %5308 = vmatpush.bf16.msra.mxu0 %v3800
    %5309 = vmatpush.bf16.msra.mxu0 %v3796
    %5310 = vmatpush.bf16.msra.mxu0 %v3792
    %5311 = vmatpush.bf16.msra.mxu0 %v3788
    %5312 = vmatpush.bf16.msra.mxu0 %v3784
    %5313 = vmatpush.bf16.msra.mxu0 %v3780
    %5314 = vmatpush.bf16.msra.mxu0 %v3776
    %5315 = vmatpush.bf16.msra.mxu0 %v3772
    %5316 = vmatmul.bf16.gmra.mxu0 %v498
    %v5317 = vpop.f32.mrf.mxu0
    %v5318 = vadd.f32 %v1460, %v5317
    %v5319 = vpop.f32.mrf.mxu0
    %v5320 = vadd.f32 %v1460, %v5319
    %5321 = vmatmul.bf16.gmra.mxu0 %v522
    %v5322 = vpop.f32.mrf.mxu0
    %v5323 = vadd.f32 %v1460, %v5322
    %v5324 = vpop.f32.mrf.mxu0
    %v5325 = vadd.f32 %v1460, %v5324
    %5326 = vmatmul.bf16.gmra.mxu0 %v546
    %v5327 = vpop.f32.mrf.mxu0
    %v5328 = vadd.f32 %v1460, %v5327
    %v5329 = vpop.f32.mrf.mxu0
    %v5330 = vadd.f32 %v1460, %v5329
    %5331 = vmatmul.bf16.gmra.mxu0 %v570
    %v5332 = vpop.f32.mrf.mxu0
    %v5333 = vadd.f32 %v1460, %v5332
    %v5334 = vpop.f32.mrf.mxu0
    %v5335 = vadd.f32 %v1460, %v5334
    %5336 = vmatmul.bf16.gmra.mxu0 %v594
    %v5337 = vpop.f32.mrf.mxu0
    %v5338 = vadd.f32 %v1460, %v5337
    %v5339 = vpop.f32.mrf.mxu0
    %v5340 = vadd.f32 %v1460, %v5339
    %5341 = vmatmul.bf16.gmra.mxu0 %v618
    %v5342 = vpop.f32.mrf.mxu0
    %v5343 = vadd.f32 %v1460, %v5342
    %v5344 = vpop.f32.mrf.mxu0
    %v5345 = vadd.f32 %v1460, %v5344
    %5346 = vmatmul.bf16.gmra.mxu0 %v642
    %v5347 = vpop.f32.mrf.mxu0
    %v5348 = vadd.f32 %v1460, %v5347
    %v5349 = vpop.f32.mrf.mxu0
    %v5350 = vadd.f32 %v1460, %v5349
    %5351 = vmatmul.bf16.gmra.mxu0 %v666
    %v5352 = vpop.f32.mrf.mxu0
    %v5353 = vadd.f32 %v1460, %v5352
    %v5354 = vpop.f32.mrf.mxu0
    %v5355 = vadd.f32 %v1460, %v5354
    %5356 = vdwg.mxu0
    %5357 = vmatpush.bf16.msra.mxu0 %v3832
    %5358 = vmatpush.bf16.msra.mxu0 %v3828
    %5359 = vmatpush.bf16.msra.mxu0 %v3824
    %5360 = vmatpush.bf16.msra.mxu0 %v3820
    %5361 = vmatpush.bf16.msra.mxu0 %v3816
    %5362 = vmatpush.bf16.msra.mxu0 %v3812
    %5363 = vmatpush.bf16.msra.mxu0 %v3808
    %5364 = vmatpush.bf16.msra.mxu0 %v3804
    %5365 = vmatmul.bf16.gmra.mxu0 %v499
    %v5366 = vpop.f32.mrf.mxu0
    %v5367 = vadd.f32 %v5318, %v5366
    %v5368 = vpop.f32.mrf.mxu0
    %v5369 = vadd.f32 %v5320, %v5368
    %5370 = vmatmul.bf16.gmra.mxu0 %v523
    %v5371 = vpop.f32.mrf.mxu0
    %v5372 = vadd.f32 %v5323, %v5371
    %v5373 = vpop.f32.mrf.mxu0
    %v5374 = vadd.f32 %v5325, %v5373
    %5375 = vmatmul.bf16.gmra.mxu0 %v547
    %v5376 = vpop.f32.mrf.mxu0
    %v5377 = vadd.f32 %v5328, %v5376
    %v5378 = vpop.f32.mrf.mxu0
    %v5379 = vadd.f32 %v5330, %v5378
    %5380 = vmatmul.bf16.gmra.mxu0 %v571
    %v5381 = vpop.f32.mrf.mxu0
    %v5382 = vadd.f32 %v5333, %v5381
    %v5383 = vpop.f32.mrf.mxu0
    %v5384 = vadd.f32 %v5335, %v5383
    %5385 = vmatmul.bf16.gmra.mxu0 %v595
    %v5386 = vpop.f32.mrf.mxu0
    %v5387 = vadd.f32 %v5338, %v5386
    %v5388 = vpop.f32.mrf.mxu0
    %v5389 = vadd.f32 %v5340, %v5388
    %5390 = vmatmul.bf16.gmra.mxu0 %v619
    %v5391 = vpop.f32.mrf.mxu0
    %v5392 = vadd.f32 %v5343, %v5391
    %v5393 = vpop.f32.mrf.mxu0
    %v5394 = vadd.f32 %v5345, %v5393
    %5395 = vmatmul.bf16.gmra.mxu0 %v643
    %v5396 = vpop.f32.mrf.mxu0
    %v5397 = vadd.f32 %v5348, %v5396
    %v5398 = vpop.f32.mrf.mxu0
    %v5399 = vadd.f32 %v5350, %v5398
    %5400 = vmatmul.bf16.gmra.mxu0 %v667
    %v5401 = vpop.f32.mrf.mxu0
    %v5402 = vadd.f32 %v5353, %v5401
    %v5403 = vpop.f32.mrf.mxu0
    %v5404 = vadd.f32 %v5355, %v5403
    %5405 = vdwg.mxu0
    %5406 = vmatpush.bf16.msra.mxu0 %v3864
    %5407 = vmatpush.bf16.msra.mxu0 %v3860
    %5408 = vmatpush.bf16.msra.mxu0 %v3856
    %5409 = vmatpush.bf16.msra.mxu0 %v3852
    %5410 = vmatpush.bf16.msra.mxu0 %v3848
    %5411 = vmatpush.bf16.msra.mxu0 %v3844
    %5412 = vmatpush.bf16.msra.mxu0 %v3840
    %5413 = vmatpush.bf16.msra.mxu0 %v3836
    %5414 = vmatmul.bf16.gmra.mxu0 %v500
    %v5415 = vpop.f32.mrf.mxu0
    %v5416 = vadd.f32 %v5367, %v5415
    %v5417 = vpop.f32.mrf.mxu0
    %v5418 = vadd.f32 %v5369, %v5417
    %5419 = vmatmul.bf16.gmra.mxu0 %v524
    %v5420 = vpop.f32.mrf.mxu0
    %v5421 = vadd.f32 %v5372, %v5420
    %v5422 = vpop.f32.mrf.mxu0
    %v5423 = vadd.f32 %v5374, %v5422
    %5424 = vmatmul.bf16.gmra.mxu0 %v548
    %v5425 = vpop.f32.mrf.mxu0
    %v5426 = vadd.f32 %v5377, %v5425
    %v5427 = vpop.f32.mrf.mxu0
    %v5428 = vadd.f32 %v5379, %v5427
    %5429 = vmatmul.bf16.gmra.mxu0 %v572
    %v5430 = vpop.f32.mrf.mxu0
    %v5431 = vadd.f32 %v5382, %v5430
    %v5432 = vpop.f32.mrf.mxu0
    %v5433 = vadd.f32 %v5384, %v5432
    %5434 = vmatmul.bf16.gmra.mxu0 %v596
    %v5435 = vpop.f32.mrf.mxu0
    %v5436 = vadd.f32 %v5387, %v5435
    %v5437 = vpop.f32.mrf.mxu0
    %v5438 = vadd.f32 %v5389, %v5437
    %5439 = vmatmul.bf16.gmra.mxu0 %v620
    %v5440 = vpop.f32.mrf.mxu0
    %v5441 = vadd.f32 %v5392, %v5440
    %v5442 = vpop.f32.mrf.mxu0
    %v5443 = vadd.f32 %v5394, %v5442
    %5444 = vmatmul.bf16.gmra.mxu0 %v644
    %v5445 = vpop.f32.mrf.mxu0
    %v5446 = vadd.f32 %v5397, %v5445
    %v5447 = vpop.f32.mrf.mxu0
    %v5448 = vadd.f32 %v5399, %v5447
    %5449 = vmatmul.bf16.gmra.mxu0 %v668
    %v5450 = vpop.f32.mrf.mxu0
    %v5451 = vadd.f32 %v5402, %v5450
    %v5452 = vpop.f32.mrf.mxu0
    %v5453 = vadd.f32 %v5404, %v5452
    %5454 = vdwg.mxu0
    %5455 = vmatpush.bf16.msra.mxu0 %v3896
    %5456 = vmatpush.bf16.msra.mxu0 %v3892
    %5457 = vmatpush.bf16.msra.mxu0 %v3888
    %5458 = vmatpush.bf16.msra.mxu0 %v3884
    %5459 = vmatpush.bf16.msra.mxu0 %v3880
    %5460 = vmatpush.bf16.msra.mxu0 %v3876
    %5461 = vmatpush.bf16.msra.mxu0 %v3872
    %5462 = vmatpush.bf16.msra.mxu0 %v3868
    %5463 = vmatmul.bf16.gmra.mxu0 %v501
    %v5464 = vpop.f32.mrf.mxu0
    %v5465 = vadd.f32 %v5416, %v5464
    %v5466 = vpop.f32.mrf.mxu0
    %v5467 = vadd.f32 %v5418, %v5466
    %5468 = vmatmul.bf16.gmra.mxu0 %v525
    %v5469 = vpop.f32.mrf.mxu0
    %v5470 = vadd.f32 %v5421, %v5469
    %v5471 = vpop.f32.mrf.mxu0
    %v5472 = vadd.f32 %v5423, %v5471
    %5473 = vmatmul.bf16.gmra.mxu0 %v549
    %v5474 = vpop.f32.mrf.mxu0
    %v5475 = vadd.f32 %v5426, %v5474
    %v5476 = vpop.f32.mrf.mxu0
    %v5477 = vadd.f32 %v5428, %v5476
    %5478 = vmatmul.bf16.gmra.mxu0 %v573
    %v5479 = vpop.f32.mrf.mxu0
    %v5480 = vadd.f32 %v5431, %v5479
    %v5481 = vpop.f32.mrf.mxu0
    %v5482 = vadd.f32 %v5433, %v5481
    %5483 = vmatmul.bf16.gmra.mxu0 %v597
    %v5484 = vpop.f32.mrf.mxu0
    %v5485 = vadd.f32 %v5436, %v5484
    %v5486 = vpop.f32.mrf.mxu0
    %v5487 = vadd.f32 %v5438, %v5486
    %5488 = vmatmul.bf16.gmra.mxu0 %v621
    %v5489 = vpop.f32.mrf.mxu0
    %v5490 = vadd.f32 %v5441, %v5489
    %v5491 = vpop.f32.mrf.mxu0
    %v5492 = vadd.f32 %v5443, %v5491
    %5493 = vmatmul.bf16.gmra.mxu0 %v645
    %v5494 = vpop.f32.mrf.mxu0
    %v5495 = vadd.f32 %v5446, %v5494
    %v5496 = vpop.f32.mrf.mxu0
    %v5497 = vadd.f32 %v5448, %v5496
    %5498 = vmatmul.bf16.gmra.mxu0 %v669
    %v5499 = vpop.f32.mrf.mxu0
    %v5500 = vadd.f32 %v5451, %v5499
    %v5501 = vpop.f32.mrf.mxu0
    %v5502 = vadd.f32 %v5453, %v5501
    %5503 = vdwg.mxu0
    %5504 = vmatpush.bf16.msra.mxu0 %v3928
    %5505 = vmatpush.bf16.msra.mxu0 %v3924
    %5506 = vmatpush.bf16.msra.mxu0 %v3920
    %5507 = vmatpush.bf16.msra.mxu0 %v3916
    %5508 = vmatpush.bf16.msra.mxu0 %v3912
    %5509 = vmatpush.bf16.msra.mxu0 %v3908
    %5510 = vmatpush.bf16.msra.mxu0 %v3904
    %5511 = vmatpush.bf16.msra.mxu0 %v3900
    %5512 = vmatmul.bf16.gmra.mxu0 %v502
    %v5513 = vpop.f32.mrf.mxu0
    %v5514 = vadd.f32 %v5465, %v5513
    %v5515 = vpop.f32.mrf.mxu0
    %v5516 = vadd.f32 %v5467, %v5515
    %5517 = vmatmul.bf16.gmra.mxu0 %v526
    %v5518 = vpop.f32.mrf.mxu0
    %v5519 = vadd.f32 %v5470, %v5518
    %v5520 = vpop.f32.mrf.mxu0
    %v5521 = vadd.f32 %v5472, %v5520
    %5522 = vmatmul.bf16.gmra.mxu0 %v550
    %v5523 = vpop.f32.mrf.mxu0
    %v5524 = vadd.f32 %v5475, %v5523
    %v5525 = vpop.f32.mrf.mxu0
    %v5526 = vadd.f32 %v5477, %v5525
    %5527 = vmatmul.bf16.gmra.mxu0 %v574
    %v5528 = vpop.f32.mrf.mxu0
    %v5529 = vadd.f32 %v5480, %v5528
    %v5530 = vpop.f32.mrf.mxu0
    %v5531 = vadd.f32 %v5482, %v5530
    %5532 = vmatmul.bf16.gmra.mxu0 %v598
    %v5533 = vpop.f32.mrf.mxu0
    %v5534 = vadd.f32 %v5485, %v5533
    %v5535 = vpop.f32.mrf.mxu0
    %v5536 = vadd.f32 %v5487, %v5535
    %5537 = vmatmul.bf16.gmra.mxu0 %v622
    %v5538 = vpop.f32.mrf.mxu0
    %v5539 = vadd.f32 %v5490, %v5538
    %v5540 = vpop.f32.mrf.mxu0
    %v5541 = vadd.f32 %v5492, %v5540
    %5542 = vmatmul.bf16.gmra.mxu0 %v646
    %v5543 = vpop.f32.mrf.mxu0
    %v5544 = vadd.f32 %v5495, %v5543
    %v5545 = vpop.f32.mrf.mxu0
    %v5546 = vadd.f32 %v5497, %v5545
    %5547 = vmatmul.bf16.gmra.mxu0 %v670
    %v5548 = vpop.f32.mrf.mxu0
    %v5549 = vadd.f32 %v5500, %v5548
    %v5550 = vpop.f32.mrf.mxu0
    %v5551 = vadd.f32 %v5502, %v5550
    %5552 = vdwg.mxu0
    %5553 = vmatpush.bf16.msra.mxu0 %v3960
    %5554 = vmatpush.bf16.msra.mxu0 %v3956
    %5555 = vmatpush.bf16.msra.mxu0 %v3952
    %5556 = vmatpush.bf16.msra.mxu0 %v3948
    %5557 = vmatpush.bf16.msra.mxu0 %v3944
    %5558 = vmatpush.bf16.msra.mxu0 %v3940
    %5559 = vmatpush.bf16.msra.mxu0 %v3936
    %5560 = vmatpush.bf16.msra.mxu0 %v3932
    %5561 = vmatmul.bf16.gmra.mxu0 %v503
    %v5562 = vpop.f32.mrf.mxu0
    %v5563 = vadd.f32 %v5514, %v5562
    %v5564 = vpop.f32.mrf.mxu0
    %v5565 = vadd.f32 %v5516, %v5564
    %5566 = vmatmul.bf16.gmra.mxu0 %v527
    %v5567 = vpop.f32.mrf.mxu0
    %v5568 = vadd.f32 %v5519, %v5567
    %v5569 = vpop.f32.mrf.mxu0
    %v5570 = vadd.f32 %v5521, %v5569
    %5571 = vmatmul.bf16.gmra.mxu0 %v551
    %v5572 = vpop.f32.mrf.mxu0
    %v5573 = vadd.f32 %v5524, %v5572
    %v5574 = vpop.f32.mrf.mxu0
    %v5575 = vadd.f32 %v5526, %v5574
    %5576 = vmatmul.bf16.gmra.mxu0 %v575
    %v5577 = vpop.f32.mrf.mxu0
    %v5578 = vadd.f32 %v5529, %v5577
    %v5579 = vpop.f32.mrf.mxu0
    %v5580 = vadd.f32 %v5531, %v5579
    %5581 = vmatmul.bf16.gmra.mxu0 %v599
    %v5582 = vpop.f32.mrf.mxu0
    %v5583 = vadd.f32 %v5534, %v5582
    %v5584 = vpop.f32.mrf.mxu0
    %v5585 = vadd.f32 %v5536, %v5584
    %5586 = vmatmul.bf16.gmra.mxu0 %v623
    %v5587 = vpop.f32.mrf.mxu0
    %v5588 = vadd.f32 %v5539, %v5587
    %v5589 = vpop.f32.mrf.mxu0
    %v5590 = vadd.f32 %v5541, %v5589
    %5591 = vmatmul.bf16.gmra.mxu0 %v647
    %v5592 = vpop.f32.mrf.mxu0
    %v5593 = vadd.f32 %v5544, %v5592
    %v5594 = vpop.f32.mrf.mxu0
    %v5595 = vadd.f32 %v5546, %v5594
    %5596 = vmatmul.bf16.gmra.mxu0 %v671
    %v5597 = vpop.f32.mrf.mxu0
    %v5598 = vadd.f32 %v5549, %v5597
    %v5599 = vpop.f32.mrf.mxu0
    %v5600 = vadd.f32 %v5551, %v5599
    %5601 = vdwg.mxu0
    %5602 = vmatpush.bf16.msra.mxu0 %v3992
    %5603 = vmatpush.bf16.msra.mxu0 %v3988
    %5604 = vmatpush.bf16.msra.mxu0 %v3984
    %5605 = vmatpush.bf16.msra.mxu0 %v3980
    %5606 = vmatpush.bf16.msra.mxu0 %v3976
    %5607 = vmatpush.bf16.msra.mxu0 %v3972
    %5608 = vmatpush.bf16.msra.mxu0 %v3968
    %5609 = vmatpush.bf16.msra.mxu0 %v3964
    %5610 = vmatmul.bf16.gmra.mxu0 %v504
    %v5611 = vpop.f32.mrf.mxu0
    %v5612 = vadd.f32 %v5563, %v5611
    %v5613 = vpop.f32.mrf.mxu0
    %v5614 = vadd.f32 %v5565, %v5613
    %5615 = vmatmul.bf16.gmra.mxu0 %v528
    %v5616 = vpop.f32.mrf.mxu0
    %v5617 = vadd.f32 %v5568, %v5616
    %v5618 = vpop.f32.mrf.mxu0
    %v5619 = vadd.f32 %v5570, %v5618
    %5620 = vmatmul.bf16.gmra.mxu0 %v552
    %v5621 = vpop.f32.mrf.mxu0
    %v5622 = vadd.f32 %v5573, %v5621
    %v5623 = vpop.f32.mrf.mxu0
    %v5624 = vadd.f32 %v5575, %v5623
    %5625 = vmatmul.bf16.gmra.mxu0 %v576
    %v5626 = vpop.f32.mrf.mxu0
    %v5627 = vadd.f32 %v5578, %v5626
    %v5628 = vpop.f32.mrf.mxu0
    %v5629 = vadd.f32 %v5580, %v5628
    %5630 = vmatmul.bf16.gmra.mxu0 %v600
    %v5631 = vpop.f32.mrf.mxu0
    %v5632 = vadd.f32 %v5583, %v5631
    %v5633 = vpop.f32.mrf.mxu0
    %v5634 = vadd.f32 %v5585, %v5633
    %5635 = vmatmul.bf16.gmra.mxu0 %v624
    %v5636 = vpop.f32.mrf.mxu0
    %v5637 = vadd.f32 %v5588, %v5636
    %v5638 = vpop.f32.mrf.mxu0
    %v5639 = vadd.f32 %v5590, %v5638
    %5640 = vmatmul.bf16.gmra.mxu0 %v648
    %v5641 = vpop.f32.mrf.mxu0
    %v5642 = vadd.f32 %v5593, %v5641
    %v5643 = vpop.f32.mrf.mxu0
    %v5644 = vadd.f32 %v5595, %v5643
    %5645 = vmatmul.bf16.gmra.mxu0 %v672
    %v5646 = vpop.f32.mrf.mxu0
    %v5647 = vadd.f32 %v5598, %v5646
    %v5648 = vpop.f32.mrf.mxu0
    %v5649 = vadd.f32 %v5600, %v5648
    %5650 = vdwg.mxu0
    %5651 = vmatpush.bf16.msra.mxu0 %v4024
    %5652 = vmatpush.bf16.msra.mxu0 %v4020
    %5653 = vmatpush.bf16.msra.mxu0 %v4016
    %5654 = vmatpush.bf16.msra.mxu0 %v4012
    %5655 = vmatpush.bf16.msra.mxu0 %v4008
    %5656 = vmatpush.bf16.msra.mxu0 %v4004
    %5657 = vmatpush.bf16.msra.mxu0 %v4000
    %5658 = vmatpush.bf16.msra.mxu0 %v3996
    %5659 = vmatmul.bf16.gmra.mxu0 %v505
    %v5660 = vpop.f32.mrf.mxu0
    %v5661 = vadd.f32 %v5612, %v5660
    %v5662 = vpop.f32.mrf.mxu0
    %v5663 = vadd.f32 %v5614, %v5662
    %5664 = vmatmul.bf16.gmra.mxu0 %v529
    %v5665 = vpop.f32.mrf.mxu0
    %v5666 = vadd.f32 %v5617, %v5665
    %v5667 = vpop.f32.mrf.mxu0
    %v5668 = vadd.f32 %v5619, %v5667
    %5669 = vmatmul.bf16.gmra.mxu0 %v553
    %v5670 = vpop.f32.mrf.mxu0
    %v5671 = vadd.f32 %v5622, %v5670
    %v5672 = vpop.f32.mrf.mxu0
    %v5673 = vadd.f32 %v5624, %v5672
    %5674 = vmatmul.bf16.gmra.mxu0 %v577
    %v5675 = vpop.f32.mrf.mxu0
    %v5676 = vadd.f32 %v5627, %v5675
    %v5677 = vpop.f32.mrf.mxu0
    %v5678 = vadd.f32 %v5629, %v5677
    %5679 = vmatmul.bf16.gmra.mxu0 %v601
    %v5680 = vpop.f32.mrf.mxu0
    %v5681 = vadd.f32 %v5632, %v5680
    %v5682 = vpop.f32.mrf.mxu0
    %v5683 = vadd.f32 %v5634, %v5682
    %5684 = vmatmul.bf16.gmra.mxu0 %v625
    %v5685 = vpop.f32.mrf.mxu0
    %v5686 = vadd.f32 %v5637, %v5685
    %v5687 = vpop.f32.mrf.mxu0
    %v5688 = vadd.f32 %v5639, %v5687
    %5689 = vmatmul.bf16.gmra.mxu0 %v649
    %v5690 = vpop.f32.mrf.mxu0
    %v5691 = vadd.f32 %v5642, %v5690
    %v5692 = vpop.f32.mrf.mxu0
    %v5693 = vadd.f32 %v5644, %v5692
    %5694 = vmatmul.bf16.gmra.mxu0 %v673
    %v5695 = vpop.f32.mrf.mxu0
    %v5696 = vadd.f32 %v5647, %v5695
    %v5697 = vpop.f32.mrf.mxu0
    %v5698 = vadd.f32 %v5649, %v5697
    %5699 = vdwg.mxu0
    %5700 = vmatpush.bf16.msra.mxu0 %v4056
    %5701 = vmatpush.bf16.msra.mxu0 %v4052
    %5702 = vmatpush.bf16.msra.mxu0 %v4048
    %5703 = vmatpush.bf16.msra.mxu0 %v4044
    %5704 = vmatpush.bf16.msra.mxu0 %v4040
    %5705 = vmatpush.bf16.msra.mxu0 %v4036
    %5706 = vmatpush.bf16.msra.mxu0 %v4032
    %5707 = vmatpush.bf16.msra.mxu0 %v4028
    %5708 = vmatmul.bf16.gmra.mxu0 %v506
    %v5709 = vpop.f32.mrf.mxu0
    %v5710 = vadd.f32 %v5661, %v5709
    %v5711 = vpop.f32.mrf.mxu0
    %v5712 = vadd.f32 %v5663, %v5711
    %5713 = vmatmul.bf16.gmra.mxu0 %v530
    %v5714 = vpop.f32.mrf.mxu0
    %v5715 = vadd.f32 %v5666, %v5714
    %v5716 = vpop.f32.mrf.mxu0
    %v5717 = vadd.f32 %v5668, %v5716
    %5718 = vmatmul.bf16.gmra.mxu0 %v554
    %v5719 = vpop.f32.mrf.mxu0
    %v5720 = vadd.f32 %v5671, %v5719
    %v5721 = vpop.f32.mrf.mxu0
    %v5722 = vadd.f32 %v5673, %v5721
    %5723 = vmatmul.bf16.gmra.mxu0 %v578
    %v5724 = vpop.f32.mrf.mxu0
    %v5725 = vadd.f32 %v5676, %v5724
    %v5726 = vpop.f32.mrf.mxu0
    %v5727 = vadd.f32 %v5678, %v5726
    %5728 = vmatmul.bf16.gmra.mxu0 %v602
    %v5729 = vpop.f32.mrf.mxu0
    %v5730 = vadd.f32 %v5681, %v5729
    %v5731 = vpop.f32.mrf.mxu0
    %v5732 = vadd.f32 %v5683, %v5731
    %5733 = vmatmul.bf16.gmra.mxu0 %v626
    %v5734 = vpop.f32.mrf.mxu0
    %v5735 = vadd.f32 %v5686, %v5734
    %v5736 = vpop.f32.mrf.mxu0
    %v5737 = vadd.f32 %v5688, %v5736
    %5738 = vmatmul.bf16.gmra.mxu0 %v650
    %v5739 = vpop.f32.mrf.mxu0
    %v5740 = vadd.f32 %v5691, %v5739
    %v5741 = vpop.f32.mrf.mxu0
    %v5742 = vadd.f32 %v5693, %v5741
    %5743 = vmatmul.bf16.gmra.mxu0 %v674
    %v5744 = vpop.f32.mrf.mxu0
    %v5745 = vadd.f32 %v5696, %v5744
    %v5746 = vpop.f32.mrf.mxu0
    %v5747 = vadd.f32 %v5698, %v5746
    %5748 = vdwg.mxu0
    %5749 = vmatpush.bf16.msra.mxu0 %v4088
    %5750 = vmatpush.bf16.msra.mxu0 %v4084
    %5751 = vmatpush.bf16.msra.mxu0 %v4080
    %5752 = vmatpush.bf16.msra.mxu0 %v4076
    %5753 = vmatpush.bf16.msra.mxu0 %v4072
    %5754 = vmatpush.bf16.msra.mxu0 %v4068
    %5755 = vmatpush.bf16.msra.mxu0 %v4064
    %5756 = vmatpush.bf16.msra.mxu0 %v4060
    %5757 = vmatmul.bf16.gmra.mxu0 %v507
    %v5758 = vpop.f32.mrf.mxu0
    %v5759 = vadd.f32 %v5710, %v5758
    %v5760 = vpop.f32.mrf.mxu0
    %v5761 = vadd.f32 %v5712, %v5760
    %5762 = vmatmul.bf16.gmra.mxu0 %v531
    %v5763 = vpop.f32.mrf.mxu0
    %v5764 = vadd.f32 %v5715, %v5763
    %v5765 = vpop.f32.mrf.mxu0
    %v5766 = vadd.f32 %v5717, %v5765
    %5767 = vmatmul.bf16.gmra.mxu0 %v555
    %v5768 = vpop.f32.mrf.mxu0
    %v5769 = vadd.f32 %v5720, %v5768
    %v5770 = vpop.f32.mrf.mxu0
    %v5771 = vadd.f32 %v5722, %v5770
    %5772 = vmatmul.bf16.gmra.mxu0 %v579
    %v5773 = vpop.f32.mrf.mxu0
    %v5774 = vadd.f32 %v5725, %v5773
    %v5775 = vpop.f32.mrf.mxu0
    %v5776 = vadd.f32 %v5727, %v5775
    %5777 = vmatmul.bf16.gmra.mxu0 %v603
    %v5778 = vpop.f32.mrf.mxu0
    %v5779 = vadd.f32 %v5730, %v5778
    %v5780 = vpop.f32.mrf.mxu0
    %v5781 = vadd.f32 %v5732, %v5780
    %5782 = vmatmul.bf16.gmra.mxu0 %v627
    %v5783 = vpop.f32.mrf.mxu0
    %v5784 = vadd.f32 %v5735, %v5783
    %v5785 = vpop.f32.mrf.mxu0
    %v5786 = vadd.f32 %v5737, %v5785
    %5787 = vmatmul.bf16.gmra.mxu0 %v651
    %v5788 = vpop.f32.mrf.mxu0
    %v5789 = vadd.f32 %v5740, %v5788
    %v5790 = vpop.f32.mrf.mxu0
    %v5791 = vadd.f32 %v5742, %v5790
    %5792 = vmatmul.bf16.gmra.mxu0 %v675
    %v5793 = vpop.f32.mrf.mxu0
    %v5794 = vadd.f32 %v5745, %v5793
    %v5795 = vpop.f32.mrf.mxu0
    %v5796 = vadd.f32 %v5747, %v5795
    %5797 = vdwg.mxu0
    %5798 = vmatpush.bf16.msra.mxu0 %v4120
    %5799 = vmatpush.bf16.msra.mxu0 %v4116
    %5800 = vmatpush.bf16.msra.mxu0 %v4112
    %5801 = vmatpush.bf16.msra.mxu0 %v4108
    %5802 = vmatpush.bf16.msra.mxu0 %v4104
    %5803 = vmatpush.bf16.msra.mxu0 %v4100
    %5804 = vmatpush.bf16.msra.mxu0 %v4096
    %5805 = vmatpush.bf16.msra.mxu0 %v4092
    %5806 = vmatmul.bf16.gmra.mxu0 %v508
    %v5807 = vpop.f32.mrf.mxu0
    %v5808 = vadd.f32 %v5759, %v5807
    %v5809 = vpop.f32.mrf.mxu0
    %v5810 = vadd.f32 %v5761, %v5809
    %5811 = vmatmul.bf16.gmra.mxu0 %v532
    %v5812 = vpop.f32.mrf.mxu0
    %v5813 = vadd.f32 %v5764, %v5812
    %v5814 = vpop.f32.mrf.mxu0
    %v5815 = vadd.f32 %v5766, %v5814
    %5816 = vmatmul.bf16.gmra.mxu0 %v556
    %v5817 = vpop.f32.mrf.mxu0
    %v5818 = vadd.f32 %v5769, %v5817
    %v5819 = vpop.f32.mrf.mxu0
    %v5820 = vadd.f32 %v5771, %v5819
    %5821 = vmatmul.bf16.gmra.mxu0 %v580
    %v5822 = vpop.f32.mrf.mxu0
    %v5823 = vadd.f32 %v5774, %v5822
    %v5824 = vpop.f32.mrf.mxu0
    %v5825 = vadd.f32 %v5776, %v5824
    %5826 = vmatmul.bf16.gmra.mxu0 %v604
    %v5827 = vpop.f32.mrf.mxu0
    %v5828 = vadd.f32 %v5779, %v5827
    %v5829 = vpop.f32.mrf.mxu0
    %v5830 = vadd.f32 %v5781, %v5829
    %5831 = vmatmul.bf16.gmra.mxu0 %v628
    %v5832 = vpop.f32.mrf.mxu0
    %v5833 = vadd.f32 %v5784, %v5832
    %v5834 = vpop.f32.mrf.mxu0
    %v5835 = vadd.f32 %v5786, %v5834
    %5836 = vmatmul.bf16.gmra.mxu0 %v652
    %v5837 = vpop.f32.mrf.mxu0
    %v5838 = vadd.f32 %v5789, %v5837
    %v5839 = vpop.f32.mrf.mxu0
    %v5840 = vadd.f32 %v5791, %v5839
    %5841 = vmatmul.bf16.gmra.mxu0 %v676
    %v5842 = vpop.f32.mrf.mxu0
    %v5843 = vadd.f32 %v5794, %v5842
    %v5844 = vpop.f32.mrf.mxu0
    %v5845 = vadd.f32 %v5796, %v5844
    %5846 = vdwg.mxu0
    %5847 = vmatpush.bf16.msra.mxu0 %v4152
    %5848 = vmatpush.bf16.msra.mxu0 %v4148
    %5849 = vmatpush.bf16.msra.mxu0 %v4144
    %5850 = vmatpush.bf16.msra.mxu0 %v4140
    %5851 = vmatpush.bf16.msra.mxu0 %v4136
    %5852 = vmatpush.bf16.msra.mxu0 %v4132
    %5853 = vmatpush.bf16.msra.mxu0 %v4128
    %5854 = vmatpush.bf16.msra.mxu0 %v4124
    %5855 = vmatmul.bf16.gmra.mxu0 %v509
    %v5856 = vpop.f32.mrf.mxu0
    %v5857 = vadd.f32 %v5808, %v5856
    %v5858 = vpop.f32.mrf.mxu0
    %v5859 = vadd.f32 %v5810, %v5858
    %5860 = vmatmul.bf16.gmra.mxu0 %v533
    %v5861 = vpop.f32.mrf.mxu0
    %v5862 = vadd.f32 %v5813, %v5861
    %v5863 = vpop.f32.mrf.mxu0
    %v5864 = vadd.f32 %v5815, %v5863
    %5865 = vmatmul.bf16.gmra.mxu0 %v557
    %v5866 = vpop.f32.mrf.mxu0
    %v5867 = vadd.f32 %v5818, %v5866
    %v5868 = vpop.f32.mrf.mxu0
    %v5869 = vadd.f32 %v5820, %v5868
    %5870 = vmatmul.bf16.gmra.mxu0 %v581
    %v5871 = vpop.f32.mrf.mxu0
    %v5872 = vadd.f32 %v5823, %v5871
    %v5873 = vpop.f32.mrf.mxu0
    %v5874 = vadd.f32 %v5825, %v5873
    %5875 = vmatmul.bf16.gmra.mxu0 %v605
    %v5876 = vpop.f32.mrf.mxu0
    %v5877 = vadd.f32 %v5828, %v5876
    %v5878 = vpop.f32.mrf.mxu0
    %v5879 = vadd.f32 %v5830, %v5878
    %5880 = vmatmul.bf16.gmra.mxu0 %v629
    %v5881 = vpop.f32.mrf.mxu0
    %v5882 = vadd.f32 %v5833, %v5881
    %v5883 = vpop.f32.mrf.mxu0
    %v5884 = vadd.f32 %v5835, %v5883
    %5885 = vmatmul.bf16.gmra.mxu0 %v653
    %v5886 = vpop.f32.mrf.mxu0
    %v5887 = vadd.f32 %v5838, %v5886
    %v5888 = vpop.f32.mrf.mxu0
    %v5889 = vadd.f32 %v5840, %v5888
    %5890 = vmatmul.bf16.gmra.mxu0 %v677
    %v5891 = vpop.f32.mrf.mxu0
    %v5892 = vadd.f32 %v5843, %v5891
    %v5893 = vpop.f32.mrf.mxu0
    %v5894 = vadd.f32 %v5845, %v5893
    %5895 = vdwg.mxu0
    %5896 = vmatpush.bf16.msra.mxu0 %v4184
    %5897 = vmatpush.bf16.msra.mxu0 %v4180
    %5898 = vmatpush.bf16.msra.mxu0 %v4176
    %5899 = vmatpush.bf16.msra.mxu0 %v4172
    %5900 = vmatpush.bf16.msra.mxu0 %v4168
    %5901 = vmatpush.bf16.msra.mxu0 %v4164
    %5902 = vmatpush.bf16.msra.mxu0 %v4160
    %5903 = vmatpush.bf16.msra.mxu0 %v4156
    %5904 = vmatmul.bf16.gmra.mxu0 %v510
    %v5905 = vpop.f32.mrf.mxu0
    %v5906 = vadd.f32 %v5857, %v5905
    %v5907 = vpop.f32.mrf.mxu0
    %v5908 = vadd.f32 %v5859, %v5907
    %5909 = vmatmul.bf16.gmra.mxu0 %v534
    %v5910 = vpop.f32.mrf.mxu0
    %v5911 = vadd.f32 %v5862, %v5910
    %v5912 = vpop.f32.mrf.mxu0
    %v5913 = vadd.f32 %v5864, %v5912
    %5914 = vmatmul.bf16.gmra.mxu0 %v558
    %v5915 = vpop.f32.mrf.mxu0
    %v5916 = vadd.f32 %v5867, %v5915
    %v5917 = vpop.f32.mrf.mxu0
    %v5918 = vadd.f32 %v5869, %v5917
    %5919 = vmatmul.bf16.gmra.mxu0 %v582
    %v5920 = vpop.f32.mrf.mxu0
    %v5921 = vadd.f32 %v5872, %v5920
    %v5922 = vpop.f32.mrf.mxu0
    %v5923 = vadd.f32 %v5874, %v5922
    %5924 = vmatmul.bf16.gmra.mxu0 %v606
    %v5925 = vpop.f32.mrf.mxu0
    %v5926 = vadd.f32 %v5877, %v5925
    %v5927 = vpop.f32.mrf.mxu0
    %v5928 = vadd.f32 %v5879, %v5927
    %5929 = vmatmul.bf16.gmra.mxu0 %v630
    %v5930 = vpop.f32.mrf.mxu0
    %v5931 = vadd.f32 %v5882, %v5930
    %v5932 = vpop.f32.mrf.mxu0
    %v5933 = vadd.f32 %v5884, %v5932
    %5934 = vmatmul.bf16.gmra.mxu0 %v654
    %v5935 = vpop.f32.mrf.mxu0
    %v5936 = vadd.f32 %v5887, %v5935
    %v5937 = vpop.f32.mrf.mxu0
    %v5938 = vadd.f32 %v5889, %v5937
    %5939 = vmatmul.bf16.gmra.mxu0 %v678
    %v5940 = vpop.f32.mrf.mxu0
    %v5941 = vadd.f32 %v5892, %v5940
    %v5942 = vpop.f32.mrf.mxu0
    %v5943 = vadd.f32 %v5894, %v5942
    %5944 = vdwg.mxu0
    %5945 = vmatpush.bf16.msra.mxu0 %v4216
    %5946 = vmatpush.bf16.msra.mxu0 %v4212
    %5947 = vmatpush.bf16.msra.mxu0 %v4208
    %5948 = vmatpush.bf16.msra.mxu0 %v4204
    %5949 = vmatpush.bf16.msra.mxu0 %v4200
    %5950 = vmatpush.bf16.msra.mxu0 %v4196
    %5951 = vmatpush.bf16.msra.mxu0 %v4192
    %5952 = vmatpush.bf16.msra.mxu0 %v4188
    %5953 = vmatmul.bf16.gmra.mxu0 %v511
    %v5954 = vpop.f32.mrf.mxu0
    %v5955 = vadd.f32 %v5906, %v5954
    %v5956 = vpop.f32.mrf.mxu0
    %v5957 = vadd.f32 %v5908, %v5956
    %5958 = vmatmul.bf16.gmra.mxu0 %v535
    %v5959 = vpop.f32.mrf.mxu0
    %v5960 = vadd.f32 %v5911, %v5959
    %v5961 = vpop.f32.mrf.mxu0
    %v5962 = vadd.f32 %v5913, %v5961
    %5963 = vmatmul.bf16.gmra.mxu0 %v559
    %v5964 = vpop.f32.mrf.mxu0
    %v5965 = vadd.f32 %v5916, %v5964
    %v5966 = vpop.f32.mrf.mxu0
    %v5967 = vadd.f32 %v5918, %v5966
    %5968 = vmatmul.bf16.gmra.mxu0 %v583
    %v5969 = vpop.f32.mrf.mxu0
    %v5970 = vadd.f32 %v5921, %v5969
    %v5971 = vpop.f32.mrf.mxu0
    %v5972 = vadd.f32 %v5923, %v5971
    %5973 = vmatmul.bf16.gmra.mxu0 %v607
    %v5974 = vpop.f32.mrf.mxu0
    %v5975 = vadd.f32 %v5926, %v5974
    %v5976 = vpop.f32.mrf.mxu0
    %v5977 = vadd.f32 %v5928, %v5976
    %5978 = vmatmul.bf16.gmra.mxu0 %v631
    %v5979 = vpop.f32.mrf.mxu0
    %v5980 = vadd.f32 %v5931, %v5979
    %v5981 = vpop.f32.mrf.mxu0
    %v5982 = vadd.f32 %v5933, %v5981
    %5983 = vmatmul.bf16.gmra.mxu0 %v655
    %v5984 = vpop.f32.mrf.mxu0
    %v5985 = vadd.f32 %v5936, %v5984
    %v5986 = vpop.f32.mrf.mxu0
    %v5987 = vadd.f32 %v5938, %v5986
    %5988 = vmatmul.bf16.gmra.mxu0 %v679
    %v5989 = vpop.f32.mrf.mxu0
    %v5990 = vadd.f32 %v5941, %v5989
    %v5991 = vpop.f32.mrf.mxu0
    %v5992 = vadd.f32 %v5943, %v5991
    %5993 = vdwg.mxu0
    %5994 = vmatpush.bf16.msra.mxu0 %v4248
    %5995 = vmatpush.bf16.msra.mxu0 %v4244
    %5996 = vmatpush.bf16.msra.mxu0 %v4240
    %5997 = vmatpush.bf16.msra.mxu0 %v4236
    %5998 = vmatpush.bf16.msra.mxu0 %v4232
    %5999 = vmatpush.bf16.msra.mxu0 %v4228
    %6000 = vmatpush.bf16.msra.mxu0 %v4224
    %6001 = vmatpush.bf16.msra.mxu0 %v4220
    %6002 = vmatmul.bf16.gmra.mxu0 %v512
    %v6003 = vpop.f32.mrf.mxu0
    %v6004 = vadd.f32 %v5955, %v6003
    %v6005 = vpop.f32.mrf.mxu0
    %v6006 = vadd.f32 %v5957, %v6005
    %6007 = vmatmul.bf16.gmra.mxu0 %v536
    %v6008 = vpop.f32.mrf.mxu0
    %v6009 = vadd.f32 %v5960, %v6008
    %v6010 = vpop.f32.mrf.mxu0
    %v6011 = vadd.f32 %v5962, %v6010
    %6012 = vmatmul.bf16.gmra.mxu0 %v560
    %v6013 = vpop.f32.mrf.mxu0
    %v6014 = vadd.f32 %v5965, %v6013
    %v6015 = vpop.f32.mrf.mxu0
    %v6016 = vadd.f32 %v5967, %v6015
    %6017 = vmatmul.bf16.gmra.mxu0 %v584
    %v6018 = vpop.f32.mrf.mxu0
    %v6019 = vadd.f32 %v5970, %v6018
    %v6020 = vpop.f32.mrf.mxu0
    %v6021 = vadd.f32 %v5972, %v6020
    %6022 = vmatmul.bf16.gmra.mxu0 %v608
    %v6023 = vpop.f32.mrf.mxu0
    %v6024 = vadd.f32 %v5975, %v6023
    %v6025 = vpop.f32.mrf.mxu0
    %v6026 = vadd.f32 %v5977, %v6025
    %6027 = vmatmul.bf16.gmra.mxu0 %v632
    %v6028 = vpop.f32.mrf.mxu0
    %v6029 = vadd.f32 %v5980, %v6028
    %v6030 = vpop.f32.mrf.mxu0
    %v6031 = vadd.f32 %v5982, %v6030
    %6032 = vmatmul.bf16.gmra.mxu0 %v656
    %v6033 = vpop.f32.mrf.mxu0
    %v6034 = vadd.f32 %v5985, %v6033
    %v6035 = vpop.f32.mrf.mxu0
    %v6036 = vadd.f32 %v5987, %v6035
    %6037 = vmatmul.bf16.gmra.mxu0 %v680
    %v6038 = vpop.f32.mrf.mxu0
    %v6039 = vadd.f32 %v5990, %v6038
    %v6040 = vpop.f32.mrf.mxu0
    %v6041 = vadd.f32 %v5992, %v6040
    %6042 = vdwg.mxu0
    %6043 = vmatpush.bf16.msra.mxu0 %v4280
    %6044 = vmatpush.bf16.msra.mxu0 %v4276
    %6045 = vmatpush.bf16.msra.mxu0 %v4272
    %6046 = vmatpush.bf16.msra.mxu0 %v4268
    %6047 = vmatpush.bf16.msra.mxu0 %v4264
    %6048 = vmatpush.bf16.msra.mxu0 %v4260
    %6049 = vmatpush.bf16.msra.mxu0 %v4256
    %6050 = vmatpush.bf16.msra.mxu0 %v4252
    %6051 = vmatmul.bf16.gmra.mxu0 %v513
    %v6052 = vpop.f32.mrf.mxu0
    %v6053 = vadd.f32 %v6004, %v6052
    %v6054 = vpop.f32.mrf.mxu0
    %v6055 = vadd.f32 %v6006, %v6054
    %6056 = vmatmul.bf16.gmra.mxu0 %v537
    %v6057 = vpop.f32.mrf.mxu0
    %v6058 = vadd.f32 %v6009, %v6057
    %v6059 = vpop.f32.mrf.mxu0
    %v6060 = vadd.f32 %v6011, %v6059
    %6061 = vmatmul.bf16.gmra.mxu0 %v561
    %v6062 = vpop.f32.mrf.mxu0
    %v6063 = vadd.f32 %v6014, %v6062
    %v6064 = vpop.f32.mrf.mxu0
    %v6065 = vadd.f32 %v6016, %v6064
    %6066 = vmatmul.bf16.gmra.mxu0 %v585
    %v6067 = vpop.f32.mrf.mxu0
    %v6068 = vadd.f32 %v6019, %v6067
    %v6069 = vpop.f32.mrf.mxu0
    %v6070 = vadd.f32 %v6021, %v6069
    %6071 = vmatmul.bf16.gmra.mxu0 %v609
    %v6072 = vpop.f32.mrf.mxu0
    %v6073 = vadd.f32 %v6024, %v6072
    %v6074 = vpop.f32.mrf.mxu0
    %v6075 = vadd.f32 %v6026, %v6074
    %6076 = vmatmul.bf16.gmra.mxu0 %v633
    %v6077 = vpop.f32.mrf.mxu0
    %v6078 = vadd.f32 %v6029, %v6077
    %v6079 = vpop.f32.mrf.mxu0
    %v6080 = vadd.f32 %v6031, %v6079
    %6081 = vmatmul.bf16.gmra.mxu0 %v657
    %v6082 = vpop.f32.mrf.mxu0
    %v6083 = vadd.f32 %v6034, %v6082
    %v6084 = vpop.f32.mrf.mxu0
    %v6085 = vadd.f32 %v6036, %v6084
    %6086 = vmatmul.bf16.gmra.mxu0 %v681
    %v6087 = vpop.f32.mrf.mxu0
    %v6088 = vadd.f32 %v6039, %v6087
    %v6089 = vpop.f32.mrf.mxu0
    %v6090 = vadd.f32 %v6041, %v6089
    %6091 = vdwg.mxu0
    %6092 = vmatpush.bf16.msra.mxu0 %v4312
    %6093 = vmatpush.bf16.msra.mxu0 %v4308
    %6094 = vmatpush.bf16.msra.mxu0 %v4304
    %6095 = vmatpush.bf16.msra.mxu0 %v4300
    %6096 = vmatpush.bf16.msra.mxu0 %v4296
    %6097 = vmatpush.bf16.msra.mxu0 %v4292
    %6098 = vmatpush.bf16.msra.mxu0 %v4288
    %6099 = vmatpush.bf16.msra.mxu0 %v4284
    %6100 = vmatmul.bf16.gmra.mxu0 %v514
    %v6101 = vpop.f32.mrf.mxu0
    %v6102 = vadd.f32 %v6053, %v6101
    %v6103 = vpop.f32.mrf.mxu0
    %v6104 = vadd.f32 %v6055, %v6103
    %6105 = vmatmul.bf16.gmra.mxu0 %v538
    %v6106 = vpop.f32.mrf.mxu0
    %v6107 = vadd.f32 %v6058, %v6106
    %v6108 = vpop.f32.mrf.mxu0
    %v6109 = vadd.f32 %v6060, %v6108
    %6110 = vmatmul.bf16.gmra.mxu0 %v562
    %v6111 = vpop.f32.mrf.mxu0
    %v6112 = vadd.f32 %v6063, %v6111
    %v6113 = vpop.f32.mrf.mxu0
    %v6114 = vadd.f32 %v6065, %v6113
    %6115 = vmatmul.bf16.gmra.mxu0 %v586
    %v6116 = vpop.f32.mrf.mxu0
    %v6117 = vadd.f32 %v6068, %v6116
    %v6118 = vpop.f32.mrf.mxu0
    %v6119 = vadd.f32 %v6070, %v6118
    %6120 = vmatmul.bf16.gmra.mxu0 %v610
    %v6121 = vpop.f32.mrf.mxu0
    %v6122 = vadd.f32 %v6073, %v6121
    %v6123 = vpop.f32.mrf.mxu0
    %v6124 = vadd.f32 %v6075, %v6123
    %6125 = vmatmul.bf16.gmra.mxu0 %v634
    %v6126 = vpop.f32.mrf.mxu0
    %v6127 = vadd.f32 %v6078, %v6126
    %v6128 = vpop.f32.mrf.mxu0
    %v6129 = vadd.f32 %v6080, %v6128
    %6130 = vmatmul.bf16.gmra.mxu0 %v658
    %v6131 = vpop.f32.mrf.mxu0
    %v6132 = vadd.f32 %v6083, %v6131
    %v6133 = vpop.f32.mrf.mxu0
    %v6134 = vadd.f32 %v6085, %v6133
    %6135 = vmatmul.bf16.gmra.mxu0 %v682
    %v6136 = vpop.f32.mrf.mxu0
    %v6137 = vadd.f32 %v6088, %v6136
    %v6138 = vpop.f32.mrf.mxu0
    %v6139 = vadd.f32 %v6090, %v6138
    %6140 = vdwg.mxu0
    %6141 = vmatpush.bf16.msra.mxu0 %v4344
    %6142 = vmatpush.bf16.msra.mxu0 %v4340
    %6143 = vmatpush.bf16.msra.mxu0 %v4336
    %6144 = vmatpush.bf16.msra.mxu0 %v4332
    %6145 = vmatpush.bf16.msra.mxu0 %v4328
    %6146 = vmatpush.bf16.msra.mxu0 %v4324
    %6147 = vmatpush.bf16.msra.mxu0 %v4320
    %6148 = vmatpush.bf16.msra.mxu0 %v4316
    %6149 = vmatmul.bf16.gmra.mxu0 %v515
    %v6150 = vpop.f32.mrf.mxu0
    %v6151 = vadd.f32 %v6102, %v6150
    %v6152 = vpop.f32.mrf.mxu0
    %v6153 = vadd.f32 %v6104, %v6152
    %6154 = vmatmul.bf16.gmra.mxu0 %v539
    %v6155 = vpop.f32.mrf.mxu0
    %v6156 = vadd.f32 %v6107, %v6155
    %v6157 = vpop.f32.mrf.mxu0
    %v6158 = vadd.f32 %v6109, %v6157
    %6159 = vmatmul.bf16.gmra.mxu0 %v563
    %v6160 = vpop.f32.mrf.mxu0
    %v6161 = vadd.f32 %v6112, %v6160
    %v6162 = vpop.f32.mrf.mxu0
    %v6163 = vadd.f32 %v6114, %v6162
    %6164 = vmatmul.bf16.gmra.mxu0 %v587
    %v6165 = vpop.f32.mrf.mxu0
    %v6166 = vadd.f32 %v6117, %v6165
    %v6167 = vpop.f32.mrf.mxu0
    %v6168 = vadd.f32 %v6119, %v6167
    %6169 = vmatmul.bf16.gmra.mxu0 %v611
    %v6170 = vpop.f32.mrf.mxu0
    %v6171 = vadd.f32 %v6122, %v6170
    %v6172 = vpop.f32.mrf.mxu0
    %v6173 = vadd.f32 %v6124, %v6172
    %6174 = vmatmul.bf16.gmra.mxu0 %v635
    %v6175 = vpop.f32.mrf.mxu0
    %v6176 = vadd.f32 %v6127, %v6175
    %v6177 = vpop.f32.mrf.mxu0
    %v6178 = vadd.f32 %v6129, %v6177
    %6179 = vmatmul.bf16.gmra.mxu0 %v659
    %v6180 = vpop.f32.mrf.mxu0
    %v6181 = vadd.f32 %v6132, %v6180
    %v6182 = vpop.f32.mrf.mxu0
    %v6183 = vadd.f32 %v6134, %v6182
    %6184 = vmatmul.bf16.gmra.mxu0 %v683
    %v6185 = vpop.f32.mrf.mxu0
    %v6186 = vadd.f32 %v6137, %v6185
    %v6187 = vpop.f32.mrf.mxu0
    %v6188 = vadd.f32 %v6139, %v6187
    %6189 = vdwg.mxu0
    %6190 = vmatpush.bf16.msra.mxu0 %v4376
    %6191 = vmatpush.bf16.msra.mxu0 %v4372
    %6192 = vmatpush.bf16.msra.mxu0 %v4368
    %6193 = vmatpush.bf16.msra.mxu0 %v4364
    %6194 = vmatpush.bf16.msra.mxu0 %v4360
    %6195 = vmatpush.bf16.msra.mxu0 %v4356
    %6196 = vmatpush.bf16.msra.mxu0 %v4352
    %6197 = vmatpush.bf16.msra.mxu0 %v4348
    %6198 = vmatmul.bf16.gmra.mxu0 %v516
    %v6199 = vpop.f32.mrf.mxu0
    %v6200 = vadd.f32 %v6151, %v6199
    %v6201 = vpop.f32.mrf.mxu0
    %v6202 = vadd.f32 %v6153, %v6201
    %6203 = vmatmul.bf16.gmra.mxu0 %v540
    %v6204 = vpop.f32.mrf.mxu0
    %v6205 = vadd.f32 %v6156, %v6204
    %v6206 = vpop.f32.mrf.mxu0
    %v6207 = vadd.f32 %v6158, %v6206
    %6208 = vmatmul.bf16.gmra.mxu0 %v564
    %v6209 = vpop.f32.mrf.mxu0
    %v6210 = vadd.f32 %v6161, %v6209
    %v6211 = vpop.f32.mrf.mxu0
    %v6212 = vadd.f32 %v6163, %v6211
    %6213 = vmatmul.bf16.gmra.mxu0 %v588
    %v6214 = vpop.f32.mrf.mxu0
    %v6215 = vadd.f32 %v6166, %v6214
    %v6216 = vpop.f32.mrf.mxu0
    %v6217 = vadd.f32 %v6168, %v6216
    %6218 = vmatmul.bf16.gmra.mxu0 %v612
    %v6219 = vpop.f32.mrf.mxu0
    %v6220 = vadd.f32 %v6171, %v6219
    %v6221 = vpop.f32.mrf.mxu0
    %v6222 = vadd.f32 %v6173, %v6221
    %6223 = vmatmul.bf16.gmra.mxu0 %v636
    %v6224 = vpop.f32.mrf.mxu0
    %v6225 = vadd.f32 %v6176, %v6224
    %v6226 = vpop.f32.mrf.mxu0
    %v6227 = vadd.f32 %v6178, %v6226
    %6228 = vmatmul.bf16.gmra.mxu0 %v660
    %v6229 = vpop.f32.mrf.mxu0
    %v6230 = vadd.f32 %v6181, %v6229
    %v6231 = vpop.f32.mrf.mxu0
    %v6232 = vadd.f32 %v6183, %v6231
    %6233 = vmatmul.bf16.gmra.mxu0 %v684
    %v6234 = vpop.f32.mrf.mxu0
    %v6235 = vadd.f32 %v6186, %v6234
    %v6236 = vpop.f32.mrf.mxu0
    %v6237 = vadd.f32 %v6188, %v6236
    %6238 = vdwg.mxu0
    %6239 = vmatpush.bf16.msra.mxu0 %v4408
    %6240 = vmatpush.bf16.msra.mxu0 %v4404
    %6241 = vmatpush.bf16.msra.mxu0 %v4400
    %6242 = vmatpush.bf16.msra.mxu0 %v4396
    %6243 = vmatpush.bf16.msra.mxu0 %v4392
    %6244 = vmatpush.bf16.msra.mxu0 %v4388
    %6245 = vmatpush.bf16.msra.mxu0 %v4384
    %6246 = vmatpush.bf16.msra.mxu0 %v4380
    %6247 = vmatmul.bf16.gmra.mxu0 %v517
    %v6248 = vpop.f32.mrf.mxu0
    %v6249 = vadd.f32 %v6200, %v6248
    %v6250 = vpop.f32.mrf.mxu0
    %v6251 = vadd.f32 %v6202, %v6250
    %6252 = vmatmul.bf16.gmra.mxu0 %v541
    %v6253 = vpop.f32.mrf.mxu0
    %v6254 = vadd.f32 %v6205, %v6253
    %v6255 = vpop.f32.mrf.mxu0
    %v6256 = vadd.f32 %v6207, %v6255
    %6257 = vmatmul.bf16.gmra.mxu0 %v565
    %v6258 = vpop.f32.mrf.mxu0
    %v6259 = vadd.f32 %v6210, %v6258
    %v6260 = vpop.f32.mrf.mxu0
    %v6261 = vadd.f32 %v6212, %v6260
    %6262 = vmatmul.bf16.gmra.mxu0 %v589
    %v6263 = vpop.f32.mrf.mxu0
    %v6264 = vadd.f32 %v6215, %v6263
    %v6265 = vpop.f32.mrf.mxu0
    %v6266 = vadd.f32 %v6217, %v6265
    %6267 = vmatmul.bf16.gmra.mxu0 %v613
    %v6268 = vpop.f32.mrf.mxu0
    %v6269 = vadd.f32 %v6220, %v6268
    %v6270 = vpop.f32.mrf.mxu0
    %v6271 = vadd.f32 %v6222, %v6270
    %6272 = vmatmul.bf16.gmra.mxu0 %v637
    %v6273 = vpop.f32.mrf.mxu0
    %v6274 = vadd.f32 %v6225, %v6273
    %v6275 = vpop.f32.mrf.mxu0
    %v6276 = vadd.f32 %v6227, %v6275
    %6277 = vmatmul.bf16.gmra.mxu0 %v661
    %v6278 = vpop.f32.mrf.mxu0
    %v6279 = vadd.f32 %v6230, %v6278
    %v6280 = vpop.f32.mrf.mxu0
    %v6281 = vadd.f32 %v6232, %v6280
    %6282 = vmatmul.bf16.gmra.mxu0 %v685
    %v6283 = vpop.f32.mrf.mxu0
    %v6284 = vadd.f32 %v6235, %v6283
    %v6285 = vpop.f32.mrf.mxu0
    %v6286 = vadd.f32 %v6237, %v6285
    %6287 = vdwg.mxu0
    %6288 = vmatpush.bf16.msra.mxu0 %v4440
    %6289 = vmatpush.bf16.msra.mxu0 %v4436
    %6290 = vmatpush.bf16.msra.mxu0 %v4432
    %6291 = vmatpush.bf16.msra.mxu0 %v4428
    %6292 = vmatpush.bf16.msra.mxu0 %v4424
    %6293 = vmatpush.bf16.msra.mxu0 %v4420
    %6294 = vmatpush.bf16.msra.mxu0 %v4416
    %6295 = vmatpush.bf16.msra.mxu0 %v4412
    %6296 = vmatmul.bf16.gmra.mxu0 %v518
    %v6297 = vpop.f32.mrf.mxu0
    %v6298 = vadd.f32 %v6249, %v6297
    %v6299 = vpop.f32.mrf.mxu0
    %v6300 = vadd.f32 %v6251, %v6299
    %6301 = vmatmul.bf16.gmra.mxu0 %v542
    %v6302 = vpop.f32.mrf.mxu0
    %v6303 = vadd.f32 %v6254, %v6302
    %v6304 = vpop.f32.mrf.mxu0
    %v6305 = vadd.f32 %v6256, %v6304
    %6306 = vmatmul.bf16.gmra.mxu0 %v566
    %v6307 = vpop.f32.mrf.mxu0
    %v6308 = vadd.f32 %v6259, %v6307
    %v6309 = vpop.f32.mrf.mxu0
    %v6310 = vadd.f32 %v6261, %v6309
    %6311 = vmatmul.bf16.gmra.mxu0 %v590
    %v6312 = vpop.f32.mrf.mxu0
    %v6313 = vadd.f32 %v6264, %v6312
    %v6314 = vpop.f32.mrf.mxu0
    %v6315 = vadd.f32 %v6266, %v6314
    %6316 = vmatmul.bf16.gmra.mxu0 %v614
    %v6317 = vpop.f32.mrf.mxu0
    %v6318 = vadd.f32 %v6269, %v6317
    %v6319 = vpop.f32.mrf.mxu0
    %v6320 = vadd.f32 %v6271, %v6319
    %6321 = vmatmul.bf16.gmra.mxu0 %v638
    %v6322 = vpop.f32.mrf.mxu0
    %v6323 = vadd.f32 %v6274, %v6322
    %v6324 = vpop.f32.mrf.mxu0
    %v6325 = vadd.f32 %v6276, %v6324
    %6326 = vmatmul.bf16.gmra.mxu0 %v662
    %v6327 = vpop.f32.mrf.mxu0
    %v6328 = vadd.f32 %v6279, %v6327
    %v6329 = vpop.f32.mrf.mxu0
    %v6330 = vadd.f32 %v6281, %v6329
    %6331 = vmatmul.bf16.gmra.mxu0 %v686
    %v6332 = vpop.f32.mrf.mxu0
    %v6333 = vadd.f32 %v6284, %v6332
    %v6334 = vpop.f32.mrf.mxu0
    %v6335 = vadd.f32 %v6286, %v6334
    %6336 = vdwg.mxu0
    %6337 = vmatpush.bf16.msra.mxu0 %v4472
    %6338 = vmatpush.bf16.msra.mxu0 %v4468
    %6339 = vmatpush.bf16.msra.mxu0 %v4464
    %6340 = vmatpush.bf16.msra.mxu0 %v4460
    %6341 = vmatpush.bf16.msra.mxu0 %v4456
    %6342 = vmatpush.bf16.msra.mxu0 %v4452
    %6343 = vmatpush.bf16.msra.mxu0 %v4448
    %6344 = vmatpush.bf16.msra.mxu0 %v4444
    %6345 = vmatmul.bf16.gmra.mxu0 %v519
    %v6346 = vpop.f32.mrf.mxu0
    %v6347 = vadd.f32 %v6298, %v6346
    %v6348 = vpop.f32.mrf.mxu0
    %v6349 = vadd.f32 %v6300, %v6348
    %6350 = vmatmul.bf16.gmra.mxu0 %v543
    %v6351 = vpop.f32.mrf.mxu0
    %v6352 = vadd.f32 %v6303, %v6351
    %v6353 = vpop.f32.mrf.mxu0
    %v6354 = vadd.f32 %v6305, %v6353
    %6355 = vmatmul.bf16.gmra.mxu0 %v567
    %v6356 = vpop.f32.mrf.mxu0
    %v6357 = vadd.f32 %v6308, %v6356
    %v6358 = vpop.f32.mrf.mxu0
    %v6359 = vadd.f32 %v6310, %v6358
    %6360 = vmatmul.bf16.gmra.mxu0 %v591
    %v6361 = vpop.f32.mrf.mxu0
    %v6362 = vadd.f32 %v6313, %v6361
    %v6363 = vpop.f32.mrf.mxu0
    %v6364 = vadd.f32 %v6315, %v6363
    %6365 = vmatmul.bf16.gmra.mxu0 %v615
    %v6366 = vpop.f32.mrf.mxu0
    %v6367 = vadd.f32 %v6318, %v6366
    %v6368 = vpop.f32.mrf.mxu0
    %v6369 = vadd.f32 %v6320, %v6368
    %6370 = vmatmul.bf16.gmra.mxu0 %v639
    %v6371 = vpop.f32.mrf.mxu0
    %v6372 = vadd.f32 %v6323, %v6371
    %v6373 = vpop.f32.mrf.mxu0
    %v6374 = vadd.f32 %v6325, %v6373
    %6375 = vmatmul.bf16.gmra.mxu0 %v663
    %v6376 = vpop.f32.mrf.mxu0
    %v6377 = vadd.f32 %v6328, %v6376
    %v6378 = vpop.f32.mrf.mxu0
    %v6379 = vadd.f32 %v6330, %v6378
    %6380 = vmatmul.bf16.gmra.mxu0 %v687
    %v6381 = vpop.f32.mrf.mxu0
    %v6382 = vadd.f32 %v6333, %v6381
    %v6383 = vpop.f32.mrf.mxu0
    %v6384 = vadd.f32 %v6335, %v6383
    %6385 = vdwg.mxu0
    %6386 = vmatpush.bf16.msra.mxu0 %v4504
    %6387 = vmatpush.bf16.msra.mxu0 %v4500
    %6388 = vmatpush.bf16.msra.mxu0 %v4496
    %6389 = vmatpush.bf16.msra.mxu0 %v4492
    %6390 = vmatpush.bf16.msra.mxu0 %v4488
    %6391 = vmatpush.bf16.msra.mxu0 %v4484
    %6392 = vmatpush.bf16.msra.mxu0 %v4480
    %6393 = vmatpush.bf16.msra.mxu0 %v4476
    %6394 = vmatmul.bf16.gmra.mxu0 %v520
    %v6395 = vpop.f32.mrf.mxu0
    %v6396 = vadd.f32 %v6347, %v6395
    %v6397 = vpop.f32.mrf.mxu0
    %v6398 = vadd.f32 %v6349, %v6397
    %6399 = vmatmul.bf16.gmra.mxu0 %v544
    %v6400 = vpop.f32.mrf.mxu0
    %v6401 = vadd.f32 %v6352, %v6400
    %v6402 = vpop.f32.mrf.mxu0
    %v6403 = vadd.f32 %v6354, %v6402
    %6404 = vmatmul.bf16.gmra.mxu0 %v568
    %v6405 = vpop.f32.mrf.mxu0
    %v6406 = vadd.f32 %v6357, %v6405
    %v6407 = vpop.f32.mrf.mxu0
    %v6408 = vadd.f32 %v6359, %v6407
    %6409 = vmatmul.bf16.gmra.mxu0 %v592
    %v6410 = vpop.f32.mrf.mxu0
    %v6411 = vadd.f32 %v6362, %v6410
    %v6412 = vpop.f32.mrf.mxu0
    %v6413 = vadd.f32 %v6364, %v6412
    %6414 = vmatmul.bf16.gmra.mxu0 %v616
    %v6415 = vpop.f32.mrf.mxu0
    %v6416 = vadd.f32 %v6367, %v6415
    %v6417 = vpop.f32.mrf.mxu0
    %v6418 = vadd.f32 %v6369, %v6417
    %6419 = vmatmul.bf16.gmra.mxu0 %v640
    %v6420 = vpop.f32.mrf.mxu0
    %v6421 = vadd.f32 %v6372, %v6420
    %v6422 = vpop.f32.mrf.mxu0
    %v6423 = vadd.f32 %v6374, %v6422
    %6424 = vmatmul.bf16.gmra.mxu0 %v664
    %v6425 = vpop.f32.mrf.mxu0
    %v6426 = vadd.f32 %v6377, %v6425
    %v6427 = vpop.f32.mrf.mxu0
    %v6428 = vadd.f32 %v6379, %v6427
    %6429 = vmatmul.bf16.gmra.mxu0 %v688
    %v6430 = vpop.f32.mrf.mxu0
    %v6431 = vadd.f32 %v6382, %v6430
    %v6432 = vpop.f32.mrf.mxu0
    %v6433 = vadd.f32 %v6384, %v6432
    %6434 = vdwg.mxu0
    %6435 = vmatpush.bf16.msra.mxu0 %v4536
    %6436 = vmatpush.bf16.msra.mxu0 %v4532
    %6437 = vmatpush.bf16.msra.mxu0 %v4528
    %6438 = vmatpush.bf16.msra.mxu0 %v4524
    %6439 = vmatpush.bf16.msra.mxu0 %v4520
    %6440 = vmatpush.bf16.msra.mxu0 %v4516
    %6441 = vmatpush.bf16.msra.mxu0 %v4512
    %6442 = vmatpush.bf16.msra.mxu0 %v4508
    %6443 = vmatmul.bf16.gmra.mxu0 %v521
    %v6444 = vpop.f32.mrf.mxu0
    %v6445 = vadd.f32 %v6396, %v6444
    %v6446 = vpop.f32.mrf.mxu0
    %v6447 = vadd.f32 %v6398, %v6446
    %6448 = vmatmul.bf16.gmra.mxu0 %v545
    %v6449 = vpop.f32.mrf.mxu0
    %v6450 = vadd.f32 %v6401, %v6449
    %v6451 = vpop.f32.mrf.mxu0
    %v6452 = vadd.f32 %v6403, %v6451
    %6453 = vmatmul.bf16.gmra.mxu0 %v569
    %v6454 = vpop.f32.mrf.mxu0
    %v6455 = vadd.f32 %v6406, %v6454
    %v6456 = vpop.f32.mrf.mxu0
    %v6457 = vadd.f32 %v6408, %v6456
    %6458 = vmatmul.bf16.gmra.mxu0 %v593
    %v6459 = vpop.f32.mrf.mxu0
    %v6460 = vadd.f32 %v6411, %v6459
    %v6461 = vpop.f32.mrf.mxu0
    %v6462 = vadd.f32 %v6413, %v6461
    %6463 = vmatmul.bf16.gmra.mxu0 %v617
    %v6464 = vpop.f32.mrf.mxu0
    %v6465 = vadd.f32 %v6416, %v6464
    %v6466 = vpop.f32.mrf.mxu0
    %v6467 = vadd.f32 %v6418, %v6466
    %6468 = vmatmul.bf16.gmra.mxu0 %v641
    %v6469 = vpop.f32.mrf.mxu0
    %v6470 = vadd.f32 %v6421, %v6469
    %v6471 = vpop.f32.mrf.mxu0
    %v6472 = vadd.f32 %v6423, %v6471
    %6473 = vmatmul.bf16.gmra.mxu0 %v665
    %v6474 = vpop.f32.mrf.mxu0
    %v6475 = vadd.f32 %v6426, %v6474
    %v6476 = vpop.f32.mrf.mxu0
    %v6477 = vadd.f32 %v6428, %v6476
    %6478 = vmatmul.bf16.gmra.mxu0 %v689
    %v6479 = vpop.f32.mrf.mxu0
    %v6480 = vadd.f32 %v6431, %v6479
    %v6481 = vpop.f32.mrf.mxu0
    %v6482 = vadd.f32 %v6433, %v6481
    %6483 = vdwg.mxu0
    %6484 = vmatpush.bf16.msra.mxu0 %v3801
    %6485 = vmatpush.bf16.msra.mxu0 %v3797
    %6486 = vmatpush.bf16.msra.mxu0 %v3793
    %6487 = vmatpush.bf16.msra.mxu0 %v3789
    %6488 = vmatpush.bf16.msra.mxu0 %v3785
    %6489 = vmatpush.bf16.msra.mxu0 %v3781
    %6490 = vmatpush.bf16.msra.mxu0 %v3777
    %6491 = vmatpush.bf16.msra.mxu0 %v3773
    %6492 = vmatmul.bf16.gmra.mxu0 %v498
    %v6493 = vpop.f32.mrf.mxu0
    %v6494 = vadd.f32 %v1461, %v6493
    %v6495 = vpop.f32.mrf.mxu0
    %v6496 = vadd.f32 %v1461, %v6495
    %6497 = vmatmul.bf16.gmra.mxu0 %v522
    %v6498 = vpop.f32.mrf.mxu0
    %v6499 = vadd.f32 %v1461, %v6498
    %v6500 = vpop.f32.mrf.mxu0
    %v6501 = vadd.f32 %v1461, %v6500
    %6502 = vmatmul.bf16.gmra.mxu0 %v546
    %v6503 = vpop.f32.mrf.mxu0
    %v6504 = vadd.f32 %v1461, %v6503
    %v6505 = vpop.f32.mrf.mxu0
    %v6506 = vadd.f32 %v1461, %v6505
    %6507 = vmatmul.bf16.gmra.mxu0 %v570
    %v6508 = vpop.f32.mrf.mxu0
    %v6509 = vadd.f32 %v1461, %v6508
    %v6510 = vpop.f32.mrf.mxu0
    %v6511 = vadd.f32 %v1461, %v6510
    %6512 = vmatmul.bf16.gmra.mxu0 %v594
    %v6513 = vpop.f32.mrf.mxu0
    %v6514 = vadd.f32 %v1461, %v6513
    %v6515 = vpop.f32.mrf.mxu0
    %v6516 = vadd.f32 %v1461, %v6515
    %6517 = vmatmul.bf16.gmra.mxu0 %v618
    %v6518 = vpop.f32.mrf.mxu0
    %v6519 = vadd.f32 %v1461, %v6518
    %v6520 = vpop.f32.mrf.mxu0
    %v6521 = vadd.f32 %v1461, %v6520
    %6522 = vmatmul.bf16.gmra.mxu0 %v642
    %v6523 = vpop.f32.mrf.mxu0
    %v6524 = vadd.f32 %v1461, %v6523
    %v6525 = vpop.f32.mrf.mxu0
    %v6526 = vadd.f32 %v1461, %v6525
    %6527 = vmatmul.bf16.gmra.mxu0 %v666
    %v6528 = vpop.f32.mrf.mxu0
    %v6529 = vadd.f32 %v1461, %v6528
    %v6530 = vpop.f32.mrf.mxu0
    %v6531 = vadd.f32 %v1461, %v6530
    %6532 = vdwg.mxu0
    %6533 = vmatpush.bf16.msra.mxu0 %v3833
    %6534 = vmatpush.bf16.msra.mxu0 %v3829
    %6535 = vmatpush.bf16.msra.mxu0 %v3825
    %6536 = vmatpush.bf16.msra.mxu0 %v3821
    %6537 = vmatpush.bf16.msra.mxu0 %v3817
    %6538 = vmatpush.bf16.msra.mxu0 %v3813
    %6539 = vmatpush.bf16.msra.mxu0 %v3809
    %6540 = vmatpush.bf16.msra.mxu0 %v3805
    %6541 = vmatmul.bf16.gmra.mxu0 %v499
    %v6542 = vpop.f32.mrf.mxu0
    %v6543 = vadd.f32 %v6494, %v6542
    %v6544 = vpop.f32.mrf.mxu0
    %v6545 = vadd.f32 %v6496, %v6544
    %6546 = vmatmul.bf16.gmra.mxu0 %v523
    %v6547 = vpop.f32.mrf.mxu0
    %v6548 = vadd.f32 %v6499, %v6547
    %v6549 = vpop.f32.mrf.mxu0
    %v6550 = vadd.f32 %v6501, %v6549
    %6551 = vmatmul.bf16.gmra.mxu0 %v547
    %v6552 = vpop.f32.mrf.mxu0
    %v6553 = vadd.f32 %v6504, %v6552
    %v6554 = vpop.f32.mrf.mxu0
    %v6555 = vadd.f32 %v6506, %v6554
    %6556 = vmatmul.bf16.gmra.mxu0 %v571
    %v6557 = vpop.f32.mrf.mxu0
    %v6558 = vadd.f32 %v6509, %v6557
    %v6559 = vpop.f32.mrf.mxu0
    %v6560 = vadd.f32 %v6511, %v6559
    %6561 = vmatmul.bf16.gmra.mxu0 %v595
    %v6562 = vpop.f32.mrf.mxu0
    %v6563 = vadd.f32 %v6514, %v6562
    %v6564 = vpop.f32.mrf.mxu0
    %v6565 = vadd.f32 %v6516, %v6564
    %6566 = vmatmul.bf16.gmra.mxu0 %v619
    %v6567 = vpop.f32.mrf.mxu0
    %v6568 = vadd.f32 %v6519, %v6567
    %v6569 = vpop.f32.mrf.mxu0
    %v6570 = vadd.f32 %v6521, %v6569
    %6571 = vmatmul.bf16.gmra.mxu0 %v643
    %v6572 = vpop.f32.mrf.mxu0
    %v6573 = vadd.f32 %v6524, %v6572
    %v6574 = vpop.f32.mrf.mxu0
    %v6575 = vadd.f32 %v6526, %v6574
    %6576 = vmatmul.bf16.gmra.mxu0 %v667
    %v6577 = vpop.f32.mrf.mxu0
    %v6578 = vadd.f32 %v6529, %v6577
    %v6579 = vpop.f32.mrf.mxu0
    %v6580 = vadd.f32 %v6531, %v6579
    %6581 = vdwg.mxu0
    %6582 = vmatpush.bf16.msra.mxu0 %v3865
    %6583 = vmatpush.bf16.msra.mxu0 %v3861
    %6584 = vmatpush.bf16.msra.mxu0 %v3857
    %6585 = vmatpush.bf16.msra.mxu0 %v3853
    %6586 = vmatpush.bf16.msra.mxu0 %v3849
    %6587 = vmatpush.bf16.msra.mxu0 %v3845
    %6588 = vmatpush.bf16.msra.mxu0 %v3841
    %6589 = vmatpush.bf16.msra.mxu0 %v3837
    %6590 = vmatmul.bf16.gmra.mxu0 %v500
    %v6591 = vpop.f32.mrf.mxu0
    %v6592 = vadd.f32 %v6543, %v6591
    %v6593 = vpop.f32.mrf.mxu0
    %v6594 = vadd.f32 %v6545, %v6593
    %6595 = vmatmul.bf16.gmra.mxu0 %v524
    %v6596 = vpop.f32.mrf.mxu0
    %v6597 = vadd.f32 %v6548, %v6596
    %v6598 = vpop.f32.mrf.mxu0
    %v6599 = vadd.f32 %v6550, %v6598
    %6600 = vmatmul.bf16.gmra.mxu0 %v548
    %v6601 = vpop.f32.mrf.mxu0
    %v6602 = vadd.f32 %v6553, %v6601
    %v6603 = vpop.f32.mrf.mxu0
    %v6604 = vadd.f32 %v6555, %v6603
    %6605 = vmatmul.bf16.gmra.mxu0 %v572
    %v6606 = vpop.f32.mrf.mxu0
    %v6607 = vadd.f32 %v6558, %v6606
    %v6608 = vpop.f32.mrf.mxu0
    %v6609 = vadd.f32 %v6560, %v6608
    %6610 = vmatmul.bf16.gmra.mxu0 %v596
    %v6611 = vpop.f32.mrf.mxu0
    %v6612 = vadd.f32 %v6563, %v6611
    %v6613 = vpop.f32.mrf.mxu0
    %v6614 = vadd.f32 %v6565, %v6613
    %6615 = vmatmul.bf16.gmra.mxu0 %v620
    %v6616 = vpop.f32.mrf.mxu0
    %v6617 = vadd.f32 %v6568, %v6616
    %v6618 = vpop.f32.mrf.mxu0
    %v6619 = vadd.f32 %v6570, %v6618
    %6620 = vmatmul.bf16.gmra.mxu0 %v644
    %v6621 = vpop.f32.mrf.mxu0
    %v6622 = vadd.f32 %v6573, %v6621
    %v6623 = vpop.f32.mrf.mxu0
    %v6624 = vadd.f32 %v6575, %v6623
    %6625 = vmatmul.bf16.gmra.mxu0 %v668
    %v6626 = vpop.f32.mrf.mxu0
    %v6627 = vadd.f32 %v6578, %v6626
    %v6628 = vpop.f32.mrf.mxu0
    %v6629 = vadd.f32 %v6580, %v6628
    %6630 = vdwg.mxu0
    %6631 = vmatpush.bf16.msra.mxu0 %v3897
    %6632 = vmatpush.bf16.msra.mxu0 %v3893
    %6633 = vmatpush.bf16.msra.mxu0 %v3889
    %6634 = vmatpush.bf16.msra.mxu0 %v3885
    %6635 = vmatpush.bf16.msra.mxu0 %v3881
    %6636 = vmatpush.bf16.msra.mxu0 %v3877
    %6637 = vmatpush.bf16.msra.mxu0 %v3873
    %6638 = vmatpush.bf16.msra.mxu0 %v3869
    %6639 = vmatmul.bf16.gmra.mxu0 %v501
    %v6640 = vpop.f32.mrf.mxu0
    %v6641 = vadd.f32 %v6592, %v6640
    %v6642 = vpop.f32.mrf.mxu0
    %v6643 = vadd.f32 %v6594, %v6642
    %6644 = vmatmul.bf16.gmra.mxu0 %v525
    %v6645 = vpop.f32.mrf.mxu0
    %v6646 = vadd.f32 %v6597, %v6645
    %v6647 = vpop.f32.mrf.mxu0
    %v6648 = vadd.f32 %v6599, %v6647
    %6649 = vmatmul.bf16.gmra.mxu0 %v549
    %v6650 = vpop.f32.mrf.mxu0
    %v6651 = vadd.f32 %v6602, %v6650
    %v6652 = vpop.f32.mrf.mxu0
    %v6653 = vadd.f32 %v6604, %v6652
    %6654 = vmatmul.bf16.gmra.mxu0 %v573
    %v6655 = vpop.f32.mrf.mxu0
    %v6656 = vadd.f32 %v6607, %v6655
    %v6657 = vpop.f32.mrf.mxu0
    %v6658 = vadd.f32 %v6609, %v6657
    %6659 = vmatmul.bf16.gmra.mxu0 %v597
    %v6660 = vpop.f32.mrf.mxu0
    %v6661 = vadd.f32 %v6612, %v6660
    %v6662 = vpop.f32.mrf.mxu0
    %v6663 = vadd.f32 %v6614, %v6662
    %6664 = vmatmul.bf16.gmra.mxu0 %v621
    %v6665 = vpop.f32.mrf.mxu0
    %v6666 = vadd.f32 %v6617, %v6665
    %v6667 = vpop.f32.mrf.mxu0
    %v6668 = vadd.f32 %v6619, %v6667
    %6669 = vmatmul.bf16.gmra.mxu0 %v645
    %v6670 = vpop.f32.mrf.mxu0
    %v6671 = vadd.f32 %v6622, %v6670
    %v6672 = vpop.f32.mrf.mxu0
    %v6673 = vadd.f32 %v6624, %v6672
    %6674 = vmatmul.bf16.gmra.mxu0 %v669
    %v6675 = vpop.f32.mrf.mxu0
    %v6676 = vadd.f32 %v6627, %v6675
    %v6677 = vpop.f32.mrf.mxu0
    %v6678 = vadd.f32 %v6629, %v6677
    %6679 = vdwg.mxu0
    %6680 = vmatpush.bf16.msra.mxu0 %v3929
    %6681 = vmatpush.bf16.msra.mxu0 %v3925
    %6682 = vmatpush.bf16.msra.mxu0 %v3921
    %6683 = vmatpush.bf16.msra.mxu0 %v3917
    %6684 = vmatpush.bf16.msra.mxu0 %v3913
    %6685 = vmatpush.bf16.msra.mxu0 %v3909
    %6686 = vmatpush.bf16.msra.mxu0 %v3905
    %6687 = vmatpush.bf16.msra.mxu0 %v3901
    %6688 = vmatmul.bf16.gmra.mxu0 %v502
    %v6689 = vpop.f32.mrf.mxu0
    %v6690 = vadd.f32 %v6641, %v6689
    %v6691 = vpop.f32.mrf.mxu0
    %v6692 = vadd.f32 %v6643, %v6691
    %6693 = vmatmul.bf16.gmra.mxu0 %v526
    %v6694 = vpop.f32.mrf.mxu0
    %v6695 = vadd.f32 %v6646, %v6694
    %v6696 = vpop.f32.mrf.mxu0
    %v6697 = vadd.f32 %v6648, %v6696
    %6698 = vmatmul.bf16.gmra.mxu0 %v550
    %v6699 = vpop.f32.mrf.mxu0
    %v6700 = vadd.f32 %v6651, %v6699
    %v6701 = vpop.f32.mrf.mxu0
    %v6702 = vadd.f32 %v6653, %v6701
    %6703 = vmatmul.bf16.gmra.mxu0 %v574
    %v6704 = vpop.f32.mrf.mxu0
    %v6705 = vadd.f32 %v6656, %v6704
    %v6706 = vpop.f32.mrf.mxu0
    %v6707 = vadd.f32 %v6658, %v6706
    %6708 = vmatmul.bf16.gmra.mxu0 %v598
    %v6709 = vpop.f32.mrf.mxu0
    %v6710 = vadd.f32 %v6661, %v6709
    %v6711 = vpop.f32.mrf.mxu0
    %v6712 = vadd.f32 %v6663, %v6711
    %6713 = vmatmul.bf16.gmra.mxu0 %v622
    %v6714 = vpop.f32.mrf.mxu0
    %v6715 = vadd.f32 %v6666, %v6714
    %v6716 = vpop.f32.mrf.mxu0
    %v6717 = vadd.f32 %v6668, %v6716
    %6718 = vmatmul.bf16.gmra.mxu0 %v646
    %v6719 = vpop.f32.mrf.mxu0
    %v6720 = vadd.f32 %v6671, %v6719
    %v6721 = vpop.f32.mrf.mxu0
    %v6722 = vadd.f32 %v6673, %v6721
    %6723 = vmatmul.bf16.gmra.mxu0 %v670
    %v6724 = vpop.f32.mrf.mxu0
    %v6725 = vadd.f32 %v6676, %v6724
    %v6726 = vpop.f32.mrf.mxu0
    %v6727 = vadd.f32 %v6678, %v6726
    %6728 = vdwg.mxu0
    %6729 = vmatpush.bf16.msra.mxu0 %v3961
    %6730 = vmatpush.bf16.msra.mxu0 %v3957
    %6731 = vmatpush.bf16.msra.mxu0 %v3953
    %6732 = vmatpush.bf16.msra.mxu0 %v3949
    %6733 = vmatpush.bf16.msra.mxu0 %v3945
    %6734 = vmatpush.bf16.msra.mxu0 %v3941
    %6735 = vmatpush.bf16.msra.mxu0 %v3937
    %6736 = vmatpush.bf16.msra.mxu0 %v3933
    %6737 = vmatmul.bf16.gmra.mxu0 %v503
    %v6738 = vpop.f32.mrf.mxu0
    %v6739 = vadd.f32 %v6690, %v6738
    %v6740 = vpop.f32.mrf.mxu0
    %v6741 = vadd.f32 %v6692, %v6740
    %6742 = vmatmul.bf16.gmra.mxu0 %v527
    %v6743 = vpop.f32.mrf.mxu0
    %v6744 = vadd.f32 %v6695, %v6743
    %v6745 = vpop.f32.mrf.mxu0
    %v6746 = vadd.f32 %v6697, %v6745
    %6747 = vmatmul.bf16.gmra.mxu0 %v551
    %v6748 = vpop.f32.mrf.mxu0
    %v6749 = vadd.f32 %v6700, %v6748
    %v6750 = vpop.f32.mrf.mxu0
    %v6751 = vadd.f32 %v6702, %v6750
    %6752 = vmatmul.bf16.gmra.mxu0 %v575
    %v6753 = vpop.f32.mrf.mxu0
    %v6754 = vadd.f32 %v6705, %v6753
    %v6755 = vpop.f32.mrf.mxu0
    %v6756 = vadd.f32 %v6707, %v6755
    %6757 = vmatmul.bf16.gmra.mxu0 %v599
    %v6758 = vpop.f32.mrf.mxu0
    %v6759 = vadd.f32 %v6710, %v6758
    %v6760 = vpop.f32.mrf.mxu0
    %v6761 = vadd.f32 %v6712, %v6760
    %6762 = vmatmul.bf16.gmra.mxu0 %v623
    %v6763 = vpop.f32.mrf.mxu0
    %v6764 = vadd.f32 %v6715, %v6763
    %v6765 = vpop.f32.mrf.mxu0
    %v6766 = vadd.f32 %v6717, %v6765
    %6767 = vmatmul.bf16.gmra.mxu0 %v647
    %v6768 = vpop.f32.mrf.mxu0
    %v6769 = vadd.f32 %v6720, %v6768
    %v6770 = vpop.f32.mrf.mxu0
    %v6771 = vadd.f32 %v6722, %v6770
    %6772 = vmatmul.bf16.gmra.mxu0 %v671
    %v6773 = vpop.f32.mrf.mxu0
    %v6774 = vadd.f32 %v6725, %v6773
    %v6775 = vpop.f32.mrf.mxu0
    %v6776 = vadd.f32 %v6727, %v6775
    %6777 = vdwg.mxu0
    %6778 = vmatpush.bf16.msra.mxu0 %v3993
    %6779 = vmatpush.bf16.msra.mxu0 %v3989
    %6780 = vmatpush.bf16.msra.mxu0 %v3985
    %6781 = vmatpush.bf16.msra.mxu0 %v3981
    %6782 = vmatpush.bf16.msra.mxu0 %v3977
    %6783 = vmatpush.bf16.msra.mxu0 %v3973
    %6784 = vmatpush.bf16.msra.mxu0 %v3969
    %6785 = vmatpush.bf16.msra.mxu0 %v3965
    %6786 = vmatmul.bf16.gmra.mxu0 %v504
    %v6787 = vpop.f32.mrf.mxu0
    %v6788 = vadd.f32 %v6739, %v6787
    %v6789 = vpop.f32.mrf.mxu0
    %v6790 = vadd.f32 %v6741, %v6789
    %6791 = vmatmul.bf16.gmra.mxu0 %v528
    %v6792 = vpop.f32.mrf.mxu0
    %v6793 = vadd.f32 %v6744, %v6792
    %v6794 = vpop.f32.mrf.mxu0
    %v6795 = vadd.f32 %v6746, %v6794
    %6796 = vmatmul.bf16.gmra.mxu0 %v552
    %v6797 = vpop.f32.mrf.mxu0
    %v6798 = vadd.f32 %v6749, %v6797
    %v6799 = vpop.f32.mrf.mxu0
    %v6800 = vadd.f32 %v6751, %v6799
    %6801 = vmatmul.bf16.gmra.mxu0 %v576
    %v6802 = vpop.f32.mrf.mxu0
    %v6803 = vadd.f32 %v6754, %v6802
    %v6804 = vpop.f32.mrf.mxu0
    %v6805 = vadd.f32 %v6756, %v6804
    %6806 = vmatmul.bf16.gmra.mxu0 %v600
    %v6807 = vpop.f32.mrf.mxu0
    %v6808 = vadd.f32 %v6759, %v6807
    %v6809 = vpop.f32.mrf.mxu0
    %v6810 = vadd.f32 %v6761, %v6809
    %6811 = vmatmul.bf16.gmra.mxu0 %v624
    %v6812 = vpop.f32.mrf.mxu0
    %v6813 = vadd.f32 %v6764, %v6812
    %v6814 = vpop.f32.mrf.mxu0
    %v6815 = vadd.f32 %v6766, %v6814
    %6816 = vmatmul.bf16.gmra.mxu0 %v648
    %v6817 = vpop.f32.mrf.mxu0
    %v6818 = vadd.f32 %v6769, %v6817
    %v6819 = vpop.f32.mrf.mxu0
    %v6820 = vadd.f32 %v6771, %v6819
    %6821 = vmatmul.bf16.gmra.mxu0 %v672
    %v6822 = vpop.f32.mrf.mxu0
    %v6823 = vadd.f32 %v6774, %v6822
    %v6824 = vpop.f32.mrf.mxu0
    %v6825 = vadd.f32 %v6776, %v6824
    %6826 = vdwg.mxu0
    %6827 = vmatpush.bf16.msra.mxu0 %v4025
    %6828 = vmatpush.bf16.msra.mxu0 %v4021
    %6829 = vmatpush.bf16.msra.mxu0 %v4017
    %6830 = vmatpush.bf16.msra.mxu0 %v4013
    %6831 = vmatpush.bf16.msra.mxu0 %v4009
    %6832 = vmatpush.bf16.msra.mxu0 %v4005
    %6833 = vmatpush.bf16.msra.mxu0 %v4001
    %6834 = vmatpush.bf16.msra.mxu0 %v3997
    %6835 = vmatmul.bf16.gmra.mxu0 %v505
    %v6836 = vpop.f32.mrf.mxu0
    %v6837 = vadd.f32 %v6788, %v6836
    %v6838 = vpop.f32.mrf.mxu0
    %v6839 = vadd.f32 %v6790, %v6838
    %6840 = vmatmul.bf16.gmra.mxu0 %v529
    %v6841 = vpop.f32.mrf.mxu0
    %v6842 = vadd.f32 %v6793, %v6841
    %v6843 = vpop.f32.mrf.mxu0
    %v6844 = vadd.f32 %v6795, %v6843
    %6845 = vmatmul.bf16.gmra.mxu0 %v553
    %v6846 = vpop.f32.mrf.mxu0
    %v6847 = vadd.f32 %v6798, %v6846
    %v6848 = vpop.f32.mrf.mxu0
    %v6849 = vadd.f32 %v6800, %v6848
    %6850 = vmatmul.bf16.gmra.mxu0 %v577
    %v6851 = vpop.f32.mrf.mxu0
    %v6852 = vadd.f32 %v6803, %v6851
    %v6853 = vpop.f32.mrf.mxu0
    %v6854 = vadd.f32 %v6805, %v6853
    %6855 = vmatmul.bf16.gmra.mxu0 %v601
    %v6856 = vpop.f32.mrf.mxu0
    %v6857 = vadd.f32 %v6808, %v6856
    %v6858 = vpop.f32.mrf.mxu0
    %v6859 = vadd.f32 %v6810, %v6858
    %6860 = vmatmul.bf16.gmra.mxu0 %v625
    %v6861 = vpop.f32.mrf.mxu0
    %v6862 = vadd.f32 %v6813, %v6861
    %v6863 = vpop.f32.mrf.mxu0
    %v6864 = vadd.f32 %v6815, %v6863
    %6865 = vmatmul.bf16.gmra.mxu0 %v649
    %v6866 = vpop.f32.mrf.mxu0
    %v6867 = vadd.f32 %v6818, %v6866
    %v6868 = vpop.f32.mrf.mxu0
    %v6869 = vadd.f32 %v6820, %v6868
    %6870 = vmatmul.bf16.gmra.mxu0 %v673
    %v6871 = vpop.f32.mrf.mxu0
    %v6872 = vadd.f32 %v6823, %v6871
    %v6873 = vpop.f32.mrf.mxu0
    %v6874 = vadd.f32 %v6825, %v6873
    %6875 = vdwg.mxu0
    %6876 = vmatpush.bf16.msra.mxu0 %v4057
    %6877 = vmatpush.bf16.msra.mxu0 %v4053
    %6878 = vmatpush.bf16.msra.mxu0 %v4049
    %6879 = vmatpush.bf16.msra.mxu0 %v4045
    %6880 = vmatpush.bf16.msra.mxu0 %v4041
    %6881 = vmatpush.bf16.msra.mxu0 %v4037
    %6882 = vmatpush.bf16.msra.mxu0 %v4033
    %6883 = vmatpush.bf16.msra.mxu0 %v4029
    %6884 = vmatmul.bf16.gmra.mxu0 %v506
    %v6885 = vpop.f32.mrf.mxu0
    %v6886 = vadd.f32 %v6837, %v6885
    %v6887 = vpop.f32.mrf.mxu0
    %v6888 = vadd.f32 %v6839, %v6887
    %6889 = vmatmul.bf16.gmra.mxu0 %v530
    %v6890 = vpop.f32.mrf.mxu0
    %v6891 = vadd.f32 %v6842, %v6890
    %v6892 = vpop.f32.mrf.mxu0
    %v6893 = vadd.f32 %v6844, %v6892
    %6894 = vmatmul.bf16.gmra.mxu0 %v554
    %v6895 = vpop.f32.mrf.mxu0
    %v6896 = vadd.f32 %v6847, %v6895
    %v6897 = vpop.f32.mrf.mxu0
    %v6898 = vadd.f32 %v6849, %v6897
    %6899 = vmatmul.bf16.gmra.mxu0 %v578
    %v6900 = vpop.f32.mrf.mxu0
    %v6901 = vadd.f32 %v6852, %v6900
    %v6902 = vpop.f32.mrf.mxu0
    %v6903 = vadd.f32 %v6854, %v6902
    %6904 = vmatmul.bf16.gmra.mxu0 %v602
    %v6905 = vpop.f32.mrf.mxu0
    %v6906 = vadd.f32 %v6857, %v6905
    %v6907 = vpop.f32.mrf.mxu0
    %v6908 = vadd.f32 %v6859, %v6907
    %6909 = vmatmul.bf16.gmra.mxu0 %v626
    %v6910 = vpop.f32.mrf.mxu0
    %v6911 = vadd.f32 %v6862, %v6910
    %v6912 = vpop.f32.mrf.mxu0
    %v6913 = vadd.f32 %v6864, %v6912
    %6914 = vmatmul.bf16.gmra.mxu0 %v650
    %v6915 = vpop.f32.mrf.mxu0
    %v6916 = vadd.f32 %v6867, %v6915
    %v6917 = vpop.f32.mrf.mxu0
    %v6918 = vadd.f32 %v6869, %v6917
    %6919 = vmatmul.bf16.gmra.mxu0 %v674
    %v6920 = vpop.f32.mrf.mxu0
    %v6921 = vadd.f32 %v6872, %v6920
    %v6922 = vpop.f32.mrf.mxu0
    %v6923 = vadd.f32 %v6874, %v6922
    %6924 = vdwg.mxu0
    %6925 = vmatpush.bf16.msra.mxu0 %v4089
    %6926 = vmatpush.bf16.msra.mxu0 %v4085
    %6927 = vmatpush.bf16.msra.mxu0 %v4081
    %6928 = vmatpush.bf16.msra.mxu0 %v4077
    %6929 = vmatpush.bf16.msra.mxu0 %v4073
    %6930 = vmatpush.bf16.msra.mxu0 %v4069
    %6931 = vmatpush.bf16.msra.mxu0 %v4065
    %6932 = vmatpush.bf16.msra.mxu0 %v4061
    %6933 = vmatmul.bf16.gmra.mxu0 %v507
    %v6934 = vpop.f32.mrf.mxu0
    %v6935 = vadd.f32 %v6886, %v6934
    %v6936 = vpop.f32.mrf.mxu0
    %v6937 = vadd.f32 %v6888, %v6936
    %6938 = vmatmul.bf16.gmra.mxu0 %v531
    %v6939 = vpop.f32.mrf.mxu0
    %v6940 = vadd.f32 %v6891, %v6939
    %v6941 = vpop.f32.mrf.mxu0
    %v6942 = vadd.f32 %v6893, %v6941
    %6943 = vmatmul.bf16.gmra.mxu0 %v555
    %v6944 = vpop.f32.mrf.mxu0
    %v6945 = vadd.f32 %v6896, %v6944
    %v6946 = vpop.f32.mrf.mxu0
    %v6947 = vadd.f32 %v6898, %v6946
    %6948 = vmatmul.bf16.gmra.mxu0 %v579
    %v6949 = vpop.f32.mrf.mxu0
    %v6950 = vadd.f32 %v6901, %v6949
    %v6951 = vpop.f32.mrf.mxu0
    %v6952 = vadd.f32 %v6903, %v6951
    %6953 = vmatmul.bf16.gmra.mxu0 %v603
    %v6954 = vpop.f32.mrf.mxu0
    %v6955 = vadd.f32 %v6906, %v6954
    %v6956 = vpop.f32.mrf.mxu0
    %v6957 = vadd.f32 %v6908, %v6956
    %6958 = vmatmul.bf16.gmra.mxu0 %v627
    %v6959 = vpop.f32.mrf.mxu0
    %v6960 = vadd.f32 %v6911, %v6959
    %v6961 = vpop.f32.mrf.mxu0
    %v6962 = vadd.f32 %v6913, %v6961
    %6963 = vmatmul.bf16.gmra.mxu0 %v651
    %v6964 = vpop.f32.mrf.mxu0
    %v6965 = vadd.f32 %v6916, %v6964
    %v6966 = vpop.f32.mrf.mxu0
    %v6967 = vadd.f32 %v6918, %v6966
    %6968 = vmatmul.bf16.gmra.mxu0 %v675
    %v6969 = vpop.f32.mrf.mxu0
    %v6970 = vadd.f32 %v6921, %v6969
    %v6971 = vpop.f32.mrf.mxu0
    %v6972 = vadd.f32 %v6923, %v6971
    %6973 = vdwg.mxu0
    %6974 = vmatpush.bf16.msra.mxu0 %v4121
    %6975 = vmatpush.bf16.msra.mxu0 %v4117
    %6976 = vmatpush.bf16.msra.mxu0 %v4113
    %6977 = vmatpush.bf16.msra.mxu0 %v4109
    %6978 = vmatpush.bf16.msra.mxu0 %v4105
    %6979 = vmatpush.bf16.msra.mxu0 %v4101
    %6980 = vmatpush.bf16.msra.mxu0 %v4097
    %6981 = vmatpush.bf16.msra.mxu0 %v4093
    %6982 = vmatmul.bf16.gmra.mxu0 %v508
    %v6983 = vpop.f32.mrf.mxu0
    %v6984 = vadd.f32 %v6935, %v6983
    %v6985 = vpop.f32.mrf.mxu0
    %v6986 = vadd.f32 %v6937, %v6985
    %6987 = vmatmul.bf16.gmra.mxu0 %v532
    %v6988 = vpop.f32.mrf.mxu0
    %v6989 = vadd.f32 %v6940, %v6988
    %v6990 = vpop.f32.mrf.mxu0
    %v6991 = vadd.f32 %v6942, %v6990
    %6992 = vmatmul.bf16.gmra.mxu0 %v556
    %v6993 = vpop.f32.mrf.mxu0
    %v6994 = vadd.f32 %v6945, %v6993
    %v6995 = vpop.f32.mrf.mxu0
    %v6996 = vadd.f32 %v6947, %v6995
    %6997 = vmatmul.bf16.gmra.mxu0 %v580
    %v6998 = vpop.f32.mrf.mxu0
    %v6999 = vadd.f32 %v6950, %v6998
    %v7000 = vpop.f32.mrf.mxu0
    %v7001 = vadd.f32 %v6952, %v7000
    %7002 = vmatmul.bf16.gmra.mxu0 %v604
    %v7003 = vpop.f32.mrf.mxu0
    %v7004 = vadd.f32 %v6955, %v7003
    %v7005 = vpop.f32.mrf.mxu0
    %v7006 = vadd.f32 %v6957, %v7005
    %7007 = vmatmul.bf16.gmra.mxu0 %v628
    %v7008 = vpop.f32.mrf.mxu0
    %v7009 = vadd.f32 %v6960, %v7008
    %v7010 = vpop.f32.mrf.mxu0
    %v7011 = vadd.f32 %v6962, %v7010
    %7012 = vmatmul.bf16.gmra.mxu0 %v652
    %v7013 = vpop.f32.mrf.mxu0
    %v7014 = vadd.f32 %v6965, %v7013
    %v7015 = vpop.f32.mrf.mxu0
    %v7016 = vadd.f32 %v6967, %v7015
    %7017 = vmatmul.bf16.gmra.mxu0 %v676
    %v7018 = vpop.f32.mrf.mxu0
    %v7019 = vadd.f32 %v6970, %v7018
    %v7020 = vpop.f32.mrf.mxu0
    %v7021 = vadd.f32 %v6972, %v7020
    %7022 = vdwg.mxu0
    %7023 = vmatpush.bf16.msra.mxu0 %v4153
    %7024 = vmatpush.bf16.msra.mxu0 %v4149
    %7025 = vmatpush.bf16.msra.mxu0 %v4145
    %7026 = vmatpush.bf16.msra.mxu0 %v4141
    %7027 = vmatpush.bf16.msra.mxu0 %v4137
    %7028 = vmatpush.bf16.msra.mxu0 %v4133
    %7029 = vmatpush.bf16.msra.mxu0 %v4129
    %7030 = vmatpush.bf16.msra.mxu0 %v4125
    %7031 = vmatmul.bf16.gmra.mxu0 %v509
    %v7032 = vpop.f32.mrf.mxu0
    %v7033 = vadd.f32 %v6984, %v7032
    %v7034 = vpop.f32.mrf.mxu0
    %v7035 = vadd.f32 %v6986, %v7034
    %7036 = vmatmul.bf16.gmra.mxu0 %v533
    %v7037 = vpop.f32.mrf.mxu0
    %v7038 = vadd.f32 %v6989, %v7037
    %v7039 = vpop.f32.mrf.mxu0
    %v7040 = vadd.f32 %v6991, %v7039
    %7041 = vmatmul.bf16.gmra.mxu0 %v557
    %v7042 = vpop.f32.mrf.mxu0
    %v7043 = vadd.f32 %v6994, %v7042
    %v7044 = vpop.f32.mrf.mxu0
    %v7045 = vadd.f32 %v6996, %v7044
    %7046 = vmatmul.bf16.gmra.mxu0 %v581
    %v7047 = vpop.f32.mrf.mxu0
    %v7048 = vadd.f32 %v6999, %v7047
    %v7049 = vpop.f32.mrf.mxu0
    %v7050 = vadd.f32 %v7001, %v7049
    %7051 = vmatmul.bf16.gmra.mxu0 %v605
    %v7052 = vpop.f32.mrf.mxu0
    %v7053 = vadd.f32 %v7004, %v7052
    %v7054 = vpop.f32.mrf.mxu0
    %v7055 = vadd.f32 %v7006, %v7054
    %7056 = vmatmul.bf16.gmra.mxu0 %v629
    %v7057 = vpop.f32.mrf.mxu0
    %v7058 = vadd.f32 %v7009, %v7057
    %v7059 = vpop.f32.mrf.mxu0
    %v7060 = vadd.f32 %v7011, %v7059
    %7061 = vmatmul.bf16.gmra.mxu0 %v653
    %v7062 = vpop.f32.mrf.mxu0
    %v7063 = vadd.f32 %v7014, %v7062
    %v7064 = vpop.f32.mrf.mxu0
    %v7065 = vadd.f32 %v7016, %v7064
    %7066 = vmatmul.bf16.gmra.mxu0 %v677
    %v7067 = vpop.f32.mrf.mxu0
    %v7068 = vadd.f32 %v7019, %v7067
    %v7069 = vpop.f32.mrf.mxu0
    %v7070 = vadd.f32 %v7021, %v7069
    %7071 = vdwg.mxu0
    %7072 = vmatpush.bf16.msra.mxu0 %v4185
    %7073 = vmatpush.bf16.msra.mxu0 %v4181
    %7074 = vmatpush.bf16.msra.mxu0 %v4177
    %7075 = vmatpush.bf16.msra.mxu0 %v4173
    %7076 = vmatpush.bf16.msra.mxu0 %v4169
    %7077 = vmatpush.bf16.msra.mxu0 %v4165
    %7078 = vmatpush.bf16.msra.mxu0 %v4161
    %7079 = vmatpush.bf16.msra.mxu0 %v4157
    %7080 = vmatmul.bf16.gmra.mxu0 %v510
    %v7081 = vpop.f32.mrf.mxu0
    %v7082 = vadd.f32 %v7033, %v7081
    %v7083 = vpop.f32.mrf.mxu0
    %v7084 = vadd.f32 %v7035, %v7083
    %7085 = vmatmul.bf16.gmra.mxu0 %v534
    %v7086 = vpop.f32.mrf.mxu0
    %v7087 = vadd.f32 %v7038, %v7086
    %v7088 = vpop.f32.mrf.mxu0
    %v7089 = vadd.f32 %v7040, %v7088
    %7090 = vmatmul.bf16.gmra.mxu0 %v558
    %v7091 = vpop.f32.mrf.mxu0
    %v7092 = vadd.f32 %v7043, %v7091
    %v7093 = vpop.f32.mrf.mxu0
    %v7094 = vadd.f32 %v7045, %v7093
    %7095 = vmatmul.bf16.gmra.mxu0 %v582
    %v7096 = vpop.f32.mrf.mxu0
    %v7097 = vadd.f32 %v7048, %v7096
    %v7098 = vpop.f32.mrf.mxu0
    %v7099 = vadd.f32 %v7050, %v7098
    %7100 = vmatmul.bf16.gmra.mxu0 %v606
    %v7101 = vpop.f32.mrf.mxu0
    %v7102 = vadd.f32 %v7053, %v7101
    %v7103 = vpop.f32.mrf.mxu0
    %v7104 = vadd.f32 %v7055, %v7103
    %7105 = vmatmul.bf16.gmra.mxu0 %v630
    %v7106 = vpop.f32.mrf.mxu0
    %v7107 = vadd.f32 %v7058, %v7106
    %v7108 = vpop.f32.mrf.mxu0
    %v7109 = vadd.f32 %v7060, %v7108
    %7110 = vmatmul.bf16.gmra.mxu0 %v654
    %v7111 = vpop.f32.mrf.mxu0
    %v7112 = vadd.f32 %v7063, %v7111
    %v7113 = vpop.f32.mrf.mxu0
    %v7114 = vadd.f32 %v7065, %v7113
    %7115 = vmatmul.bf16.gmra.mxu0 %v678
    %v7116 = vpop.f32.mrf.mxu0
    %v7117 = vadd.f32 %v7068, %v7116
    %v7118 = vpop.f32.mrf.mxu0
    %v7119 = vadd.f32 %v7070, %v7118
    %7120 = vdwg.mxu0
    %7121 = vmatpush.bf16.msra.mxu0 %v4217
    %7122 = vmatpush.bf16.msra.mxu0 %v4213
    %7123 = vmatpush.bf16.msra.mxu0 %v4209
    %7124 = vmatpush.bf16.msra.mxu0 %v4205
    %7125 = vmatpush.bf16.msra.mxu0 %v4201
    %7126 = vmatpush.bf16.msra.mxu0 %v4197
    %7127 = vmatpush.bf16.msra.mxu0 %v4193
    %7128 = vmatpush.bf16.msra.mxu0 %v4189
    %7129 = vmatmul.bf16.gmra.mxu0 %v511
    %v7130 = vpop.f32.mrf.mxu0
    %v7131 = vadd.f32 %v7082, %v7130
    %v7132 = vpop.f32.mrf.mxu0
    %v7133 = vadd.f32 %v7084, %v7132
    %7134 = vmatmul.bf16.gmra.mxu0 %v535
    %v7135 = vpop.f32.mrf.mxu0
    %v7136 = vadd.f32 %v7087, %v7135
    %v7137 = vpop.f32.mrf.mxu0
    %v7138 = vadd.f32 %v7089, %v7137
    %7139 = vmatmul.bf16.gmra.mxu0 %v559
    %v7140 = vpop.f32.mrf.mxu0
    %v7141 = vadd.f32 %v7092, %v7140
    %v7142 = vpop.f32.mrf.mxu0
    %v7143 = vadd.f32 %v7094, %v7142
    %7144 = vmatmul.bf16.gmra.mxu0 %v583
    %v7145 = vpop.f32.mrf.mxu0
    %v7146 = vadd.f32 %v7097, %v7145
    %v7147 = vpop.f32.mrf.mxu0
    %v7148 = vadd.f32 %v7099, %v7147
    %7149 = vmatmul.bf16.gmra.mxu0 %v607
    %v7150 = vpop.f32.mrf.mxu0
    %v7151 = vadd.f32 %v7102, %v7150
    %v7152 = vpop.f32.mrf.mxu0
    %v7153 = vadd.f32 %v7104, %v7152
    %7154 = vmatmul.bf16.gmra.mxu0 %v631
    %v7155 = vpop.f32.mrf.mxu0
    %v7156 = vadd.f32 %v7107, %v7155
    %v7157 = vpop.f32.mrf.mxu0
    %v7158 = vadd.f32 %v7109, %v7157
    %7159 = vmatmul.bf16.gmra.mxu0 %v655
    %v7160 = vpop.f32.mrf.mxu0
    %v7161 = vadd.f32 %v7112, %v7160
    %v7162 = vpop.f32.mrf.mxu0
    %v7163 = vadd.f32 %v7114, %v7162
    %7164 = vmatmul.bf16.gmra.mxu0 %v679
    %v7165 = vpop.f32.mrf.mxu0
    %v7166 = vadd.f32 %v7117, %v7165
    %v7167 = vpop.f32.mrf.mxu0
    %v7168 = vadd.f32 %v7119, %v7167
    %7169 = vdwg.mxu0
    %7170 = vmatpush.bf16.msra.mxu0 %v4249
    %7171 = vmatpush.bf16.msra.mxu0 %v4245
    %7172 = vmatpush.bf16.msra.mxu0 %v4241
    %7173 = vmatpush.bf16.msra.mxu0 %v4237
    %7174 = vmatpush.bf16.msra.mxu0 %v4233
    %7175 = vmatpush.bf16.msra.mxu0 %v4229
    %7176 = vmatpush.bf16.msra.mxu0 %v4225
    %7177 = vmatpush.bf16.msra.mxu0 %v4221
    %7178 = vmatmul.bf16.gmra.mxu0 %v512
    %v7179 = vpop.f32.mrf.mxu0
    %v7180 = vadd.f32 %v7131, %v7179
    %v7181 = vpop.f32.mrf.mxu0
    %v7182 = vadd.f32 %v7133, %v7181
    %7183 = vmatmul.bf16.gmra.mxu0 %v536
    %v7184 = vpop.f32.mrf.mxu0
    %v7185 = vadd.f32 %v7136, %v7184
    %v7186 = vpop.f32.mrf.mxu0
    %v7187 = vadd.f32 %v7138, %v7186
    %7188 = vmatmul.bf16.gmra.mxu0 %v560
    %v7189 = vpop.f32.mrf.mxu0
    %v7190 = vadd.f32 %v7141, %v7189
    %v7191 = vpop.f32.mrf.mxu0
    %v7192 = vadd.f32 %v7143, %v7191
    %7193 = vmatmul.bf16.gmra.mxu0 %v584
    %v7194 = vpop.f32.mrf.mxu0
    %v7195 = vadd.f32 %v7146, %v7194
    %v7196 = vpop.f32.mrf.mxu0
    %v7197 = vadd.f32 %v7148, %v7196
    %7198 = vmatmul.bf16.gmra.mxu0 %v608
    %v7199 = vpop.f32.mrf.mxu0
    %v7200 = vadd.f32 %v7151, %v7199
    %v7201 = vpop.f32.mrf.mxu0
    %v7202 = vadd.f32 %v7153, %v7201
    %7203 = vmatmul.bf16.gmra.mxu0 %v632
    %v7204 = vpop.f32.mrf.mxu0
    %v7205 = vadd.f32 %v7156, %v7204
    %v7206 = vpop.f32.mrf.mxu0
    %v7207 = vadd.f32 %v7158, %v7206
    %7208 = vmatmul.bf16.gmra.mxu0 %v656
    %v7209 = vpop.f32.mrf.mxu0
    %v7210 = vadd.f32 %v7161, %v7209
    %v7211 = vpop.f32.mrf.mxu0
    %v7212 = vadd.f32 %v7163, %v7211
    %7213 = vmatmul.bf16.gmra.mxu0 %v680
    %v7214 = vpop.f32.mrf.mxu0
    %v7215 = vadd.f32 %v7166, %v7214
    %v7216 = vpop.f32.mrf.mxu0
    %v7217 = vadd.f32 %v7168, %v7216
    %7218 = vdwg.mxu0
    %7219 = vmatpush.bf16.msra.mxu0 %v4281
    %7220 = vmatpush.bf16.msra.mxu0 %v4277
    %7221 = vmatpush.bf16.msra.mxu0 %v4273
    %7222 = vmatpush.bf16.msra.mxu0 %v4269
    %7223 = vmatpush.bf16.msra.mxu0 %v4265
    %7224 = vmatpush.bf16.msra.mxu0 %v4261
    %7225 = vmatpush.bf16.msra.mxu0 %v4257
    %7226 = vmatpush.bf16.msra.mxu0 %v4253
    %7227 = vmatmul.bf16.gmra.mxu0 %v513
    %v7228 = vpop.f32.mrf.mxu0
    %v7229 = vadd.f32 %v7180, %v7228
    %v7230 = vpop.f32.mrf.mxu0
    %v7231 = vadd.f32 %v7182, %v7230
    %7232 = vmatmul.bf16.gmra.mxu0 %v537
    %v7233 = vpop.f32.mrf.mxu0
    %v7234 = vadd.f32 %v7185, %v7233
    %v7235 = vpop.f32.mrf.mxu0
    %v7236 = vadd.f32 %v7187, %v7235
    %7237 = vmatmul.bf16.gmra.mxu0 %v561
    %v7238 = vpop.f32.mrf.mxu0
    %v7239 = vadd.f32 %v7190, %v7238
    %v7240 = vpop.f32.mrf.mxu0
    %v7241 = vadd.f32 %v7192, %v7240
    %7242 = vmatmul.bf16.gmra.mxu0 %v585
    %v7243 = vpop.f32.mrf.mxu0
    %v7244 = vadd.f32 %v7195, %v7243
    %v7245 = vpop.f32.mrf.mxu0
    %v7246 = vadd.f32 %v7197, %v7245
    %7247 = vmatmul.bf16.gmra.mxu0 %v609
    %v7248 = vpop.f32.mrf.mxu0
    %v7249 = vadd.f32 %v7200, %v7248
    %v7250 = vpop.f32.mrf.mxu0
    %v7251 = vadd.f32 %v7202, %v7250
    %7252 = vmatmul.bf16.gmra.mxu0 %v633
    %v7253 = vpop.f32.mrf.mxu0
    %v7254 = vadd.f32 %v7205, %v7253
    %v7255 = vpop.f32.mrf.mxu0
    %v7256 = vadd.f32 %v7207, %v7255
    %7257 = vmatmul.bf16.gmra.mxu0 %v657
    %v7258 = vpop.f32.mrf.mxu0
    %v7259 = vadd.f32 %v7210, %v7258
    %v7260 = vpop.f32.mrf.mxu0
    %v7261 = vadd.f32 %v7212, %v7260
    %7262 = vmatmul.bf16.gmra.mxu0 %v681
    %v7263 = vpop.f32.mrf.mxu0
    %v7264 = vadd.f32 %v7215, %v7263
    %v7265 = vpop.f32.mrf.mxu0
    %v7266 = vadd.f32 %v7217, %v7265
    %7267 = vdwg.mxu0
    %7268 = vmatpush.bf16.msra.mxu0 %v4313
    %7269 = vmatpush.bf16.msra.mxu0 %v4309
    %7270 = vmatpush.bf16.msra.mxu0 %v4305
    %7271 = vmatpush.bf16.msra.mxu0 %v4301
    %7272 = vmatpush.bf16.msra.mxu0 %v4297
    %7273 = vmatpush.bf16.msra.mxu0 %v4293
    %7274 = vmatpush.bf16.msra.mxu0 %v4289
    %7275 = vmatpush.bf16.msra.mxu0 %v4285
    %7276 = vmatmul.bf16.gmra.mxu0 %v514
    %v7277 = vpop.f32.mrf.mxu0
    %v7278 = vadd.f32 %v7229, %v7277
    %v7279 = vpop.f32.mrf.mxu0
    %v7280 = vadd.f32 %v7231, %v7279
    %7281 = vmatmul.bf16.gmra.mxu0 %v538
    %v7282 = vpop.f32.mrf.mxu0
    %v7283 = vadd.f32 %v7234, %v7282
    %v7284 = vpop.f32.mrf.mxu0
    %v7285 = vadd.f32 %v7236, %v7284
    %7286 = vmatmul.bf16.gmra.mxu0 %v562
    %v7287 = vpop.f32.mrf.mxu0
    %v7288 = vadd.f32 %v7239, %v7287
    %v7289 = vpop.f32.mrf.mxu0
    %v7290 = vadd.f32 %v7241, %v7289
    %7291 = vmatmul.bf16.gmra.mxu0 %v586
    %v7292 = vpop.f32.mrf.mxu0
    %v7293 = vadd.f32 %v7244, %v7292
    %v7294 = vpop.f32.mrf.mxu0
    %v7295 = vadd.f32 %v7246, %v7294
    %7296 = vmatmul.bf16.gmra.mxu0 %v610
    %v7297 = vpop.f32.mrf.mxu0
    %v7298 = vadd.f32 %v7249, %v7297
    %v7299 = vpop.f32.mrf.mxu0
    %v7300 = vadd.f32 %v7251, %v7299
    %7301 = vmatmul.bf16.gmra.mxu0 %v634
    %v7302 = vpop.f32.mrf.mxu0
    %v7303 = vadd.f32 %v7254, %v7302
    %v7304 = vpop.f32.mrf.mxu0
    %v7305 = vadd.f32 %v7256, %v7304
    %7306 = vmatmul.bf16.gmra.mxu0 %v658
    %v7307 = vpop.f32.mrf.mxu0
    %v7308 = vadd.f32 %v7259, %v7307
    %v7309 = vpop.f32.mrf.mxu0
    %v7310 = vadd.f32 %v7261, %v7309
    %7311 = vmatmul.bf16.gmra.mxu0 %v682
    %v7312 = vpop.f32.mrf.mxu0
    %v7313 = vadd.f32 %v7264, %v7312
    %v7314 = vpop.f32.mrf.mxu0
    %v7315 = vadd.f32 %v7266, %v7314
    %7316 = vdwg.mxu0
    %7317 = vmatpush.bf16.msra.mxu0 %v4345
    %7318 = vmatpush.bf16.msra.mxu0 %v4341
    %7319 = vmatpush.bf16.msra.mxu0 %v4337
    %7320 = vmatpush.bf16.msra.mxu0 %v4333
    %7321 = vmatpush.bf16.msra.mxu0 %v4329
    %7322 = vmatpush.bf16.msra.mxu0 %v4325
    %7323 = vmatpush.bf16.msra.mxu0 %v4321
    %7324 = vmatpush.bf16.msra.mxu0 %v4317
    %7325 = vmatmul.bf16.gmra.mxu0 %v515
    %v7326 = vpop.f32.mrf.mxu0
    %v7327 = vadd.f32 %v7278, %v7326
    %v7328 = vpop.f32.mrf.mxu0
    %v7329 = vadd.f32 %v7280, %v7328
    %7330 = vmatmul.bf16.gmra.mxu0 %v539
    %v7331 = vpop.f32.mrf.mxu0
    %v7332 = vadd.f32 %v7283, %v7331
    %v7333 = vpop.f32.mrf.mxu0
    %v7334 = vadd.f32 %v7285, %v7333
    %7335 = vmatmul.bf16.gmra.mxu0 %v563
    %v7336 = vpop.f32.mrf.mxu0
    %v7337 = vadd.f32 %v7288, %v7336
    %v7338 = vpop.f32.mrf.mxu0
    %v7339 = vadd.f32 %v7290, %v7338
    %7340 = vmatmul.bf16.gmra.mxu0 %v587
    %v7341 = vpop.f32.mrf.mxu0
    %v7342 = vadd.f32 %v7293, %v7341
    %v7343 = vpop.f32.mrf.mxu0
    %v7344 = vadd.f32 %v7295, %v7343
    %7345 = vmatmul.bf16.gmra.mxu0 %v611
    %v7346 = vpop.f32.mrf.mxu0
    %v7347 = vadd.f32 %v7298, %v7346
    %v7348 = vpop.f32.mrf.mxu0
    %v7349 = vadd.f32 %v7300, %v7348
    %7350 = vmatmul.bf16.gmra.mxu0 %v635
    %v7351 = vpop.f32.mrf.mxu0
    %v7352 = vadd.f32 %v7303, %v7351
    %v7353 = vpop.f32.mrf.mxu0
    %v7354 = vadd.f32 %v7305, %v7353
    %7355 = vmatmul.bf16.gmra.mxu0 %v659
    %v7356 = vpop.f32.mrf.mxu0
    %v7357 = vadd.f32 %v7308, %v7356
    %v7358 = vpop.f32.mrf.mxu0
    %v7359 = vadd.f32 %v7310, %v7358
    %7360 = vmatmul.bf16.gmra.mxu0 %v683
    %v7361 = vpop.f32.mrf.mxu0
    %v7362 = vadd.f32 %v7313, %v7361
    %v7363 = vpop.f32.mrf.mxu0
    %v7364 = vadd.f32 %v7315, %v7363
    %7365 = vdwg.mxu0
    %7366 = vmatpush.bf16.msra.mxu0 %v4377
    %7367 = vmatpush.bf16.msra.mxu0 %v4373
    %7368 = vmatpush.bf16.msra.mxu0 %v4369
    %7369 = vmatpush.bf16.msra.mxu0 %v4365
    %7370 = vmatpush.bf16.msra.mxu0 %v4361
    %7371 = vmatpush.bf16.msra.mxu0 %v4357
    %7372 = vmatpush.bf16.msra.mxu0 %v4353
    %7373 = vmatpush.bf16.msra.mxu0 %v4349
    %7374 = vmatmul.bf16.gmra.mxu0 %v516
    %v7375 = vpop.f32.mrf.mxu0
    %v7376 = vadd.f32 %v7327, %v7375
    %v7377 = vpop.f32.mrf.mxu0
    %v7378 = vadd.f32 %v7329, %v7377
    %7379 = vmatmul.bf16.gmra.mxu0 %v540
    %v7380 = vpop.f32.mrf.mxu0
    %v7381 = vadd.f32 %v7332, %v7380
    %v7382 = vpop.f32.mrf.mxu0
    %v7383 = vadd.f32 %v7334, %v7382
    %7384 = vmatmul.bf16.gmra.mxu0 %v564
    %v7385 = vpop.f32.mrf.mxu0
    %v7386 = vadd.f32 %v7337, %v7385
    %v7387 = vpop.f32.mrf.mxu0
    %v7388 = vadd.f32 %v7339, %v7387
    %7389 = vmatmul.bf16.gmra.mxu0 %v588
    %v7390 = vpop.f32.mrf.mxu0
    %v7391 = vadd.f32 %v7342, %v7390
    %v7392 = vpop.f32.mrf.mxu0
    %v7393 = vadd.f32 %v7344, %v7392
    %7394 = vmatmul.bf16.gmra.mxu0 %v612
    %v7395 = vpop.f32.mrf.mxu0
    %v7396 = vadd.f32 %v7347, %v7395
    %v7397 = vpop.f32.mrf.mxu0
    %v7398 = vadd.f32 %v7349, %v7397
    %7399 = vmatmul.bf16.gmra.mxu0 %v636
    %v7400 = vpop.f32.mrf.mxu0
    %v7401 = vadd.f32 %v7352, %v7400
    %v7402 = vpop.f32.mrf.mxu0
    %v7403 = vadd.f32 %v7354, %v7402
    %7404 = vmatmul.bf16.gmra.mxu0 %v660
    %v7405 = vpop.f32.mrf.mxu0
    %v7406 = vadd.f32 %v7357, %v7405
    %v7407 = vpop.f32.mrf.mxu0
    %v7408 = vadd.f32 %v7359, %v7407
    %7409 = vmatmul.bf16.gmra.mxu0 %v684
    %v7410 = vpop.f32.mrf.mxu0
    %v7411 = vadd.f32 %v7362, %v7410
    %v7412 = vpop.f32.mrf.mxu0
    %v7413 = vadd.f32 %v7364, %v7412
    %7414 = vdwg.mxu0
    %7415 = vmatpush.bf16.msra.mxu0 %v4409
    %7416 = vmatpush.bf16.msra.mxu0 %v4405
    %7417 = vmatpush.bf16.msra.mxu0 %v4401
    %7418 = vmatpush.bf16.msra.mxu0 %v4397
    %7419 = vmatpush.bf16.msra.mxu0 %v4393
    %7420 = vmatpush.bf16.msra.mxu0 %v4389
    %7421 = vmatpush.bf16.msra.mxu0 %v4385
    %7422 = vmatpush.bf16.msra.mxu0 %v4381
    %7423 = vmatmul.bf16.gmra.mxu0 %v517
    %v7424 = vpop.f32.mrf.mxu0
    %v7425 = vadd.f32 %v7376, %v7424
    %v7426 = vpop.f32.mrf.mxu0
    %v7427 = vadd.f32 %v7378, %v7426
    %7428 = vmatmul.bf16.gmra.mxu0 %v541
    %v7429 = vpop.f32.mrf.mxu0
    %v7430 = vadd.f32 %v7381, %v7429
    %v7431 = vpop.f32.mrf.mxu0
    %v7432 = vadd.f32 %v7383, %v7431
    %7433 = vmatmul.bf16.gmra.mxu0 %v565
    %v7434 = vpop.f32.mrf.mxu0
    %v7435 = vadd.f32 %v7386, %v7434
    %v7436 = vpop.f32.mrf.mxu0
    %v7437 = vadd.f32 %v7388, %v7436
    %7438 = vmatmul.bf16.gmra.mxu0 %v589
    %v7439 = vpop.f32.mrf.mxu0
    %v7440 = vadd.f32 %v7391, %v7439
    %v7441 = vpop.f32.mrf.mxu0
    %v7442 = vadd.f32 %v7393, %v7441
    %7443 = vmatmul.bf16.gmra.mxu0 %v613
    %v7444 = vpop.f32.mrf.mxu0
    %v7445 = vadd.f32 %v7396, %v7444
    %v7446 = vpop.f32.mrf.mxu0
    %v7447 = vadd.f32 %v7398, %v7446
    %7448 = vmatmul.bf16.gmra.mxu0 %v637
    %v7449 = vpop.f32.mrf.mxu0
    %v7450 = vadd.f32 %v7401, %v7449
    %v7451 = vpop.f32.mrf.mxu0
    %v7452 = vadd.f32 %v7403, %v7451
    %7453 = vmatmul.bf16.gmra.mxu0 %v661
    %v7454 = vpop.f32.mrf.mxu0
    %v7455 = vadd.f32 %v7406, %v7454
    %v7456 = vpop.f32.mrf.mxu0
    %v7457 = vadd.f32 %v7408, %v7456
    %7458 = vmatmul.bf16.gmra.mxu0 %v685
    %v7459 = vpop.f32.mrf.mxu0
    %v7460 = vadd.f32 %v7411, %v7459
    %v7461 = vpop.f32.mrf.mxu0
    %v7462 = vadd.f32 %v7413, %v7461
    %7463 = vdwg.mxu0
    %7464 = vmatpush.bf16.msra.mxu0 %v4441
    %7465 = vmatpush.bf16.msra.mxu0 %v4437
    %7466 = vmatpush.bf16.msra.mxu0 %v4433
    %7467 = vmatpush.bf16.msra.mxu0 %v4429
    %7468 = vmatpush.bf16.msra.mxu0 %v4425
    %7469 = vmatpush.bf16.msra.mxu0 %v4421
    %7470 = vmatpush.bf16.msra.mxu0 %v4417
    %7471 = vmatpush.bf16.msra.mxu0 %v4413
    %7472 = vmatmul.bf16.gmra.mxu0 %v518
    %v7473 = vpop.f32.mrf.mxu0
    %v7474 = vadd.f32 %v7425, %v7473
    %v7475 = vpop.f32.mrf.mxu0
    %v7476 = vadd.f32 %v7427, %v7475
    %7477 = vmatmul.bf16.gmra.mxu0 %v542
    %v7478 = vpop.f32.mrf.mxu0
    %v7479 = vadd.f32 %v7430, %v7478
    %v7480 = vpop.f32.mrf.mxu0
    %v7481 = vadd.f32 %v7432, %v7480
    %7482 = vmatmul.bf16.gmra.mxu0 %v566
    %v7483 = vpop.f32.mrf.mxu0
    %v7484 = vadd.f32 %v7435, %v7483
    %v7485 = vpop.f32.mrf.mxu0
    %v7486 = vadd.f32 %v7437, %v7485
    %7487 = vmatmul.bf16.gmra.mxu0 %v590
    %v7488 = vpop.f32.mrf.mxu0
    %v7489 = vadd.f32 %v7440, %v7488
    %v7490 = vpop.f32.mrf.mxu0
    %v7491 = vadd.f32 %v7442, %v7490
    %7492 = vmatmul.bf16.gmra.mxu0 %v614
    %v7493 = vpop.f32.mrf.mxu0
    %v7494 = vadd.f32 %v7445, %v7493
    %v7495 = vpop.f32.mrf.mxu0
    %v7496 = vadd.f32 %v7447, %v7495
    %7497 = vmatmul.bf16.gmra.mxu0 %v638
    %v7498 = vpop.f32.mrf.mxu0
    %v7499 = vadd.f32 %v7450, %v7498
    %v7500 = vpop.f32.mrf.mxu0
    %v7501 = vadd.f32 %v7452, %v7500
    %7502 = vmatmul.bf16.gmra.mxu0 %v662
    %v7503 = vpop.f32.mrf.mxu0
    %v7504 = vadd.f32 %v7455, %v7503
    %v7505 = vpop.f32.mrf.mxu0
    %v7506 = vadd.f32 %v7457, %v7505
    %7507 = vmatmul.bf16.gmra.mxu0 %v686
    %v7508 = vpop.f32.mrf.mxu0
    %v7509 = vadd.f32 %v7460, %v7508
    %v7510 = vpop.f32.mrf.mxu0
    %v7511 = vadd.f32 %v7462, %v7510
    %7512 = vdwg.mxu0
    %7513 = vmatpush.bf16.msra.mxu0 %v4473
    %7514 = vmatpush.bf16.msra.mxu0 %v4469
    %7515 = vmatpush.bf16.msra.mxu0 %v4465
    %7516 = vmatpush.bf16.msra.mxu0 %v4461
    %7517 = vmatpush.bf16.msra.mxu0 %v4457
    %7518 = vmatpush.bf16.msra.mxu0 %v4453
    %7519 = vmatpush.bf16.msra.mxu0 %v4449
    %7520 = vmatpush.bf16.msra.mxu0 %v4445
    %7521 = vmatmul.bf16.gmra.mxu0 %v519
    %v7522 = vpop.f32.mrf.mxu0
    %v7523 = vadd.f32 %v7474, %v7522
    %v7524 = vpop.f32.mrf.mxu0
    %v7525 = vadd.f32 %v7476, %v7524
    %7526 = vmatmul.bf16.gmra.mxu0 %v543
    %v7527 = vpop.f32.mrf.mxu0
    %v7528 = vadd.f32 %v7479, %v7527
    %v7529 = vpop.f32.mrf.mxu0
    %v7530 = vadd.f32 %v7481, %v7529
    %7531 = vmatmul.bf16.gmra.mxu0 %v567
    %v7532 = vpop.f32.mrf.mxu0
    %v7533 = vadd.f32 %v7484, %v7532
    %v7534 = vpop.f32.mrf.mxu0
    %v7535 = vadd.f32 %v7486, %v7534
    %7536 = vmatmul.bf16.gmra.mxu0 %v591
    %v7537 = vpop.f32.mrf.mxu0
    %v7538 = vadd.f32 %v7489, %v7537
    %v7539 = vpop.f32.mrf.mxu0
    %v7540 = vadd.f32 %v7491, %v7539
    %7541 = vmatmul.bf16.gmra.mxu0 %v615
    %v7542 = vpop.f32.mrf.mxu0
    %v7543 = vadd.f32 %v7494, %v7542
    %v7544 = vpop.f32.mrf.mxu0
    %v7545 = vadd.f32 %v7496, %v7544
    %7546 = vmatmul.bf16.gmra.mxu0 %v639
    %v7547 = vpop.f32.mrf.mxu0
    %v7548 = vadd.f32 %v7499, %v7547
    %v7549 = vpop.f32.mrf.mxu0
    %v7550 = vadd.f32 %v7501, %v7549
    %7551 = vmatmul.bf16.gmra.mxu0 %v663
    %v7552 = vpop.f32.mrf.mxu0
    %v7553 = vadd.f32 %v7504, %v7552
    %v7554 = vpop.f32.mrf.mxu0
    %v7555 = vadd.f32 %v7506, %v7554
    %7556 = vmatmul.bf16.gmra.mxu0 %v687
    %v7557 = vpop.f32.mrf.mxu0
    %v7558 = vadd.f32 %v7509, %v7557
    %v7559 = vpop.f32.mrf.mxu0
    %v7560 = vadd.f32 %v7511, %v7559
    %7561 = vdwg.mxu0
    %7562 = vmatpush.bf16.msra.mxu0 %v4505
    %7563 = vmatpush.bf16.msra.mxu0 %v4501
    %7564 = vmatpush.bf16.msra.mxu0 %v4497
    %7565 = vmatpush.bf16.msra.mxu0 %v4493
    %7566 = vmatpush.bf16.msra.mxu0 %v4489
    %7567 = vmatpush.bf16.msra.mxu0 %v4485
    %7568 = vmatpush.bf16.msra.mxu0 %v4481
    %7569 = vmatpush.bf16.msra.mxu0 %v4477
    %7570 = vmatmul.bf16.gmra.mxu0 %v520
    %v7571 = vpop.f32.mrf.mxu0
    %v7572 = vadd.f32 %v7523, %v7571
    %v7573 = vpop.f32.mrf.mxu0
    %v7574 = vadd.f32 %v7525, %v7573
    %7575 = vmatmul.bf16.gmra.mxu0 %v544
    %v7576 = vpop.f32.mrf.mxu0
    %v7577 = vadd.f32 %v7528, %v7576
    %v7578 = vpop.f32.mrf.mxu0
    %v7579 = vadd.f32 %v7530, %v7578
    %7580 = vmatmul.bf16.gmra.mxu0 %v568
    %v7581 = vpop.f32.mrf.mxu0
    %v7582 = vadd.f32 %v7533, %v7581
    %v7583 = vpop.f32.mrf.mxu0
    %v7584 = vadd.f32 %v7535, %v7583
    %7585 = vmatmul.bf16.gmra.mxu0 %v592
    %v7586 = vpop.f32.mrf.mxu0
    %v7587 = vadd.f32 %v7538, %v7586
    %v7588 = vpop.f32.mrf.mxu0
    %v7589 = vadd.f32 %v7540, %v7588
    %7590 = vmatmul.bf16.gmra.mxu0 %v616
    %v7591 = vpop.f32.mrf.mxu0
    %v7592 = vadd.f32 %v7543, %v7591
    %v7593 = vpop.f32.mrf.mxu0
    %v7594 = vadd.f32 %v7545, %v7593
    %7595 = vmatmul.bf16.gmra.mxu0 %v640
    %v7596 = vpop.f32.mrf.mxu0
    %v7597 = vadd.f32 %v7548, %v7596
    %v7598 = vpop.f32.mrf.mxu0
    %v7599 = vadd.f32 %v7550, %v7598
    %7600 = vmatmul.bf16.gmra.mxu0 %v664
    %v7601 = vpop.f32.mrf.mxu0
    %v7602 = vadd.f32 %v7553, %v7601
    %v7603 = vpop.f32.mrf.mxu0
    %v7604 = vadd.f32 %v7555, %v7603
    %7605 = vmatmul.bf16.gmra.mxu0 %v688
    %v7606 = vpop.f32.mrf.mxu0
    %v7607 = vadd.f32 %v7558, %v7606
    %v7608 = vpop.f32.mrf.mxu0
    %v7609 = vadd.f32 %v7560, %v7608
    %7610 = vdwg.mxu0
    %7611 = vmatpush.bf16.msra.mxu0 %v4537
    %7612 = vmatpush.bf16.msra.mxu0 %v4533
    %7613 = vmatpush.bf16.msra.mxu0 %v4529
    %7614 = vmatpush.bf16.msra.mxu0 %v4525
    %7615 = vmatpush.bf16.msra.mxu0 %v4521
    %7616 = vmatpush.bf16.msra.mxu0 %v4517
    %7617 = vmatpush.bf16.msra.mxu0 %v4513
    %7618 = vmatpush.bf16.msra.mxu0 %v4509
    %7619 = vmatmul.bf16.gmra.mxu0 %v521
    %v7620 = vpop.f32.mrf.mxu0
    %v7621 = vadd.f32 %v7572, %v7620
    %v7622 = vpop.f32.mrf.mxu0
    %v7623 = vadd.f32 %v7574, %v7622
    %7624 = vmatmul.bf16.gmra.mxu0 %v545
    %v7625 = vpop.f32.mrf.mxu0
    %v7626 = vadd.f32 %v7577, %v7625
    %v7627 = vpop.f32.mrf.mxu0
    %v7628 = vadd.f32 %v7579, %v7627
    %7629 = vmatmul.bf16.gmra.mxu0 %v569
    %v7630 = vpop.f32.mrf.mxu0
    %v7631 = vadd.f32 %v7582, %v7630
    %v7632 = vpop.f32.mrf.mxu0
    %v7633 = vadd.f32 %v7584, %v7632
    %7634 = vmatmul.bf16.gmra.mxu0 %v593
    %v7635 = vpop.f32.mrf.mxu0
    %v7636 = vadd.f32 %v7587, %v7635
    %v7637 = vpop.f32.mrf.mxu0
    %v7638 = vadd.f32 %v7589, %v7637
    %7639 = vmatmul.bf16.gmra.mxu0 %v617
    %v7640 = vpop.f32.mrf.mxu0
    %v7641 = vadd.f32 %v7592, %v7640
    %v7642 = vpop.f32.mrf.mxu0
    %v7643 = vadd.f32 %v7594, %v7642
    %7644 = vmatmul.bf16.gmra.mxu0 %v641
    %v7645 = vpop.f32.mrf.mxu0
    %v7646 = vadd.f32 %v7597, %v7645
    %v7647 = vpop.f32.mrf.mxu0
    %v7648 = vadd.f32 %v7599, %v7647
    %7649 = vmatmul.bf16.gmra.mxu0 %v665
    %v7650 = vpop.f32.mrf.mxu0
    %v7651 = vadd.f32 %v7602, %v7650
    %v7652 = vpop.f32.mrf.mxu0
    %v7653 = vadd.f32 %v7604, %v7652
    %7654 = vmatmul.bf16.gmra.mxu0 %v689
    %v7655 = vpop.f32.mrf.mxu0
    %v7656 = vadd.f32 %v7607, %v7655
    %v7657 = vpop.f32.mrf.mxu0
    %v7658 = vadd.f32 %v7609, %v7657
    %7659 = vdwg.mxu0
    %7660 = vmatpush.bf16.msra.mxu0 %v3802
    %7661 = vmatpush.bf16.msra.mxu0 %v3798
    %7662 = vmatpush.bf16.msra.mxu0 %v3794
    %7663 = vmatpush.bf16.msra.mxu0 %v3790
    %7664 = vmatpush.bf16.msra.mxu0 %v3786
    %7665 = vmatpush.bf16.msra.mxu0 %v3782
    %7666 = vmatpush.bf16.msra.mxu0 %v3778
    %7667 = vmatpush.bf16.msra.mxu0 %v3774
    %7668 = vmatmul.bf16.gmra.mxu0 %v498
    %v7669 = vpop.f32.mrf.mxu0
    %v7670 = vadd.f32 %v1462, %v7669
    %v7671 = vpop.f32.mrf.mxu0
    %v7672 = vadd.f32 %v1462, %v7671
    %7673 = vmatmul.bf16.gmra.mxu0 %v522
    %v7674 = vpop.f32.mrf.mxu0
    %v7675 = vadd.f32 %v1462, %v7674
    %v7676 = vpop.f32.mrf.mxu0
    %v7677 = vadd.f32 %v1462, %v7676
    %7678 = vmatmul.bf16.gmra.mxu0 %v546
    %v7679 = vpop.f32.mrf.mxu0
    %v7680 = vadd.f32 %v1462, %v7679
    %v7681 = vpop.f32.mrf.mxu0
    %v7682 = vadd.f32 %v1462, %v7681
    %7683 = vmatmul.bf16.gmra.mxu0 %v570
    %v7684 = vpop.f32.mrf.mxu0
    %v7685 = vadd.f32 %v1462, %v7684
    %v7686 = vpop.f32.mrf.mxu0
    %v7687 = vadd.f32 %v1462, %v7686
    %7688 = vmatmul.bf16.gmra.mxu0 %v594
    %v7689 = vpop.f32.mrf.mxu0
    %v7690 = vadd.f32 %v1462, %v7689
    %v7691 = vpop.f32.mrf.mxu0
    %v7692 = vadd.f32 %v1462, %v7691
    %7693 = vmatmul.bf16.gmra.mxu0 %v618
    %v7694 = vpop.f32.mrf.mxu0
    %v7695 = vadd.f32 %v1462, %v7694
    %v7696 = vpop.f32.mrf.mxu0
    %v7697 = vadd.f32 %v1462, %v7696
    %7698 = vmatmul.bf16.gmra.mxu0 %v642
    %v7699 = vpop.f32.mrf.mxu0
    %v7700 = vadd.f32 %v1462, %v7699
    %v7701 = vpop.f32.mrf.mxu0
    %v7702 = vadd.f32 %v1462, %v7701
    %7703 = vmatmul.bf16.gmra.mxu0 %v666
    %v7704 = vpop.f32.mrf.mxu0
    %v7705 = vadd.f32 %v1462, %v7704
    %v7706 = vpop.f32.mrf.mxu0
    %v7707 = vadd.f32 %v1462, %v7706
    %7708 = vdwg.mxu0
    %7709 = vmatpush.bf16.msra.mxu0 %v3834
    %7710 = vmatpush.bf16.msra.mxu0 %v3830
    %7711 = vmatpush.bf16.msra.mxu0 %v3826
    %7712 = vmatpush.bf16.msra.mxu0 %v3822
    %7713 = vmatpush.bf16.msra.mxu0 %v3818
    %7714 = vmatpush.bf16.msra.mxu0 %v3814
    %7715 = vmatpush.bf16.msra.mxu0 %v3810
    %7716 = vmatpush.bf16.msra.mxu0 %v3806
    %7717 = vmatmul.bf16.gmra.mxu0 %v499
    %v7718 = vpop.f32.mrf.mxu0
    %v7719 = vadd.f32 %v7670, %v7718
    %v7720 = vpop.f32.mrf.mxu0
    %v7721 = vadd.f32 %v7672, %v7720
    %7722 = vmatmul.bf16.gmra.mxu0 %v523
    %v7723 = vpop.f32.mrf.mxu0
    %v7724 = vadd.f32 %v7675, %v7723
    %v7725 = vpop.f32.mrf.mxu0
    %v7726 = vadd.f32 %v7677, %v7725
    %7727 = vmatmul.bf16.gmra.mxu0 %v547
    %v7728 = vpop.f32.mrf.mxu0
    %v7729 = vadd.f32 %v7680, %v7728
    %v7730 = vpop.f32.mrf.mxu0
    %v7731 = vadd.f32 %v7682, %v7730
    %7732 = vmatmul.bf16.gmra.mxu0 %v571
    %v7733 = vpop.f32.mrf.mxu0
    %v7734 = vadd.f32 %v7685, %v7733
    %v7735 = vpop.f32.mrf.mxu0
    %v7736 = vadd.f32 %v7687, %v7735
    %7737 = vmatmul.bf16.gmra.mxu0 %v595
    %v7738 = vpop.f32.mrf.mxu0
    %v7739 = vadd.f32 %v7690, %v7738
    %v7740 = vpop.f32.mrf.mxu0
    %v7741 = vadd.f32 %v7692, %v7740
    %7742 = vmatmul.bf16.gmra.mxu0 %v619
    %v7743 = vpop.f32.mrf.mxu0
    %v7744 = vadd.f32 %v7695, %v7743
    %v7745 = vpop.f32.mrf.mxu0
    %v7746 = vadd.f32 %v7697, %v7745
    %7747 = vmatmul.bf16.gmra.mxu0 %v643
    %v7748 = vpop.f32.mrf.mxu0
    %v7749 = vadd.f32 %v7700, %v7748
    %v7750 = vpop.f32.mrf.mxu0
    %v7751 = vadd.f32 %v7702, %v7750
    %7752 = vmatmul.bf16.gmra.mxu0 %v667
    %v7753 = vpop.f32.mrf.mxu0
    %v7754 = vadd.f32 %v7705, %v7753
    %v7755 = vpop.f32.mrf.mxu0
    %v7756 = vadd.f32 %v7707, %v7755
    %7757 = vdwg.mxu0
    %7758 = vmatpush.bf16.msra.mxu0 %v3866
    %7759 = vmatpush.bf16.msra.mxu0 %v3862
    %7760 = vmatpush.bf16.msra.mxu0 %v3858
    %7761 = vmatpush.bf16.msra.mxu0 %v3854
    %7762 = vmatpush.bf16.msra.mxu0 %v3850
    %7763 = vmatpush.bf16.msra.mxu0 %v3846
    %7764 = vmatpush.bf16.msra.mxu0 %v3842
    %7765 = vmatpush.bf16.msra.mxu0 %v3838
    %7766 = vmatmul.bf16.gmra.mxu0 %v500
    %v7767 = vpop.f32.mrf.mxu0
    %v7768 = vadd.f32 %v7719, %v7767
    %v7769 = vpop.f32.mrf.mxu0
    %v7770 = vadd.f32 %v7721, %v7769
    %7771 = vmatmul.bf16.gmra.mxu0 %v524
    %v7772 = vpop.f32.mrf.mxu0
    %v7773 = vadd.f32 %v7724, %v7772
    %v7774 = vpop.f32.mrf.mxu0
    %v7775 = vadd.f32 %v7726, %v7774
    %7776 = vmatmul.bf16.gmra.mxu0 %v548
    %v7777 = vpop.f32.mrf.mxu0
    %v7778 = vadd.f32 %v7729, %v7777
    %v7779 = vpop.f32.mrf.mxu0
    %v7780 = vadd.f32 %v7731, %v7779
    %7781 = vmatmul.bf16.gmra.mxu0 %v572
    %v7782 = vpop.f32.mrf.mxu0
    %v7783 = vadd.f32 %v7734, %v7782
    %v7784 = vpop.f32.mrf.mxu0
    %v7785 = vadd.f32 %v7736, %v7784
    %7786 = vmatmul.bf16.gmra.mxu0 %v596
    %v7787 = vpop.f32.mrf.mxu0
    %v7788 = vadd.f32 %v7739, %v7787
    %v7789 = vpop.f32.mrf.mxu0
    %v7790 = vadd.f32 %v7741, %v7789
    %7791 = vmatmul.bf16.gmra.mxu0 %v620
    %v7792 = vpop.f32.mrf.mxu0
    %v7793 = vadd.f32 %v7744, %v7792
    %v7794 = vpop.f32.mrf.mxu0
    %v7795 = vadd.f32 %v7746, %v7794
    %7796 = vmatmul.bf16.gmra.mxu0 %v644
    %v7797 = vpop.f32.mrf.mxu0
    %v7798 = vadd.f32 %v7749, %v7797
    %v7799 = vpop.f32.mrf.mxu0
    %v7800 = vadd.f32 %v7751, %v7799
    %7801 = vmatmul.bf16.gmra.mxu0 %v668
    %v7802 = vpop.f32.mrf.mxu0
    %v7803 = vadd.f32 %v7754, %v7802
    %v7804 = vpop.f32.mrf.mxu0
    %v7805 = vadd.f32 %v7756, %v7804
    %7806 = vdwg.mxu0
    %7807 = vmatpush.bf16.msra.mxu0 %v3898
    %7808 = vmatpush.bf16.msra.mxu0 %v3894
    %7809 = vmatpush.bf16.msra.mxu0 %v3890
    %7810 = vmatpush.bf16.msra.mxu0 %v3886
    %7811 = vmatpush.bf16.msra.mxu0 %v3882
    %7812 = vmatpush.bf16.msra.mxu0 %v3878
    %7813 = vmatpush.bf16.msra.mxu0 %v3874
    %7814 = vmatpush.bf16.msra.mxu0 %v3870
    %7815 = vmatmul.bf16.gmra.mxu0 %v501
    %v7816 = vpop.f32.mrf.mxu0
    %v7817 = vadd.f32 %v7768, %v7816
    %v7818 = vpop.f32.mrf.mxu0
    %v7819 = vadd.f32 %v7770, %v7818
    %7820 = vmatmul.bf16.gmra.mxu0 %v525
    %v7821 = vpop.f32.mrf.mxu0
    %v7822 = vadd.f32 %v7773, %v7821
    %v7823 = vpop.f32.mrf.mxu0
    %v7824 = vadd.f32 %v7775, %v7823
    %7825 = vmatmul.bf16.gmra.mxu0 %v549
    %v7826 = vpop.f32.mrf.mxu0
    %v7827 = vadd.f32 %v7778, %v7826
    %v7828 = vpop.f32.mrf.mxu0
    %v7829 = vadd.f32 %v7780, %v7828
    %7830 = vmatmul.bf16.gmra.mxu0 %v573
    %v7831 = vpop.f32.mrf.mxu0
    %v7832 = vadd.f32 %v7783, %v7831
    %v7833 = vpop.f32.mrf.mxu0
    %v7834 = vadd.f32 %v7785, %v7833
    %7835 = vmatmul.bf16.gmra.mxu0 %v597
    %v7836 = vpop.f32.mrf.mxu0
    %v7837 = vadd.f32 %v7788, %v7836
    %v7838 = vpop.f32.mrf.mxu0
    %v7839 = vadd.f32 %v7790, %v7838
    %7840 = vmatmul.bf16.gmra.mxu0 %v621
    %v7841 = vpop.f32.mrf.mxu0
    %v7842 = vadd.f32 %v7793, %v7841
    %v7843 = vpop.f32.mrf.mxu0
    %v7844 = vadd.f32 %v7795, %v7843
    %7845 = vmatmul.bf16.gmra.mxu0 %v645
    %v7846 = vpop.f32.mrf.mxu0
    %v7847 = vadd.f32 %v7798, %v7846
    %v7848 = vpop.f32.mrf.mxu0
    %v7849 = vadd.f32 %v7800, %v7848
    %7850 = vmatmul.bf16.gmra.mxu0 %v669
    %v7851 = vpop.f32.mrf.mxu0
    %v7852 = vadd.f32 %v7803, %v7851
    %v7853 = vpop.f32.mrf.mxu0
    %v7854 = vadd.f32 %v7805, %v7853
    %7855 = vdwg.mxu0
    %7856 = vmatpush.bf16.msra.mxu0 %v3930
    %7857 = vmatpush.bf16.msra.mxu0 %v3926
    %7858 = vmatpush.bf16.msra.mxu0 %v3922
    %7859 = vmatpush.bf16.msra.mxu0 %v3918
    %7860 = vmatpush.bf16.msra.mxu0 %v3914
    %7861 = vmatpush.bf16.msra.mxu0 %v3910
    %7862 = vmatpush.bf16.msra.mxu0 %v3906
    %7863 = vmatpush.bf16.msra.mxu0 %v3902
    %7864 = vmatmul.bf16.gmra.mxu0 %v502
    %v7865 = vpop.f32.mrf.mxu0
    %v7866 = vadd.f32 %v7817, %v7865
    %v7867 = vpop.f32.mrf.mxu0
    %v7868 = vadd.f32 %v7819, %v7867
    %7869 = vmatmul.bf16.gmra.mxu0 %v526
    %v7870 = vpop.f32.mrf.mxu0
    %v7871 = vadd.f32 %v7822, %v7870
    %v7872 = vpop.f32.mrf.mxu0
    %v7873 = vadd.f32 %v7824, %v7872
    %7874 = vmatmul.bf16.gmra.mxu0 %v550
    %v7875 = vpop.f32.mrf.mxu0
    %v7876 = vadd.f32 %v7827, %v7875
    %v7877 = vpop.f32.mrf.mxu0
    %v7878 = vadd.f32 %v7829, %v7877
    %7879 = vmatmul.bf16.gmra.mxu0 %v574
    %v7880 = vpop.f32.mrf.mxu0
    %v7881 = vadd.f32 %v7832, %v7880
    %v7882 = vpop.f32.mrf.mxu0
    %v7883 = vadd.f32 %v7834, %v7882
    %7884 = vmatmul.bf16.gmra.mxu0 %v598
    %v7885 = vpop.f32.mrf.mxu0
    %v7886 = vadd.f32 %v7837, %v7885
    %v7887 = vpop.f32.mrf.mxu0
    %v7888 = vadd.f32 %v7839, %v7887
    %7889 = vmatmul.bf16.gmra.mxu0 %v622
    %v7890 = vpop.f32.mrf.mxu0
    %v7891 = vadd.f32 %v7842, %v7890
    %v7892 = vpop.f32.mrf.mxu0
    %v7893 = vadd.f32 %v7844, %v7892
    %7894 = vmatmul.bf16.gmra.mxu0 %v646
    %v7895 = vpop.f32.mrf.mxu0
    %v7896 = vadd.f32 %v7847, %v7895
    %v7897 = vpop.f32.mrf.mxu0
    %v7898 = vadd.f32 %v7849, %v7897
    %7899 = vmatmul.bf16.gmra.mxu0 %v670
    %v7900 = vpop.f32.mrf.mxu0
    %v7901 = vadd.f32 %v7852, %v7900
    %v7902 = vpop.f32.mrf.mxu0
    %v7903 = vadd.f32 %v7854, %v7902
    %7904 = vdwg.mxu0
    %7905 = vmatpush.bf16.msra.mxu0 %v3962
    %7906 = vmatpush.bf16.msra.mxu0 %v3958
    %7907 = vmatpush.bf16.msra.mxu0 %v3954
    %7908 = vmatpush.bf16.msra.mxu0 %v3950
    %7909 = vmatpush.bf16.msra.mxu0 %v3946
    %7910 = vmatpush.bf16.msra.mxu0 %v3942
    %7911 = vmatpush.bf16.msra.mxu0 %v3938
    %7912 = vmatpush.bf16.msra.mxu0 %v3934
    %7913 = vmatmul.bf16.gmra.mxu0 %v503
    %v7914 = vpop.f32.mrf.mxu0
    %v7915 = vadd.f32 %v7866, %v7914
    %v7916 = vpop.f32.mrf.mxu0
    %v7917 = vadd.f32 %v7868, %v7916
    %7918 = vmatmul.bf16.gmra.mxu0 %v527
    %v7919 = vpop.f32.mrf.mxu0
    %v7920 = vadd.f32 %v7871, %v7919
    %v7921 = vpop.f32.mrf.mxu0
    %v7922 = vadd.f32 %v7873, %v7921
    %7923 = vmatmul.bf16.gmra.mxu0 %v551
    %v7924 = vpop.f32.mrf.mxu0
    %v7925 = vadd.f32 %v7876, %v7924
    %v7926 = vpop.f32.mrf.mxu0
    %v7927 = vadd.f32 %v7878, %v7926
    %7928 = vmatmul.bf16.gmra.mxu0 %v575
    %v7929 = vpop.f32.mrf.mxu0
    %v7930 = vadd.f32 %v7881, %v7929
    %v7931 = vpop.f32.mrf.mxu0
    %v7932 = vadd.f32 %v7883, %v7931
    %7933 = vmatmul.bf16.gmra.mxu0 %v599
    %v7934 = vpop.f32.mrf.mxu0
    %v7935 = vadd.f32 %v7886, %v7934
    %v7936 = vpop.f32.mrf.mxu0
    %v7937 = vadd.f32 %v7888, %v7936
    %7938 = vmatmul.bf16.gmra.mxu0 %v623
    %v7939 = vpop.f32.mrf.mxu0
    %v7940 = vadd.f32 %v7891, %v7939
    %v7941 = vpop.f32.mrf.mxu0
    %v7942 = vadd.f32 %v7893, %v7941
    %7943 = vmatmul.bf16.gmra.mxu0 %v647
    %v7944 = vpop.f32.mrf.mxu0
    %v7945 = vadd.f32 %v7896, %v7944
    %v7946 = vpop.f32.mrf.mxu0
    %v7947 = vadd.f32 %v7898, %v7946
    %7948 = vmatmul.bf16.gmra.mxu0 %v671
    %v7949 = vpop.f32.mrf.mxu0
    %v7950 = vadd.f32 %v7901, %v7949
    %v7951 = vpop.f32.mrf.mxu0
    %v7952 = vadd.f32 %v7903, %v7951
    %7953 = vdwg.mxu0
    %7954 = vmatpush.bf16.msra.mxu0 %v3994
    %7955 = vmatpush.bf16.msra.mxu0 %v3990
    %7956 = vmatpush.bf16.msra.mxu0 %v3986
    %7957 = vmatpush.bf16.msra.mxu0 %v3982
    %7958 = vmatpush.bf16.msra.mxu0 %v3978
    %7959 = vmatpush.bf16.msra.mxu0 %v3974
    %7960 = vmatpush.bf16.msra.mxu0 %v3970
    %7961 = vmatpush.bf16.msra.mxu0 %v3966
    %7962 = vmatmul.bf16.gmra.mxu0 %v504
    %v7963 = vpop.f32.mrf.mxu0
    %v7964 = vadd.f32 %v7915, %v7963
    %v7965 = vpop.f32.mrf.mxu0
    %v7966 = vadd.f32 %v7917, %v7965
    %7967 = vmatmul.bf16.gmra.mxu0 %v528
    %v7968 = vpop.f32.mrf.mxu0
    %v7969 = vadd.f32 %v7920, %v7968
    %v7970 = vpop.f32.mrf.mxu0
    %v7971 = vadd.f32 %v7922, %v7970
    %7972 = vmatmul.bf16.gmra.mxu0 %v552
    %v7973 = vpop.f32.mrf.mxu0
    %v7974 = vadd.f32 %v7925, %v7973
    %v7975 = vpop.f32.mrf.mxu0
    %v7976 = vadd.f32 %v7927, %v7975
    %7977 = vmatmul.bf16.gmra.mxu0 %v576
    %v7978 = vpop.f32.mrf.mxu0
    %v7979 = vadd.f32 %v7930, %v7978
    %v7980 = vpop.f32.mrf.mxu0
    %v7981 = vadd.f32 %v7932, %v7980
    %7982 = vmatmul.bf16.gmra.mxu0 %v600
    %v7983 = vpop.f32.mrf.mxu0
    %v7984 = vadd.f32 %v7935, %v7983
    %v7985 = vpop.f32.mrf.mxu0
    %v7986 = vadd.f32 %v7937, %v7985
    %7987 = vmatmul.bf16.gmra.mxu0 %v624
    %v7988 = vpop.f32.mrf.mxu0
    %v7989 = vadd.f32 %v7940, %v7988
    %v7990 = vpop.f32.mrf.mxu0
    %v7991 = vadd.f32 %v7942, %v7990
    %7992 = vmatmul.bf16.gmra.mxu0 %v648
    %v7993 = vpop.f32.mrf.mxu0
    %v7994 = vadd.f32 %v7945, %v7993
    %v7995 = vpop.f32.mrf.mxu0
    %v7996 = vadd.f32 %v7947, %v7995
    %7997 = vmatmul.bf16.gmra.mxu0 %v672
    %v7998 = vpop.f32.mrf.mxu0
    %v7999 = vadd.f32 %v7950, %v7998
    %v8000 = vpop.f32.mrf.mxu0
    %v8001 = vadd.f32 %v7952, %v8000
    %8002 = vdwg.mxu0
    %8003 = vmatpush.bf16.msra.mxu0 %v4026
    %8004 = vmatpush.bf16.msra.mxu0 %v4022
    %8005 = vmatpush.bf16.msra.mxu0 %v4018
    %8006 = vmatpush.bf16.msra.mxu0 %v4014
    %8007 = vmatpush.bf16.msra.mxu0 %v4010
    %8008 = vmatpush.bf16.msra.mxu0 %v4006
    %8009 = vmatpush.bf16.msra.mxu0 %v4002
    %8010 = vmatpush.bf16.msra.mxu0 %v3998
    %8011 = vmatmul.bf16.gmra.mxu0 %v505
    %v8012 = vpop.f32.mrf.mxu0
    %v8013 = vadd.f32 %v7964, %v8012
    %v8014 = vpop.f32.mrf.mxu0
    %v8015 = vadd.f32 %v7966, %v8014
    %8016 = vmatmul.bf16.gmra.mxu0 %v529
    %v8017 = vpop.f32.mrf.mxu0
    %v8018 = vadd.f32 %v7969, %v8017
    %v8019 = vpop.f32.mrf.mxu0
    %v8020 = vadd.f32 %v7971, %v8019
    %8021 = vmatmul.bf16.gmra.mxu0 %v553
    %v8022 = vpop.f32.mrf.mxu0
    %v8023 = vadd.f32 %v7974, %v8022
    %v8024 = vpop.f32.mrf.mxu0
    %v8025 = vadd.f32 %v7976, %v8024
    %8026 = vmatmul.bf16.gmra.mxu0 %v577
    %v8027 = vpop.f32.mrf.mxu0
    %v8028 = vadd.f32 %v7979, %v8027
    %v8029 = vpop.f32.mrf.mxu0
    %v8030 = vadd.f32 %v7981, %v8029
    %8031 = vmatmul.bf16.gmra.mxu0 %v601
    %v8032 = vpop.f32.mrf.mxu0
    %v8033 = vadd.f32 %v7984, %v8032
    %v8034 = vpop.f32.mrf.mxu0
    %v8035 = vadd.f32 %v7986, %v8034
    %8036 = vmatmul.bf16.gmra.mxu0 %v625
    %v8037 = vpop.f32.mrf.mxu0
    %v8038 = vadd.f32 %v7989, %v8037
    %v8039 = vpop.f32.mrf.mxu0
    %v8040 = vadd.f32 %v7991, %v8039
    %8041 = vmatmul.bf16.gmra.mxu0 %v649
    %v8042 = vpop.f32.mrf.mxu0
    %v8043 = vadd.f32 %v7994, %v8042
    %v8044 = vpop.f32.mrf.mxu0
    %v8045 = vadd.f32 %v7996, %v8044
    %8046 = vmatmul.bf16.gmra.mxu0 %v673
    %v8047 = vpop.f32.mrf.mxu0
    %v8048 = vadd.f32 %v7999, %v8047
    %v8049 = vpop.f32.mrf.mxu0
    %v8050 = vadd.f32 %v8001, %v8049
    %8051 = vdwg.mxu0
    %8052 = vmatpush.bf16.msra.mxu0 %v4058
    %8053 = vmatpush.bf16.msra.mxu0 %v4054
    %8054 = vmatpush.bf16.msra.mxu0 %v4050
    %8055 = vmatpush.bf16.msra.mxu0 %v4046
    %8056 = vmatpush.bf16.msra.mxu0 %v4042
    %8057 = vmatpush.bf16.msra.mxu0 %v4038
    %8058 = vmatpush.bf16.msra.mxu0 %v4034
    %8059 = vmatpush.bf16.msra.mxu0 %v4030
    %8060 = vmatmul.bf16.gmra.mxu0 %v506
    %v8061 = vpop.f32.mrf.mxu0
    %v8062 = vadd.f32 %v8013, %v8061
    %v8063 = vpop.f32.mrf.mxu0
    %v8064 = vadd.f32 %v8015, %v8063
    %8065 = vmatmul.bf16.gmra.mxu0 %v530
    %v8066 = vpop.f32.mrf.mxu0
    %v8067 = vadd.f32 %v8018, %v8066
    %v8068 = vpop.f32.mrf.mxu0
    %v8069 = vadd.f32 %v8020, %v8068
    %8070 = vmatmul.bf16.gmra.mxu0 %v554
    %v8071 = vpop.f32.mrf.mxu0
    %v8072 = vadd.f32 %v8023, %v8071
    %v8073 = vpop.f32.mrf.mxu0
    %v8074 = vadd.f32 %v8025, %v8073
    %8075 = vmatmul.bf16.gmra.mxu0 %v578
    %v8076 = vpop.f32.mrf.mxu0
    %v8077 = vadd.f32 %v8028, %v8076
    %v8078 = vpop.f32.mrf.mxu0
    %v8079 = vadd.f32 %v8030, %v8078
    %8080 = vmatmul.bf16.gmra.mxu0 %v602
    %v8081 = vpop.f32.mrf.mxu0
    %v8082 = vadd.f32 %v8033, %v8081
    %v8083 = vpop.f32.mrf.mxu0
    %v8084 = vadd.f32 %v8035, %v8083
    %8085 = vmatmul.bf16.gmra.mxu0 %v626
    %v8086 = vpop.f32.mrf.mxu0
    %v8087 = vadd.f32 %v8038, %v8086
    %v8088 = vpop.f32.mrf.mxu0
    %v8089 = vadd.f32 %v8040, %v8088
    %8090 = vmatmul.bf16.gmra.mxu0 %v650
    %v8091 = vpop.f32.mrf.mxu0
    %v8092 = vadd.f32 %v8043, %v8091
    %v8093 = vpop.f32.mrf.mxu0
    %v8094 = vadd.f32 %v8045, %v8093
    %8095 = vmatmul.bf16.gmra.mxu0 %v674
    %v8096 = vpop.f32.mrf.mxu0
    %v8097 = vadd.f32 %v8048, %v8096
    %v8098 = vpop.f32.mrf.mxu0
    %v8099 = vadd.f32 %v8050, %v8098
    %8100 = vdwg.mxu0
    %8101 = vmatpush.bf16.msra.mxu0 %v4090
    %8102 = vmatpush.bf16.msra.mxu0 %v4086
    %8103 = vmatpush.bf16.msra.mxu0 %v4082
    %8104 = vmatpush.bf16.msra.mxu0 %v4078
    %8105 = vmatpush.bf16.msra.mxu0 %v4074
    %8106 = vmatpush.bf16.msra.mxu0 %v4070
    %8107 = vmatpush.bf16.msra.mxu0 %v4066
    %8108 = vmatpush.bf16.msra.mxu0 %v4062
    %8109 = vmatmul.bf16.gmra.mxu0 %v507
    %v8110 = vpop.f32.mrf.mxu0
    %v8111 = vadd.f32 %v8062, %v8110
    %v8112 = vpop.f32.mrf.mxu0
    %v8113 = vadd.f32 %v8064, %v8112
    %8114 = vmatmul.bf16.gmra.mxu0 %v531
    %v8115 = vpop.f32.mrf.mxu0
    %v8116 = vadd.f32 %v8067, %v8115
    %v8117 = vpop.f32.mrf.mxu0
    %v8118 = vadd.f32 %v8069, %v8117
    %8119 = vmatmul.bf16.gmra.mxu0 %v555
    %v8120 = vpop.f32.mrf.mxu0
    %v8121 = vadd.f32 %v8072, %v8120
    %v8122 = vpop.f32.mrf.mxu0
    %v8123 = vadd.f32 %v8074, %v8122
    %8124 = vmatmul.bf16.gmra.mxu0 %v579
    %v8125 = vpop.f32.mrf.mxu0
    %v8126 = vadd.f32 %v8077, %v8125
    %v8127 = vpop.f32.mrf.mxu0
    %v8128 = vadd.f32 %v8079, %v8127
    %8129 = vmatmul.bf16.gmra.mxu0 %v603
    %v8130 = vpop.f32.mrf.mxu0
    %v8131 = vadd.f32 %v8082, %v8130
    %v8132 = vpop.f32.mrf.mxu0
    %v8133 = vadd.f32 %v8084, %v8132
    %8134 = vmatmul.bf16.gmra.mxu0 %v627
    %v8135 = vpop.f32.mrf.mxu0
    %v8136 = vadd.f32 %v8087, %v8135
    %v8137 = vpop.f32.mrf.mxu0
    %v8138 = vadd.f32 %v8089, %v8137
    %8139 = vmatmul.bf16.gmra.mxu0 %v651
    %v8140 = vpop.f32.mrf.mxu0
    %v8141 = vadd.f32 %v8092, %v8140
    %v8142 = vpop.f32.mrf.mxu0
    %v8143 = vadd.f32 %v8094, %v8142
    %8144 = vmatmul.bf16.gmra.mxu0 %v675
    %v8145 = vpop.f32.mrf.mxu0
    %v8146 = vadd.f32 %v8097, %v8145
    %v8147 = vpop.f32.mrf.mxu0
    %v8148 = vadd.f32 %v8099, %v8147
    %8149 = vdwg.mxu0
    %8150 = vmatpush.bf16.msra.mxu0 %v4122
    %8151 = vmatpush.bf16.msra.mxu0 %v4118
    %8152 = vmatpush.bf16.msra.mxu0 %v4114
    %8153 = vmatpush.bf16.msra.mxu0 %v4110
    %8154 = vmatpush.bf16.msra.mxu0 %v4106
    %8155 = vmatpush.bf16.msra.mxu0 %v4102
    %8156 = vmatpush.bf16.msra.mxu0 %v4098
    %8157 = vmatpush.bf16.msra.mxu0 %v4094
    %8158 = vmatmul.bf16.gmra.mxu0 %v508
    %v8159 = vpop.f32.mrf.mxu0
    %v8160 = vadd.f32 %v8111, %v8159
    %v8161 = vpop.f32.mrf.mxu0
    %v8162 = vadd.f32 %v8113, %v8161
    %8163 = vmatmul.bf16.gmra.mxu0 %v532
    %v8164 = vpop.f32.mrf.mxu0
    %v8165 = vadd.f32 %v8116, %v8164
    %v8166 = vpop.f32.mrf.mxu0
    %v8167 = vadd.f32 %v8118, %v8166
    %8168 = vmatmul.bf16.gmra.mxu0 %v556
    %v8169 = vpop.f32.mrf.mxu0
    %v8170 = vadd.f32 %v8121, %v8169
    %v8171 = vpop.f32.mrf.mxu0
    %v8172 = vadd.f32 %v8123, %v8171
    %8173 = vmatmul.bf16.gmra.mxu0 %v580
    %v8174 = vpop.f32.mrf.mxu0
    %v8175 = vadd.f32 %v8126, %v8174
    %v8176 = vpop.f32.mrf.mxu0
    %v8177 = vadd.f32 %v8128, %v8176
    %8178 = vmatmul.bf16.gmra.mxu0 %v604
    %v8179 = vpop.f32.mrf.mxu0
    %v8180 = vadd.f32 %v8131, %v8179
    %v8181 = vpop.f32.mrf.mxu0
    %v8182 = vadd.f32 %v8133, %v8181
    %8183 = vmatmul.bf16.gmra.mxu0 %v628
    %v8184 = vpop.f32.mrf.mxu0
    %v8185 = vadd.f32 %v8136, %v8184
    %v8186 = vpop.f32.mrf.mxu0
    %v8187 = vadd.f32 %v8138, %v8186
    %8188 = vmatmul.bf16.gmra.mxu0 %v652
    %v8189 = vpop.f32.mrf.mxu0
    %v8190 = vadd.f32 %v8141, %v8189
    %v8191 = vpop.f32.mrf.mxu0
    %v8192 = vadd.f32 %v8143, %v8191
    %8193 = vmatmul.bf16.gmra.mxu0 %v676
    %v8194 = vpop.f32.mrf.mxu0
    %v8195 = vadd.f32 %v8146, %v8194
    %v8196 = vpop.f32.mrf.mxu0
    %v8197 = vadd.f32 %v8148, %v8196
    %8198 = vdwg.mxu0
    %8199 = vmatpush.bf16.msra.mxu0 %v4154
    %8200 = vmatpush.bf16.msra.mxu0 %v4150
    %8201 = vmatpush.bf16.msra.mxu0 %v4146
    %8202 = vmatpush.bf16.msra.mxu0 %v4142
    %8203 = vmatpush.bf16.msra.mxu0 %v4138
    %8204 = vmatpush.bf16.msra.mxu0 %v4134
    %8205 = vmatpush.bf16.msra.mxu0 %v4130
    %8206 = vmatpush.bf16.msra.mxu0 %v4126
    %8207 = vmatmul.bf16.gmra.mxu0 %v509
    %v8208 = vpop.f32.mrf.mxu0
    %v8209 = vadd.f32 %v8160, %v8208
    %v8210 = vpop.f32.mrf.mxu0
    %v8211 = vadd.f32 %v8162, %v8210
    %8212 = vmatmul.bf16.gmra.mxu0 %v533
    %v8213 = vpop.f32.mrf.mxu0
    %v8214 = vadd.f32 %v8165, %v8213
    %v8215 = vpop.f32.mrf.mxu0
    %v8216 = vadd.f32 %v8167, %v8215
    %8217 = vmatmul.bf16.gmra.mxu0 %v557
    %v8218 = vpop.f32.mrf.mxu0
    %v8219 = vadd.f32 %v8170, %v8218
    %v8220 = vpop.f32.mrf.mxu0
    %v8221 = vadd.f32 %v8172, %v8220
    %8222 = vmatmul.bf16.gmra.mxu0 %v581
    %v8223 = vpop.f32.mrf.mxu0
    %v8224 = vadd.f32 %v8175, %v8223
    %v8225 = vpop.f32.mrf.mxu0
    %v8226 = vadd.f32 %v8177, %v8225
    %8227 = vmatmul.bf16.gmra.mxu0 %v605
    %v8228 = vpop.f32.mrf.mxu0
    %v8229 = vadd.f32 %v8180, %v8228
    %v8230 = vpop.f32.mrf.mxu0
    %v8231 = vadd.f32 %v8182, %v8230
    %8232 = vmatmul.bf16.gmra.mxu0 %v629
    %v8233 = vpop.f32.mrf.mxu0
    %v8234 = vadd.f32 %v8185, %v8233
    %v8235 = vpop.f32.mrf.mxu0
    %v8236 = vadd.f32 %v8187, %v8235
    %8237 = vmatmul.bf16.gmra.mxu0 %v653
    %v8238 = vpop.f32.mrf.mxu0
    %v8239 = vadd.f32 %v8190, %v8238
    %v8240 = vpop.f32.mrf.mxu0
    %v8241 = vadd.f32 %v8192, %v8240
    %8242 = vmatmul.bf16.gmra.mxu0 %v677
    %v8243 = vpop.f32.mrf.mxu0
    %v8244 = vadd.f32 %v8195, %v8243
    %v8245 = vpop.f32.mrf.mxu0
    %v8246 = vadd.f32 %v8197, %v8245
    %8247 = vdwg.mxu0
    %8248 = vmatpush.bf16.msra.mxu0 %v4186
    %8249 = vmatpush.bf16.msra.mxu0 %v4182
    %8250 = vmatpush.bf16.msra.mxu0 %v4178
    %8251 = vmatpush.bf16.msra.mxu0 %v4174
    %8252 = vmatpush.bf16.msra.mxu0 %v4170
    %8253 = vmatpush.bf16.msra.mxu0 %v4166
    %8254 = vmatpush.bf16.msra.mxu0 %v4162
    %8255 = vmatpush.bf16.msra.mxu0 %v4158
    %8256 = vmatmul.bf16.gmra.mxu0 %v510
    %v8257 = vpop.f32.mrf.mxu0
    %v8258 = vadd.f32 %v8209, %v8257
    %v8259 = vpop.f32.mrf.mxu0
    %v8260 = vadd.f32 %v8211, %v8259
    %8261 = vmatmul.bf16.gmra.mxu0 %v534
    %v8262 = vpop.f32.mrf.mxu0
    %v8263 = vadd.f32 %v8214, %v8262
    %v8264 = vpop.f32.mrf.mxu0
    %v8265 = vadd.f32 %v8216, %v8264
    %8266 = vmatmul.bf16.gmra.mxu0 %v558
    %v8267 = vpop.f32.mrf.mxu0
    %v8268 = vadd.f32 %v8219, %v8267
    %v8269 = vpop.f32.mrf.mxu0
    %v8270 = vadd.f32 %v8221, %v8269
    %8271 = vmatmul.bf16.gmra.mxu0 %v582
    %v8272 = vpop.f32.mrf.mxu0
    %v8273 = vadd.f32 %v8224, %v8272
    %v8274 = vpop.f32.mrf.mxu0
    %v8275 = vadd.f32 %v8226, %v8274
    %8276 = vmatmul.bf16.gmra.mxu0 %v606
    %v8277 = vpop.f32.mrf.mxu0
    %v8278 = vadd.f32 %v8229, %v8277
    %v8279 = vpop.f32.mrf.mxu0
    %v8280 = vadd.f32 %v8231, %v8279
    %8281 = vmatmul.bf16.gmra.mxu0 %v630
    %v8282 = vpop.f32.mrf.mxu0
    %v8283 = vadd.f32 %v8234, %v8282
    %v8284 = vpop.f32.mrf.mxu0
    %v8285 = vadd.f32 %v8236, %v8284
    %8286 = vmatmul.bf16.gmra.mxu0 %v654
    %v8287 = vpop.f32.mrf.mxu0
    %v8288 = vadd.f32 %v8239, %v8287
    %v8289 = vpop.f32.mrf.mxu0
    %v8290 = vadd.f32 %v8241, %v8289
    %8291 = vmatmul.bf16.gmra.mxu0 %v678
    %v8292 = vpop.f32.mrf.mxu0
    %v8293 = vadd.f32 %v8244, %v8292
    %v8294 = vpop.f32.mrf.mxu0
    %v8295 = vadd.f32 %v8246, %v8294
    %8296 = vdwg.mxu0
    %8297 = vmatpush.bf16.msra.mxu0 %v4218
    %8298 = vmatpush.bf16.msra.mxu0 %v4214
    %8299 = vmatpush.bf16.msra.mxu0 %v4210
    %8300 = vmatpush.bf16.msra.mxu0 %v4206
    %8301 = vmatpush.bf16.msra.mxu0 %v4202
    %8302 = vmatpush.bf16.msra.mxu0 %v4198
    %8303 = vmatpush.bf16.msra.mxu0 %v4194
    %8304 = vmatpush.bf16.msra.mxu0 %v4190
    %8305 = vmatmul.bf16.gmra.mxu0 %v511
    %v8306 = vpop.f32.mrf.mxu0
    %v8307 = vadd.f32 %v8258, %v8306
    %v8308 = vpop.f32.mrf.mxu0
    %v8309 = vadd.f32 %v8260, %v8308
    %8310 = vmatmul.bf16.gmra.mxu0 %v535
    %v8311 = vpop.f32.mrf.mxu0
    %v8312 = vadd.f32 %v8263, %v8311
    %v8313 = vpop.f32.mrf.mxu0
    %v8314 = vadd.f32 %v8265, %v8313
    %8315 = vmatmul.bf16.gmra.mxu0 %v559
    %v8316 = vpop.f32.mrf.mxu0
    %v8317 = vadd.f32 %v8268, %v8316
    %v8318 = vpop.f32.mrf.mxu0
    %v8319 = vadd.f32 %v8270, %v8318
    %8320 = vmatmul.bf16.gmra.mxu0 %v583
    %v8321 = vpop.f32.mrf.mxu0
    %v8322 = vadd.f32 %v8273, %v8321
    %v8323 = vpop.f32.mrf.mxu0
    %v8324 = vadd.f32 %v8275, %v8323
    %8325 = vmatmul.bf16.gmra.mxu0 %v607
    %v8326 = vpop.f32.mrf.mxu0
    %v8327 = vadd.f32 %v8278, %v8326
    %v8328 = vpop.f32.mrf.mxu0
    %v8329 = vadd.f32 %v8280, %v8328
    %8330 = vmatmul.bf16.gmra.mxu0 %v631
    %v8331 = vpop.f32.mrf.mxu0
    %v8332 = vadd.f32 %v8283, %v8331
    %v8333 = vpop.f32.mrf.mxu0
    %v8334 = vadd.f32 %v8285, %v8333
    %8335 = vmatmul.bf16.gmra.mxu0 %v655
    %v8336 = vpop.f32.mrf.mxu0
    %v8337 = vadd.f32 %v8288, %v8336
    %v8338 = vpop.f32.mrf.mxu0
    %v8339 = vadd.f32 %v8290, %v8338
    %8340 = vmatmul.bf16.gmra.mxu0 %v679
    %v8341 = vpop.f32.mrf.mxu0
    %v8342 = vadd.f32 %v8293, %v8341
    %v8343 = vpop.f32.mrf.mxu0
    %v8344 = vadd.f32 %v8295, %v8343
    %8345 = vdwg.mxu0
    %8346 = vmatpush.bf16.msra.mxu0 %v4250
    %8347 = vmatpush.bf16.msra.mxu0 %v4246
    %8348 = vmatpush.bf16.msra.mxu0 %v4242
    %8349 = vmatpush.bf16.msra.mxu0 %v4238
    %8350 = vmatpush.bf16.msra.mxu0 %v4234
    %8351 = vmatpush.bf16.msra.mxu0 %v4230
    %8352 = vmatpush.bf16.msra.mxu0 %v4226
    %8353 = vmatpush.bf16.msra.mxu0 %v4222
    %8354 = vmatmul.bf16.gmra.mxu0 %v512
    %v8355 = vpop.f32.mrf.mxu0
    %v8356 = vadd.f32 %v8307, %v8355
    %v8357 = vpop.f32.mrf.mxu0
    %v8358 = vadd.f32 %v8309, %v8357
    %8359 = vmatmul.bf16.gmra.mxu0 %v536
    %v8360 = vpop.f32.mrf.mxu0
    %v8361 = vadd.f32 %v8312, %v8360
    %v8362 = vpop.f32.mrf.mxu0
    %v8363 = vadd.f32 %v8314, %v8362
    %8364 = vmatmul.bf16.gmra.mxu0 %v560
    %v8365 = vpop.f32.mrf.mxu0
    %v8366 = vadd.f32 %v8317, %v8365
    %v8367 = vpop.f32.mrf.mxu0
    %v8368 = vadd.f32 %v8319, %v8367
    %8369 = vmatmul.bf16.gmra.mxu0 %v584
    %v8370 = vpop.f32.mrf.mxu0
    %v8371 = vadd.f32 %v8322, %v8370
    %v8372 = vpop.f32.mrf.mxu0
    %v8373 = vadd.f32 %v8324, %v8372
    %8374 = vmatmul.bf16.gmra.mxu0 %v608
    %v8375 = vpop.f32.mrf.mxu0
    %v8376 = vadd.f32 %v8327, %v8375
    %v8377 = vpop.f32.mrf.mxu0
    %v8378 = vadd.f32 %v8329, %v8377
    %8379 = vmatmul.bf16.gmra.mxu0 %v632
    %v8380 = vpop.f32.mrf.mxu0
    %v8381 = vadd.f32 %v8332, %v8380
    %v8382 = vpop.f32.mrf.mxu0
    %v8383 = vadd.f32 %v8334, %v8382
    %8384 = vmatmul.bf16.gmra.mxu0 %v656
    %v8385 = vpop.f32.mrf.mxu0
    %v8386 = vadd.f32 %v8337, %v8385
    %v8387 = vpop.f32.mrf.mxu0
    %v8388 = vadd.f32 %v8339, %v8387
    %8389 = vmatmul.bf16.gmra.mxu0 %v680
    %v8390 = vpop.f32.mrf.mxu0
    %v8391 = vadd.f32 %v8342, %v8390
    %v8392 = vpop.f32.mrf.mxu0
    %v8393 = vadd.f32 %v8344, %v8392
    %8394 = vdwg.mxu0
    %8395 = vmatpush.bf16.msra.mxu0 %v4282
    %8396 = vmatpush.bf16.msra.mxu0 %v4278
    %8397 = vmatpush.bf16.msra.mxu0 %v4274
    %8398 = vmatpush.bf16.msra.mxu0 %v4270
    %8399 = vmatpush.bf16.msra.mxu0 %v4266
    %8400 = vmatpush.bf16.msra.mxu0 %v4262
    %8401 = vmatpush.bf16.msra.mxu0 %v4258
    %8402 = vmatpush.bf16.msra.mxu0 %v4254
    %8403 = vmatmul.bf16.gmra.mxu0 %v513
    %v8404 = vpop.f32.mrf.mxu0
    %v8405 = vadd.f32 %v8356, %v8404
    %v8406 = vpop.f32.mrf.mxu0
    %v8407 = vadd.f32 %v8358, %v8406
    %8408 = vmatmul.bf16.gmra.mxu0 %v537
    %v8409 = vpop.f32.mrf.mxu0
    %v8410 = vadd.f32 %v8361, %v8409
    %v8411 = vpop.f32.mrf.mxu0
    %v8412 = vadd.f32 %v8363, %v8411
    %8413 = vmatmul.bf16.gmra.mxu0 %v561
    %v8414 = vpop.f32.mrf.mxu0
    %v8415 = vadd.f32 %v8366, %v8414
    %v8416 = vpop.f32.mrf.mxu0
    %v8417 = vadd.f32 %v8368, %v8416
    %8418 = vmatmul.bf16.gmra.mxu0 %v585
    %v8419 = vpop.f32.mrf.mxu0
    %v8420 = vadd.f32 %v8371, %v8419
    %v8421 = vpop.f32.mrf.mxu0
    %v8422 = vadd.f32 %v8373, %v8421
    %8423 = vmatmul.bf16.gmra.mxu0 %v609
    %v8424 = vpop.f32.mrf.mxu0
    %v8425 = vadd.f32 %v8376, %v8424
    %v8426 = vpop.f32.mrf.mxu0
    %v8427 = vadd.f32 %v8378, %v8426
    %8428 = vmatmul.bf16.gmra.mxu0 %v633
    %v8429 = vpop.f32.mrf.mxu0
    %v8430 = vadd.f32 %v8381, %v8429
    %v8431 = vpop.f32.mrf.mxu0
    %v8432 = vadd.f32 %v8383, %v8431
    %8433 = vmatmul.bf16.gmra.mxu0 %v657
    %v8434 = vpop.f32.mrf.mxu0
    %v8435 = vadd.f32 %v8386, %v8434
    %v8436 = vpop.f32.mrf.mxu0
    %v8437 = vadd.f32 %v8388, %v8436
    %8438 = vmatmul.bf16.gmra.mxu0 %v681
    %v8439 = vpop.f32.mrf.mxu0
    %v8440 = vadd.f32 %v8391, %v8439
    %v8441 = vpop.f32.mrf.mxu0
    %v8442 = vadd.f32 %v8393, %v8441
    %8443 = vdwg.mxu0
    %8444 = vmatpush.bf16.msra.mxu0 %v4314
    %8445 = vmatpush.bf16.msra.mxu0 %v4310
    %8446 = vmatpush.bf16.msra.mxu0 %v4306
    %8447 = vmatpush.bf16.msra.mxu0 %v4302
    %8448 = vmatpush.bf16.msra.mxu0 %v4298
    %8449 = vmatpush.bf16.msra.mxu0 %v4294
    %8450 = vmatpush.bf16.msra.mxu0 %v4290
    %8451 = vmatpush.bf16.msra.mxu0 %v4286
    %8452 = vmatmul.bf16.gmra.mxu0 %v514
    %v8453 = vpop.f32.mrf.mxu0
    %v8454 = vadd.f32 %v8405, %v8453
    %v8455 = vpop.f32.mrf.mxu0
    %v8456 = vadd.f32 %v8407, %v8455
    %8457 = vmatmul.bf16.gmra.mxu0 %v538
    %v8458 = vpop.f32.mrf.mxu0
    %v8459 = vadd.f32 %v8410, %v8458
    %v8460 = vpop.f32.mrf.mxu0
    %v8461 = vadd.f32 %v8412, %v8460
    %8462 = vmatmul.bf16.gmra.mxu0 %v562
    %v8463 = vpop.f32.mrf.mxu0
    %v8464 = vadd.f32 %v8415, %v8463
    %v8465 = vpop.f32.mrf.mxu0
    %v8466 = vadd.f32 %v8417, %v8465
    %8467 = vmatmul.bf16.gmra.mxu0 %v586
    %v8468 = vpop.f32.mrf.mxu0
    %v8469 = vadd.f32 %v8420, %v8468
    %v8470 = vpop.f32.mrf.mxu0
    %v8471 = vadd.f32 %v8422, %v8470
    %8472 = vmatmul.bf16.gmra.mxu0 %v610
    %v8473 = vpop.f32.mrf.mxu0
    %v8474 = vadd.f32 %v8425, %v8473
    %v8475 = vpop.f32.mrf.mxu0
    %v8476 = vadd.f32 %v8427, %v8475
    %8477 = vmatmul.bf16.gmra.mxu0 %v634
    %v8478 = vpop.f32.mrf.mxu0
    %v8479 = vadd.f32 %v8430, %v8478
    %v8480 = vpop.f32.mrf.mxu0
    %v8481 = vadd.f32 %v8432, %v8480
    %8482 = vmatmul.bf16.gmra.mxu0 %v658
    %v8483 = vpop.f32.mrf.mxu0
    %v8484 = vadd.f32 %v8435, %v8483
    %v8485 = vpop.f32.mrf.mxu0
    %v8486 = vadd.f32 %v8437, %v8485
    %8487 = vmatmul.bf16.gmra.mxu0 %v682
    %v8488 = vpop.f32.mrf.mxu0
    %v8489 = vadd.f32 %v8440, %v8488
    %v8490 = vpop.f32.mrf.mxu0
    %v8491 = vadd.f32 %v8442, %v8490
    %8492 = vdwg.mxu0
    %8493 = vmatpush.bf16.msra.mxu0 %v4346
    %8494 = vmatpush.bf16.msra.mxu0 %v4342
    %8495 = vmatpush.bf16.msra.mxu0 %v4338
    %8496 = vmatpush.bf16.msra.mxu0 %v4334
    %8497 = vmatpush.bf16.msra.mxu0 %v4330
    %8498 = vmatpush.bf16.msra.mxu0 %v4326
    %8499 = vmatpush.bf16.msra.mxu0 %v4322
    %8500 = vmatpush.bf16.msra.mxu0 %v4318
    %8501 = vmatmul.bf16.gmra.mxu0 %v515
    %v8502 = vpop.f32.mrf.mxu0
    %v8503 = vadd.f32 %v8454, %v8502
    %v8504 = vpop.f32.mrf.mxu0
    %v8505 = vadd.f32 %v8456, %v8504
    %8506 = vmatmul.bf16.gmra.mxu0 %v539
    %v8507 = vpop.f32.mrf.mxu0
    %v8508 = vadd.f32 %v8459, %v8507
    %v8509 = vpop.f32.mrf.mxu0
    %v8510 = vadd.f32 %v8461, %v8509
    %8511 = vmatmul.bf16.gmra.mxu0 %v563
    %v8512 = vpop.f32.mrf.mxu0
    %v8513 = vadd.f32 %v8464, %v8512
    %v8514 = vpop.f32.mrf.mxu0
    %v8515 = vadd.f32 %v8466, %v8514
    %8516 = vmatmul.bf16.gmra.mxu0 %v587
    %v8517 = vpop.f32.mrf.mxu0
    %v8518 = vadd.f32 %v8469, %v8517
    %v8519 = vpop.f32.mrf.mxu0
    %v8520 = vadd.f32 %v8471, %v8519
    %8521 = vmatmul.bf16.gmra.mxu0 %v611
    %v8522 = vpop.f32.mrf.mxu0
    %v8523 = vadd.f32 %v8474, %v8522
    %v8524 = vpop.f32.mrf.mxu0
    %v8525 = vadd.f32 %v8476, %v8524
    %8526 = vmatmul.bf16.gmra.mxu0 %v635
    %v8527 = vpop.f32.mrf.mxu0
    %v8528 = vadd.f32 %v8479, %v8527
    %v8529 = vpop.f32.mrf.mxu0
    %v8530 = vadd.f32 %v8481, %v8529
    %8531 = vmatmul.bf16.gmra.mxu0 %v659
    %v8532 = vpop.f32.mrf.mxu0
    %v8533 = vadd.f32 %v8484, %v8532
    %v8534 = vpop.f32.mrf.mxu0
    %v8535 = vadd.f32 %v8486, %v8534
    %8536 = vmatmul.bf16.gmra.mxu0 %v683
    %v8537 = vpop.f32.mrf.mxu0
    %v8538 = vadd.f32 %v8489, %v8537
    %v8539 = vpop.f32.mrf.mxu0
    %v8540 = vadd.f32 %v8491, %v8539
    %8541 = vdwg.mxu0
    %8542 = vmatpush.bf16.msra.mxu0 %v4378
    %8543 = vmatpush.bf16.msra.mxu0 %v4374
    %8544 = vmatpush.bf16.msra.mxu0 %v4370
    %8545 = vmatpush.bf16.msra.mxu0 %v4366
    %8546 = vmatpush.bf16.msra.mxu0 %v4362
    %8547 = vmatpush.bf16.msra.mxu0 %v4358
    %8548 = vmatpush.bf16.msra.mxu0 %v4354
    %8549 = vmatpush.bf16.msra.mxu0 %v4350
    %8550 = vmatmul.bf16.gmra.mxu0 %v516
    %v8551 = vpop.f32.mrf.mxu0
    %v8552 = vadd.f32 %v8503, %v8551
    %v8553 = vpop.f32.mrf.mxu0
    %v8554 = vadd.f32 %v8505, %v8553
    %8555 = vmatmul.bf16.gmra.mxu0 %v540
    %v8556 = vpop.f32.mrf.mxu0
    %v8557 = vadd.f32 %v8508, %v8556
    %v8558 = vpop.f32.mrf.mxu0
    %v8559 = vadd.f32 %v8510, %v8558
    %8560 = vmatmul.bf16.gmra.mxu0 %v564
    %v8561 = vpop.f32.mrf.mxu0
    %v8562 = vadd.f32 %v8513, %v8561
    %v8563 = vpop.f32.mrf.mxu0
    %v8564 = vadd.f32 %v8515, %v8563
    %8565 = vmatmul.bf16.gmra.mxu0 %v588
    %v8566 = vpop.f32.mrf.mxu0
    %v8567 = vadd.f32 %v8518, %v8566
    %v8568 = vpop.f32.mrf.mxu0
    %v8569 = vadd.f32 %v8520, %v8568
    %8570 = vmatmul.bf16.gmra.mxu0 %v612
    %v8571 = vpop.f32.mrf.mxu0
    %v8572 = vadd.f32 %v8523, %v8571
    %v8573 = vpop.f32.mrf.mxu0
    %v8574 = vadd.f32 %v8525, %v8573
    %8575 = vmatmul.bf16.gmra.mxu0 %v636
    %v8576 = vpop.f32.mrf.mxu0
    %v8577 = vadd.f32 %v8528, %v8576
    %v8578 = vpop.f32.mrf.mxu0
    %v8579 = vadd.f32 %v8530, %v8578
    %8580 = vmatmul.bf16.gmra.mxu0 %v660
    %v8581 = vpop.f32.mrf.mxu0
    %v8582 = vadd.f32 %v8533, %v8581
    %v8583 = vpop.f32.mrf.mxu0
    %v8584 = vadd.f32 %v8535, %v8583
    %8585 = vmatmul.bf16.gmra.mxu0 %v684
    %v8586 = vpop.f32.mrf.mxu0
    %v8587 = vadd.f32 %v8538, %v8586
    %v8588 = vpop.f32.mrf.mxu0
    %v8589 = vadd.f32 %v8540, %v8588
    %8590 = vdwg.mxu0
    %8591 = vmatpush.bf16.msra.mxu0 %v4410
    %8592 = vmatpush.bf16.msra.mxu0 %v4406
    %8593 = vmatpush.bf16.msra.mxu0 %v4402
    %8594 = vmatpush.bf16.msra.mxu0 %v4398
    %8595 = vmatpush.bf16.msra.mxu0 %v4394
    %8596 = vmatpush.bf16.msra.mxu0 %v4390
    %8597 = vmatpush.bf16.msra.mxu0 %v4386
    %8598 = vmatpush.bf16.msra.mxu0 %v4382
    %8599 = vmatmul.bf16.gmra.mxu0 %v517
    %v8600 = vpop.f32.mrf.mxu0
    %v8601 = vadd.f32 %v8552, %v8600
    %v8602 = vpop.f32.mrf.mxu0
    %v8603 = vadd.f32 %v8554, %v8602
    %8604 = vmatmul.bf16.gmra.mxu0 %v541
    %v8605 = vpop.f32.mrf.mxu0
    %v8606 = vadd.f32 %v8557, %v8605
    %v8607 = vpop.f32.mrf.mxu0
    %v8608 = vadd.f32 %v8559, %v8607
    %8609 = vmatmul.bf16.gmra.mxu0 %v565
    %v8610 = vpop.f32.mrf.mxu0
    %v8611 = vadd.f32 %v8562, %v8610
    %v8612 = vpop.f32.mrf.mxu0
    %v8613 = vadd.f32 %v8564, %v8612
    %8614 = vmatmul.bf16.gmra.mxu0 %v589
    %v8615 = vpop.f32.mrf.mxu0
    %v8616 = vadd.f32 %v8567, %v8615
    %v8617 = vpop.f32.mrf.mxu0
    %v8618 = vadd.f32 %v8569, %v8617
    %8619 = vmatmul.bf16.gmra.mxu0 %v613
    %v8620 = vpop.f32.mrf.mxu0
    %v8621 = vadd.f32 %v8572, %v8620
    %v8622 = vpop.f32.mrf.mxu0
    %v8623 = vadd.f32 %v8574, %v8622
    %8624 = vmatmul.bf16.gmra.mxu0 %v637
    %v8625 = vpop.f32.mrf.mxu0
    %v8626 = vadd.f32 %v8577, %v8625
    %v8627 = vpop.f32.mrf.mxu0
    %v8628 = vadd.f32 %v8579, %v8627
    %8629 = vmatmul.bf16.gmra.mxu0 %v661
    %v8630 = vpop.f32.mrf.mxu0
    %v8631 = vadd.f32 %v8582, %v8630
    %v8632 = vpop.f32.mrf.mxu0
    %v8633 = vadd.f32 %v8584, %v8632
    %8634 = vmatmul.bf16.gmra.mxu0 %v685
    %v8635 = vpop.f32.mrf.mxu0
    %v8636 = vadd.f32 %v8587, %v8635
    %v8637 = vpop.f32.mrf.mxu0
    %v8638 = vadd.f32 %v8589, %v8637
    %8639 = vdwg.mxu0
    %8640 = vmatpush.bf16.msra.mxu0 %v4442
    %8641 = vmatpush.bf16.msra.mxu0 %v4438
    %8642 = vmatpush.bf16.msra.mxu0 %v4434
    %8643 = vmatpush.bf16.msra.mxu0 %v4430
    %8644 = vmatpush.bf16.msra.mxu0 %v4426
    %8645 = vmatpush.bf16.msra.mxu0 %v4422
    %8646 = vmatpush.bf16.msra.mxu0 %v4418
    %8647 = vmatpush.bf16.msra.mxu0 %v4414
    %8648 = vmatmul.bf16.gmra.mxu0 %v518
    %v8649 = vpop.f32.mrf.mxu0
    %v8650 = vadd.f32 %v8601, %v8649
    %v8651 = vpop.f32.mrf.mxu0
    %v8652 = vadd.f32 %v8603, %v8651
    %8653 = vmatmul.bf16.gmra.mxu0 %v542
    %v8654 = vpop.f32.mrf.mxu0
    %v8655 = vadd.f32 %v8606, %v8654
    %v8656 = vpop.f32.mrf.mxu0
    %v8657 = vadd.f32 %v8608, %v8656
    %8658 = vmatmul.bf16.gmra.mxu0 %v566
    %v8659 = vpop.f32.mrf.mxu0
    %v8660 = vadd.f32 %v8611, %v8659
    %v8661 = vpop.f32.mrf.mxu0
    %v8662 = vadd.f32 %v8613, %v8661
    %8663 = vmatmul.bf16.gmra.mxu0 %v590
    %v8664 = vpop.f32.mrf.mxu0
    %v8665 = vadd.f32 %v8616, %v8664
    %v8666 = vpop.f32.mrf.mxu0
    %v8667 = vadd.f32 %v8618, %v8666
    %8668 = vmatmul.bf16.gmra.mxu0 %v614
    %v8669 = vpop.f32.mrf.mxu0
    %v8670 = vadd.f32 %v8621, %v8669
    %v8671 = vpop.f32.mrf.mxu0
    %v8672 = vadd.f32 %v8623, %v8671
    %8673 = vmatmul.bf16.gmra.mxu0 %v638
    %v8674 = vpop.f32.mrf.mxu0
    %v8675 = vadd.f32 %v8626, %v8674
    %v8676 = vpop.f32.mrf.mxu0
    %v8677 = vadd.f32 %v8628, %v8676
    %8678 = vmatmul.bf16.gmra.mxu0 %v662
    %v8679 = vpop.f32.mrf.mxu0
    %v8680 = vadd.f32 %v8631, %v8679
    %v8681 = vpop.f32.mrf.mxu0
    %v8682 = vadd.f32 %v8633, %v8681
    %8683 = vmatmul.bf16.gmra.mxu0 %v686
    %v8684 = vpop.f32.mrf.mxu0
    %v8685 = vadd.f32 %v8636, %v8684
    %v8686 = vpop.f32.mrf.mxu0
    %v8687 = vadd.f32 %v8638, %v8686
    %8688 = vdwg.mxu0
    %8689 = vmatpush.bf16.msra.mxu0 %v4474
    %8690 = vmatpush.bf16.msra.mxu0 %v4470
    %8691 = vmatpush.bf16.msra.mxu0 %v4466
    %8692 = vmatpush.bf16.msra.mxu0 %v4462
    %8693 = vmatpush.bf16.msra.mxu0 %v4458
    %8694 = vmatpush.bf16.msra.mxu0 %v4454
    %8695 = vmatpush.bf16.msra.mxu0 %v4450
    %8696 = vmatpush.bf16.msra.mxu0 %v4446
    %8697 = vmatmul.bf16.gmra.mxu0 %v519
    %v8698 = vpop.f32.mrf.mxu0
    %v8699 = vadd.f32 %v8650, %v8698
    %v8700 = vpop.f32.mrf.mxu0
    %v8701 = vadd.f32 %v8652, %v8700
    %8702 = vmatmul.bf16.gmra.mxu0 %v543
    %v8703 = vpop.f32.mrf.mxu0
    %v8704 = vadd.f32 %v8655, %v8703
    %v8705 = vpop.f32.mrf.mxu0
    %v8706 = vadd.f32 %v8657, %v8705
    %8707 = vmatmul.bf16.gmra.mxu0 %v567
    %v8708 = vpop.f32.mrf.mxu0
    %v8709 = vadd.f32 %v8660, %v8708
    %v8710 = vpop.f32.mrf.mxu0
    %v8711 = vadd.f32 %v8662, %v8710
    %8712 = vmatmul.bf16.gmra.mxu0 %v591
    %v8713 = vpop.f32.mrf.mxu0
    %v8714 = vadd.f32 %v8665, %v8713
    %v8715 = vpop.f32.mrf.mxu0
    %v8716 = vadd.f32 %v8667, %v8715
    %8717 = vmatmul.bf16.gmra.mxu0 %v615
    %v8718 = vpop.f32.mrf.mxu0
    %v8719 = vadd.f32 %v8670, %v8718
    %v8720 = vpop.f32.mrf.mxu0
    %v8721 = vadd.f32 %v8672, %v8720
    %8722 = vmatmul.bf16.gmra.mxu0 %v639
    %v8723 = vpop.f32.mrf.mxu0
    %v8724 = vadd.f32 %v8675, %v8723
    %v8725 = vpop.f32.mrf.mxu0
    %v8726 = vadd.f32 %v8677, %v8725
    %8727 = vmatmul.bf16.gmra.mxu0 %v663
    %v8728 = vpop.f32.mrf.mxu0
    %v8729 = vadd.f32 %v8680, %v8728
    %v8730 = vpop.f32.mrf.mxu0
    %v8731 = vadd.f32 %v8682, %v8730
    %8732 = vmatmul.bf16.gmra.mxu0 %v687
    %v8733 = vpop.f32.mrf.mxu0
    %v8734 = vadd.f32 %v8685, %v8733
    %v8735 = vpop.f32.mrf.mxu0
    %v8736 = vadd.f32 %v8687, %v8735
    %8737 = vdwg.mxu0
    %8738 = vmatpush.bf16.msra.mxu0 %v4506
    %8739 = vmatpush.bf16.msra.mxu0 %v4502
    %8740 = vmatpush.bf16.msra.mxu0 %v4498
    %8741 = vmatpush.bf16.msra.mxu0 %v4494
    %8742 = vmatpush.bf16.msra.mxu0 %v4490
    %8743 = vmatpush.bf16.msra.mxu0 %v4486
    %8744 = vmatpush.bf16.msra.mxu0 %v4482
    %8745 = vmatpush.bf16.msra.mxu0 %v4478
    %8746 = vmatmul.bf16.gmra.mxu0 %v520
    %v8747 = vpop.f32.mrf.mxu0
    %v8748 = vadd.f32 %v8699, %v8747
    %v8749 = vpop.f32.mrf.mxu0
    %v8750 = vadd.f32 %v8701, %v8749
    %8751 = vmatmul.bf16.gmra.mxu0 %v544
    %v8752 = vpop.f32.mrf.mxu0
    %v8753 = vadd.f32 %v8704, %v8752
    %v8754 = vpop.f32.mrf.mxu0
    %v8755 = vadd.f32 %v8706, %v8754
    %8756 = vmatmul.bf16.gmra.mxu0 %v568
    %v8757 = vpop.f32.mrf.mxu0
    %v8758 = vadd.f32 %v8709, %v8757
    %v8759 = vpop.f32.mrf.mxu0
    %v8760 = vadd.f32 %v8711, %v8759
    %8761 = vmatmul.bf16.gmra.mxu0 %v592
    %v8762 = vpop.f32.mrf.mxu0
    %v8763 = vadd.f32 %v8714, %v8762
    %v8764 = vpop.f32.mrf.mxu0
    %v8765 = vadd.f32 %v8716, %v8764
    %8766 = vmatmul.bf16.gmra.mxu0 %v616
    %v8767 = vpop.f32.mrf.mxu0
    %v8768 = vadd.f32 %v8719, %v8767
    %v8769 = vpop.f32.mrf.mxu0
    %v8770 = vadd.f32 %v8721, %v8769
    %8771 = vmatmul.bf16.gmra.mxu0 %v640
    %v8772 = vpop.f32.mrf.mxu0
    %v8773 = vadd.f32 %v8724, %v8772
    %v8774 = vpop.f32.mrf.mxu0
    %v8775 = vadd.f32 %v8726, %v8774
    %8776 = vmatmul.bf16.gmra.mxu0 %v664
    %v8777 = vpop.f32.mrf.mxu0
    %v8778 = vadd.f32 %v8729, %v8777
    %v8779 = vpop.f32.mrf.mxu0
    %v8780 = vadd.f32 %v8731, %v8779
    %8781 = vmatmul.bf16.gmra.mxu0 %v688
    %v8782 = vpop.f32.mrf.mxu0
    %v8783 = vadd.f32 %v8734, %v8782
    %v8784 = vpop.f32.mrf.mxu0
    %v8785 = vadd.f32 %v8736, %v8784
    %8786 = vdwg.mxu0
    %8787 = vmatpush.bf16.msra.mxu0 %v4538
    %8788 = vmatpush.bf16.msra.mxu0 %v4534
    %8789 = vmatpush.bf16.msra.mxu0 %v4530
    %8790 = vmatpush.bf16.msra.mxu0 %v4526
    %8791 = vmatpush.bf16.msra.mxu0 %v4522
    %8792 = vmatpush.bf16.msra.mxu0 %v4518
    %8793 = vmatpush.bf16.msra.mxu0 %v4514
    %8794 = vmatpush.bf16.msra.mxu0 %v4510
    %8795 = vmatmul.bf16.gmra.mxu0 %v521
    %v8796 = vpop.f32.mrf.mxu0
    %v8797 = vadd.f32 %v8748, %v8796
    %v8798 = vpop.f32.mrf.mxu0
    %v8799 = vadd.f32 %v8750, %v8798
    %8800 = vmatmul.bf16.gmra.mxu0 %v545
    %v8801 = vpop.f32.mrf.mxu0
    %v8802 = vadd.f32 %v8753, %v8801
    %v8803 = vpop.f32.mrf.mxu0
    %v8804 = vadd.f32 %v8755, %v8803
    %8805 = vmatmul.bf16.gmra.mxu0 %v569
    %v8806 = vpop.f32.mrf.mxu0
    %v8807 = vadd.f32 %v8758, %v8806
    %v8808 = vpop.f32.mrf.mxu0
    %v8809 = vadd.f32 %v8760, %v8808
    %8810 = vmatmul.bf16.gmra.mxu0 %v593
    %v8811 = vpop.f32.mrf.mxu0
    %v8812 = vadd.f32 %v8763, %v8811
    %v8813 = vpop.f32.mrf.mxu0
    %v8814 = vadd.f32 %v8765, %v8813
    %8815 = vmatmul.bf16.gmra.mxu0 %v617
    %v8816 = vpop.f32.mrf.mxu0
    %v8817 = vadd.f32 %v8768, %v8816
    %v8818 = vpop.f32.mrf.mxu0
    %v8819 = vadd.f32 %v8770, %v8818
    %8820 = vmatmul.bf16.gmra.mxu0 %v641
    %v8821 = vpop.f32.mrf.mxu0
    %v8822 = vadd.f32 %v8773, %v8821
    %v8823 = vpop.f32.mrf.mxu0
    %v8824 = vadd.f32 %v8775, %v8823
    %8825 = vmatmul.bf16.gmra.mxu0 %v665
    %v8826 = vpop.f32.mrf.mxu0
    %v8827 = vadd.f32 %v8778, %v8826
    %v8828 = vpop.f32.mrf.mxu0
    %v8829 = vadd.f32 %v8780, %v8828
    %8830 = vmatmul.bf16.gmra.mxu0 %v689
    %v8831 = vpop.f32.mrf.mxu0
    %v8832 = vadd.f32 %v8783, %v8831
    %v8833 = vpop.f32.mrf.mxu0
    %v8834 = vadd.f32 %v8785, %v8833
    %8835 = vdwg.mxu0
    %8836 = vmatpush.bf16.msra.mxu0 %v3803
    %8837 = vmatpush.bf16.msra.mxu0 %v3799
    %8838 = vmatpush.bf16.msra.mxu0 %v3795
    %8839 = vmatpush.bf16.msra.mxu0 %v3791
    %8840 = vmatpush.bf16.msra.mxu0 %v3787
    %8841 = vmatpush.bf16.msra.mxu0 %v3783
    %8842 = vmatpush.bf16.msra.mxu0 %v3779
    %8843 = vmatpush.bf16.msra.mxu0 %v3775
    %8844 = vmatmul.bf16.gmra.mxu0 %v498
    %v8845 = vpop.f32.mrf.mxu0
    %v8846 = vadd.f32 %v1463, %v8845
    %v8847 = vpop.f32.mrf.mxu0
    %v8848 = vadd.f32 %v1463, %v8847
    %8849 = vmatmul.bf16.gmra.mxu0 %v522
    %v8850 = vpop.f32.mrf.mxu0
    %v8851 = vadd.f32 %v1463, %v8850
    %v8852 = vpop.f32.mrf.mxu0
    %v8853 = vadd.f32 %v1463, %v8852
    %8854 = vmatmul.bf16.gmra.mxu0 %v546
    %v8855 = vpop.f32.mrf.mxu0
    %v8856 = vadd.f32 %v1463, %v8855
    %v8857 = vpop.f32.mrf.mxu0
    %v8858 = vadd.f32 %v1463, %v8857
    %8859 = vmatmul.bf16.gmra.mxu0 %v570
    %v8860 = vpop.f32.mrf.mxu0
    %v8861 = vadd.f32 %v1463, %v8860
    %v8862 = vpop.f32.mrf.mxu0
    %v8863 = vadd.f32 %v1463, %v8862
    %8864 = vmatmul.bf16.gmra.mxu0 %v594
    %v8865 = vpop.f32.mrf.mxu0
    %v8866 = vadd.f32 %v1463, %v8865
    %v8867 = vpop.f32.mrf.mxu0
    %v8868 = vadd.f32 %v1463, %v8867
    %8869 = vmatmul.bf16.gmra.mxu0 %v618
    %v8870 = vpop.f32.mrf.mxu0
    %v8871 = vadd.f32 %v1463, %v8870
    %v8872 = vpop.f32.mrf.mxu0
    %v8873 = vadd.f32 %v1463, %v8872
    %8874 = vmatmul.bf16.gmra.mxu0 %v642
    %v8875 = vpop.f32.mrf.mxu0
    %v8876 = vadd.f32 %v1463, %v8875
    %v8877 = vpop.f32.mrf.mxu0
    %v8878 = vadd.f32 %v1463, %v8877
    %8879 = vmatmul.bf16.gmra.mxu0 %v666
    %v8880 = vpop.f32.mrf.mxu0
    %v8881 = vadd.f32 %v1463, %v8880
    %v8882 = vpop.f32.mrf.mxu0
    %v8883 = vadd.f32 %v1463, %v8882
    %8884 = vdwg.mxu0
    %8885 = vmatpush.bf16.msra.mxu0 %v3835
    %8886 = vmatpush.bf16.msra.mxu0 %v3831
    %8887 = vmatpush.bf16.msra.mxu0 %v3827
    %8888 = vmatpush.bf16.msra.mxu0 %v3823
    %8889 = vmatpush.bf16.msra.mxu0 %v3819
    %8890 = vmatpush.bf16.msra.mxu0 %v3815
    %8891 = vmatpush.bf16.msra.mxu0 %v3811
    %8892 = vmatpush.bf16.msra.mxu0 %v3807
    %8893 = vmatmul.bf16.gmra.mxu0 %v499
    %v8894 = vpop.f32.mrf.mxu0
    %v8895 = vadd.f32 %v8846, %v8894
    %v8896 = vpop.f32.mrf.mxu0
    %v8897 = vadd.f32 %v8848, %v8896
    %8898 = vmatmul.bf16.gmra.mxu0 %v523
    %v8899 = vpop.f32.mrf.mxu0
    %v8900 = vadd.f32 %v8851, %v8899
    %v8901 = vpop.f32.mrf.mxu0
    %v8902 = vadd.f32 %v8853, %v8901
    %8903 = vmatmul.bf16.gmra.mxu0 %v547
    %v8904 = vpop.f32.mrf.mxu0
    %v8905 = vadd.f32 %v8856, %v8904
    %v8906 = vpop.f32.mrf.mxu0
    %v8907 = vadd.f32 %v8858, %v8906
    %8908 = vmatmul.bf16.gmra.mxu0 %v571
    %v8909 = vpop.f32.mrf.mxu0
    %v8910 = vadd.f32 %v8861, %v8909
    %v8911 = vpop.f32.mrf.mxu0
    %v8912 = vadd.f32 %v8863, %v8911
    %8913 = vmatmul.bf16.gmra.mxu0 %v595
    %v8914 = vpop.f32.mrf.mxu0
    %v8915 = vadd.f32 %v8866, %v8914
    %v8916 = vpop.f32.mrf.mxu0
    %v8917 = vadd.f32 %v8868, %v8916
    %8918 = vmatmul.bf16.gmra.mxu0 %v619
    %v8919 = vpop.f32.mrf.mxu0
    %v8920 = vadd.f32 %v8871, %v8919
    %v8921 = vpop.f32.mrf.mxu0
    %v8922 = vadd.f32 %v8873, %v8921
    %8923 = vmatmul.bf16.gmra.mxu0 %v643
    %v8924 = vpop.f32.mrf.mxu0
    %v8925 = vadd.f32 %v8876, %v8924
    %v8926 = vpop.f32.mrf.mxu0
    %v8927 = vadd.f32 %v8878, %v8926
    %8928 = vmatmul.bf16.gmra.mxu0 %v667
    %v8929 = vpop.f32.mrf.mxu0
    %v8930 = vadd.f32 %v8881, %v8929
    %v8931 = vpop.f32.mrf.mxu0
    %v8932 = vadd.f32 %v8883, %v8931
    %8933 = vdwg.mxu0
    %8934 = vmatpush.bf16.msra.mxu0 %v3867
    %8935 = vmatpush.bf16.msra.mxu0 %v3863
    %8936 = vmatpush.bf16.msra.mxu0 %v3859
    %8937 = vmatpush.bf16.msra.mxu0 %v3855
    %8938 = vmatpush.bf16.msra.mxu0 %v3851
    %8939 = vmatpush.bf16.msra.mxu0 %v3847
    %8940 = vmatpush.bf16.msra.mxu0 %v3843
    %8941 = vmatpush.bf16.msra.mxu0 %v3839
    %8942 = vmatmul.bf16.gmra.mxu0 %v500
    %v8943 = vpop.f32.mrf.mxu0
    %v8944 = vadd.f32 %v8895, %v8943
    %v8945 = vpop.f32.mrf.mxu0
    %v8946 = vadd.f32 %v8897, %v8945
    %8947 = vmatmul.bf16.gmra.mxu0 %v524
    %v8948 = vpop.f32.mrf.mxu0
    %v8949 = vadd.f32 %v8900, %v8948
    %v8950 = vpop.f32.mrf.mxu0
    %v8951 = vadd.f32 %v8902, %v8950
    %8952 = vmatmul.bf16.gmra.mxu0 %v548
    %v8953 = vpop.f32.mrf.mxu0
    %v8954 = vadd.f32 %v8905, %v8953
    %v8955 = vpop.f32.mrf.mxu0
    %v8956 = vadd.f32 %v8907, %v8955
    %8957 = vmatmul.bf16.gmra.mxu0 %v572
    %v8958 = vpop.f32.mrf.mxu0
    %v8959 = vadd.f32 %v8910, %v8958
    %v8960 = vpop.f32.mrf.mxu0
    %v8961 = vadd.f32 %v8912, %v8960
    %8962 = vmatmul.bf16.gmra.mxu0 %v596
    %v8963 = vpop.f32.mrf.mxu0
    %v8964 = vadd.f32 %v8915, %v8963
    %v8965 = vpop.f32.mrf.mxu0
    %v8966 = vadd.f32 %v8917, %v8965
    %8967 = vmatmul.bf16.gmra.mxu0 %v620
    %v8968 = vpop.f32.mrf.mxu0
    %v8969 = vadd.f32 %v8920, %v8968
    %v8970 = vpop.f32.mrf.mxu0
    %v8971 = vadd.f32 %v8922, %v8970
    %8972 = vmatmul.bf16.gmra.mxu0 %v644
    %v8973 = vpop.f32.mrf.mxu0
    %v8974 = vadd.f32 %v8925, %v8973
    %v8975 = vpop.f32.mrf.mxu0
    %v8976 = vadd.f32 %v8927, %v8975
    %8977 = vmatmul.bf16.gmra.mxu0 %v668
    %v8978 = vpop.f32.mrf.mxu0
    %v8979 = vadd.f32 %v8930, %v8978
    %v8980 = vpop.f32.mrf.mxu0
    %v8981 = vadd.f32 %v8932, %v8980
    %8982 = vdwg.mxu0
    %8983 = vmatpush.bf16.msra.mxu0 %v3899
    %8984 = vmatpush.bf16.msra.mxu0 %v3895
    %8985 = vmatpush.bf16.msra.mxu0 %v3891
    %8986 = vmatpush.bf16.msra.mxu0 %v3887
    %8987 = vmatpush.bf16.msra.mxu0 %v3883
    %8988 = vmatpush.bf16.msra.mxu0 %v3879
    %8989 = vmatpush.bf16.msra.mxu0 %v3875
    %8990 = vmatpush.bf16.msra.mxu0 %v3871
    %8991 = vmatmul.bf16.gmra.mxu0 %v501
    %v8992 = vpop.f32.mrf.mxu0
    %v8993 = vadd.f32 %v8944, %v8992
    %v8994 = vpop.f32.mrf.mxu0
    %v8995 = vadd.f32 %v8946, %v8994
    %8996 = vmatmul.bf16.gmra.mxu0 %v525
    %v8997 = vpop.f32.mrf.mxu0
    %v8998 = vadd.f32 %v8949, %v8997
    %v8999 = vpop.f32.mrf.mxu0
    %v9000 = vadd.f32 %v8951, %v8999
    %9001 = vmatmul.bf16.gmra.mxu0 %v549
    %v9002 = vpop.f32.mrf.mxu0
    %v9003 = vadd.f32 %v8954, %v9002
    %v9004 = vpop.f32.mrf.mxu0
    %v9005 = vadd.f32 %v8956, %v9004
    %9006 = vmatmul.bf16.gmra.mxu0 %v573
    %v9007 = vpop.f32.mrf.mxu0
    %v9008 = vadd.f32 %v8959, %v9007
    %v9009 = vpop.f32.mrf.mxu0
    %v9010 = vadd.f32 %v8961, %v9009
    %9011 = vmatmul.bf16.gmra.mxu0 %v597
    %v9012 = vpop.f32.mrf.mxu0
    %v9013 = vadd.f32 %v8964, %v9012
    %v9014 = vpop.f32.mrf.mxu0
    %v9015 = vadd.f32 %v8966, %v9014
    %9016 = vmatmul.bf16.gmra.mxu0 %v621
    %v9017 = vpop.f32.mrf.mxu0
    %v9018 = vadd.f32 %v8969, %v9017
    %v9019 = vpop.f32.mrf.mxu0
    %v9020 = vadd.f32 %v8971, %v9019
    %9021 = vmatmul.bf16.gmra.mxu0 %v645
    %v9022 = vpop.f32.mrf.mxu0
    %v9023 = vadd.f32 %v8974, %v9022
    %v9024 = vpop.f32.mrf.mxu0
    %v9025 = vadd.f32 %v8976, %v9024
    %9026 = vmatmul.bf16.gmra.mxu0 %v669
    %v9027 = vpop.f32.mrf.mxu0
    %v9028 = vadd.f32 %v8979, %v9027
    %v9029 = vpop.f32.mrf.mxu0
    %v9030 = vadd.f32 %v8981, %v9029
    %9031 = vdwg.mxu0
    %9032 = vmatpush.bf16.msra.mxu0 %v3931
    %9033 = vmatpush.bf16.msra.mxu0 %v3927
    %9034 = vmatpush.bf16.msra.mxu0 %v3923
    %9035 = vmatpush.bf16.msra.mxu0 %v3919
    %9036 = vmatpush.bf16.msra.mxu0 %v3915
    %9037 = vmatpush.bf16.msra.mxu0 %v3911
    %9038 = vmatpush.bf16.msra.mxu0 %v3907
    %9039 = vmatpush.bf16.msra.mxu0 %v3903
    %9040 = vmatmul.bf16.gmra.mxu0 %v502
    %v9041 = vpop.f32.mrf.mxu0
    %v9042 = vadd.f32 %v8993, %v9041
    %v9043 = vpop.f32.mrf.mxu0
    %v9044 = vadd.f32 %v8995, %v9043
    %9045 = vmatmul.bf16.gmra.mxu0 %v526
    %v9046 = vpop.f32.mrf.mxu0
    %v9047 = vadd.f32 %v8998, %v9046
    %v9048 = vpop.f32.mrf.mxu0
    %v9049 = vadd.f32 %v9000, %v9048
    %9050 = vmatmul.bf16.gmra.mxu0 %v550
    %v9051 = vpop.f32.mrf.mxu0
    %v9052 = vadd.f32 %v9003, %v9051
    %v9053 = vpop.f32.mrf.mxu0
    %v9054 = vadd.f32 %v9005, %v9053
    %9055 = vmatmul.bf16.gmra.mxu0 %v574
    %v9056 = vpop.f32.mrf.mxu0
    %v9057 = vadd.f32 %v9008, %v9056
    %v9058 = vpop.f32.mrf.mxu0
    %v9059 = vadd.f32 %v9010, %v9058
    %9060 = vmatmul.bf16.gmra.mxu0 %v598
    %v9061 = vpop.f32.mrf.mxu0
    %v9062 = vadd.f32 %v9013, %v9061
    %v9063 = vpop.f32.mrf.mxu0
    %v9064 = vadd.f32 %v9015, %v9063
    %9065 = vmatmul.bf16.gmra.mxu0 %v622
    %v9066 = vpop.f32.mrf.mxu0
    %v9067 = vadd.f32 %v9018, %v9066
    %v9068 = vpop.f32.mrf.mxu0
    %v9069 = vadd.f32 %v9020, %v9068
    %9070 = vmatmul.bf16.gmra.mxu0 %v646
    %v9071 = vpop.f32.mrf.mxu0
    %v9072 = vadd.f32 %v9023, %v9071
    %v9073 = vpop.f32.mrf.mxu0
    %v9074 = vadd.f32 %v9025, %v9073
    %9075 = vmatmul.bf16.gmra.mxu0 %v670
    %v9076 = vpop.f32.mrf.mxu0
    %v9077 = vadd.f32 %v9028, %v9076
    %v9078 = vpop.f32.mrf.mxu0
    %v9079 = vadd.f32 %v9030, %v9078
    %9080 = vdwg.mxu0
    %9081 = vmatpush.bf16.msra.mxu0 %v3963
    %9082 = vmatpush.bf16.msra.mxu0 %v3959
    %9083 = vmatpush.bf16.msra.mxu0 %v3955
    %9084 = vmatpush.bf16.msra.mxu0 %v3951
    %9085 = vmatpush.bf16.msra.mxu0 %v3947
    %9086 = vmatpush.bf16.msra.mxu0 %v3943
    %9087 = vmatpush.bf16.msra.mxu0 %v3939
    %9088 = vmatpush.bf16.msra.mxu0 %v3935
    %9089 = vmatmul.bf16.gmra.mxu0 %v503
    %v9090 = vpop.f32.mrf.mxu0
    %v9091 = vadd.f32 %v9042, %v9090
    %v9092 = vpop.f32.mrf.mxu0
    %v9093 = vadd.f32 %v9044, %v9092
    %9094 = vmatmul.bf16.gmra.mxu0 %v527
    %v9095 = vpop.f32.mrf.mxu0
    %v9096 = vadd.f32 %v9047, %v9095
    %v9097 = vpop.f32.mrf.mxu0
    %v9098 = vadd.f32 %v9049, %v9097
    %9099 = vmatmul.bf16.gmra.mxu0 %v551
    %v9100 = vpop.f32.mrf.mxu0
    %v9101 = vadd.f32 %v9052, %v9100
    %v9102 = vpop.f32.mrf.mxu0
    %v9103 = vadd.f32 %v9054, %v9102
    %9104 = vmatmul.bf16.gmra.mxu0 %v575
    %v9105 = vpop.f32.mrf.mxu0
    %v9106 = vadd.f32 %v9057, %v9105
    %v9107 = vpop.f32.mrf.mxu0
    %v9108 = vadd.f32 %v9059, %v9107
    %9109 = vmatmul.bf16.gmra.mxu0 %v599
    %v9110 = vpop.f32.mrf.mxu0
    %v9111 = vadd.f32 %v9062, %v9110
    %v9112 = vpop.f32.mrf.mxu0
    %v9113 = vadd.f32 %v9064, %v9112
    %9114 = vmatmul.bf16.gmra.mxu0 %v623
    %v9115 = vpop.f32.mrf.mxu0
    %v9116 = vadd.f32 %v9067, %v9115
    %v9117 = vpop.f32.mrf.mxu0
    %v9118 = vadd.f32 %v9069, %v9117
    %9119 = vmatmul.bf16.gmra.mxu0 %v647
    %v9120 = vpop.f32.mrf.mxu0
    %v9121 = vadd.f32 %v9072, %v9120
    %v9122 = vpop.f32.mrf.mxu0
    %v9123 = vadd.f32 %v9074, %v9122
    %9124 = vmatmul.bf16.gmra.mxu0 %v671
    %v9125 = vpop.f32.mrf.mxu0
    %v9126 = vadd.f32 %v9077, %v9125
    %v9127 = vpop.f32.mrf.mxu0
    %v9128 = vadd.f32 %v9079, %v9127
    %9129 = vdwg.mxu0
    %9130 = vmatpush.bf16.msra.mxu0 %v3995
    %9131 = vmatpush.bf16.msra.mxu0 %v3991
    %9132 = vmatpush.bf16.msra.mxu0 %v3987
    %9133 = vmatpush.bf16.msra.mxu0 %v3983
    %9134 = vmatpush.bf16.msra.mxu0 %v3979
    %9135 = vmatpush.bf16.msra.mxu0 %v3975
    %9136 = vmatpush.bf16.msra.mxu0 %v3971
    %9137 = vmatpush.bf16.msra.mxu0 %v3967
    %9138 = vmatmul.bf16.gmra.mxu0 %v504
    %v9139 = vpop.f32.mrf.mxu0
    %v9140 = vadd.f32 %v9091, %v9139
    %v9141 = vpop.f32.mrf.mxu0
    %v9142 = vadd.f32 %v9093, %v9141
    %9143 = vmatmul.bf16.gmra.mxu0 %v528
    %v9144 = vpop.f32.mrf.mxu0
    %v9145 = vadd.f32 %v9096, %v9144
    %v9146 = vpop.f32.mrf.mxu0
    %v9147 = vadd.f32 %v9098, %v9146
    %9148 = vmatmul.bf16.gmra.mxu0 %v552
    %v9149 = vpop.f32.mrf.mxu0
    %v9150 = vadd.f32 %v9101, %v9149
    %v9151 = vpop.f32.mrf.mxu0
    %v9152 = vadd.f32 %v9103, %v9151
    %9153 = vmatmul.bf16.gmra.mxu0 %v576
    %v9154 = vpop.f32.mrf.mxu0
    %v9155 = vadd.f32 %v9106, %v9154
    %v9156 = vpop.f32.mrf.mxu0
    %v9157 = vadd.f32 %v9108, %v9156
    %9158 = vmatmul.bf16.gmra.mxu0 %v600
    %v9159 = vpop.f32.mrf.mxu0
    %v9160 = vadd.f32 %v9111, %v9159
    %v9161 = vpop.f32.mrf.mxu0
    %v9162 = vadd.f32 %v9113, %v9161
    %9163 = vmatmul.bf16.gmra.mxu0 %v624
    %v9164 = vpop.f32.mrf.mxu0
    %v9165 = vadd.f32 %v9116, %v9164
    %v9166 = vpop.f32.mrf.mxu0
    %v9167 = vadd.f32 %v9118, %v9166
    %9168 = vmatmul.bf16.gmra.mxu0 %v648
    %v9169 = vpop.f32.mrf.mxu0
    %v9170 = vadd.f32 %v9121, %v9169
    %v9171 = vpop.f32.mrf.mxu0
    %v9172 = vadd.f32 %v9123, %v9171
    %9173 = vmatmul.bf16.gmra.mxu0 %v672
    %v9174 = vpop.f32.mrf.mxu0
    %v9175 = vadd.f32 %v9126, %v9174
    %v9176 = vpop.f32.mrf.mxu0
    %v9177 = vadd.f32 %v9128, %v9176
    %9178 = vdwg.mxu0
    %9179 = vmatpush.bf16.msra.mxu0 %v4027
    %9180 = vmatpush.bf16.msra.mxu0 %v4023
    %9181 = vmatpush.bf16.msra.mxu0 %v4019
    %9182 = vmatpush.bf16.msra.mxu0 %v4015
    %9183 = vmatpush.bf16.msra.mxu0 %v4011
    %9184 = vmatpush.bf16.msra.mxu0 %v4007
    %9185 = vmatpush.bf16.msra.mxu0 %v4003
    %9186 = vmatpush.bf16.msra.mxu0 %v3999
    %9187 = vmatmul.bf16.gmra.mxu0 %v505
    %v9188 = vpop.f32.mrf.mxu0
    %v9189 = vadd.f32 %v9140, %v9188
    %v9190 = vpop.f32.mrf.mxu0
    %v9191 = vadd.f32 %v9142, %v9190
    %9192 = vmatmul.bf16.gmra.mxu0 %v529
    %v9193 = vpop.f32.mrf.mxu0
    %v9194 = vadd.f32 %v9145, %v9193
    %v9195 = vpop.f32.mrf.mxu0
    %v9196 = vadd.f32 %v9147, %v9195
    %9197 = vmatmul.bf16.gmra.mxu0 %v553
    %v9198 = vpop.f32.mrf.mxu0
    %v9199 = vadd.f32 %v9150, %v9198
    %v9200 = vpop.f32.mrf.mxu0
    %v9201 = vadd.f32 %v9152, %v9200
    %9202 = vmatmul.bf16.gmra.mxu0 %v577
    %v9203 = vpop.f32.mrf.mxu0
    %v9204 = vadd.f32 %v9155, %v9203
    %v9205 = vpop.f32.mrf.mxu0
    %v9206 = vadd.f32 %v9157, %v9205
    %9207 = vmatmul.bf16.gmra.mxu0 %v601
    %v9208 = vpop.f32.mrf.mxu0
    %v9209 = vadd.f32 %v9160, %v9208
    %v9210 = vpop.f32.mrf.mxu0
    %v9211 = vadd.f32 %v9162, %v9210
    %9212 = vmatmul.bf16.gmra.mxu0 %v625
    %v9213 = vpop.f32.mrf.mxu0
    %v9214 = vadd.f32 %v9165, %v9213
    %v9215 = vpop.f32.mrf.mxu0
    %v9216 = vadd.f32 %v9167, %v9215
    %9217 = vmatmul.bf16.gmra.mxu0 %v649
    %v9218 = vpop.f32.mrf.mxu0
    %v9219 = vadd.f32 %v9170, %v9218
    %v9220 = vpop.f32.mrf.mxu0
    %v9221 = vadd.f32 %v9172, %v9220
    %9222 = vmatmul.bf16.gmra.mxu0 %v673
    %v9223 = vpop.f32.mrf.mxu0
    %v9224 = vadd.f32 %v9175, %v9223
    %v9225 = vpop.f32.mrf.mxu0
    %v9226 = vadd.f32 %v9177, %v9225
    %9227 = vdwg.mxu0
    %9228 = vmatpush.bf16.msra.mxu0 %v4059
    %9229 = vmatpush.bf16.msra.mxu0 %v4055
    %9230 = vmatpush.bf16.msra.mxu0 %v4051
    %9231 = vmatpush.bf16.msra.mxu0 %v4047
    %9232 = vmatpush.bf16.msra.mxu0 %v4043
    %9233 = vmatpush.bf16.msra.mxu0 %v4039
    %9234 = vmatpush.bf16.msra.mxu0 %v4035
    %9235 = vmatpush.bf16.msra.mxu0 %v4031
    %9236 = vmatmul.bf16.gmra.mxu0 %v506
    %v9237 = vpop.f32.mrf.mxu0
    %v9238 = vadd.f32 %v9189, %v9237
    %v9239 = vpop.f32.mrf.mxu0
    %v9240 = vadd.f32 %v9191, %v9239
    %9241 = vmatmul.bf16.gmra.mxu0 %v530
    %v9242 = vpop.f32.mrf.mxu0
    %v9243 = vadd.f32 %v9194, %v9242
    %v9244 = vpop.f32.mrf.mxu0
    %v9245 = vadd.f32 %v9196, %v9244
    %9246 = vmatmul.bf16.gmra.mxu0 %v554
    %v9247 = vpop.f32.mrf.mxu0
    %v9248 = vadd.f32 %v9199, %v9247
    %v9249 = vpop.f32.mrf.mxu0
    %v9250 = vadd.f32 %v9201, %v9249
    %9251 = vmatmul.bf16.gmra.mxu0 %v578
    %v9252 = vpop.f32.mrf.mxu0
    %v9253 = vadd.f32 %v9204, %v9252
    %v9254 = vpop.f32.mrf.mxu0
    %v9255 = vadd.f32 %v9206, %v9254
    %9256 = vmatmul.bf16.gmra.mxu0 %v602
    %v9257 = vpop.f32.mrf.mxu0
    %v9258 = vadd.f32 %v9209, %v9257
    %v9259 = vpop.f32.mrf.mxu0
    %v9260 = vadd.f32 %v9211, %v9259
    %9261 = vmatmul.bf16.gmra.mxu0 %v626
    %v9262 = vpop.f32.mrf.mxu0
    %v9263 = vadd.f32 %v9214, %v9262
    %v9264 = vpop.f32.mrf.mxu0
    %v9265 = vadd.f32 %v9216, %v9264
    %9266 = vmatmul.bf16.gmra.mxu0 %v650
    %v9267 = vpop.f32.mrf.mxu0
    %v9268 = vadd.f32 %v9219, %v9267
    %v9269 = vpop.f32.mrf.mxu0
    %v9270 = vadd.f32 %v9221, %v9269
    %9271 = vmatmul.bf16.gmra.mxu0 %v674
    %v9272 = vpop.f32.mrf.mxu0
    %v9273 = vadd.f32 %v9224, %v9272
    %v9274 = vpop.f32.mrf.mxu0
    %v9275 = vadd.f32 %v9226, %v9274
    %9276 = vdwg.mxu0
    %9277 = vmatpush.bf16.msra.mxu0 %v4091
    %9278 = vmatpush.bf16.msra.mxu0 %v4087
    %9279 = vmatpush.bf16.msra.mxu0 %v4083
    %9280 = vmatpush.bf16.msra.mxu0 %v4079
    %9281 = vmatpush.bf16.msra.mxu0 %v4075
    %9282 = vmatpush.bf16.msra.mxu0 %v4071
    %9283 = vmatpush.bf16.msra.mxu0 %v4067
    %9284 = vmatpush.bf16.msra.mxu0 %v4063
    %9285 = vmatmul.bf16.gmra.mxu0 %v507
    %v9286 = vpop.f32.mrf.mxu0
    %v9287 = vadd.f32 %v9238, %v9286
    %v9288 = vpop.f32.mrf.mxu0
    %v9289 = vadd.f32 %v9240, %v9288
    %9290 = vmatmul.bf16.gmra.mxu0 %v531
    %v9291 = vpop.f32.mrf.mxu0
    %v9292 = vadd.f32 %v9243, %v9291
    %v9293 = vpop.f32.mrf.mxu0
    %v9294 = vadd.f32 %v9245, %v9293
    %9295 = vmatmul.bf16.gmra.mxu0 %v555
    %v9296 = vpop.f32.mrf.mxu0
    %v9297 = vadd.f32 %v9248, %v9296
    %v9298 = vpop.f32.mrf.mxu0
    %v9299 = vadd.f32 %v9250, %v9298
    %9300 = vmatmul.bf16.gmra.mxu0 %v579
    %v9301 = vpop.f32.mrf.mxu0
    %v9302 = vadd.f32 %v9253, %v9301
    %v9303 = vpop.f32.mrf.mxu0
    %v9304 = vadd.f32 %v9255, %v9303
    %9305 = vmatmul.bf16.gmra.mxu0 %v603
    %v9306 = vpop.f32.mrf.mxu0
    %v9307 = vadd.f32 %v9258, %v9306
    %v9308 = vpop.f32.mrf.mxu0
    %v9309 = vadd.f32 %v9260, %v9308
    %9310 = vmatmul.bf16.gmra.mxu0 %v627
    %v9311 = vpop.f32.mrf.mxu0
    %v9312 = vadd.f32 %v9263, %v9311
    %v9313 = vpop.f32.mrf.mxu0
    %v9314 = vadd.f32 %v9265, %v9313
    %9315 = vmatmul.bf16.gmra.mxu0 %v651
    %v9316 = vpop.f32.mrf.mxu0
    %v9317 = vadd.f32 %v9268, %v9316
    %v9318 = vpop.f32.mrf.mxu0
    %v9319 = vadd.f32 %v9270, %v9318
    %9320 = vmatmul.bf16.gmra.mxu0 %v675
    %v9321 = vpop.f32.mrf.mxu0
    %v9322 = vadd.f32 %v9273, %v9321
    %v9323 = vpop.f32.mrf.mxu0
    %v9324 = vadd.f32 %v9275, %v9323
    %9325 = vdwg.mxu0
    %9326 = vmatpush.bf16.msra.mxu0 %v4123
    %9327 = vmatpush.bf16.msra.mxu0 %v4119
    %9328 = vmatpush.bf16.msra.mxu0 %v4115
    %9329 = vmatpush.bf16.msra.mxu0 %v4111
    %9330 = vmatpush.bf16.msra.mxu0 %v4107
    %9331 = vmatpush.bf16.msra.mxu0 %v4103
    %9332 = vmatpush.bf16.msra.mxu0 %v4099
    %9333 = vmatpush.bf16.msra.mxu0 %v4095
    %9334 = vmatmul.bf16.gmra.mxu0 %v508
    %v9335 = vpop.f32.mrf.mxu0
    %v9336 = vadd.f32 %v9287, %v9335
    %v9337 = vpop.f32.mrf.mxu0
    %v9338 = vadd.f32 %v9289, %v9337
    %9339 = vmatmul.bf16.gmra.mxu0 %v532
    %v9340 = vpop.f32.mrf.mxu0
    %v9341 = vadd.f32 %v9292, %v9340
    %v9342 = vpop.f32.mrf.mxu0
    %v9343 = vadd.f32 %v9294, %v9342
    %9344 = vmatmul.bf16.gmra.mxu0 %v556
    %v9345 = vpop.f32.mrf.mxu0
    %v9346 = vadd.f32 %v9297, %v9345
    %v9347 = vpop.f32.mrf.mxu0
    %v9348 = vadd.f32 %v9299, %v9347
    %9349 = vmatmul.bf16.gmra.mxu0 %v580
    %v9350 = vpop.f32.mrf.mxu0
    %v9351 = vadd.f32 %v9302, %v9350
    %v9352 = vpop.f32.mrf.mxu0
    %v9353 = vadd.f32 %v9304, %v9352
    %9354 = vmatmul.bf16.gmra.mxu0 %v604
    %v9355 = vpop.f32.mrf.mxu0
    %v9356 = vadd.f32 %v9307, %v9355
    %v9357 = vpop.f32.mrf.mxu0
    %v9358 = vadd.f32 %v9309, %v9357
    %9359 = vmatmul.bf16.gmra.mxu0 %v628
    %v9360 = vpop.f32.mrf.mxu0
    %v9361 = vadd.f32 %v9312, %v9360
    %v9362 = vpop.f32.mrf.mxu0
    %v9363 = vadd.f32 %v9314, %v9362
    %9364 = vmatmul.bf16.gmra.mxu0 %v652
    %v9365 = vpop.f32.mrf.mxu0
    %v9366 = vadd.f32 %v9317, %v9365
    %v9367 = vpop.f32.mrf.mxu0
    %v9368 = vadd.f32 %v9319, %v9367
    %9369 = vmatmul.bf16.gmra.mxu0 %v676
    %v9370 = vpop.f32.mrf.mxu0
    %v9371 = vadd.f32 %v9322, %v9370
    %v9372 = vpop.f32.mrf.mxu0
    %v9373 = vadd.f32 %v9324, %v9372
    %9374 = vdwg.mxu0
    %9375 = vmatpush.bf16.msra.mxu0 %v4155
    %9376 = vmatpush.bf16.msra.mxu0 %v4151
    %9377 = vmatpush.bf16.msra.mxu0 %v4147
    %9378 = vmatpush.bf16.msra.mxu0 %v4143
    %9379 = vmatpush.bf16.msra.mxu0 %v4139
    %9380 = vmatpush.bf16.msra.mxu0 %v4135
    %9381 = vmatpush.bf16.msra.mxu0 %v4131
    %9382 = vmatpush.bf16.msra.mxu0 %v4127
    %9383 = vmatmul.bf16.gmra.mxu0 %v509
    %v9384 = vpop.f32.mrf.mxu0
    %v9385 = vadd.f32 %v9336, %v9384
    %v9386 = vpop.f32.mrf.mxu0
    %v9387 = vadd.f32 %v9338, %v9386
    %9388 = vmatmul.bf16.gmra.mxu0 %v533
    %v9389 = vpop.f32.mrf.mxu0
    %v9390 = vadd.f32 %v9341, %v9389
    %v9391 = vpop.f32.mrf.mxu0
    %v9392 = vadd.f32 %v9343, %v9391
    %9393 = vmatmul.bf16.gmra.mxu0 %v557
    %v9394 = vpop.f32.mrf.mxu0
    %v9395 = vadd.f32 %v9346, %v9394
    %v9396 = vpop.f32.mrf.mxu0
    %v9397 = vadd.f32 %v9348, %v9396
    %9398 = vmatmul.bf16.gmra.mxu0 %v581
    %v9399 = vpop.f32.mrf.mxu0
    %v9400 = vadd.f32 %v9351, %v9399
    %v9401 = vpop.f32.mrf.mxu0
    %v9402 = vadd.f32 %v9353, %v9401
    %9403 = vmatmul.bf16.gmra.mxu0 %v605
    %v9404 = vpop.f32.mrf.mxu0
    %v9405 = vadd.f32 %v9356, %v9404
    %v9406 = vpop.f32.mrf.mxu0
    %v9407 = vadd.f32 %v9358, %v9406
    %9408 = vmatmul.bf16.gmra.mxu0 %v629
    %v9409 = vpop.f32.mrf.mxu0
    %v9410 = vadd.f32 %v9361, %v9409
    %v9411 = vpop.f32.mrf.mxu0
    %v9412 = vadd.f32 %v9363, %v9411
    %9413 = vmatmul.bf16.gmra.mxu0 %v653
    %v9414 = vpop.f32.mrf.mxu0
    %v9415 = vadd.f32 %v9366, %v9414
    %v9416 = vpop.f32.mrf.mxu0
    %v9417 = vadd.f32 %v9368, %v9416
    %9418 = vmatmul.bf16.gmra.mxu0 %v677
    %v9419 = vpop.f32.mrf.mxu0
    %v9420 = vadd.f32 %v9371, %v9419
    %v9421 = vpop.f32.mrf.mxu0
    %v9422 = vadd.f32 %v9373, %v9421
    %9423 = vdwg.mxu0
    %9424 = vmatpush.bf16.msra.mxu0 %v4187
    %9425 = vmatpush.bf16.msra.mxu0 %v4183
    %9426 = vmatpush.bf16.msra.mxu0 %v4179
    %9427 = vmatpush.bf16.msra.mxu0 %v4175
    %9428 = vmatpush.bf16.msra.mxu0 %v4171
    %9429 = vmatpush.bf16.msra.mxu0 %v4167
    %9430 = vmatpush.bf16.msra.mxu0 %v4163
    %9431 = vmatpush.bf16.msra.mxu0 %v4159
    %9432 = vmatmul.bf16.gmra.mxu0 %v510
    %v9433 = vpop.f32.mrf.mxu0
    %v9434 = vadd.f32 %v9385, %v9433
    %v9435 = vpop.f32.mrf.mxu0
    %v9436 = vadd.f32 %v9387, %v9435
    %9437 = vmatmul.bf16.gmra.mxu0 %v534
    %v9438 = vpop.f32.mrf.mxu0
    %v9439 = vadd.f32 %v9390, %v9438
    %v9440 = vpop.f32.mrf.mxu0
    %v9441 = vadd.f32 %v9392, %v9440
    %9442 = vmatmul.bf16.gmra.mxu0 %v558
    %v9443 = vpop.f32.mrf.mxu0
    %v9444 = vadd.f32 %v9395, %v9443
    %v9445 = vpop.f32.mrf.mxu0
    %v9446 = vadd.f32 %v9397, %v9445
    %9447 = vmatmul.bf16.gmra.mxu0 %v582
    %v9448 = vpop.f32.mrf.mxu0
    %v9449 = vadd.f32 %v9400, %v9448
    %v9450 = vpop.f32.mrf.mxu0
    %v9451 = vadd.f32 %v9402, %v9450
    %9452 = vmatmul.bf16.gmra.mxu0 %v606
    %v9453 = vpop.f32.mrf.mxu0
    %v9454 = vadd.f32 %v9405, %v9453
    %v9455 = vpop.f32.mrf.mxu0
    %v9456 = vadd.f32 %v9407, %v9455
    %9457 = vmatmul.bf16.gmra.mxu0 %v630
    %v9458 = vpop.f32.mrf.mxu0
    %v9459 = vadd.f32 %v9410, %v9458
    %v9460 = vpop.f32.mrf.mxu0
    %v9461 = vadd.f32 %v9412, %v9460
    %9462 = vmatmul.bf16.gmra.mxu0 %v654
    %v9463 = vpop.f32.mrf.mxu0
    %v9464 = vadd.f32 %v9415, %v9463
    %v9465 = vpop.f32.mrf.mxu0
    %v9466 = vadd.f32 %v9417, %v9465
    %9467 = vmatmul.bf16.gmra.mxu0 %v678
    %v9468 = vpop.f32.mrf.mxu0
    %v9469 = vadd.f32 %v9420, %v9468
    %v9470 = vpop.f32.mrf.mxu0
    %v9471 = vadd.f32 %v9422, %v9470
    %9472 = vdwg.mxu0
    %9473 = vmatpush.bf16.msra.mxu0 %v4219
    %9474 = vmatpush.bf16.msra.mxu0 %v4215
    %9475 = vmatpush.bf16.msra.mxu0 %v4211
    %9476 = vmatpush.bf16.msra.mxu0 %v4207
    %9477 = vmatpush.bf16.msra.mxu0 %v4203
    %9478 = vmatpush.bf16.msra.mxu0 %v4199
    %9479 = vmatpush.bf16.msra.mxu0 %v4195
    %9480 = vmatpush.bf16.msra.mxu0 %v4191
    %9481 = vmatmul.bf16.gmra.mxu0 %v511
    %v9482 = vpop.f32.mrf.mxu0
    %v9483 = vadd.f32 %v9434, %v9482
    %v9484 = vpop.f32.mrf.mxu0
    %v9485 = vadd.f32 %v9436, %v9484
    %9486 = vmatmul.bf16.gmra.mxu0 %v535
    %v9487 = vpop.f32.mrf.mxu0
    %v9488 = vadd.f32 %v9439, %v9487
    %v9489 = vpop.f32.mrf.mxu0
    %v9490 = vadd.f32 %v9441, %v9489
    %9491 = vmatmul.bf16.gmra.mxu0 %v559
    %v9492 = vpop.f32.mrf.mxu0
    %v9493 = vadd.f32 %v9444, %v9492
    %v9494 = vpop.f32.mrf.mxu0
    %v9495 = vadd.f32 %v9446, %v9494
    %9496 = vmatmul.bf16.gmra.mxu0 %v583
    %v9497 = vpop.f32.mrf.mxu0
    %v9498 = vadd.f32 %v9449, %v9497
    %v9499 = vpop.f32.mrf.mxu0
    %v9500 = vadd.f32 %v9451, %v9499
    %9501 = vmatmul.bf16.gmra.mxu0 %v607
    %v9502 = vpop.f32.mrf.mxu0
    %v9503 = vadd.f32 %v9454, %v9502
    %v9504 = vpop.f32.mrf.mxu0
    %v9505 = vadd.f32 %v9456, %v9504
    %9506 = vmatmul.bf16.gmra.mxu0 %v631
    %v9507 = vpop.f32.mrf.mxu0
    %v9508 = vadd.f32 %v9459, %v9507
    %v9509 = vpop.f32.mrf.mxu0
    %v9510 = vadd.f32 %v9461, %v9509
    %9511 = vmatmul.bf16.gmra.mxu0 %v655
    %v9512 = vpop.f32.mrf.mxu0
    %v9513 = vadd.f32 %v9464, %v9512
    %v9514 = vpop.f32.mrf.mxu0
    %v9515 = vadd.f32 %v9466, %v9514
    %9516 = vmatmul.bf16.gmra.mxu0 %v679
    %v9517 = vpop.f32.mrf.mxu0
    %v9518 = vadd.f32 %v9469, %v9517
    %v9519 = vpop.f32.mrf.mxu0
    %v9520 = vadd.f32 %v9471, %v9519
    %9521 = vdwg.mxu0
    %9522 = vmatpush.bf16.msra.mxu0 %v4251
    %9523 = vmatpush.bf16.msra.mxu0 %v4247
    %9524 = vmatpush.bf16.msra.mxu0 %v4243
    %9525 = vmatpush.bf16.msra.mxu0 %v4239
    %9526 = vmatpush.bf16.msra.mxu0 %v4235
    %9527 = vmatpush.bf16.msra.mxu0 %v4231
    %9528 = vmatpush.bf16.msra.mxu0 %v4227
    %9529 = vmatpush.bf16.msra.mxu0 %v4223
    %9530 = vmatmul.bf16.gmra.mxu0 %v512
    %v9531 = vpop.f32.mrf.mxu0
    %v9532 = vadd.f32 %v9483, %v9531
    %v9533 = vpop.f32.mrf.mxu0
    %v9534 = vadd.f32 %v9485, %v9533
    %9535 = vmatmul.bf16.gmra.mxu0 %v536
    %v9536 = vpop.f32.mrf.mxu0
    %v9537 = vadd.f32 %v9488, %v9536
    %v9538 = vpop.f32.mrf.mxu0
    %v9539 = vadd.f32 %v9490, %v9538
    %9540 = vmatmul.bf16.gmra.mxu0 %v560
    %v9541 = vpop.f32.mrf.mxu0
    %v9542 = vadd.f32 %v9493, %v9541
    %v9543 = vpop.f32.mrf.mxu0
    %v9544 = vadd.f32 %v9495, %v9543
    %9545 = vmatmul.bf16.gmra.mxu0 %v584
    %v9546 = vpop.f32.mrf.mxu0
    %v9547 = vadd.f32 %v9498, %v9546
    %v9548 = vpop.f32.mrf.mxu0
    %v9549 = vadd.f32 %v9500, %v9548
    %9550 = vmatmul.bf16.gmra.mxu0 %v608
    %v9551 = vpop.f32.mrf.mxu0
    %v9552 = vadd.f32 %v9503, %v9551
    %v9553 = vpop.f32.mrf.mxu0
    %v9554 = vadd.f32 %v9505, %v9553
    %9555 = vmatmul.bf16.gmra.mxu0 %v632
    %v9556 = vpop.f32.mrf.mxu0
    %v9557 = vadd.f32 %v9508, %v9556
    %v9558 = vpop.f32.mrf.mxu0
    %v9559 = vadd.f32 %v9510, %v9558
    %9560 = vmatmul.bf16.gmra.mxu0 %v656
    %v9561 = vpop.f32.mrf.mxu0
    %v9562 = vadd.f32 %v9513, %v9561
    %v9563 = vpop.f32.mrf.mxu0
    %v9564 = vadd.f32 %v9515, %v9563
    %9565 = vmatmul.bf16.gmra.mxu0 %v680
    %v9566 = vpop.f32.mrf.mxu0
    %v9567 = vadd.f32 %v9518, %v9566
    %v9568 = vpop.f32.mrf.mxu0
    %v9569 = vadd.f32 %v9520, %v9568
    %9570 = vdwg.mxu0
    %9571 = vmatpush.bf16.msra.mxu0 %v4283
    %9572 = vmatpush.bf16.msra.mxu0 %v4279
    %9573 = vmatpush.bf16.msra.mxu0 %v4275
    %9574 = vmatpush.bf16.msra.mxu0 %v4271
    %9575 = vmatpush.bf16.msra.mxu0 %v4267
    %9576 = vmatpush.bf16.msra.mxu0 %v4263
    %9577 = vmatpush.bf16.msra.mxu0 %v4259
    %9578 = vmatpush.bf16.msra.mxu0 %v4255
    %9579 = vmatmul.bf16.gmra.mxu0 %v513
    %v9580 = vpop.f32.mrf.mxu0
    %v9581 = vadd.f32 %v9532, %v9580
    %v9582 = vpop.f32.mrf.mxu0
    %v9583 = vadd.f32 %v9534, %v9582
    %9584 = vmatmul.bf16.gmra.mxu0 %v537
    %v9585 = vpop.f32.mrf.mxu0
    %v9586 = vadd.f32 %v9537, %v9585
    %v9587 = vpop.f32.mrf.mxu0
    %v9588 = vadd.f32 %v9539, %v9587
    %9589 = vmatmul.bf16.gmra.mxu0 %v561
    %v9590 = vpop.f32.mrf.mxu0
    %v9591 = vadd.f32 %v9542, %v9590
    %v9592 = vpop.f32.mrf.mxu0
    %v9593 = vadd.f32 %v9544, %v9592
    %9594 = vmatmul.bf16.gmra.mxu0 %v585
    %v9595 = vpop.f32.mrf.mxu0
    %v9596 = vadd.f32 %v9547, %v9595
    %v9597 = vpop.f32.mrf.mxu0
    %v9598 = vadd.f32 %v9549, %v9597
    %9599 = vmatmul.bf16.gmra.mxu0 %v609
    %v9600 = vpop.f32.mrf.mxu0
    %v9601 = vadd.f32 %v9552, %v9600
    %v9602 = vpop.f32.mrf.mxu0
    %v9603 = vadd.f32 %v9554, %v9602
    %9604 = vmatmul.bf16.gmra.mxu0 %v633
    %v9605 = vpop.f32.mrf.mxu0
    %v9606 = vadd.f32 %v9557, %v9605
    %v9607 = vpop.f32.mrf.mxu0
    %v9608 = vadd.f32 %v9559, %v9607
    %9609 = vmatmul.bf16.gmra.mxu0 %v657
    %v9610 = vpop.f32.mrf.mxu0
    %v9611 = vadd.f32 %v9562, %v9610
    %v9612 = vpop.f32.mrf.mxu0
    %v9613 = vadd.f32 %v9564, %v9612
    %9614 = vmatmul.bf16.gmra.mxu0 %v681
    %v9615 = vpop.f32.mrf.mxu0
    %v9616 = vadd.f32 %v9567, %v9615
    %v9617 = vpop.f32.mrf.mxu0
    %v9618 = vadd.f32 %v9569, %v9617
    %9619 = vdwg.mxu0
    %9620 = vmatpush.bf16.msra.mxu0 %v4315
    %9621 = vmatpush.bf16.msra.mxu0 %v4311
    %9622 = vmatpush.bf16.msra.mxu0 %v4307
    %9623 = vmatpush.bf16.msra.mxu0 %v4303
    %9624 = vmatpush.bf16.msra.mxu0 %v4299
    %9625 = vmatpush.bf16.msra.mxu0 %v4295
    %9626 = vmatpush.bf16.msra.mxu0 %v4291
    %9627 = vmatpush.bf16.msra.mxu0 %v4287
    %9628 = vmatmul.bf16.gmra.mxu0 %v514
    %v9629 = vpop.f32.mrf.mxu0
    %v9630 = vadd.f32 %v9581, %v9629
    %v9631 = vpop.f32.mrf.mxu0
    %v9632 = vadd.f32 %v9583, %v9631
    %9633 = vmatmul.bf16.gmra.mxu0 %v538
    %v9634 = vpop.f32.mrf.mxu0
    %v9635 = vadd.f32 %v9586, %v9634
    %v9636 = vpop.f32.mrf.mxu0
    %v9637 = vadd.f32 %v9588, %v9636
    %9638 = vmatmul.bf16.gmra.mxu0 %v562
    %v9639 = vpop.f32.mrf.mxu0
    %v9640 = vadd.f32 %v9591, %v9639
    %v9641 = vpop.f32.mrf.mxu0
    %v9642 = vadd.f32 %v9593, %v9641
    %9643 = vmatmul.bf16.gmra.mxu0 %v586
    %v9644 = vpop.f32.mrf.mxu0
    %v9645 = vadd.f32 %v9596, %v9644
    %v9646 = vpop.f32.mrf.mxu0
    %v9647 = vadd.f32 %v9598, %v9646
    %9648 = vmatmul.bf16.gmra.mxu0 %v610
    %v9649 = vpop.f32.mrf.mxu0
    %v9650 = vadd.f32 %v9601, %v9649
    %v9651 = vpop.f32.mrf.mxu0
    %v9652 = vadd.f32 %v9603, %v9651
    %9653 = vmatmul.bf16.gmra.mxu0 %v634
    %v9654 = vpop.f32.mrf.mxu0
    %v9655 = vadd.f32 %v9606, %v9654
    %v9656 = vpop.f32.mrf.mxu0
    %v9657 = vadd.f32 %v9608, %v9656
    %9658 = vmatmul.bf16.gmra.mxu0 %v658
    %v9659 = vpop.f32.mrf.mxu0
    %v9660 = vadd.f32 %v9611, %v9659
    %v9661 = vpop.f32.mrf.mxu0
    %v9662 = vadd.f32 %v9613, %v9661
    %9663 = vmatmul.bf16.gmra.mxu0 %v682
    %v9664 = vpop.f32.mrf.mxu0
    %v9665 = vadd.f32 %v9616, %v9664
    %v9666 = vpop.f32.mrf.mxu0
    %v9667 = vadd.f32 %v9618, %v9666
    %9668 = vdwg.mxu0
    %9669 = vmatpush.bf16.msra.mxu0 %v4347
    %9670 = vmatpush.bf16.msra.mxu0 %v4343
    %9671 = vmatpush.bf16.msra.mxu0 %v4339
    %9672 = vmatpush.bf16.msra.mxu0 %v4335
    %9673 = vmatpush.bf16.msra.mxu0 %v4331
    %9674 = vmatpush.bf16.msra.mxu0 %v4327
    %9675 = vmatpush.bf16.msra.mxu0 %v4323
    %9676 = vmatpush.bf16.msra.mxu0 %v4319
    %9677 = vmatmul.bf16.gmra.mxu0 %v515
    %v9678 = vpop.f32.mrf.mxu0
    %v9679 = vadd.f32 %v9630, %v9678
    %v9680 = vpop.f32.mrf.mxu0
    %v9681 = vadd.f32 %v9632, %v9680
    %9682 = vmatmul.bf16.gmra.mxu0 %v539
    %v9683 = vpop.f32.mrf.mxu0
    %v9684 = vadd.f32 %v9635, %v9683
    %v9685 = vpop.f32.mrf.mxu0
    %v9686 = vadd.f32 %v9637, %v9685
    %9687 = vmatmul.bf16.gmra.mxu0 %v563
    %v9688 = vpop.f32.mrf.mxu0
    %v9689 = vadd.f32 %v9640, %v9688
    %v9690 = vpop.f32.mrf.mxu0
    %v9691 = vadd.f32 %v9642, %v9690
    %9692 = vmatmul.bf16.gmra.mxu0 %v587
    %v9693 = vpop.f32.mrf.mxu0
    %v9694 = vadd.f32 %v9645, %v9693
    %v9695 = vpop.f32.mrf.mxu0
    %v9696 = vadd.f32 %v9647, %v9695
    %9697 = vmatmul.bf16.gmra.mxu0 %v611
    %v9698 = vpop.f32.mrf.mxu0
    %v9699 = vadd.f32 %v9650, %v9698
    %v9700 = vpop.f32.mrf.mxu0
    %v9701 = vadd.f32 %v9652, %v9700
    %9702 = vmatmul.bf16.gmra.mxu0 %v635
    %v9703 = vpop.f32.mrf.mxu0
    %v9704 = vadd.f32 %v9655, %v9703
    %v9705 = vpop.f32.mrf.mxu0
    %v9706 = vadd.f32 %v9657, %v9705
    %9707 = vmatmul.bf16.gmra.mxu0 %v659
    %v9708 = vpop.f32.mrf.mxu0
    %v9709 = vadd.f32 %v9660, %v9708
    %v9710 = vpop.f32.mrf.mxu0
    %v9711 = vadd.f32 %v9662, %v9710
    %9712 = vmatmul.bf16.gmra.mxu0 %v683
    %v9713 = vpop.f32.mrf.mxu0
    %v9714 = vadd.f32 %v9665, %v9713
    %v9715 = vpop.f32.mrf.mxu0
    %v9716 = vadd.f32 %v9667, %v9715
    %9717 = vdwg.mxu0
    %9718 = vmatpush.bf16.msra.mxu0 %v4379
    %9719 = vmatpush.bf16.msra.mxu0 %v4375
    %9720 = vmatpush.bf16.msra.mxu0 %v4371
    %9721 = vmatpush.bf16.msra.mxu0 %v4367
    %9722 = vmatpush.bf16.msra.mxu0 %v4363
    %9723 = vmatpush.bf16.msra.mxu0 %v4359
    %9724 = vmatpush.bf16.msra.mxu0 %v4355
    %9725 = vmatpush.bf16.msra.mxu0 %v4351
    %9726 = vmatmul.bf16.gmra.mxu0 %v516
    %v9727 = vpop.f32.mrf.mxu0
    %v9728 = vadd.f32 %v9679, %v9727
    %v9729 = vpop.f32.mrf.mxu0
    %v9730 = vadd.f32 %v9681, %v9729
    %9731 = vmatmul.bf16.gmra.mxu0 %v540
    %v9732 = vpop.f32.mrf.mxu0
    %v9733 = vadd.f32 %v9684, %v9732
    %v9734 = vpop.f32.mrf.mxu0
    %v9735 = vadd.f32 %v9686, %v9734
    %9736 = vmatmul.bf16.gmra.mxu0 %v564
    %v9737 = vpop.f32.mrf.mxu0
    %v9738 = vadd.f32 %v9689, %v9737
    %v9739 = vpop.f32.mrf.mxu0
    %v9740 = vadd.f32 %v9691, %v9739
    %9741 = vmatmul.bf16.gmra.mxu0 %v588
    %v9742 = vpop.f32.mrf.mxu0
    %v9743 = vadd.f32 %v9694, %v9742
    %v9744 = vpop.f32.mrf.mxu0
    %v9745 = vadd.f32 %v9696, %v9744
    %9746 = vmatmul.bf16.gmra.mxu0 %v612
    %v9747 = vpop.f32.mrf.mxu0
    %v9748 = vadd.f32 %v9699, %v9747
    %v9749 = vpop.f32.mrf.mxu0
    %v9750 = vadd.f32 %v9701, %v9749
    %9751 = vmatmul.bf16.gmra.mxu0 %v636
    %v9752 = vpop.f32.mrf.mxu0
    %v9753 = vadd.f32 %v9704, %v9752
    %v9754 = vpop.f32.mrf.mxu0
    %v9755 = vadd.f32 %v9706, %v9754
    %9756 = vmatmul.bf16.gmra.mxu0 %v660
    %v9757 = vpop.f32.mrf.mxu0
    %v9758 = vadd.f32 %v9709, %v9757
    %v9759 = vpop.f32.mrf.mxu0
    %v9760 = vadd.f32 %v9711, %v9759
    %9761 = vmatmul.bf16.gmra.mxu0 %v684
    %v9762 = vpop.f32.mrf.mxu0
    %v9763 = vadd.f32 %v9714, %v9762
    %v9764 = vpop.f32.mrf.mxu0
    %v9765 = vadd.f32 %v9716, %v9764
    %9766 = vdwg.mxu0
    %9767 = vmatpush.bf16.msra.mxu0 %v4411
    %9768 = vmatpush.bf16.msra.mxu0 %v4407
    %9769 = vmatpush.bf16.msra.mxu0 %v4403
    %9770 = vmatpush.bf16.msra.mxu0 %v4399
    %9771 = vmatpush.bf16.msra.mxu0 %v4395
    %9772 = vmatpush.bf16.msra.mxu0 %v4391
    %9773 = vmatpush.bf16.msra.mxu0 %v4387
    %9774 = vmatpush.bf16.msra.mxu0 %v4383
    %9775 = vmatmul.bf16.gmra.mxu0 %v517
    %v9776 = vpop.f32.mrf.mxu0
    %v9777 = vadd.f32 %v9728, %v9776
    %v9778 = vpop.f32.mrf.mxu0
    %v9779 = vadd.f32 %v9730, %v9778
    %9780 = vmatmul.bf16.gmra.mxu0 %v541
    %v9781 = vpop.f32.mrf.mxu0
    %v9782 = vadd.f32 %v9733, %v9781
    %v9783 = vpop.f32.mrf.mxu0
    %v9784 = vadd.f32 %v9735, %v9783
    %9785 = vmatmul.bf16.gmra.mxu0 %v565
    %v9786 = vpop.f32.mrf.mxu0
    %v9787 = vadd.f32 %v9738, %v9786
    %v9788 = vpop.f32.mrf.mxu0
    %v9789 = vadd.f32 %v9740, %v9788
    %9790 = vmatmul.bf16.gmra.mxu0 %v589
    %v9791 = vpop.f32.mrf.mxu0
    %v9792 = vadd.f32 %v9743, %v9791
    %v9793 = vpop.f32.mrf.mxu0
    %v9794 = vadd.f32 %v9745, %v9793
    %9795 = vmatmul.bf16.gmra.mxu0 %v613
    %v9796 = vpop.f32.mrf.mxu0
    %v9797 = vadd.f32 %v9748, %v9796
    %v9798 = vpop.f32.mrf.mxu0
    %v9799 = vadd.f32 %v9750, %v9798
    %9800 = vmatmul.bf16.gmra.mxu0 %v637
    %v9801 = vpop.f32.mrf.mxu0
    %v9802 = vadd.f32 %v9753, %v9801
    %v9803 = vpop.f32.mrf.mxu0
    %v9804 = vadd.f32 %v9755, %v9803
    %9805 = vmatmul.bf16.gmra.mxu0 %v661
    %v9806 = vpop.f32.mrf.mxu0
    %v9807 = vadd.f32 %v9758, %v9806
    %v9808 = vpop.f32.mrf.mxu0
    %v9809 = vadd.f32 %v9760, %v9808
    %9810 = vmatmul.bf16.gmra.mxu0 %v685
    %v9811 = vpop.f32.mrf.mxu0
    %v9812 = vadd.f32 %v9763, %v9811
    %v9813 = vpop.f32.mrf.mxu0
    %v9814 = vadd.f32 %v9765, %v9813
    %9815 = vdwg.mxu0
    %9816 = vmatpush.bf16.msra.mxu0 %v4443
    %9817 = vmatpush.bf16.msra.mxu0 %v4439
    %9818 = vmatpush.bf16.msra.mxu0 %v4435
    %9819 = vmatpush.bf16.msra.mxu0 %v4431
    %9820 = vmatpush.bf16.msra.mxu0 %v4427
    %9821 = vmatpush.bf16.msra.mxu0 %v4423
    %9822 = vmatpush.bf16.msra.mxu0 %v4419
    %9823 = vmatpush.bf16.msra.mxu0 %v4415
    %9824 = vmatmul.bf16.gmra.mxu0 %v518
    %v9825 = vpop.f32.mrf.mxu0
    %v9826 = vadd.f32 %v9777, %v9825
    %v9827 = vpop.f32.mrf.mxu0
    %v9828 = vadd.f32 %v9779, %v9827
    %9829 = vmatmul.bf16.gmra.mxu0 %v542
    %v9830 = vpop.f32.mrf.mxu0
    %v9831 = vadd.f32 %v9782, %v9830
    %v9832 = vpop.f32.mrf.mxu0
    %v9833 = vadd.f32 %v9784, %v9832
    %9834 = vmatmul.bf16.gmra.mxu0 %v566
    %v9835 = vpop.f32.mrf.mxu0
    %v9836 = vadd.f32 %v9787, %v9835
    %v9837 = vpop.f32.mrf.mxu0
    %v9838 = vadd.f32 %v9789, %v9837
    %9839 = vmatmul.bf16.gmra.mxu0 %v590
    %v9840 = vpop.f32.mrf.mxu0
    %v9841 = vadd.f32 %v9792, %v9840
    %v9842 = vpop.f32.mrf.mxu0
    %v9843 = vadd.f32 %v9794, %v9842
    %9844 = vmatmul.bf16.gmra.mxu0 %v614
    %v9845 = vpop.f32.mrf.mxu0
    %v9846 = vadd.f32 %v9797, %v9845
    %v9847 = vpop.f32.mrf.mxu0
    %v9848 = vadd.f32 %v9799, %v9847
    %9849 = vmatmul.bf16.gmra.mxu0 %v638
    %v9850 = vpop.f32.mrf.mxu0
    %v9851 = vadd.f32 %v9802, %v9850
    %v9852 = vpop.f32.mrf.mxu0
    %v9853 = vadd.f32 %v9804, %v9852
    %9854 = vmatmul.bf16.gmra.mxu0 %v662
    %v9855 = vpop.f32.mrf.mxu0
    %v9856 = vadd.f32 %v9807, %v9855
    %v9857 = vpop.f32.mrf.mxu0
    %v9858 = vadd.f32 %v9809, %v9857
    %9859 = vmatmul.bf16.gmra.mxu0 %v686
    %v9860 = vpop.f32.mrf.mxu0
    %v9861 = vadd.f32 %v9812, %v9860
    %v9862 = vpop.f32.mrf.mxu0
    %v9863 = vadd.f32 %v9814, %v9862
    %9864 = vdwg.mxu0
    %9865 = vmatpush.bf16.msra.mxu0 %v4475
    %9866 = vmatpush.bf16.msra.mxu0 %v4471
    %9867 = vmatpush.bf16.msra.mxu0 %v4467
    %9868 = vmatpush.bf16.msra.mxu0 %v4463
    %9869 = vmatpush.bf16.msra.mxu0 %v4459
    %9870 = vmatpush.bf16.msra.mxu0 %v4455
    %9871 = vmatpush.bf16.msra.mxu0 %v4451
    %9872 = vmatpush.bf16.msra.mxu0 %v4447
    %9873 = vmatmul.bf16.gmra.mxu0 %v519
    %v9874 = vpop.f32.mrf.mxu0
    %v9875 = vadd.f32 %v9826, %v9874
    %v9876 = vpop.f32.mrf.mxu0
    %v9877 = vadd.f32 %v9828, %v9876
    %9878 = vmatmul.bf16.gmra.mxu0 %v543
    %v9879 = vpop.f32.mrf.mxu0
    %v9880 = vadd.f32 %v9831, %v9879
    %v9881 = vpop.f32.mrf.mxu0
    %v9882 = vadd.f32 %v9833, %v9881
    %9883 = vmatmul.bf16.gmra.mxu0 %v567
    %v9884 = vpop.f32.mrf.mxu0
    %v9885 = vadd.f32 %v9836, %v9884
    %v9886 = vpop.f32.mrf.mxu0
    %v9887 = vadd.f32 %v9838, %v9886
    %9888 = vmatmul.bf16.gmra.mxu0 %v591
    %v9889 = vpop.f32.mrf.mxu0
    %v9890 = vadd.f32 %v9841, %v9889
    %v9891 = vpop.f32.mrf.mxu0
    %v9892 = vadd.f32 %v9843, %v9891
    %9893 = vmatmul.bf16.gmra.mxu0 %v615
    %v9894 = vpop.f32.mrf.mxu0
    %v9895 = vadd.f32 %v9846, %v9894
    %v9896 = vpop.f32.mrf.mxu0
    %v9897 = vadd.f32 %v9848, %v9896
    %9898 = vmatmul.bf16.gmra.mxu0 %v639
    %v9899 = vpop.f32.mrf.mxu0
    %v9900 = vadd.f32 %v9851, %v9899
    %v9901 = vpop.f32.mrf.mxu0
    %v9902 = vadd.f32 %v9853, %v9901
    %9903 = vmatmul.bf16.gmra.mxu0 %v663
    %v9904 = vpop.f32.mrf.mxu0
    %v9905 = vadd.f32 %v9856, %v9904
    %v9906 = vpop.f32.mrf.mxu0
    %v9907 = vadd.f32 %v9858, %v9906
    %9908 = vmatmul.bf16.gmra.mxu0 %v687
    %v9909 = vpop.f32.mrf.mxu0
    %v9910 = vadd.f32 %v9861, %v9909
    %v9911 = vpop.f32.mrf.mxu0
    %v9912 = vadd.f32 %v9863, %v9911
    %9913 = vdwg.mxu0
    %9914 = vmatpush.bf16.msra.mxu0 %v4507
    %9915 = vmatpush.bf16.msra.mxu0 %v4503
    %9916 = vmatpush.bf16.msra.mxu0 %v4499
    %9917 = vmatpush.bf16.msra.mxu0 %v4495
    %9918 = vmatpush.bf16.msra.mxu0 %v4491
    %9919 = vmatpush.bf16.msra.mxu0 %v4487
    %9920 = vmatpush.bf16.msra.mxu0 %v4483
    %9921 = vmatpush.bf16.msra.mxu0 %v4479
    %9922 = vmatmul.bf16.gmra.mxu0 %v520
    %v9923 = vpop.f32.mrf.mxu0
    %v9924 = vadd.f32 %v9875, %v9923
    %v9925 = vpop.f32.mrf.mxu0
    %v9926 = vadd.f32 %v9877, %v9925
    %9927 = vmatmul.bf16.gmra.mxu0 %v544
    %v9928 = vpop.f32.mrf.mxu0
    %v9929 = vadd.f32 %v9880, %v9928
    %v9930 = vpop.f32.mrf.mxu0
    %v9931 = vadd.f32 %v9882, %v9930
    %9932 = vmatmul.bf16.gmra.mxu0 %v568
    %v9933 = vpop.f32.mrf.mxu0
    %v9934 = vadd.f32 %v9885, %v9933
    %v9935 = vpop.f32.mrf.mxu0
    %v9936 = vadd.f32 %v9887, %v9935
    %9937 = vmatmul.bf16.gmra.mxu0 %v592
    %v9938 = vpop.f32.mrf.mxu0
    %v9939 = vadd.f32 %v9890, %v9938
    %v9940 = vpop.f32.mrf.mxu0
    %v9941 = vadd.f32 %v9892, %v9940
    %9942 = vmatmul.bf16.gmra.mxu0 %v616
    %v9943 = vpop.f32.mrf.mxu0
    %v9944 = vadd.f32 %v9895, %v9943
    %v9945 = vpop.f32.mrf.mxu0
    %v9946 = vadd.f32 %v9897, %v9945
    %9947 = vmatmul.bf16.gmra.mxu0 %v640
    %v9948 = vpop.f32.mrf.mxu0
    %v9949 = vadd.f32 %v9900, %v9948
    %v9950 = vpop.f32.mrf.mxu0
    %v9951 = vadd.f32 %v9902, %v9950
    %9952 = vmatmul.bf16.gmra.mxu0 %v664
    %v9953 = vpop.f32.mrf.mxu0
    %v9954 = vadd.f32 %v9905, %v9953
    %v9955 = vpop.f32.mrf.mxu0
    %v9956 = vadd.f32 %v9907, %v9955
    %9957 = vmatmul.bf16.gmra.mxu0 %v688
    %v9958 = vpop.f32.mrf.mxu0
    %v9959 = vadd.f32 %v9910, %v9958
    %v9960 = vpop.f32.mrf.mxu0
    %v9961 = vadd.f32 %v9912, %v9960
    %9962 = vdwg.mxu0
    %9963 = vmatpush.bf16.msra.mxu0 %v4539
    %9964 = vmatpush.bf16.msra.mxu0 %v4535
    %9965 = vmatpush.bf16.msra.mxu0 %v4531
    %9966 = vmatpush.bf16.msra.mxu0 %v4527
    %9967 = vmatpush.bf16.msra.mxu0 %v4523
    %9968 = vmatpush.bf16.msra.mxu0 %v4519
    %9969 = vmatpush.bf16.msra.mxu0 %v4515
    %9970 = vmatpush.bf16.msra.mxu0 %v4511
    %9971 = vmatmul.bf16.gmra.mxu0 %v521
    %v9972 = vpop.f32.mrf.mxu0
    %v9973 = vadd.f32 %v9924, %v9972
    %v9974 = vpop.f32.mrf.mxu0
    %v9975 = vadd.f32 %v9926, %v9974
    %9976 = vmatmul.bf16.gmra.mxu0 %v545
    %v9977 = vpop.f32.mrf.mxu0
    %v9978 = vadd.f32 %v9929, %v9977
    %v9979 = vpop.f32.mrf.mxu0
    %v9980 = vadd.f32 %v9931, %v9979
    %9981 = vmatmul.bf16.gmra.mxu0 %v569
    %v9982 = vpop.f32.mrf.mxu0
    %v9983 = vadd.f32 %v9934, %v9982
    %v9984 = vpop.f32.mrf.mxu0
    %v9985 = vadd.f32 %v9936, %v9984
    %9986 = vmatmul.bf16.gmra.mxu0 %v593
    %v9987 = vpop.f32.mrf.mxu0
    %v9988 = vadd.f32 %v9939, %v9987
    %v9989 = vpop.f32.mrf.mxu0
    %v9990 = vadd.f32 %v9941, %v9989
    %9991 = vmatmul.bf16.gmra.mxu0 %v617
    %v9992 = vpop.f32.mrf.mxu0
    %v9993 = vadd.f32 %v9944, %v9992
    %v9994 = vpop.f32.mrf.mxu0
    %v9995 = vadd.f32 %v9946, %v9994
    %9996 = vmatmul.bf16.gmra.mxu0 %v641
    %v9997 = vpop.f32.mrf.mxu0
    %v9998 = vadd.f32 %v9949, %v9997
    %v9999 = vpop.f32.mrf.mxu0
    %v10000 = vadd.f32 %v9951, %v9999
    %10001 = vmatmul.bf16.gmra.mxu0 %v665
    %v10002 = vpop.f32.mrf.mxu0
    %v10003 = vadd.f32 %v9954, %v10002
    %v10004 = vpop.f32.mrf.mxu0
    %v10005 = vadd.f32 %v9956, %v10004
    %10006 = vmatmul.bf16.gmra.mxu0 %v689
    %v10007 = vpop.f32.mrf.mxu0
    %v10008 = vadd.f32 %v9959, %v10007
    %v10009 = vpop.f32.mrf.mxu0
    %v10010 = vadd.f32 %v9961, %v10009
    %10011 = vdwg.mxu0
    %v10012 = vmax.f32 %v6445, 0.0
    %v10013 = vmax.f32 %v7621, 0.0
    %v10014 = vmax.f32 %v8797, 0.0
    %v10015 = vmax.f32 %v9973, 0.0
    %v10016 = vmax.f32 %v6447, 0.0
    %v10017 = vmax.f32 %v7623, 0.0
    %v10018 = vmax.f32 %v8799, 0.0
    %v10019 = vmax.f32 %v9975, 0.0
    %v10020 = vmax.f32 %v6450, 0.0
    %v10021 = vmax.f32 %v7626, 0.0
    %v10022 = vmax.f32 %v8802, 0.0
    %v10023 = vmax.f32 %v9978, 0.0
    %v10024 = vmax.f32 %v6452, 0.0
    %v10025 = vmax.f32 %v7628, 0.0
    %v10026 = vmax.f32 %v8804, 0.0
    %v10027 = vmax.f32 %v9980, 0.0
    %v10028 = vmax.f32 %v6455, 0.0
    %v10029 = vmax.f32 %v7631, 0.0
    %v10030 = vmax.f32 %v8807, 0.0
    %v10031 = vmax.f32 %v9983, 0.0
    %v10032 = vmax.f32 %v6457, 0.0
    %v10033 = vmax.f32 %v7633, 0.0
    %v10034 = vmax.f32 %v8809, 0.0
    %v10035 = vmax.f32 %v9985, 0.0
    %v10036 = vmax.f32 %v6460, 0.0
    %v10037 = vmax.f32 %v7636, 0.0
    %v10038 = vmax.f32 %v8812, 0.0
    %v10039 = vmax.f32 %v9988, 0.0
    %v10040 = vmax.f32 %v6462, 0.0
    %v10041 = vmax.f32 %v7638, 0.0
    %v10042 = vmax.f32 %v8814, 0.0
    %v10043 = vmax.f32 %v9990, 0.0
    %v10044 = vmax.f32 %v6465, 0.0
    %v10045 = vmax.f32 %v7641, 0.0
    %v10046 = vmax.f32 %v8817, 0.0
    %v10047 = vmax.f32 %v9993, 0.0
    %v10048 = vmax.f32 %v6467, 0.0
    %v10049 = vmax.f32 %v7643, 0.0
    %v10050 = vmax.f32 %v8819, 0.0
    %v10051 = vmax.f32 %v9995, 0.0
    %v10052 = vmax.f32 %v6470, 0.0
    %v10053 = vmax.f32 %v7646, 0.0
    %v10054 = vmax.f32 %v8822, 0.0
    %v10055 = vmax.f32 %v9998, 0.0
    %v10056 = vmax.f32 %v6472, 0.0
    %v10057 = vmax.f32 %v7648, 0.0
    %v10058 = vmax.f32 %v8824, 0.0
    %v10059 = vmax.f32 %v10000, 0.0
    %v10060 = vmax.f32 %v6475, 0.0
    %v10061 = vmax.f32 %v7651, 0.0
    %v10062 = vmax.f32 %v8827, 0.0
    %v10063 = vmax.f32 %v10003, 0.0
    %v10064 = vmax.f32 %v6477, 0.0
    %v10065 = vmax.f32 %v7653, 0.0
    %v10066 = vmax.f32 %v8829, 0.0
    %v10067 = vmax.f32 %v10005, 0.0
    %v10068 = vmax.f32 %v6480, 0.0
    %v10069 = vmax.f32 %v7656, 0.0
    %v10070 = vmax.f32 %v8832, 0.0
    %v10071 = vmax.f32 %v10008, 0.0
    %v10072 = vmax.f32 %v6482, 0.0
    %v10073 = vmax.f32 %v7658, 0.0
    %v10074 = vmax.f32 %v8834, 0.0
    %v10075 = vmax.f32 %v10010, 0.0
    %v10076 = vpack.c.bf16 %v10016, %v10012
    %v10077 = vpack.c.bf16 %v10017, %v10013
    %v10078 = vpack.c.bf16 %v10018, %v10014
    %v10079 = vpack.c.bf16 %v10019, %v10015
    %v10080 = vpack.c.bf16 %v10024, %v10020
    %v10081 = vpack.c.bf16 %v10025, %v10021
    %v10082 = vpack.c.bf16 %v10026, %v10022
    %v10083 = vpack.c.bf16 %v10027, %v10023
    %v10084 = vpack.c.bf16 %v10032, %v10028
    %v10085 = vpack.c.bf16 %v10033, %v10029
    %v10086 = vpack.c.bf16 %v10034, %v10030
    %v10087 = vpack.c.bf16 %v10035, %v10031
    %v10088 = vpack.c.bf16 %v10040, %v10036
    %v10089 = vpack.c.bf16 %v10041, %v10037
    %v10090 = vpack.c.bf16 %v10042, %v10038
    %v10091 = vpack.c.bf16 %v10043, %v10039
    %v10092 = vpack.c.bf16 %v10048, %v10044
    %v10093 = vpack.c.bf16 %v10049, %v10045
    %v10094 = vpack.c.bf16 %v10050, %v10046
    %v10095 = vpack.c.bf16 %v10051, %v10047
    %v10096 = vpack.c.bf16 %v10056, %v10052
    %v10097 = vpack.c.bf16 %v10057, %v10053
    %v10098 = vpack.c.bf16 %v10058, %v10054
    %v10099 = vpack.c.bf16 %v10059, %v10055
    %v10100 = vpack.c.bf16 %v10064, %v10060
    %v10101 = vpack.c.bf16 %v10065, %v10061
    %v10102 = vpack.c.bf16 %v10066, %v10062
    %v10103 = vpack.c.bf16 %v10067, %v10063
    %v10104 = vpack.c.bf16 %v10072, %v10068
    %v10105 = vpack.c.bf16 %v10073, %v10069
    %v10106 = vpack.c.bf16 %v10074, %v10070
    %v10107 = vpack.c.bf16 %v10075, %v10071
    %v10108 = vld [vmem:[#allocation6] sm:$0xff]
    %v10109 = vld [vmem:[#allocation6 + $0x8] sm:$0xff]
    %v10110 = vld [vmem:[#allocation6 + $0x10] sm:$0xff]
    %v10111 = vld [vmem:[#allocation6 + $0x18] sm:$0xff]
    %v10112 = vld [vmem:[#allocation6 + $0x20] sm:$0xff]
    %v10113 = vld [vmem:[#allocation6 + $0x28] sm:$0xff]
    %v10114 = vld [vmem:[#allocation6 + $0x30] sm:$0xff]
    %v10115 = vld [vmem:[#allocation6 + $0x38] sm:$0xff]
    %v10116 = vld [vmem:[#allocation6 + $0x40] sm:$0xff]
    %v10117 = vld [vmem:[#allocation6 + $0x48] sm:$0xff]
    %v10118 = vld [vmem:[#allocation6 + $0x50] sm:$0xff]
    %v10119 = vld [vmem:[#allocation6 + $0x58] sm:$0xff]
    %v10120 = vld [vmem:[#allocation6 + $0x60] sm:$0xff]
    %v10121 = vld [vmem:[#allocation6 + $0x68] sm:$0xff]
    %v10122 = vld [vmem:[#allocation6 + $0x70] sm:$0xff]
    %v10123 = vld [vmem:[#allocation6 + $0x78] sm:$0xff]
    %v10124 = vld [vmem:[#allocation6 + $0x80] sm:$0xff]
    %v10125 = vld [vmem:[#allocation6 + $0x88] sm:$0xff]
    %v10126 = vld [vmem:[#allocation6 + $0x90] sm:$0xff]
    %v10127 = vld [vmem:[#allocation6 + $0x98] sm:$0xff]
    %v10128 = vld [vmem:[#allocation6 + $0xa0] sm:$0xff]
    %v10129 = vld [vmem:[#allocation6 + $0xa8] sm:$0xff]
    %v10130 = vld [vmem:[#allocation6 + $0xb0] sm:$0xff]
    %v10131 = vld [vmem:[#allocation6 + $0xb8] sm:$0xff]
    %v10132 = vld [vmem:[#allocation6 + $0xc0] sm:$0xff]
    %v10133 = vld [vmem:[#allocation6 + $0xc8] sm:$0xff]
    %v10134 = vld [vmem:[#allocation6 + $0xd0] sm:$0xff]
    %v10135 = vld [vmem:[#allocation6 + $0xd8] sm:$0xff]
    %v10136 = vld [vmem:[#allocation6 + $0xe0] sm:$0xff]
    %v10137 = vld [vmem:[#allocation6 + $0xe8] sm:$0xff]
    %v10138 = vld [vmem:[#allocation6 + $0xf0] sm:$0xff]
    %v10139 = vld [vmem:[#allocation6 + $0xf8] sm:$0xff]
    %v10140 = vld [vmem:[#allocation6 + $0x100] sm:$0xff]
    %v10141 = vld [vmem:[#allocation6 + $0x108] sm:$0xff]
    %v10142 = vld [vmem:[#allocation6 + $0x110] sm:$0xff]
    %v10143 = vld [vmem:[#allocation6 + $0x118] sm:$0xff]
    %v10144 = vld [vmem:[#allocation6 + $0x120] sm:$0xff]
    %v10145 = vld [vmem:[#allocation6 + $0x128] sm:$0xff]
    %v10146 = vld [vmem:[#allocation6 + $0x130] sm:$0xff]
    %v10147 = vld [vmem:[#allocation6 + $0x138] sm:$0xff]
    %v10148 = vld [vmem:[#allocation6 + $0x140] sm:$0xff]
    %v10149 = vld [vmem:[#allocation6 + $0x148] sm:$0xff]
    %v10150 = vld [vmem:[#allocation6 + $0x150] sm:$0xff]
    %v10151 = vld [vmem:[#allocation6 + $0x158] sm:$0xff]
    %v10152 = vld [vmem:[#allocation6 + $0x160] sm:$0xff]
    %v10153 = vld [vmem:[#allocation6 + $0x168] sm:$0xff]
    %v10154 = vld [vmem:[#allocation6 + $0x170] sm:$0xff]
    %v10155 = vld [vmem:[#allocation6 + $0x178] sm:$0xff]
    %v10156 = vld [vmem:[#allocation6 + $0x180] sm:$0xff]
    %v10157 = vld [vmem:[#allocation6 + $0x188] sm:$0xff]
    %v10158 = vld [vmem:[#allocation6 + $0x190] sm:$0xff]
    %v10159 = vld [vmem:[#allocation6 + $0x198] sm:$0xff]
    %v10160 = vld [vmem:[#allocation6 + $0x1a0] sm:$0xff]
    %v10161 = vld [vmem:[#allocation6 + $0x1a8] sm:$0xff]
    %v10162 = vld [vmem:[#allocation6 + $0x1b0] sm:$0xff]
    %v10163 = vld [vmem:[#allocation6 + $0x1b8] sm:$0xff]
    %v10164 = vld [vmem:[#allocation6 + $0x1c0] sm:$0xff]
    %v10165 = vld [vmem:[#allocation6 + $0x1c8] sm:$0xff]
    %v10166 = vld [vmem:[#allocation6 + $0x1d0] sm:$0xff]
    %v10167 = vld [vmem:[#allocation6 + $0x1d8] sm:$0xff]
    %v10168 = vld [vmem:[#allocation6 + $0x1e0] sm:$0xff]
    %v10169 = vld [vmem:[#allocation6 + $0x1e8] sm:$0xff]
    %v10170 = vld [vmem:[#allocation6 + $0x1f0] sm:$0xff]
    %v10171 = vld [vmem:[#allocation6 + $0x1f8] sm:$0xff]
    %v10172 = vld [vmem:[#allocation6 + $0x200] sm:$0xff]
    %v10173 = vld [vmem:[#allocation6 + $0x208] sm:$0xff]
    %v10174 = vld [vmem:[#allocation6 + $0x210] sm:$0xff]
    %v10175 = vld [vmem:[#allocation6 + $0x218] sm:$0xff]
    %v10176 = vld [vmem:[#allocation6 + $0x220] sm:$0xff]
    %v10177 = vld [vmem:[#allocation6 + $0x228] sm:$0xff]
    %v10178 = vld [vmem:[#allocation6 + $0x230] sm:$0xff]
    %v10179 = vld [vmem:[#allocation6 + $0x238] sm:$0xff]
    %v10180 = vld [vmem:[#allocation6 + $0x240] sm:$0xff]
    %v10181 = vld [vmem:[#allocation6 + $0x248] sm:$0xff]
    %v10182 = vld [vmem:[#allocation6 + $0x250] sm:$0xff]
    %v10183 = vld [vmem:[#allocation6 + $0x258] sm:$0xff]
    %v10184 = vld [vmem:[#allocation6 + $0x260] sm:$0xff]
    %v10185 = vld [vmem:[#allocation6 + $0x268] sm:$0xff]
    %v10186 = vld [vmem:[#allocation6 + $0x270] sm:$0xff]
    %v10187 = vld [vmem:[#allocation6 + $0x278] sm:$0xff]
    %v10188 = vld [vmem:[#allocation6 + $0x280] sm:$0xff]
    %v10189 = vld [vmem:[#allocation6 + $0x288] sm:$0xff]
    %v10190 = vld [vmem:[#allocation6 + $0x290] sm:$0xff]
    %v10191 = vld [vmem:[#allocation6 + $0x298] sm:$0xff]
    %v10192 = vld [vmem:[#allocation6 + $0x2a0] sm:$0xff]
    %v10193 = vld [vmem:[#allocation6 + $0x2a8] sm:$0xff]
    %v10194 = vld [vmem:[#allocation6 + $0x2b0] sm:$0xff]
    %v10195 = vld [vmem:[#allocation6 + $0x2b8] sm:$0xff]
    %v10196 = vld [vmem:[#allocation6 + $0x2c0] sm:$0xff]
    %v10197 = vld [vmem:[#allocation6 + $0x2c8] sm:$0xff]
    %v10198 = vld [vmem:[#allocation6 + $0x2d0] sm:$0xff]
    %v10199 = vld [vmem:[#allocation6 + $0x2d8] sm:$0xff]
    %v10200 = vld [vmem:[#allocation6 + $0x2e0] sm:$0xff]
    %v10201 = vld [vmem:[#allocation6 + $0x2e8] sm:$0xff]
    %v10202 = vld [vmem:[#allocation6 + $0x2f0] sm:$0xff]
    %v10203 = vld [vmem:[#allocation6 + $0x2f8] sm:$0xff]
    %v10204 = vld [vmem:[#allocation6 + $0x300] sm:$0xff]
    %v10205 = vld [vmem:[#allocation6 + $0x308] sm:$0xff]
    %v10206 = vld [vmem:[#allocation6 + $0x310] sm:$0xff]
    %v10207 = vld [vmem:[#allocation6 + $0x318] sm:$0xff]
    %v10208 = vld [vmem:[#allocation6 + $0x320] sm:$0xff]
    %v10209 = vld [vmem:[#allocation6 + $0x328] sm:$0xff]
    %v10210 = vld [vmem:[#allocation6 + $0x330] sm:$0xff]
    %v10211 = vld [vmem:[#allocation6 + $0x338] sm:$0xff]
    %v10212 = vld [vmem:[#allocation6 + $0x340] sm:$0xff]
    %v10213 = vld [vmem:[#allocation6 + $0x348] sm:$0xff]
    %v10214 = vld [vmem:[#allocation6 + $0x350] sm:$0xff]
    %v10215 = vld [vmem:[#allocation6 + $0x358] sm:$0xff]
    %v10216 = vld [vmem:[#allocation6 + $0x360] sm:$0xff]
    %v10217 = vld [vmem:[#allocation6 + $0x368] sm:$0xff]
    %v10218 = vld [vmem:[#allocation6 + $0x370] sm:$0xff]
    %v10219 = vld [vmem:[#allocation6 + $0x378] sm:$0xff]
    %v10220 = vld [vmem:[#allocation6 + $0x380] sm:$0xff]
    %v10221 = vld [vmem:[#allocation6 + $0x388] sm:$0xff]
    %v10222 = vld [vmem:[#allocation6 + $0x390] sm:$0xff]
    %v10223 = vld [vmem:[#allocation6 + $0x398] sm:$0xff]
    %v10224 = vld [vmem:[#allocation6 + $0x3a0] sm:$0xff]
    %v10225 = vld [vmem:[#allocation6 + $0x3a8] sm:$0xff]
    %v10226 = vld [vmem:[#allocation6 + $0x3b0] sm:$0xff]
    %v10227 = vld [vmem:[#allocation6 + $0x3b8] sm:$0xff]
    %v10228 = vld [vmem:[#allocation6 + $0x3c0] sm:$0xff]
    %v10229 = vld [vmem:[#allocation6 + $0x3c8] sm:$0xff]
    %v10230 = vld [vmem:[#allocation6 + $0x3d0] sm:$0xff]
    %v10231 = vld [vmem:[#allocation6 + $0x3d8] sm:$0xff]
    %v10232 = vld [vmem:[#allocation6 + $0x3e0] sm:$0xff]
    %v10233 = vld [vmem:[#allocation6 + $0x3e8] sm:$0xff]
    %v10234 = vld [vmem:[#allocation6 + $0x3f0] sm:$0xff]
    %v10235 = vld [vmem:[#allocation6 + $0x3f8] sm:$0xff]
    %v10236 = vld [vmem:[#allocation7] sm:$0xf]
    %v10238 = vperm.slane %v10236, 0
    %v10239 = vperm.slane %v10236, 1
    %v10240 = vperm.slane %v10236, 2
    %v10241 = vperm.slane %v10236, 3
    %v10374 = vunpack.c.l.b16 %v10108
    %v10375 = vunpack.c.h.b16 %v10108
    %v10376 = vunpack.c.l.b16 %v10109
    %v10377 = vunpack.c.h.b16 %v10109
    %v10378 = vunpack.c.l.b16 %v10110
    %v10379 = vunpack.c.h.b16 %v10110
    %v10380 = vunpack.c.l.b16 %v10111
    %v10381 = vunpack.c.h.b16 %v10111
    %v10382 = vunpack.c.l.b16 %v10112
    %v10383 = vunpack.c.h.b16 %v10112
    %v10384 = vunpack.c.l.b16 %v10113
    %v10385 = vunpack.c.h.b16 %v10113
    %v10386 = vunpack.c.l.b16 %v10114
    %v10387 = vunpack.c.h.b16 %v10114
    %v10388 = vunpack.c.l.b16 %v10115
    %v10389 = vunpack.c.h.b16 %v10115
    %v10390 = vunpack.c.l.b16 %v10116
    %v10391 = vunpack.c.h.b16 %v10116
    %v10392 = vunpack.c.l.b16 %v10117
    %v10393 = vunpack.c.h.b16 %v10117
    %v10394 = vunpack.c.l.b16 %v10118
    %v10395 = vunpack.c.h.b16 %v10118
    %v10396 = vunpack.c.l.b16 %v10119
    %v10397 = vunpack.c.h.b16 %v10119
    %v10398 = vunpack.c.l.b16 %v10120
    %v10399 = vunpack.c.h.b16 %v10120
    %v10400 = vunpack.c.l.b16 %v10121
    %v10401 = vunpack.c.h.b16 %v10121
    %v10402 = vunpack.c.l.b16 %v10122
    %v10403 = vunpack.c.h.b16 %v10122
    %v10404 = vunpack.c.l.b16 %v10123
    %v10405 = vunpack.c.h.b16 %v10123
    %v10406 = vunpack.c.l.b16 %v10124
    %v10407 = vunpack.c.h.b16 %v10124
    %v10408 = vunpack.c.l.b16 %v10125
    %v10409 = vunpack.c.h.b16 %v10125
    %v10410 = vunpack.c.l.b16 %v10126
    %v10411 = vunpack.c.h.b16 %v10126
    %v10412 = vunpack.c.l.b16 %v10127
    %v10413 = vunpack.c.h.b16 %v10127
    %v10414 = vunpack.c.l.b16 %v10128
    %v10415 = vunpack.c.h.b16 %v10128
    %v10416 = vunpack.c.l.b16 %v10129
    %v10417 = vunpack.c.h.b16 %v10129
    %v10418 = vunpack.c.l.b16 %v10130
    %v10419 = vunpack.c.h.b16 %v10130
    %v10420 = vunpack.c.l.b16 %v10131
    %v10421 = vunpack.c.h.b16 %v10131
    %v10422 = vunpack.c.l.b16 %v10132
    %v10423 = vunpack.c.h.b16 %v10132
    %v10424 = vunpack.c.l.b16 %v10133
    %v10425 = vunpack.c.h.b16 %v10133
    %v10426 = vunpack.c.l.b16 %v10134
    %v10427 = vunpack.c.h.b16 %v10134
    %v10428 = vunpack.c.l.b16 %v10135
    %v10429 = vunpack.c.h.b16 %v10135
    %v10430 = vunpack.c.l.b16 %v10136
    %v10431 = vunpack.c.h.b16 %v10136
    %v10432 = vunpack.c.l.b16 %v10137
    %v10433 = vunpack.c.h.b16 %v10137
    %v10434 = vunpack.c.l.b16 %v10138
    %v10435 = vunpack.c.h.b16 %v10138
    %v10436 = vunpack.c.l.b16 %v10139
    %v10437 = vunpack.c.h.b16 %v10139
    %v10438 = vunpack.c.l.b16 %v10140
    %v10439 = vunpack.c.h.b16 %v10140
    %v10440 = vunpack.c.l.b16 %v10141
    %v10441 = vunpack.c.h.b16 %v10141
    %v10442 = vunpack.c.l.b16 %v10142
    %v10443 = vunpack.c.h.b16 %v10142
    %v10444 = vunpack.c.l.b16 %v10143
    %v10445 = vunpack.c.h.b16 %v10143
    %v10446 = vunpack.c.l.b16 %v10144
    %v10447 = vunpack.c.h.b16 %v10144
    %v10448 = vunpack.c.l.b16 %v10145
    %v10449 = vunpack.c.h.b16 %v10145
    %v10450 = vunpack.c.l.b16 %v10146
    %v10451 = vunpack.c.h.b16 %v10146
    %v10452 = vunpack.c.l.b16 %v10147
    %v10453 = vunpack.c.h.b16 %v10147
    %v10454 = vunpack.c.l.b16 %v10148
    %v10455 = vunpack.c.h.b16 %v10148
    %v10456 = vunpack.c.l.b16 %v10149
    %v10457 = vunpack.c.h.b16 %v10149
    %v10458 = vunpack.c.l.b16 %v10150
    %v10459 = vunpack.c.h.b16 %v10150
    %v10460 = vunpack.c.l.b16 %v10151
    %v10461 = vunpack.c.h.b16 %v10151
    %v10462 = vunpack.c.l.b16 %v10152
    %v10463 = vunpack.c.h.b16 %v10152
    %v10464 = vunpack.c.l.b16 %v10153
    %v10465 = vunpack.c.h.b16 %v10153
    %v10466 = vunpack.c.l.b16 %v10154
    %v10467 = vunpack.c.h.b16 %v10154
    %v10468 = vunpack.c.l.b16 %v10155
    %v10469 = vunpack.c.h.b16 %v10155
    %v10470 = vunpack.c.l.b16 %v10156
    %v10471 = vunpack.c.h.b16 %v10156
    %v10472 = vunpack.c.l.b16 %v10157
    %v10473 = vunpack.c.h.b16 %v10157
    %v10474 = vunpack.c.l.b16 %v10158
    %v10475 = vunpack.c.h.b16 %v10158
    %v10476 = vunpack.c.l.b16 %v10159
    %v10477 = vunpack.c.h.b16 %v10159
    %v10478 = vunpack.c.l.b16 %v10160
    %v10479 = vunpack.c.h.b16 %v10160
    %v10480 = vunpack.c.l.b16 %v10161
    %v10481 = vunpack.c.h.b16 %v10161
    %v10482 = vunpack.c.l.b16 %v10162
    %v10483 = vunpack.c.h.b16 %v10162
    %v10484 = vunpack.c.l.b16 %v10163
    %v10485 = vunpack.c.h.b16 %v10163
    %v10486 = vunpack.c.l.b16 %v10164
    %v10487 = vunpack.c.h.b16 %v10164
    %v10488 = vunpack.c.l.b16 %v10165
    %v10489 = vunpack.c.h.b16 %v10165
    %v10490 = vunpack.c.l.b16 %v10166
    %v10491 = vunpack.c.h.b16 %v10166
    %v10492 = vunpack.c.l.b16 %v10167
    %v10493 = vunpack.c.h.b16 %v10167
    %v10494 = vunpack.c.l.b16 %v10168
    %v10495 = vunpack.c.h.b16 %v10168
    %v10496 = vunpack.c.l.b16 %v10169
    %v10497 = vunpack.c.h.b16 %v10169
    %v10498 = vunpack.c.l.b16 %v10170
    %v10499 = vunpack.c.h.b16 %v10170
    %v10500 = vunpack.c.l.b16 %v10171
    %v10501 = vunpack.c.h.b16 %v10171
    %v10502 = vunpack.c.l.b16 %v10172
    %v10503 = vunpack.c.h.b16 %v10172
    %v10504 = vunpack.c.l.b16 %v10173
    %v10505 = vunpack.c.h.b16 %v10173
    %v10506 = vunpack.c.l.b16 %v10174
    %v10507 = vunpack.c.h.b16 %v10174
    %v10508 = vunpack.c.l.b16 %v10175
    %v10509 = vunpack.c.h.b16 %v10175
    %v10510 = vunpack.c.l.b16 %v10176
    %v10511 = vunpack.c.h.b16 %v10176
    %v10512 = vunpack.c.l.b16 %v10177
    %v10513 = vunpack.c.h.b16 %v10177
    %v10514 = vunpack.c.l.b16 %v10178
    %v10515 = vunpack.c.h.b16 %v10178
    %v10516 = vunpack.c.l.b16 %v10179
    %v10517 = vunpack.c.h.b16 %v10179
    %v10518 = vunpack.c.l.b16 %v10180
    %v10519 = vunpack.c.h.b16 %v10180
    %v10520 = vunpack.c.l.b16 %v10181
    %v10521 = vunpack.c.h.b16 %v10181
    %v10522 = vunpack.c.l.b16 %v10182
    %v10523 = vunpack.c.h.b16 %v10182
    %v10524 = vunpack.c.l.b16 %v10183
    %v10525 = vunpack.c.h.b16 %v10183
    %v10526 = vunpack.c.l.b16 %v10184
    %v10527 = vunpack.c.h.b16 %v10184
    %v10528 = vunpack.c.l.b16 %v10185
    %v10529 = vunpack.c.h.b16 %v10185
    %v10530 = vunpack.c.l.b16 %v10186
    %v10531 = vunpack.c.h.b16 %v10186
    %v10532 = vunpack.c.l.b16 %v10187
    %v10533 = vunpack.c.h.b16 %v10187
    %v10534 = vunpack.c.l.b16 %v10188
    %v10535 = vunpack.c.h.b16 %v10188
    %v10536 = vunpack.c.l.b16 %v10189
    %v10537 = vunpack.c.h.b16 %v10189
    %v10538 = vunpack.c.l.b16 %v10190
    %v10539 = vunpack.c.h.b16 %v10190
    %v10540 = vunpack.c.l.b16 %v10191
    %v10541 = vunpack.c.h.b16 %v10191
    %v10542 = vunpack.c.l.b16 %v10192
    %v10543 = vunpack.c.h.b16 %v10192
    %v10544 = vunpack.c.l.b16 %v10193
    %v10545 = vunpack.c.h.b16 %v10193
    %v10546 = vunpack.c.l.b16 %v10194
    %v10547 = vunpack.c.h.b16 %v10194
    %v10548 = vunpack.c.l.b16 %v10195
    %v10549 = vunpack.c.h.b16 %v10195
    %v10550 = vunpack.c.l.b16 %v10196
    %v10551 = vunpack.c.h.b16 %v10196
    %v10552 = vunpack.c.l.b16 %v10197
    %v10553 = vunpack.c.h.b16 %v10197
    %v10554 = vunpack.c.l.b16 %v10198
    %v10555 = vunpack.c.h.b16 %v10198
    %v10556 = vunpack.c.l.b16 %v10199
    %v10557 = vunpack.c.h.b16 %v10199
    %v10558 = vunpack.c.l.b16 %v10200
    %v10559 = vunpack.c.h.b16 %v10200
    %v10560 = vunpack.c.l.b16 %v10201
    %v10561 = vunpack.c.h.b16 %v10201
    %v10562 = vunpack.c.l.b16 %v10202
    %v10563 = vunpack.c.h.b16 %v10202
    %v10564 = vunpack.c.l.b16 %v10203
    %v10565 = vunpack.c.h.b16 %v10203
    %v10566 = vunpack.c.l.b16 %v10204
    %v10567 = vunpack.c.h.b16 %v10204
    %v10568 = vunpack.c.l.b16 %v10205
    %v10569 = vunpack.c.h.b16 %v10205
    %v10570 = vunpack.c.l.b16 %v10206
    %v10571 = vunpack.c.h.b16 %v10206
    %v10572 = vunpack.c.l.b16 %v10207
    %v10573 = vunpack.c.h.b16 %v10207
    %v10574 = vunpack.c.l.b16 %v10208
    %v10575 = vunpack.c.h.b16 %v10208
    %v10576 = vunpack.c.l.b16 %v10209
    %v10577 = vunpack.c.h.b16 %v10209
    %v10578 = vunpack.c.l.b16 %v10210
    %v10579 = vunpack.c.h.b16 %v10210
    %v10580 = vunpack.c.l.b16 %v10211
    %v10581 = vunpack.c.h.b16 %v10211
    %v10582 = vunpack.c.l.b16 %v10212
    %v10583 = vunpack.c.h.b16 %v10212
    %v10584 = vunpack.c.l.b16 %v10213
    %v10585 = vunpack.c.h.b16 %v10213
    %v10586 = vunpack.c.l.b16 %v10214
    %v10587 = vunpack.c.h.b16 %v10214
    %v10588 = vunpack.c.l.b16 %v10215
    %v10589 = vunpack.c.h.b16 %v10215
    %v10590 = vunpack.c.l.b16 %v10216
    %v10591 = vunpack.c.h.b16 %v10216
    %v10592 = vunpack.c.l.b16 %v10217
    %v10593 = vunpack.c.h.b16 %v10217
    %v10594 = vunpack.c.l.b16 %v10218
    %v10595 = vunpack.c.h.b16 %v10218
    %v10596 = vunpack.c.l.b16 %v10219
    %v10597 = vunpack.c.h.b16 %v10219
    %v10598 = vunpack.c.l.b16 %v10220
    %v10599 = vunpack.c.h.b16 %v10220
    %v10600 = vunpack.c.l.b16 %v10221
    %v10601 = vunpack.c.h.b16 %v10221
    %v10602 = vunpack.c.l.b16 %v10222
    %v10603 = vunpack.c.h.b16 %v10222
    %v10604 = vunpack.c.l.b16 %v10223
    %v10605 = vunpack.c.h.b16 %v10223
    %v10606 = vunpack.c.l.b16 %v10224
    %v10607 = vunpack.c.h.b16 %v10224
    %v10608 = vunpack.c.l.b16 %v10225
    %v10609 = vunpack.c.h.b16 %v10225
    %v10610 = vunpack.c.l.b16 %v10226
    %v10611 = vunpack.c.h.b16 %v10226
    %v10612 = vunpack.c.l.b16 %v10227
    %v10613 = vunpack.c.h.b16 %v10227
    %v10614 = vunpack.c.l.b16 %v10228
    %v10615 = vunpack.c.h.b16 %v10228
    %v10616 = vunpack.c.l.b16 %v10229
    %v10617 = vunpack.c.h.b16 %v10229
    %v10618 = vunpack.c.l.b16 %v10230
    %v10619 = vunpack.c.h.b16 %v10230
    %v10620 = vunpack.c.l.b16 %v10231
    %v10621 = vunpack.c.h.b16 %v10231
    %v10622 = vunpack.c.l.b16 %v10232
    %v10623 = vunpack.c.h.b16 %v10232
    %v10624 = vunpack.c.l.b16 %v10233
    %v10625 = vunpack.c.h.b16 %v10233
    %v10626 = vunpack.c.l.b16 %v10234
    %v10627 = vunpack.c.h.b16 %v10234
    %v10628 = vunpack.c.l.b16 %v10235
    %v10629 = vunpack.c.h.b16 %v10235
    %v10630 = vpack.c.b16 %v10378, %v10374
    %v10631 = vpack.c.b16 %v10379, %v10375
    %v10632 = vpack.c.b16 %v10380, %v10376
    %v10633 = vpack.c.b16 %v10381, %v10377
    %v10634 = vpack.c.b16 %v10386, %v10382
    %v10635 = vpack.c.b16 %v10387, %v10383
    %v10636 = vpack.c.b16 %v10388, %v10384
    %v10637 = vpack.c.b16 %v10389, %v10385
    %v10638 = vpack.c.b16 %v10394, %v10390
    %v10639 = vpack.c.b16 %v10395, %v10391
    %v10640 = vpack.c.b16 %v10396, %v10392
    %v10641 = vpack.c.b16 %v10397, %v10393
    %v10642 = vpack.c.b16 %v10402, %v10398
    %v10643 = vpack.c.b16 %v10403, %v10399
    %v10644 = vpack.c.b16 %v10404, %v10400
    %v10645 = vpack.c.b16 %v10405, %v10401
    %v10646 = vpack.c.b16 %v10410, %v10406
    %v10647 = vpack.c.b16 %v10411, %v10407
    %v10648 = vpack.c.b16 %v10412, %v10408
    %v10649 = vpack.c.b16 %v10413, %v10409
    %v10650 = vpack.c.b16 %v10418, %v10414
    %v10651 = vpack.c.b16 %v10419, %v10415
    %v10652 = vpack.c.b16 %v10420, %v10416
    %v10653 = vpack.c.b16 %v10421, %v10417
    %v10654 = vpack.c.b16 %v10426, %v10422
    %v10655 = vpack.c.b16 %v10427, %v10423
    %v10656 = vpack.c.b16 %v10428, %v10424
    %v10657 = vpack.c.b16 %v10429, %v10425
    %v10658 = vpack.c.b16 %v10434, %v10430
    %v10659 = vpack.c.b16 %v10435, %v10431
    %v10660 = vpack.c.b16 %v10436, %v10432
    %v10661 = vpack.c.b16 %v10437, %v10433
    %v10662 = vpack.c.b16 %v10442, %v10438
    %v10663 = vpack.c.b16 %v10443, %v10439
    %v10664 = vpack.c.b16 %v10444, %v10440
    %v10665 = vpack.c.b16 %v10445, %v10441
    %v10666 = vpack.c.b16 %v10450, %v10446
    %v10667 = vpack.c.b16 %v10451, %v10447
    %v10668 = vpack.c.b16 %v10452, %v10448
    %v10669 = vpack.c.b16 %v10453, %v10449
    %v10670 = vpack.c.b16 %v10458, %v10454
    %v10671 = vpack.c.b16 %v10459, %v10455
    %v10672 = vpack.c.b16 %v10460, %v10456
    %v10673 = vpack.c.b16 %v10461, %v10457
    %v10674 = vpack.c.b16 %v10466, %v10462
    %v10675 = vpack.c.b16 %v10467, %v10463
    %v10676 = vpack.c.b16 %v10468, %v10464
    %v10677 = vpack.c.b16 %v10469, %v10465
    %v10678 = vpack.c.b16 %v10474, %v10470
    %v10679 = vpack.c.b16 %v10475, %v10471
    %v10680 = vpack.c.b16 %v10476, %v10472
    %v10681 = vpack.c.b16 %v10477, %v10473
    %v10682 = vpack.c.b16 %v10482, %v10478
    %v10683 = vpack.c.b16 %v10483, %v10479
    %v10684 = vpack.c.b16 %v10484, %v10480
    %v10685 = vpack.c.b16 %v10485, %v10481
    %v10686 = vpack.c.b16 %v10490, %v10486
    %v10687 = vpack.c.b16 %v10491, %v10487
    %v10688 = vpack.c.b16 %v10492, %v10488
    %v10689 = vpack.c.b16 %v10493, %v10489
    %v10690 = vpack.c.b16 %v10498, %v10494
    %v10691 = vpack.c.b16 %v10499, %v10495
    %v10692 = vpack.c.b16 %v10500, %v10496
    %v10693 = vpack.c.b16 %v10501, %v10497
    %v10694 = vpack.c.b16 %v10506, %v10502
    %v10695 = vpack.c.b16 %v10507, %v10503
    %v10696 = vpack.c.b16 %v10508, %v10504
    %v10697 = vpack.c.b16 %v10509, %v10505
    %v10698 = vpack.c.b16 %v10514, %v10510
    %v10699 = vpack.c.b16 %v10515, %v10511
    %v10700 = vpack.c.b16 %v10516, %v10512
    %v10701 = vpack.c.b16 %v10517, %v10513
    %v10702 = vpack.c.b16 %v10522, %v10518
    %v10703 = vpack.c.b16 %v10523, %v10519
    %v10704 = vpack.c.b16 %v10524, %v10520
    %v10705 = vpack.c.b16 %v10525, %v10521
    %v10706 = vpack.c.b16 %v10530, %v10526
    %v10707 = vpack.c.b16 %v10531, %v10527
    %v10708 = vpack.c.b16 %v10532, %v10528
    %v10709 = vpack.c.b16 %v10533, %v10529
    %v10710 = vpack.c.b16 %v10538, %v10534
    %v10711 = vpack.c.b16 %v10539, %v10535
    %v10712 = vpack.c.b16 %v10540, %v10536
    %v10713 = vpack.c.b16 %v10541, %v10537
    %v10714 = vpack.c.b16 %v10546, %v10542
    %v10715 = vpack.c.b16 %v10547, %v10543
    %v10716 = vpack.c.b16 %v10548, %v10544
    %v10717 = vpack.c.b16 %v10549, %v10545
    %v10718 = vpack.c.b16 %v10554, %v10550
    %v10719 = vpack.c.b16 %v10555, %v10551
    %v10720 = vpack.c.b16 %v10556, %v10552
    %v10721 = vpack.c.b16 %v10557, %v10553
    %v10722 = vpack.c.b16 %v10562, %v10558
    %v10723 = vpack.c.b16 %v10563, %v10559
    %v10724 = vpack.c.b16 %v10564, %v10560
    %v10725 = vpack.c.b16 %v10565, %v10561
    %v10726 = vpack.c.b16 %v10570, %v10566
    %v10727 = vpack.c.b16 %v10571, %v10567
    %v10728 = vpack.c.b16 %v10572, %v10568
    %v10729 = vpack.c.b16 %v10573, %v10569
    %v10730 = vpack.c.b16 %v10578, %v10574
    %v10731 = vpack.c.b16 %v10579, %v10575
    %v10732 = vpack.c.b16 %v10580, %v10576
    %v10733 = vpack.c.b16 %v10581, %v10577
    %v10734 = vpack.c.b16 %v10586, %v10582
    %v10735 = vpack.c.b16 %v10587, %v10583
    %v10736 = vpack.c.b16 %v10588, %v10584
    %v10737 = vpack.c.b16 %v10589, %v10585
    %v10738 = vpack.c.b16 %v10594, %v10590
    %v10739 = vpack.c.b16 %v10595, %v10591
    %v10740 = vpack.c.b16 %v10596, %v10592
    %v10741 = vpack.c.b16 %v10597, %v10593
    %v10742 = vpack.c.b16 %v10602, %v10598
    %v10743 = vpack.c.b16 %v10603, %v10599
    %v10744 = vpack.c.b16 %v10604, %v10600
    %v10745 = vpack.c.b16 %v10605, %v10601
    %v10746 = vpack.c.b16 %v10610, %v10606
    %v10747 = vpack.c.b16 %v10611, %v10607
    %v10748 = vpack.c.b16 %v10612, %v10608
    %v10749 = vpack.c.b16 %v10613, %v10609
    %v10750 = vpack.c.b16 %v10618, %v10614
    %v10751 = vpack.c.b16 %v10619, %v10615
    %v10752 = vpack.c.b16 %v10620, %v10616
    %v10753 = vpack.c.b16 %v10621, %v10617
    %v10754 = vpack.c.b16 %v10626, %v10622
    %v10755 = vpack.c.b16 %v10627, %v10623
    %v10756 = vpack.c.b16 %v10628, %v10624
    %v10757 = vpack.c.b16 %v10629, %v10625
    %10886 = vmatpush.bf16.msra.mxu0 %v10658
    %10887 = vmatpush.bf16.msra.mxu0 %v10654
    %10888 = vmatpush.bf16.msra.mxu0 %v10650
    %10889 = vmatpush.bf16.msra.mxu0 %v10646
    %10890 = vmatpush.bf16.msra.mxu0 %v10642
    %10891 = vmatpush.bf16.msra.mxu0 %v10638
    %10892 = vmatpush.bf16.msra.mxu0 %v10634
    %10893 = vmatpush.bf16.msra.mxu0 %v10630
    %10894 = vmatmul.bf16.gmra.mxu0 %v10076
    %v10895 = vpop.f32.mrf.mxu0
    %v10896 = vadd.f32 %v10238, %v10895
    %v10897 = vpop.f32.mrf.mxu0
    %v10898 = vadd.f32 %v10238, %v10897
    %10899 = vmatmul.bf16.gmra.mxu0 %v10080
    %v10900 = vpop.f32.mrf.mxu0
    %v10901 = vadd.f32 %v10238, %v10900
    %v10902 = vpop.f32.mrf.mxu0
    %v10903 = vadd.f32 %v10238, %v10902
    %10904 = vmatmul.bf16.gmra.mxu0 %v10084
    %v10905 = vpop.f32.mrf.mxu0
    %v10906 = vadd.f32 %v10238, %v10905
    %v10907 = vpop.f32.mrf.mxu0
    %v10908 = vadd.f32 %v10238, %v10907
    %10909 = vmatmul.bf16.gmra.mxu0 %v10088
    %v10910 = vpop.f32.mrf.mxu0
    %v10911 = vadd.f32 %v10238, %v10910
    %v10912 = vpop.f32.mrf.mxu0
    %v10913 = vadd.f32 %v10238, %v10912
    %10914 = vmatmul.bf16.gmra.mxu0 %v10092
    %v10915 = vpop.f32.mrf.mxu0
    %v10916 = vadd.f32 %v10238, %v10915
    %v10917 = vpop.f32.mrf.mxu0
    %v10918 = vadd.f32 %v10238, %v10917
    %10919 = vmatmul.bf16.gmra.mxu0 %v10096
    %v10920 = vpop.f32.mrf.mxu0
    %v10921 = vadd.f32 %v10238, %v10920
    %v10922 = vpop.f32.mrf.mxu0
    %v10923 = vadd.f32 %v10238, %v10922
    %10924 = vmatmul.bf16.gmra.mxu0 %v10100
    %v10925 = vpop.f32.mrf.mxu0
    %v10926 = vadd.f32 %v10238, %v10925
    %v10927 = vpop.f32.mrf.mxu0
    %v10928 = vadd.f32 %v10238, %v10927
    %10929 = vmatmul.bf16.gmra.mxu0 %v10104
    %v10930 = vpop.f32.mrf.mxu0
    %v10931 = vadd.f32 %v10238, %v10930
    %v10932 = vpop.f32.mrf.mxu0
    %v10933 = vadd.f32 %v10238, %v10932
    %10934 = vdwg.mxu0
    %10935 = vmatpush.bf16.msra.mxu0 %v10690
    %10936 = vmatpush.bf16.msra.mxu0 %v10686
    %10937 = vmatpush.bf16.msra.mxu0 %v10682
    %10938 = vmatpush.bf16.msra.mxu0 %v10678
    %10939 = vmatpush.bf16.msra.mxu0 %v10674
    %10940 = vmatpush.bf16.msra.mxu0 %v10670
    %10941 = vmatpush.bf16.msra.mxu0 %v10666
    %10942 = vmatpush.bf16.msra.mxu0 %v10662
    %10943 = vmatmul.bf16.gmra.mxu0 %v10077
    %v10944 = vpop.f32.mrf.mxu0
    %v10945 = vadd.f32 %v10896, %v10944
    %v10946 = vpop.f32.mrf.mxu0
    %v10947 = vadd.f32 %v10898, %v10946
    %10948 = vmatmul.bf16.gmra.mxu0 %v10081
    %v10949 = vpop.f32.mrf.mxu0
    %v10950 = vadd.f32 %v10901, %v10949
    %v10951 = vpop.f32.mrf.mxu0
    %v10952 = vadd.f32 %v10903, %v10951
    %10953 = vmatmul.bf16.gmra.mxu0 %v10085
    %v10954 = vpop.f32.mrf.mxu0
    %v10955 = vadd.f32 %v10906, %v10954
    %v10956 = vpop.f32.mrf.mxu0
    %v10957 = vadd.f32 %v10908, %v10956
    %10958 = vmatmul.bf16.gmra.mxu0 %v10089
    %v10959 = vpop.f32.mrf.mxu0
    %v10960 = vadd.f32 %v10911, %v10959
    %v10961 = vpop.f32.mrf.mxu0
    %v10962 = vadd.f32 %v10913, %v10961
    %10963 = vmatmul.bf16.gmra.mxu0 %v10093
    %v10964 = vpop.f32.mrf.mxu0
    %v10965 = vadd.f32 %v10916, %v10964
    %v10966 = vpop.f32.mrf.mxu0
    %v10967 = vadd.f32 %v10918, %v10966
    %10968 = vmatmul.bf16.gmra.mxu0 %v10097
    %v10969 = vpop.f32.mrf.mxu0
    %v10970 = vadd.f32 %v10921, %v10969
    %v10971 = vpop.f32.mrf.mxu0
    %v10972 = vadd.f32 %v10923, %v10971
    %10973 = vmatmul.bf16.gmra.mxu0 %v10101
    %v10974 = vpop.f32.mrf.mxu0
    %v10975 = vadd.f32 %v10926, %v10974
    %v10976 = vpop.f32.mrf.mxu0
    %v10977 = vadd.f32 %v10928, %v10976
    %10978 = vmatmul.bf16.gmra.mxu0 %v10105
    %v10979 = vpop.f32.mrf.mxu0
    %v10980 = vadd.f32 %v10931, %v10979
    %v10981 = vpop.f32.mrf.mxu0
    %v10982 = vadd.f32 %v10933, %v10981
    %10983 = vdwg.mxu0
    %10984 = vmatpush.bf16.msra.mxu0 %v10722
    %10985 = vmatpush.bf16.msra.mxu0 %v10718
    %10986 = vmatpush.bf16.msra.mxu0 %v10714
    %10987 = vmatpush.bf16.msra.mxu0 %v10710
    %10988 = vmatpush.bf16.msra.mxu0 %v10706
    %10989 = vmatpush.bf16.msra.mxu0 %v10702
    %10990 = vmatpush.bf16.msra.mxu0 %v10698
    %10991 = vmatpush.bf16.msra.mxu0 %v10694
    %10992 = vmatmul.bf16.gmra.mxu0 %v10078
    %v10993 = vpop.f32.mrf.mxu0
    %v10994 = vadd.f32 %v10945, %v10993
    %v10995 = vpop.f32.mrf.mxu0
    %v10996 = vadd.f32 %v10947, %v10995
    %10997 = vmatmul.bf16.gmra.mxu0 %v10082
    %v10998 = vpop.f32.mrf.mxu0
    %v10999 = vadd.f32 %v10950, %v10998
    %v11000 = vpop.f32.mrf.mxu0
    %v11001 = vadd.f32 %v10952, %v11000
    %11002 = vmatmul.bf16.gmra.mxu0 %v10086
    %v11003 = vpop.f32.mrf.mxu0
    %v11004 = vadd.f32 %v10955, %v11003
    %v11005 = vpop.f32.mrf.mxu0
    %v11006 = vadd.f32 %v10957, %v11005
    %11007 = vmatmul.bf16.gmra.mxu0 %v10090
    %v11008 = vpop.f32.mrf.mxu0
    %v11009 = vadd.f32 %v10960, %v11008
    %v11010 = vpop.f32.mrf.mxu0
    %v11011 = vadd.f32 %v10962, %v11010
    %11012 = vmatmul.bf16.gmra.mxu0 %v10094
    %v11013 = vpop.f32.mrf.mxu0
    %v11014 = vadd.f32 %v10965, %v11013
    %v11015 = vpop.f32.mrf.mxu0
    %v11016 = vadd.f32 %v10967, %v11015
    %11017 = vmatmul.bf16.gmra.mxu0 %v10098
    %v11018 = vpop.f32.mrf.mxu0
    %v11019 = vadd.f32 %v10970, %v11018
    %v11020 = vpop.f32.mrf.mxu0
    %v11021 = vadd.f32 %v10972, %v11020
    %11022 = vmatmul.bf16.gmra.mxu0 %v10102
    %v11023 = vpop.f32.mrf.mxu0
    %v11024 = vadd.f32 %v10975, %v11023
    %v11025 = vpop.f32.mrf.mxu0
    %v11026 = vadd.f32 %v10977, %v11025
    %11027 = vmatmul.bf16.gmra.mxu0 %v10106
    %v11028 = vpop.f32.mrf.mxu0
    %v11029 = vadd.f32 %v10980, %v11028
    %v11030 = vpop.f32.mrf.mxu0
    %v11031 = vadd.f32 %v10982, %v11030
    %11032 = vdwg.mxu0
    %11033 = vmatpush.bf16.msra.mxu0 %v10754
    %11034 = vmatpush.bf16.msra.mxu0 %v10750
    %11035 = vmatpush.bf16.msra.mxu0 %v10746
    %11036 = vmatpush.bf16.msra.mxu0 %v10742
    %11037 = vmatpush.bf16.msra.mxu0 %v10738
    %11038 = vmatpush.bf16.msra.mxu0 %v10734
    %11039 = vmatpush.bf16.msra.mxu0 %v10730
    %11040 = vmatpush.bf16.msra.mxu0 %v10726
    %11041 = vmatmul.bf16.gmra.mxu0 %v10079
    %v11042 = vpop.f32.mrf.mxu0
    %v11043 = vadd.f32 %v10994, %v11042
    %v11044 = vpop.f32.mrf.mxu0
    %v11045 = vadd.f32 %v10996, %v11044
    %11046 = vmatmul.bf16.gmra.mxu0 %v10083
    %v11047 = vpop.f32.mrf.mxu0
    %v11048 = vadd.f32 %v10999, %v11047
    %v11049 = vpop.f32.mrf.mxu0
    %v11050 = vadd.f32 %v11001, %v11049
    %11051 = vmatmul.bf16.gmra.mxu0 %v10087
    %v11052 = vpop.f32.mrf.mxu0
    %v11053 = vadd.f32 %v11004, %v11052
    %v11054 = vpop.f32.mrf.mxu0
    %v11055 = vadd.f32 %v11006, %v11054
    %11056 = vmatmul.bf16.gmra.mxu0 %v10091
    %v11057 = vpop.f32.mrf.mxu0
    %v11058 = vadd.f32 %v11009, %v11057
    %v11059 = vpop.f32.mrf.mxu0
    %v11060 = vadd.f32 %v11011, %v11059
    %11061 = vmatmul.bf16.gmra.mxu0 %v10095
    %v11062 = vpop.f32.mrf.mxu0
    %v11063 = vadd.f32 %v11014, %v11062
    %v11064 = vpop.f32.mrf.mxu0
    %v11065 = vadd.f32 %v11016, %v11064
    %11066 = vmatmul.bf16.gmra.mxu0 %v10099
    %v11067 = vpop.f32.mrf.mxu0
    %v11068 = vadd.f32 %v11019, %v11067
    %v11069 = vpop.f32.mrf.mxu0
    %v11070 = vadd.f32 %v11021, %v11069
    %11071 = vmatmul.bf16.gmra.mxu0 %v10103
    %v11072 = vpop.f32.mrf.mxu0
    %v11073 = vadd.f32 %v11024, %v11072
    %v11074 = vpop.f32.mrf.mxu0
    %v11075 = vadd.f32 %v11026, %v11074
    %11076 = vmatmul.bf16.gmra.mxu0 %v10107
    %v11077 = vpop.f32.mrf.mxu0
    %v11078 = vadd.f32 %v11029, %v11077
    %v11079 = vpop.f32.mrf.mxu0
    %v11080 = vadd.f32 %v11031, %v11079
    %11081 = vdwg.mxu0
    %11082 = vmatpush.bf16.msra.mxu0 %v10659
    %11083 = vmatpush.bf16.msra.mxu0 %v10655
    %11084 = vmatpush.bf16.msra.mxu0 %v10651
    %11085 = vmatpush.bf16.msra.mxu0 %v10647
    %11086 = vmatpush.bf16.msra.mxu0 %v10643
    %11087 = vmatpush.bf16.msra.mxu0 %v10639
    %11088 = vmatpush.bf16.msra.mxu0 %v10635
    %11089 = vmatpush.bf16.msra.mxu0 %v10631
    %11090 = vmatmul.bf16.gmra.mxu0 %v10076
    %v11091 = vpop.f32.mrf.mxu0
    %v11092 = vadd.f32 %v10239, %v11091
    %v11093 = vpop.f32.mrf.mxu0
    %v11094 = vadd.f32 %v10239, %v11093
    %11095 = vmatmul.bf16.gmra.mxu0 %v10080
    %v11096 = vpop.f32.mrf.mxu0
    %v11097 = vadd.f32 %v10239, %v11096
    %v11098 = vpop.f32.mrf.mxu0
    %v11099 = vadd.f32 %v10239, %v11098
    %11100 = vmatmul.bf16.gmra.mxu0 %v10084
    %v11101 = vpop.f32.mrf.mxu0
    %v11102 = vadd.f32 %v10239, %v11101
    %v11103 = vpop.f32.mrf.mxu0
    %v11104 = vadd.f32 %v10239, %v11103
    %11105 = vmatmul.bf16.gmra.mxu0 %v10088
    %v11106 = vpop.f32.mrf.mxu0
    %v11107 = vadd.f32 %v10239, %v11106
    %v11108 = vpop.f32.mrf.mxu0
    %v11109 = vadd.f32 %v10239, %v11108
    %11110 = vmatmul.bf16.gmra.mxu0 %v10092
    %v11111 = vpop.f32.mrf.mxu0
    %v11112 = vadd.f32 %v10239, %v11111
    %v11113 = vpop.f32.mrf.mxu0
    %v11114 = vadd.f32 %v10239, %v11113
    %11115 = vmatmul.bf16.gmra.mxu0 %v10096
    %v11116 = vpop.f32.mrf.mxu0
    %v11117 = vadd.f32 %v10239, %v11116
    %v11118 = vpop.f32.mrf.mxu0
    %v11119 = vadd.f32 %v10239, %v11118
    %11120 = vmatmul.bf16.gmra.mxu0 %v10100
    %v11121 = vpop.f32.mrf.mxu0
    %v11122 = vadd.f32 %v10239, %v11121
    %v11123 = vpop.f32.mrf.mxu0
    %v11124 = vadd.f32 %v10239, %v11123
    %11125 = vmatmul.bf16.gmra.mxu0 %v10104
    %v11126 = vpop.f32.mrf.mxu0
    %v11127 = vadd.f32 %v10239, %v11126
    %v11128 = vpop.f32.mrf.mxu0
    %v11129 = vadd.f32 %v10239, %v11128
    %11130 = vdwg.mxu0
    %11131 = vmatpush.bf16.msra.mxu0 %v10691
    %11132 = vmatpush.bf16.msra.mxu0 %v10687
    %11133 = vmatpush.bf16.msra.mxu0 %v10683
    %11134 = vmatpush.bf16.msra.mxu0 %v10679
    %11135 = vmatpush.bf16.msra.mxu0 %v10675
    %11136 = vmatpush.bf16.msra.mxu0 %v10671
    %11137 = vmatpush.bf16.msra.mxu0 %v10667
    %11138 = vmatpush.bf16.msra.mxu0 %v10663
    %11139 = vmatmul.bf16.gmra.mxu0 %v10077
    %v11140 = vpop.f32.mrf.mxu0
    %v11141 = vadd.f32 %v11092, %v11140
    %v11142 = vpop.f32.mrf.mxu0
    %v11143 = vadd.f32 %v11094, %v11142
    %11144 = vmatmul.bf16.gmra.mxu0 %v10081
    %v11145 = vpop.f32.mrf.mxu0
    %v11146 = vadd.f32 %v11097, %v11145
    %v11147 = vpop.f32.mrf.mxu0
    %v11148 = vadd.f32 %v11099, %v11147
    %11149 = vmatmul.bf16.gmra.mxu0 %v10085
    %v11150 = vpop.f32.mrf.mxu0
    %v11151 = vadd.f32 %v11102, %v11150
    %v11152 = vpop.f32.mrf.mxu0
    %v11153 = vadd.f32 %v11104, %v11152
    %11154 = vmatmul.bf16.gmra.mxu0 %v10089
    %v11155 = vpop.f32.mrf.mxu0
    %v11156 = vadd.f32 %v11107, %v11155
    %v11157 = vpop.f32.mrf.mxu0
    %v11158 = vadd.f32 %v11109, %v11157
    %11159 = vmatmul.bf16.gmra.mxu0 %v10093
    %v11160 = vpop.f32.mrf.mxu0
    %v11161 = vadd.f32 %v11112, %v11160
    %v11162 = vpop.f32.mrf.mxu0
    %v11163 = vadd.f32 %v11114, %v11162
    %11164 = vmatmul.bf16.gmra.mxu0 %v10097
    %v11165 = vpop.f32.mrf.mxu0
    %v11166 = vadd.f32 %v11117, %v11165
    %v11167 = vpop.f32.mrf.mxu0
    %v11168 = vadd.f32 %v11119, %v11167
    %11169 = vmatmul.bf16.gmra.mxu0 %v10101
    %v11170 = vpop.f32.mrf.mxu0
    %v11171 = vadd.f32 %v11122, %v11170
    %v11172 = vpop.f32.mrf.mxu0
    %v11173 = vadd.f32 %v11124, %v11172
    %11174 = vmatmul.bf16.gmra.mxu0 %v10105
    %v11175 = vpop.f32.mrf.mxu0
    %v11176 = vadd.f32 %v11127, %v11175
    %v11177 = vpop.f32.mrf.mxu0
    %v11178 = vadd.f32 %v11129, %v11177
    %11179 = vdwg.mxu0
    %11180 = vmatpush.bf16.msra.mxu0 %v10723
    %11181 = vmatpush.bf16.msra.mxu0 %v10719
    %11182 = vmatpush.bf16.msra.mxu0 %v10715
    %11183 = vmatpush.bf16.msra.mxu0 %v10711
    %11184 = vmatpush.bf16.msra.mxu0 %v10707
    %11185 = vmatpush.bf16.msra.mxu0 %v10703
    %11186 = vmatpush.bf16.msra.mxu0 %v10699
    %11187 = vmatpush.bf16.msra.mxu0 %v10695
    %11188 = vmatmul.bf16.gmra.mxu0 %v10078
    %v11189 = vpop.f32.mrf.mxu0
    %v11190 = vadd.f32 %v11141, %v11189
    %v11191 = vpop.f32.mrf.mxu0
    %v11192 = vadd.f32 %v11143, %v11191
    %11193 = vmatmul.bf16.gmra.mxu0 %v10082
    %v11194 = vpop.f32.mrf.mxu0
    %v11195 = vadd.f32 %v11146, %v11194
    %v11196 = vpop.f32.mrf.mxu0
    %v11197 = vadd.f32 %v11148, %v11196
    %11198 = vmatmul.bf16.gmra.mxu0 %v10086
    %v11199 = vpop.f32.mrf.mxu0
    %v11200 = vadd.f32 %v11151, %v11199
    %v11201 = vpop.f32.mrf.mxu0
    %v11202 = vadd.f32 %v11153, %v11201
    %11203 = vmatmul.bf16.gmra.mxu0 %v10090
    %v11204 = vpop.f32.mrf.mxu0
    %v11205 = vadd.f32 %v11156, %v11204
    %v11206 = vpop.f32.mrf.mxu0
    %v11207 = vadd.f32 %v11158, %v11206
    %11208 = vmatmul.bf16.gmra.mxu0 %v10094
    %v11209 = vpop.f32.mrf.mxu0
    %v11210 = vadd.f32 %v11161, %v11209
    %v11211 = vpop.f32.mrf.mxu0
    %v11212 = vadd.f32 %v11163, %v11211
    %11213 = vmatmul.bf16.gmra.mxu0 %v10098
    %v11214 = vpop.f32.mrf.mxu0
    %v11215 = vadd.f32 %v11166, %v11214
    %v11216 = vpop.f32.mrf.mxu0
    %v11217 = vadd.f32 %v11168, %v11216
    %11218 = vmatmul.bf16.gmra.mxu0 %v10102
    %v11219 = vpop.f32.mrf.mxu0
    %v11220 = vadd.f32 %v11171, %v11219
    %v11221 = vpop.f32.mrf.mxu0
    %v11222 = vadd.f32 %v11173, %v11221
    %11223 = vmatmul.bf16.gmra.mxu0 %v10106
    %v11224 = vpop.f32.mrf.mxu0
    %v11225 = vadd.f32 %v11176, %v11224
    %v11226 = vpop.f32.mrf.mxu0
    %v11227 = vadd.f32 %v11178, %v11226
    %11228 = vdwg.mxu0
    %11229 = vmatpush.bf16.msra.mxu0 %v10755
    %11230 = vmatpush.bf16.msra.mxu0 %v10751
    %11231 = vmatpush.bf16.msra.mxu0 %v10747
    %11232 = vmatpush.bf16.msra.mxu0 %v10743
    %11233 = vmatpush.bf16.msra.mxu0 %v10739
    %11234 = vmatpush.bf16.msra.mxu0 %v10735
    %11235 = vmatpush.bf16.msra.mxu0 %v10731
    %11236 = vmatpush.bf16.msra.mxu0 %v10727
    %11237 = vmatmul.bf16.gmra.mxu0 %v10079
    %v11238 = vpop.f32.mrf.mxu0
    %v11239 = vadd.f32 %v11190, %v11238
    %v11240 = vpop.f32.mrf.mxu0
    %v11241 = vadd.f32 %v11192, %v11240
    %11242 = vmatmul.bf16.gmra.mxu0 %v10083
    %v11243 = vpop.f32.mrf.mxu0
    %v11244 = vadd.f32 %v11195, %v11243
    %v11245 = vpop.f32.mrf.mxu0
    %v11246 = vadd.f32 %v11197, %v11245
    %11247 = vmatmul.bf16.gmra.mxu0 %v10087
    %v11248 = vpop.f32.mrf.mxu0
    %v11249 = vadd.f32 %v11200, %v11248
    %v11250 = vpop.f32.mrf.mxu0
    %v11251 = vadd.f32 %v11202, %v11250
    %11252 = vmatmul.bf16.gmra.mxu0 %v10091
    %v11253 = vpop.f32.mrf.mxu0
    %v11254 = vadd.f32 %v11205, %v11253
    %v11255 = vpop.f32.mrf.mxu0
    %v11256 = vadd.f32 %v11207, %v11255
    %11257 = vmatmul.bf16.gmra.mxu0 %v10095
    %v11258 = vpop.f32.mrf.mxu0
    %v11259 = vadd.f32 %v11210, %v11258
    %v11260 = vpop.f32.mrf.mxu0
    %v11261 = vadd.f32 %v11212, %v11260
    %11262 = vmatmul.bf16.gmra.mxu0 %v10099
    %v11263 = vpop.f32.mrf.mxu0
    %v11264 = vadd.f32 %v11215, %v11263
    %v11265 = vpop.f32.mrf.mxu0
    %v11266 = vadd.f32 %v11217, %v11265
    %11267 = vmatmul.bf16.gmra.mxu0 %v10103
    %v11268 = vpop.f32.mrf.mxu0
    %v11269 = vadd.f32 %v11220, %v11268
    %v11270 = vpop.f32.mrf.mxu0
    %v11271 = vadd.f32 %v11222, %v11270
    %11272 = vmatmul.bf16.gmra.mxu0 %v10107
    %v11273 = vpop.f32.mrf.mxu0
    %v11274 = vadd.f32 %v11225, %v11273
    %v11275 = vpop.f32.mrf.mxu0
    %v11276 = vadd.f32 %v11227, %v11275
    %11277 = vdwg.mxu0
    %11278 = vmatpush.bf16.msra.mxu0 %v10660
    %11279 = vmatpush.bf16.msra.mxu0 %v10656
    %11280 = vmatpush.bf16.msra.mxu0 %v10652
    %11281 = vmatpush.bf16.msra.mxu0 %v10648
    %11282 = vmatpush.bf16.msra.mxu0 %v10644
    %11283 = vmatpush.bf16.msra.mxu0 %v10640
    %11284 = vmatpush.bf16.msra.mxu0 %v10636
    %11285 = vmatpush.bf16.msra.mxu0 %v10632
    %11286 = vmatmul.bf16.gmra.mxu0 %v10076
    %v11287 = vpop.f32.mrf.mxu0
    %v11288 = vadd.f32 %v10240, %v11287
    %v11289 = vpop.f32.mrf.mxu0
    %v11290 = vadd.f32 %v10240, %v11289
    %11291 = vmatmul.bf16.gmra.mxu0 %v10080
    %v11292 = vpop.f32.mrf.mxu0
    %v11293 = vadd.f32 %v10240, %v11292
    %v11294 = vpop.f32.mrf.mxu0
    %v11295 = vadd.f32 %v10240, %v11294
    %11296 = vmatmul.bf16.gmra.mxu0 %v10084
    %v11297 = vpop.f32.mrf.mxu0
    %v11298 = vadd.f32 %v10240, %v11297
    %v11299 = vpop.f32.mrf.mxu0
    %v11300 = vadd.f32 %v10240, %v11299
    %11301 = vmatmul.bf16.gmra.mxu0 %v10088
    %v11302 = vpop.f32.mrf.mxu0
    %v11303 = vadd.f32 %v10240, %v11302
    %v11304 = vpop.f32.mrf.mxu0
    %v11305 = vadd.f32 %v10240, %v11304
    %11306 = vmatmul.bf16.gmra.mxu0 %v10092
    %v11307 = vpop.f32.mrf.mxu0
    %v11308 = vadd.f32 %v10240, %v11307
    %v11309 = vpop.f32.mrf.mxu0
    %v11310 = vadd.f32 %v10240, %v11309
    %11311 = vmatmul.bf16.gmra.mxu0 %v10096
    %v11312 = vpop.f32.mrf.mxu0
    %v11313 = vadd.f32 %v10240, %v11312
    %v11314 = vpop.f32.mrf.mxu0
    %v11315 = vadd.f32 %v10240, %v11314
    %11316 = vmatmul.bf16.gmra.mxu0 %v10100
    %v11317 = vpop.f32.mrf.mxu0
    %v11318 = vadd.f32 %v10240, %v11317
    %v11319 = vpop.f32.mrf.mxu0
    %v11320 = vadd.f32 %v10240, %v11319
    %11321 = vmatmul.bf16.gmra.mxu0 %v10104
    %v11322 = vpop.f32.mrf.mxu0
    %v11323 = vadd.f32 %v10240, %v11322
    %v11324 = vpop.f32.mrf.mxu0
    %v11325 = vadd.f32 %v10240, %v11324
    %11326 = vdwg.mxu0
    %11327 = vmatpush.bf16.msra.mxu0 %v10692
    %11328 = vmatpush.bf16.msra.mxu0 %v10688
    %11329 = vmatpush.bf16.msra.mxu0 %v10684
    %11330 = vmatpush.bf16.msra.mxu0 %v10680
    %11331 = vmatpush.bf16.msra.mxu0 %v10676
    %11332 = vmatpush.bf16.msra.mxu0 %v10672
    %11333 = vmatpush.bf16.msra.mxu0 %v10668
    %11334 = vmatpush.bf16.msra.mxu0 %v10664
    %11335 = vmatmul.bf16.gmra.mxu0 %v10077
    %v11336 = vpop.f32.mrf.mxu0
    %v11337 = vadd.f32 %v11288, %v11336
    %v11338 = vpop.f32.mrf.mxu0
    %v11339 = vadd.f32 %v11290, %v11338
    %11340 = vmatmul.bf16.gmra.mxu0 %v10081
    %v11341 = vpop.f32.mrf.mxu0
    %v11342 = vadd.f32 %v11293, %v11341
    %v11343 = vpop.f32.mrf.mxu0
    %v11344 = vadd.f32 %v11295, %v11343
    %11345 = vmatmul.bf16.gmra.mxu0 %v10085
    %v11346 = vpop.f32.mrf.mxu0
    %v11347 = vadd.f32 %v11298, %v11346
    %v11348 = vpop.f32.mrf.mxu0
    %v11349 = vadd.f32 %v11300, %v11348
    %11350 = vmatmul.bf16.gmra.mxu0 %v10089
    %v11351 = vpop.f32.mrf.mxu0
    %v11352 = vadd.f32 %v11303, %v11351
    %v11353 = vpop.f32.mrf.mxu0
    %v11354 = vadd.f32 %v11305, %v11353
    %11355 = vmatmul.bf16.gmra.mxu0 %v10093
    %v11356 = vpop.f32.mrf.mxu0
    %v11357 = vadd.f32 %v11308, %v11356
    %v11358 = vpop.f32.mrf.mxu0
    %v11359 = vadd.f32 %v11310, %v11358
    %11360 = vmatmul.bf16.gmra.mxu0 %v10097
    %v11361 = vpop.f32.mrf.mxu0
    %v11362 = vadd.f32 %v11313, %v11361
    %v11363 = vpop.f32.mrf.mxu0
    %v11364 = vadd.f32 %v11315, %v11363
    %11365 = vmatmul.bf16.gmra.mxu0 %v10101
    %v11366 = vpop.f32.mrf.mxu0
    %v11367 = vadd.f32 %v11318, %v11366
    %v11368 = vpop.f32.mrf.mxu0
    %v11369 = vadd.f32 %v11320, %v11368
    %11370 = vmatmul.bf16.gmra.mxu0 %v10105
    %v11371 = vpop.f32.mrf.mxu0
    %v11372 = vadd.f32 %v11323, %v11371
    %v11373 = vpop.f32.mrf.mxu0
    %v11374 = vadd.f32 %v11325, %v11373
    %11375 = vdwg.mxu0
    %11376 = vmatpush.bf16.msra.mxu0 %v10724
    %11377 = vmatpush.bf16.msra.mxu0 %v10720
    %11378 = vmatpush.bf16.msra.mxu0 %v10716
    %11379 = vmatpush.bf16.msra.mxu0 %v10712
    %11380 = vmatpush.bf16.msra.mxu0 %v10708
    %11381 = vmatpush.bf16.msra.mxu0 %v10704
    %11382 = vmatpush.bf16.msra.mxu0 %v10700
    %11383 = vmatpush.bf16.msra.mxu0 %v10696
    %11384 = vmatmul.bf16.gmra.mxu0 %v10078
    %v11385 = vpop.f32.mrf.mxu0
    %v11386 = vadd.f32 %v11337, %v11385
    %v11387 = vpop.f32.mrf.mxu0
    %v11388 = vadd.f32 %v11339, %v11387
    %11389 = vmatmul.bf16.gmra.mxu0 %v10082
    %v11390 = vpop.f32.mrf.mxu0
    %v11391 = vadd.f32 %v11342, %v11390
    %v11392 = vpop.f32.mrf.mxu0
    %v11393 = vadd.f32 %v11344, %v11392
    %11394 = vmatmul.bf16.gmra.mxu0 %v10086
    %v11395 = vpop.f32.mrf.mxu0
    %v11396 = vadd.f32 %v11347, %v11395
    %v11397 = vpop.f32.mrf.mxu0
    %v11398 = vadd.f32 %v11349, %v11397
    %11399 = vmatmul.bf16.gmra.mxu0 %v10090
    %v11400 = vpop.f32.mrf.mxu0
    %v11401 = vadd.f32 %v11352, %v11400
    %v11402 = vpop.f32.mrf.mxu0
    %v11403 = vadd.f32 %v11354, %v11402
    %11404 = vmatmul.bf16.gmra.mxu0 %v10094
    %v11405 = vpop.f32.mrf.mxu0
    %v11406 = vadd.f32 %v11357, %v11405
    %v11407 = vpop.f32.mrf.mxu0
    %v11408 = vadd.f32 %v11359, %v11407
    %11409 = vmatmul.bf16.gmra.mxu0 %v10098
    %v11410 = vpop.f32.mrf.mxu0
    %v11411 = vadd.f32 %v11362, %v11410
    %v11412 = vpop.f32.mrf.mxu0
    %v11413 = vadd.f32 %v11364, %v11412
    %11414 = vmatmul.bf16.gmra.mxu0 %v10102
    %v11415 = vpop.f32.mrf.mxu0
    %v11416 = vadd.f32 %v11367, %v11415
    %v11417 = vpop.f32.mrf.mxu0
    %v11418 = vadd.f32 %v11369, %v11417
    %11419 = vmatmul.bf16.gmra.mxu0 %v10106
    %v11420 = vpop.f32.mrf.mxu0
    %v11421 = vadd.f32 %v11372, %v11420
    %v11422 = vpop.f32.mrf.mxu0
    %v11423 = vadd.f32 %v11374, %v11422
    %11424 = vdwg.mxu0
    %11425 = vmatpush.bf16.msra.mxu0 %v10756
    %11426 = vmatpush.bf16.msra.mxu0 %v10752
    %11427 = vmatpush.bf16.msra.mxu0 %v10748
    %11428 = vmatpush.bf16.msra.mxu0 %v10744
    %11429 = vmatpush.bf16.msra.mxu0 %v10740
    %11430 = vmatpush.bf16.msra.mxu0 %v10736
    %11431 = vmatpush.bf16.msra.mxu0 %v10732
    %11432 = vmatpush.bf16.msra.mxu0 %v10728
    %11433 = vmatmul.bf16.gmra.mxu0 %v10079
    %v11434 = vpop.f32.mrf.mxu0
    %v11435 = vadd.f32 %v11386, %v11434
    %v11436 = vpop.f32.mrf.mxu0
    %v11437 = vadd.f32 %v11388, %v11436
    %11438 = vmatmul.bf16.gmra.mxu0 %v10083
    %v11439 = vpop.f32.mrf.mxu0
    %v11440 = vadd.f32 %v11391, %v11439
    %v11441 = vpop.f32.mrf.mxu0
    %v11442 = vadd.f32 %v11393, %v11441
    %11443 = vmatmul.bf16.gmra.mxu0 %v10087
    %v11444 = vpop.f32.mrf.mxu0
    %v11445 = vadd.f32 %v11396, %v11444
    %v11446 = vpop.f32.mrf.mxu0
    %v11447 = vadd.f32 %v11398, %v11446
    %11448 = vmatmul.bf16.gmra.mxu0 %v10091
    %v11449 = vpop.f32.mrf.mxu0
    %v11450 = vadd.f32 %v11401, %v11449
    %v11451 = vpop.f32.mrf.mxu0
    %v11452 = vadd.f32 %v11403, %v11451
    %11453 = vmatmul.bf16.gmra.mxu0 %v10095
    %v11454 = vpop.f32.mrf.mxu0
    %v11455 = vadd.f32 %v11406, %v11454
    %v11456 = vpop.f32.mrf.mxu0
    %v11457 = vadd.f32 %v11408, %v11456
    %11458 = vmatmul.bf16.gmra.mxu0 %v10099
    %v11459 = vpop.f32.mrf.mxu0
    %v11460 = vadd.f32 %v11411, %v11459
    %v11461 = vpop.f32.mrf.mxu0
    %v11462 = vadd.f32 %v11413, %v11461
    %11463 = vmatmul.bf16.gmra.mxu0 %v10103
    %v11464 = vpop.f32.mrf.mxu0
    %v11465 = vadd.f32 %v11416, %v11464
    %v11466 = vpop.f32.mrf.mxu0
    %v11467 = vadd.f32 %v11418, %v11466
    %11468 = vmatmul.bf16.gmra.mxu0 %v10107
    %v11469 = vpop.f32.mrf.mxu0
    %v11470 = vadd.f32 %v11421, %v11469
    %v11471 = vpop.f32.mrf.mxu0
    %v11472 = vadd.f32 %v11423, %v11471
    %11473 = vdwg.mxu0
    %11474 = vmatpush.bf16.msra.mxu0 %v10661
    %11475 = vmatpush.bf16.msra.mxu0 %v10657
    %11476 = vmatpush.bf16.msra.mxu0 %v10653
    %11477 = vmatpush.bf16.msra.mxu0 %v10649
    %11478 = vmatpush.bf16.msra.mxu0 %v10645
    %11479 = vmatpush.bf16.msra.mxu0 %v10641
    %11480 = vmatpush.bf16.msra.mxu0 %v10637
    %11481 = vmatpush.bf16.msra.mxu0 %v10633
    %11482 = vmatmul.bf16.gmra.mxu0 %v10076
    %v11483 = vpop.f32.mrf.mxu0
    %v11484 = vadd.f32 %v10241, %v11483
    %v11485 = vpop.f32.mrf.mxu0
    %v11486 = vadd.f32 %v10241, %v11485
    %11487 = vmatmul.bf16.gmra.mxu0 %v10080
    %v11488 = vpop.f32.mrf.mxu0
    %v11489 = vadd.f32 %v10241, %v11488
    %v11490 = vpop.f32.mrf.mxu0
    %v11491 = vadd.f32 %v10241, %v11490
    %11492 = vmatmul.bf16.gmra.mxu0 %v10084
    %v11493 = vpop.f32.mrf.mxu0
    %v11494 = vadd.f32 %v10241, %v11493
    %v11495 = vpop.f32.mrf.mxu0
    %v11496 = vadd.f32 %v10241, %v11495
    %11497 = vmatmul.bf16.gmra.mxu0 %v10088
    %v11498 = vpop.f32.mrf.mxu0
    %v11499 = vadd.f32 %v10241, %v11498
    %v11500 = vpop.f32.mrf.mxu0
    %v11501 = vadd.f32 %v10241, %v11500
    %11502 = vmatmul.bf16.gmra.mxu0 %v10092
    %v11503 = vpop.f32.mrf.mxu0
    %v11504 = vadd.f32 %v10241, %v11503
    %v11505 = vpop.f32.mrf.mxu0
    %v11506 = vadd.f32 %v10241, %v11505
    %11507 = vmatmul.bf16.gmra.mxu0 %v10096
    %v11508 = vpop.f32.mrf.mxu0
    %v11509 = vadd.f32 %v10241, %v11508
    %v11510 = vpop.f32.mrf.mxu0
    %v11511 = vadd.f32 %v10241, %v11510
    %11512 = vmatmul.bf16.gmra.mxu0 %v10100
    %v11513 = vpop.f32.mrf.mxu0
    %v11514 = vadd.f32 %v10241, %v11513
    %v11515 = vpop.f32.mrf.mxu0
    %v11516 = vadd.f32 %v10241, %v11515
    %11517 = vmatmul.bf16.gmra.mxu0 %v10104
    %v11518 = vpop.f32.mrf.mxu0
    %v11519 = vadd.f32 %v10241, %v11518
    %v11520 = vpop.f32.mrf.mxu0
    %v11521 = vadd.f32 %v10241, %v11520
    %11522 = vdwg.mxu0
    %11523 = vmatpush.bf16.msra.mxu0 %v10693
    %11524 = vmatpush.bf16.msra.mxu0 %v10689
    %11525 = vmatpush.bf16.msra.mxu0 %v10685
    %11526 = vmatpush.bf16.msra.mxu0 %v10681
    %11527 = vmatpush.bf16.msra.mxu0 %v10677
    %11528 = vmatpush.bf16.msra.mxu0 %v10673
    %11529 = vmatpush.bf16.msra.mxu0 %v10669
    %11530 = vmatpush.bf16.msra.mxu0 %v10665
    %11531 = vmatmul.bf16.gmra.mxu0 %v10077
    %v11532 = vpop.f32.mrf.mxu0
    %v11533 = vadd.f32 %v11484, %v11532
    %v11534 = vpop.f32.mrf.mxu0
    %v11535 = vadd.f32 %v11486, %v11534
    %11536 = vmatmul.bf16.gmra.mxu0 %v10081
    %v11537 = vpop.f32.mrf.mxu0
    %v11538 = vadd.f32 %v11489, %v11537
    %v11539 = vpop.f32.mrf.mxu0
    %v11540 = vadd.f32 %v11491, %v11539
    %11541 = vmatmul.bf16.gmra.mxu0 %v10085
    %v11542 = vpop.f32.mrf.mxu0
    %v11543 = vadd.f32 %v11494, %v11542
    %v11544 = vpop.f32.mrf.mxu0
    %v11545 = vadd.f32 %v11496, %v11544
    %11546 = vmatmul.bf16.gmra.mxu0 %v10089
    %v11547 = vpop.f32.mrf.mxu0
    %v11548 = vadd.f32 %v11499, %v11547
    %v11549 = vpop.f32.mrf.mxu0
    %v11550 = vadd.f32 %v11501, %v11549
    %11551 = vmatmul.bf16.gmra.mxu0 %v10093
    %v11552 = vpop.f32.mrf.mxu0
    %v11553 = vadd.f32 %v11504, %v11552
    %v11554 = vpop.f32.mrf.mxu0
    %v11555 = vadd.f32 %v11506, %v11554
    %11556 = vmatmul.bf16.gmra.mxu0 %v10097
    %v11557 = vpop.f32.mrf.mxu0
    %v11558 = vadd.f32 %v11509, %v11557
    %v11559 = vpop.f32.mrf.mxu0
    %v11560 = vadd.f32 %v11511, %v11559
    %11561 = vmatmul.bf16.gmra.mxu0 %v10101
    %v11562 = vpop.f32.mrf.mxu0
    %v11563 = vadd.f32 %v11514, %v11562
    %v11564 = vpop.f32.mrf.mxu0
    %v11565 = vadd.f32 %v11516, %v11564
    %11566 = vmatmul.bf16.gmra.mxu0 %v10105
    %v11567 = vpop.f32.mrf.mxu0
    %v11568 = vadd.f32 %v11519, %v11567
    %v11569 = vpop.f32.mrf.mxu0
    %v11570 = vadd.f32 %v11521, %v11569
    %11571 = vdwg.mxu0
    %11572 = vmatpush.bf16.msra.mxu0 %v10725
    %11573 = vmatpush.bf16.msra.mxu0 %v10721
    %11574 = vmatpush.bf16.msra.mxu0 %v10717
    %11575 = vmatpush.bf16.msra.mxu0 %v10713
    %11576 = vmatpush.bf16.msra.mxu0 %v10709
    %11577 = vmatpush.bf16.msra.mxu0 %v10705
    %11578 = vmatpush.bf16.msra.mxu0 %v10701
    %11579 = vmatpush.bf16.msra.mxu0 %v10697
    %11580 = vmatmul.bf16.gmra.mxu0 %v10078
    %v11581 = vpop.f32.mrf.mxu0
    %v11582 = vadd.f32 %v11533, %v11581
    %v11583 = vpop.f32.mrf.mxu0
    %v11584 = vadd.f32 %v11535, %v11583
    %11585 = vmatmul.bf16.gmra.mxu0 %v10082
    %v11586 = vpop.f32.mrf.mxu0
    %v11587 = vadd.f32 %v11538, %v11586
    %v11588 = vpop.f32.mrf.mxu0
    %v11589 = vadd.f32 %v11540, %v11588
    %11590 = vmatmul.bf16.gmra.mxu0 %v10086
    %v11591 = vpop.f32.mrf.mxu0
    %v11592 = vadd.f32 %v11543, %v11591
    %v11593 = vpop.f32.mrf.mxu0
    %v11594 = vadd.f32 %v11545, %v11593
    %11595 = vmatmul.bf16.gmra.mxu0 %v10090
    %v11596 = vpop.f32.mrf.mxu0
    %v11597 = vadd.f32 %v11548, %v11596
    %v11598 = vpop.f32.mrf.mxu0
    %v11599 = vadd.f32 %v11550, %v11598
    %11600 = vmatmul.bf16.gmra.mxu0 %v10094
    %v11601 = vpop.f32.mrf.mxu0
    %v11602 = vadd.f32 %v11553, %v11601
    %v11603 = vpop.f32.mrf.mxu0
    %v11604 = vadd.f32 %v11555, %v11603
    %11605 = vmatmul.bf16.gmra.mxu0 %v10098
    %v11606 = vpop.f32.mrf.mxu0
    %v11607 = vadd.f32 %v11558, %v11606
    %v11608 = vpop.f32.mrf.mxu0
    %v11609 = vadd.f32 %v11560, %v11608
    %11610 = vmatmul.bf16.gmra.mxu0 %v10102
    %v11611 = vpop.f32.mrf.mxu0
    %v11612 = vadd.f32 %v11563, %v11611
    %v11613 = vpop.f32.mrf.mxu0
    %v11614 = vadd.f32 %v11565, %v11613
    %11615 = vmatmul.bf16.gmra.mxu0 %v10106
    %v11616 = vpop.f32.mrf.mxu0
    %v11617 = vadd.f32 %v11568, %v11616
    %v11618 = vpop.f32.mrf.mxu0
    %v11619 = vadd.f32 %v11570, %v11618
    %11620 = vdwg.mxu0
    %11621 = vmatpush.bf16.msra.mxu0 %v10757
    %11622 = vmatpush.bf16.msra.mxu0 %v10753
    %11623 = vmatpush.bf16.msra.mxu0 %v10749
    %11624 = vmatpush.bf16.msra.mxu0 %v10745
    %11625 = vmatpush.bf16.msra.mxu0 %v10741
    %11626 = vmatpush.bf16.msra.mxu0 %v10737
    %11627 = vmatpush.bf16.msra.mxu0 %v10733
    %11628 = vmatpush.bf16.msra.mxu0 %v10729
    %11629 = vmatmul.bf16.gmra.mxu0 %v10079
    %v11630 = vpop.f32.mrf.mxu0
    %v11631 = vadd.f32 %v11582, %v11630
    %v11632 = vpop.f32.mrf.mxu0
    %v11633 = vadd.f32 %v11584, %v11632
    %11634 = vmatmul.bf16.gmra.mxu0 %v10083
    %v11635 = vpop.f32.mrf.mxu0
    %v11636 = vadd.f32 %v11587, %v11635
    %v11637 = vpop.f32.mrf.mxu0
    %v11638 = vadd.f32 %v11589, %v11637
    %11639 = vmatmul.bf16.gmra.mxu0 %v10087
    %v11640 = vpop.f32.mrf.mxu0
    %v11641 = vadd.f32 %v11592, %v11640
    %v11642 = vpop.f32.mrf.mxu0
    %v11643 = vadd.f32 %v11594, %v11642
    %11644 = vmatmul.bf16.gmra.mxu0 %v10091
    %v11645 = vpop.f32.mrf.mxu0
    %v11646 = vadd.f32 %v11597, %v11645
    %v11647 = vpop.f32.mrf.mxu0
    %v11648 = vadd.f32 %v11599, %v11647
    %11649 = vmatmul.bf16.gmra.mxu0 %v10095
    %v11650 = vpop.f32.mrf.mxu0
    %v11651 = vadd.f32 %v11602, %v11650
    %v11652 = vpop.f32.mrf.mxu0
    %v11653 = vadd.f32 %v11604, %v11652
    %11654 = vmatmul.bf16.gmra.mxu0 %v10099
    %v11655 = vpop.f32.mrf.mxu0
    %v11656 = vadd.f32 %v11607, %v11655
    %v11657 = vpop.f32.mrf.mxu0
    %v11658 = vadd.f32 %v11609, %v11657
    %11659 = vmatmul.bf16.gmra.mxu0 %v10103
    %v11660 = vpop.f32.mrf.mxu0
    %v11661 = vadd.f32 %v11612, %v11660
    %v11662 = vpop.f32.mrf.mxu0
    %v11663 = vadd.f32 %v11614, %v11662
    %11664 = vmatmul.bf16.gmra.mxu0 %v10107
    %v11665 = vpop.f32.mrf.mxu0
    %v11666 = vadd.f32 %v11617, %v11665
    %v11667 = vpop.f32.mrf.mxu0
    %v11668 = vadd.f32 %v11619, %v11667
    %11669 = vdwg.mxu0
    %v11670 = vmax.f32 %v11043, 0.0
    %v11671 = vmax.f32 %v11239, 0.0
    %v11672 = vmax.f32 %v11435, 0.0
    %v11673 = vmax.f32 %v11631, 0.0
    %v11674 = vmax.f32 %v11045, 0.0
    %v11675 = vmax.f32 %v11241, 0.0
    %v11676 = vmax.f32 %v11437, 0.0
    %v11677 = vmax.f32 %v11633, 0.0
    %v11678 = vmax.f32 %v11048, 0.0
    %v11679 = vmax.f32 %v11244, 0.0
    %v11680 = vmax.f32 %v11440, 0.0
    %v11681 = vmax.f32 %v11636, 0.0
    %v11682 = vmax.f32 %v11050, 0.0
    %v11683 = vmax.f32 %v11246, 0.0
    %v11684 = vmax.f32 %v11442, 0.0
    %v11685 = vmax.f32 %v11638, 0.0
    %v11686 = vmax.f32 %v11053, 0.0
    %v11687 = vmax.f32 %v11249, 0.0
    %v11688 = vmax.f32 %v11445, 0.0
    %v11689 = vmax.f32 %v11641, 0.0
    %v11690 = vmax.f32 %v11055, 0.0
    %v11691 = vmax.f32 %v11251, 0.0
    %v11692 = vmax.f32 %v11447, 0.0
    %v11693 = vmax.f32 %v11643, 0.0
    %v11694 = vmax.f32 %v11058, 0.0
    %v11695 = vmax.f32 %v11254, 0.0
    %v11696 = vmax.f32 %v11450, 0.0
    %v11697 = vmax.f32 %v11646, 0.0
    %v11698 = vmax.f32 %v11060, 0.0
    %v11699 = vmax.f32 %v11256, 0.0
    %v11700 = vmax.f32 %v11452, 0.0
    %v11701 = vmax.f32 %v11648, 0.0
    %v11702 = vmax.f32 %v11063, 0.0
    %v11703 = vmax.f32 %v11259, 0.0
    %v11704 = vmax.f32 %v11455, 0.0
    %v11705 = vmax.f32 %v11651, 0.0
    %v11706 = vmax.f32 %v11065, 0.0
    %v11707 = vmax.f32 %v11261, 0.0
    %v11708 = vmax.f32 %v11457, 0.0
    %v11709 = vmax.f32 %v11653, 0.0
    %v11710 = vmax.f32 %v11068, 0.0
    %v11711 = vmax.f32 %v11264, 0.0
    %v11712 = vmax.f32 %v11460, 0.0
    %v11713 = vmax.f32 %v11656, 0.0
    %v11714 = vmax.f32 %v11070, 0.0
    %v11715 = vmax.f32 %v11266, 0.0
    %v11716 = vmax.f32 %v11462, 0.0
    %v11717 = vmax.f32 %v11658, 0.0
    %v11718 = vmax.f32 %v11073, 0.0
    %v11719 = vmax.f32 %v11269, 0.0
    %v11720 = vmax.f32 %v11465, 0.0
    %v11721 = vmax.f32 %v11661, 0.0
    %v11722 = vmax.f32 %v11075, 0.0
    %v11723 = vmax.f32 %v11271, 0.0
    %v11724 = vmax.f32 %v11467, 0.0
    %v11725 = vmax.f32 %v11663, 0.0
    %v11726 = vmax.f32 %v11078, 0.0
    %v11727 = vmax.f32 %v11274, 0.0
    %v11728 = vmax.f32 %v11470, 0.0
    %v11729 = vmax.f32 %v11666, 0.0
    %v11730 = vmax.f32 %v11080, 0.0
    %v11731 = vmax.f32 %v11276, 0.0
    %v11732 = vmax.f32 %v11472, 0.0
    %v11733 = vmax.f32 %v11668, 0.0
    %v11734 = vpack.c.bf16 %v11674, %v11670
    %v11735 = vpack.c.bf16 %v11675, %v11671
    %v11736 = vpack.c.bf16 %v11676, %v11672
    %v11737 = vpack.c.bf16 %v11677, %v11673
    %v11738 = vpack.c.bf16 %v11682, %v11678
    %v11739 = vpack.c.bf16 %v11683, %v11679
    %v11740 = vpack.c.bf16 %v11684, %v11680
    %v11741 = vpack.c.bf16 %v11685, %v11681
    %v11742 = vpack.c.bf16 %v11690, %v11686
    %v11743 = vpack.c.bf16 %v11691, %v11687
    %v11744 = vpack.c.bf16 %v11692, %v11688
    %v11745 = vpack.c.bf16 %v11693, %v11689
    %v11746 = vpack.c.bf16 %v11698, %v11694
    %v11747 = vpack.c.bf16 %v11699, %v11695
    %v11748 = vpack.c.bf16 %v11700, %v11696
    %v11749 = vpack.c.bf16 %v11701, %v11697
    %v11750 = vpack.c.bf16 %v11706, %v11702
    %v11751 = vpack.c.bf16 %v11707, %v11703
    %v11752 = vpack.c.bf16 %v11708, %v11704
    %v11753 = vpack.c.bf16 %v11709, %v11705
    %v11754 = vpack.c.bf16 %v11714, %v11710
    %v11755 = vpack.c.bf16 %v11715, %v11711
    %v11756 = vpack.c.bf16 %v11716, %v11712
    %v11757 = vpack.c.bf16 %v11717, %v11713
    %v11758 = vpack.c.bf16 %v11722, %v11718
    %v11759 = vpack.c.bf16 %v11723, %v11719
    %v11760 = vpack.c.bf16 %v11724, %v11720
    %v11761 = vpack.c.bf16 %v11725, %v11721
    %v11762 = vpack.c.bf16 %v11730, %v11726
    %v11763 = vpack.c.bf16 %v11731, %v11727
    %v11764 = vpack.c.bf16 %v11732, %v11728
    %v11765 = vpack.c.bf16 %v11733, %v11729
    %v11766 = vld [vmem:[#allocation9] sm:$0xf]
    %v11767 = vld [vmem:[#allocation9 + $0x4] sm:$0xf]
    %v11768 = vld [vmem:[#allocation9 + $0x8] sm:$0xf]
    %v11769 = vld [vmem:[#allocation9 + $0xc] sm:$0xf]
    %v11770 = vld [vmem:[#allocation9 + $0x10] sm:$0xf]
    %v11771 = vld [vmem:[#allocation9 + $0x14] sm:$0xf]
    %v11772 = vld [vmem:[#allocation9 + $0x18] sm:$0xf]
    %v11773 = vld [vmem:[#allocation9 + $0x1c] sm:$0xf]
    %v11774 = vld [vmem:[#allocation9 + $0x20] sm:$0xf]
    %v11775 = vld [vmem:[#allocation9 + $0x24] sm:$0xf]
    %v11776 = vld [vmem:[#allocation9 + $0x28] sm:$0xf]
    %v11777 = vld [vmem:[#allocation9 + $0x2c] sm:$0xf]
    %v11778 = vld [vmem:[#allocation9 + $0x30] sm:$0xf]
    %v11779 = vld [vmem:[#allocation9 + $0x34] sm:$0xf]
    %v11780 = vld [vmem:[#allocation9 + $0x38] sm:$0xf]
    %v11781 = vld [vmem:[#allocation9 + $0x3c] sm:$0xf]
    %v11782 = vld [vmem:[#allocation9 + $0x40] sm:$0xf]
    %v11783 = vld [vmem:[#allocation9 + $0x44] sm:$0xf]
    %v11784 = vld [vmem:[#allocation9 + $0x48] sm:$0xf]
    %v11785 = vld [vmem:[#allocation9 + $0x4c] sm:$0xf]
    %v11786 = vld [vmem:[#allocation9 + $0x50] sm:$0xf]
    %v11787 = vld [vmem:[#allocation9 + $0x54] sm:$0xf]
    %v11788 = vld [vmem:[#allocation9 + $0x58] sm:$0xf]
    %v11789 = vld [vmem:[#allocation9 + $0x5c] sm:$0xf]
    %v11790 = vld [vmem:[#allocation9 + $0x60] sm:$0xf]
    %v11791 = vld [vmem:[#allocation9 + $0x64] sm:$0xf]
    %v11792 = vld [vmem:[#allocation9 + $0x68] sm:$0xf]
    %v11793 = vld [vmem:[#allocation9 + $0x6c] sm:$0xf]
    %v11794 = vld [vmem:[#allocation9 + $0x70] sm:$0xf]
    %v11795 = vld [vmem:[#allocation9 + $0x74] sm:$0xf]
    %v11796 = vld [vmem:[#allocation9 + $0x78] sm:$0xf]
    %v11797 = vld [vmem:[#allocation9 + $0x7c] sm:$0xf]
    %v11798 = vld [vmem:[#allocation9 + $0x80] sm:$0xf]
    %v11799 = vld [vmem:[#allocation9 + $0x84] sm:$0xf]
    %v11800 = vld [vmem:[#allocation9 + $0x88] sm:$0xf]
    %v11801 = vld [vmem:[#allocation9 + $0x8c] sm:$0xf]
    %v11802 = vld [vmem:[#allocation9 + $0x90] sm:$0xf]
    %v11803 = vld [vmem:[#allocation9 + $0x94] sm:$0xf]
    %v11804 = vld [vmem:[#allocation9 + $0x98] sm:$0xf]
    %v11805 = vld [vmem:[#allocation9 + $0x9c] sm:$0xf]
    %v11806 = vld [vmem:[#allocation9 + $0xa0] sm:$0xf]
    %v11807 = vld [vmem:[#allocation9 + $0xa4] sm:$0xf]
    %v11808 = vld [vmem:[#allocation9 + $0xa8] sm:$0xf]
    %v11809 = vld [vmem:[#allocation9 + $0xac] sm:$0xf]
    %v11810 = vld [vmem:[#allocation9 + $0xb0] sm:$0xf]
    %v11811 = vld [vmem:[#allocation9 + $0xb4] sm:$0xf]
    %v11812 = vld [vmem:[#allocation9 + $0xb8] sm:$0xf]
    %v11813 = vld [vmem:[#allocation9 + $0xbc] sm:$0xf]
    %v11814 = vld [vmem:[#allocation9 + $0xc0] sm:$0xf]
    %v11815 = vld [vmem:[#allocation9 + $0xc4] sm:$0xf]
    %v11816 = vld [vmem:[#allocation9 + $0xc8] sm:$0xf]
    %v11817 = vld [vmem:[#allocation9 + $0xcc] sm:$0xf]
    %v11818 = vld [vmem:[#allocation9 + $0xd0] sm:$0xf]
    %v11819 = vld [vmem:[#allocation9 + $0xd4] sm:$0xf]
    %v11820 = vld [vmem:[#allocation9 + $0xd8] sm:$0xf]
    %v11821 = vld [vmem:[#allocation9 + $0xdc] sm:$0xf]
    %v11822 = vld [vmem:[#allocation9 + $0xe0] sm:$0xf]
    %v11823 = vld [vmem:[#allocation9 + $0xe4] sm:$0xf]
    %v11824 = vld [vmem:[#allocation9 + $0xe8] sm:$0xf]
    %v11825 = vld [vmem:[#allocation9 + $0xec] sm:$0xf]
    %v11826 = vld [vmem:[#allocation9 + $0xf0] sm:$0xf]
    %v11827 = vld [vmem:[#allocation9 + $0xf4] sm:$0xf]
    %v11828 = vld [vmem:[#allocation9 + $0xf8] sm:$0xf]
    %v11829 = vld [vmem:[#allocation9 + $0xfc] sm:$0xf]
    %v11830 = vld [vmem:[#allocation10] sm:$0x1]
    %v11832 = vperm.slane %v11830, 0
    %v11898 = vunpack.c.l.b16 %v11766
    %v11899 = vunpack.c.l.b16 %v11767
    %v11900 = vunpack.c.l.b16 %v11768
    %v11901 = vunpack.c.l.b16 %v11769
    %v11902 = vunpack.c.l.b16 %v11770
    %v11903 = vunpack.c.l.b16 %v11771
    %v11904 = vunpack.c.l.b16 %v11772
    %v11905 = vunpack.c.l.b16 %v11773
    %v11906 = vunpack.c.l.b16 %v11774
    %v11907 = vunpack.c.l.b16 %v11775
    %v11908 = vunpack.c.l.b16 %v11776
    %v11909 = vunpack.c.l.b16 %v11777
    %v11910 = vunpack.c.l.b16 %v11778
    %v11911 = vunpack.c.l.b16 %v11779
    %v11912 = vunpack.c.l.b16 %v11780
    %v11913 = vunpack.c.l.b16 %v11781
    %v11914 = vunpack.c.l.b16 %v11782
    %v11915 = vunpack.c.l.b16 %v11783
    %v11916 = vunpack.c.l.b16 %v11784
    %v11917 = vunpack.c.l.b16 %v11785
    %v11918 = vunpack.c.l.b16 %v11786
    %v11919 = vunpack.c.l.b16 %v11787
    %v11920 = vunpack.c.l.b16 %v11788
    %v11921 = vunpack.c.l.b16 %v11789
    %v11922 = vunpack.c.l.b16 %v11790
    %v11923 = vunpack.c.l.b16 %v11791
    %v11924 = vunpack.c.l.b16 %v11792
    %v11925 = vunpack.c.l.b16 %v11793
    %v11926 = vunpack.c.l.b16 %v11794
    %v11927 = vunpack.c.l.b16 %v11795
    %v11928 = vunpack.c.l.b16 %v11796
    %v11929 = vunpack.c.l.b16 %v11797
    %v11930 = vunpack.c.l.b16 %v11798
    %v11931 = vunpack.c.l.b16 %v11799
    %v11932 = vunpack.c.l.b16 %v11800
    %v11933 = vunpack.c.l.b16 %v11801
    %v11934 = vunpack.c.l.b16 %v11802
    %v11935 = vunpack.c.l.b16 %v11803
    %v11936 = vunpack.c.l.b16 %v11804
    %v11937 = vunpack.c.l.b16 %v11805
    %v11938 = vunpack.c.l.b16 %v11806
    %v11939 = vunpack.c.l.b16 %v11807
    %v11940 = vunpack.c.l.b16 %v11808
    %v11941 = vunpack.c.l.b16 %v11809
    %v11942 = vunpack.c.l.b16 %v11810
    %v11943 = vunpack.c.l.b16 %v11811
    %v11944 = vunpack.c.l.b16 %v11812
    %v11945 = vunpack.c.l.b16 %v11813
    %v11946 = vunpack.c.l.b16 %v11814
    %v11947 = vunpack.c.l.b16 %v11815
    %v11948 = vunpack.c.l.b16 %v11816
    %v11949 = vunpack.c.l.b16 %v11817
    %v11950 = vunpack.c.l.b16 %v11818
    %v11951 = vunpack.c.l.b16 %v11819
    %v11952 = vunpack.c.l.b16 %v11820
    %v11953 = vunpack.c.l.b16 %v11821
    %v11954 = vunpack.c.l.b16 %v11822
    %v11955 = vunpack.c.l.b16 %v11823
    %v11956 = vunpack.c.l.b16 %v11824
    %v11957 = vunpack.c.l.b16 %v11825
    %v11958 = vunpack.c.l.b16 %v11826
    %v11959 = vunpack.c.l.b16 %v11827
    %v11960 = vunpack.c.l.b16 %v11828
    %v11961 = vunpack.c.l.b16 %v11829
    %v11962 = vpack.c.b16 %v11899, %v11898
    %v11963 = vpack.c.b16 %v11901, %v11900
    %v11964 = vpack.c.b16 %v11903, %v11902
    %v11965 = vpack.c.b16 %v11905, %v11904
    %v11966 = vpack.c.b16 %v11907, %v11906
    %v11967 = vpack.c.b16 %v11909, %v11908
    %v11968 = vpack.c.b16 %v11911, %v11910
    %v11969 = vpack.c.b16 %v11913, %v11912
    %v11970 = vpack.c.b16 %v11915, %v11914
    %v11971 = vpack.c.b16 %v11917, %v11916
    %v11972 = vpack.c.b16 %v11919, %v11918
    %v11973 = vpack.c.b16 %v11921, %v11920
    %v11974 = vpack.c.b16 %v11923, %v11922
    %v11975 = vpack.c.b16 %v11925, %v11924
    %v11976 = vpack.c.b16 %v11927, %v11926
    %v11977 = vpack.c.b16 %v11929, %v11928
    %v11978 = vpack.c.b16 %v11931, %v11930
    %v11979 = vpack.c.b16 %v11933, %v11932
    %v11980 = vpack.c.b16 %v11935, %v11934
    %v11981 = vpack.c.b16 %v11937, %v11936
    %v11982 = vpack.c.b16 %v11939, %v11938
    %v11983 = vpack.c.b16 %v11941, %v11940
    %v11984 = vpack.c.b16 %v11943, %v11942
    %v11985 = vpack.c.b16 %v11945, %v11944
    %v11986 = vpack.c.b16 %v11947, %v11946
    %v11987 = vpack.c.b16 %v11949, %v11948
    %v11988 = vpack.c.b16 %v11951, %v11950
    %v11989 = vpack.c.b16 %v11953, %v11952
    %v11990 = vpack.c.b16 %v11955, %v11954
    %v11991 = vpack.c.b16 %v11957, %v11956
    %v11992 = vpack.c.b16 %v11959, %v11958
    %v11993 = vpack.c.b16 %v11961, %v11960
    %12026 = vmatpush.bf16.msra.mxu0 %v11969
    %12027 = vmatpush.bf16.msra.mxu0 %v11968
    %12028 = vmatpush.bf16.msra.mxu0 %v11967
    %12029 = vmatpush.bf16.msra.mxu0 %v11966
    %12030 = vmatpush.bf16.msra.mxu0 %v11965
    %12031 = vmatpush.bf16.msra.mxu0 %v11964
    %12032 = vmatpush.bf16.msra.mxu0 %v11963
    %12033 = vmatpush.bf16.msra.mxu0 %v11962
    %12034 = vmatmul.bf16.gmra.mxu0 %v11734
    %v12035 = vpop.f32.mrf.mxu0
    %v12036 = vadd.f32 %v11832, %v12035
    %v12037 = vpop.f32.mrf.mxu0
    %v12038 = vadd.f32 %v11832, %v12037
    %12039 = vmatmul.bf16.gmra.mxu0 %v11738
    %v12040 = vpop.f32.mrf.mxu0
    %v12041 = vadd.f32 %v11832, %v12040
    %v12042 = vpop.f32.mrf.mxu0
    %v12043 = vadd.f32 %v11832, %v12042
    %12044 = vmatmul.bf16.gmra.mxu0 %v11742
    %v12045 = vpop.f32.mrf.mxu0
    %v12046 = vadd.f32 %v11832, %v12045
    %v12047 = vpop.f32.mrf.mxu0
    %v12048 = vadd.f32 %v11832, %v12047
    %12049 = vmatmul.bf16.gmra.mxu0 %v11746
    %v12050 = vpop.f32.mrf.mxu0
    %v12051 = vadd.f32 %v11832, %v12050
    %v12052 = vpop.f32.mrf.mxu0
    %v12053 = vadd.f32 %v11832, %v12052
    %12054 = vmatmul.bf16.gmra.mxu0 %v11750
    %v12055 = vpop.f32.mrf.mxu0
    %v12056 = vadd.f32 %v11832, %v12055
    %v12057 = vpop.f32.mrf.mxu0
    %v12058 = vadd.f32 %v11832, %v12057
    %12059 = vmatmul.bf16.gmra.mxu0 %v11754
    %v12060 = vpop.f32.mrf.mxu0
    %v12061 = vadd.f32 %v11832, %v12060
    %v12062 = vpop.f32.mrf.mxu0
    %v12063 = vadd.f32 %v11832, %v12062
    %12064 = vmatmul.bf16.gmra.mxu0 %v11758
    %v12065 = vpop.f32.mrf.mxu0
    %v12066 = vadd.f32 %v11832, %v12065
    %v12067 = vpop.f32.mrf.mxu0
    %v12068 = vadd.f32 %v11832, %v12067
    %12069 = vmatmul.bf16.gmra.mxu0 %v11762
    %v12070 = vpop.f32.mrf.mxu0
    %v12071 = vadd.f32 %v11832, %v12070
    %v12072 = vpop.f32.mrf.mxu0
    %v12073 = vadd.f32 %v11832, %v12072
    %12074 = vdwg.mxu0
    %12075 = vmatpush.bf16.msra.mxu0 %v11977
    %12076 = vmatpush.bf16.msra.mxu0 %v11976
    %12077 = vmatpush.bf16.msra.mxu0 %v11975
    %12078 = vmatpush.bf16.msra.mxu0 %v11974
    %12079 = vmatpush.bf16.msra.mxu0 %v11973
    %12080 = vmatpush.bf16.msra.mxu0 %v11972
    %12081 = vmatpush.bf16.msra.mxu0 %v11971
    %12082 = vmatpush.bf16.msra.mxu0 %v11970
    %12083 = vmatmul.bf16.gmra.mxu0 %v11735
    %v12084 = vpop.f32.mrf.mxu0
    %v12085 = vadd.f32 %v12036, %v12084
    %v12086 = vpop.f32.mrf.mxu0
    %v12087 = vadd.f32 %v12038, %v12086
    %12088 = vmatmul.bf16.gmra.mxu0 %v11739
    %v12089 = vpop.f32.mrf.mxu0
    %v12090 = vadd.f32 %v12041, %v12089
    %v12091 = vpop.f32.mrf.mxu0
    %v12092 = vadd.f32 %v12043, %v12091
    %12093 = vmatmul.bf16.gmra.mxu0 %v11743
    %v12094 = vpop.f32.mrf.mxu0
    %v12095 = vadd.f32 %v12046, %v12094
    %v12096 = vpop.f32.mrf.mxu0
    %v12097 = vadd.f32 %v12048, %v12096
    %12098 = vmatmul.bf16.gmra.mxu0 %v11747
    %v12099 = vpop.f32.mrf.mxu0
    %v12100 = vadd.f32 %v12051, %v12099
    %v12101 = vpop.f32.mrf.mxu0
    %v12102 = vadd.f32 %v12053, %v12101
    %12103 = vmatmul.bf16.gmra.mxu0 %v11751
    %v12104 = vpop.f32.mrf.mxu0
    %v12105 = vadd.f32 %v12056, %v12104
    %v12106 = vpop.f32.mrf.mxu0
    %v12107 = vadd.f32 %v12058, %v12106
    %12108 = vmatmul.bf16.gmra.mxu0 %v11755
    %v12109 = vpop.f32.mrf.mxu0
    %v12110 = vadd.f32 %v12061, %v12109
    %v12111 = vpop.f32.mrf.mxu0
    %v12112 = vadd.f32 %v12063, %v12111
    %12113 = vmatmul.bf16.gmra.mxu0 %v11759
    %v12114 = vpop.f32.mrf.mxu0
    %v12115 = vadd.f32 %v12066, %v12114
    %v12116 = vpop.f32.mrf.mxu0
    %v12117 = vadd.f32 %v12068, %v12116
    %12118 = vmatmul.bf16.gmra.mxu0 %v11763
    %v12119 = vpop.f32.mrf.mxu0
    %v12120 = vadd.f32 %v12071, %v12119
    %v12121 = vpop.f32.mrf.mxu0
    %v12122 = vadd.f32 %v12073, %v12121
    %12123 = vdwg.mxu0
    %12124 = vmatpush.bf16.msra.mxu0 %v11985
    %12125 = vmatpush.bf16.msra.mxu0 %v11984
    %12126 = vmatpush.bf16.msra.mxu0 %v11983
    %12127 = vmatpush.bf16.msra.mxu0 %v11982
    %12128 = vmatpush.bf16.msra.mxu0 %v11981
    %12129 = vmatpush.bf16.msra.mxu0 %v11980
    %12130 = vmatpush.bf16.msra.mxu0 %v11979
    %12131 = vmatpush.bf16.msra.mxu0 %v11978
    %12132 = vmatmul.bf16.gmra.mxu0 %v11736
    %v12133 = vpop.f32.mrf.mxu0
    %v12134 = vadd.f32 %v12085, %v12133
    %v12135 = vpop.f32.mrf.mxu0
    %v12136 = vadd.f32 %v12087, %v12135
    %12137 = vmatmul.bf16.gmra.mxu0 %v11740
    %v12138 = vpop.f32.mrf.mxu0
    %v12139 = vadd.f32 %v12090, %v12138
    %v12140 = vpop.f32.mrf.mxu0
    %v12141 = vadd.f32 %v12092, %v12140
    %12142 = vmatmul.bf16.gmra.mxu0 %v11744
    %v12143 = vpop.f32.mrf.mxu0
    %v12144 = vadd.f32 %v12095, %v12143
    %v12145 = vpop.f32.mrf.mxu0
    %v12146 = vadd.f32 %v12097, %v12145
    %12147 = vmatmul.bf16.gmra.mxu0 %v11748
    %v12148 = vpop.f32.mrf.mxu0
    %v12149 = vadd.f32 %v12100, %v12148
    %v12150 = vpop.f32.mrf.mxu0
    %v12151 = vadd.f32 %v12102, %v12150
    %12152 = vmatmul.bf16.gmra.mxu0 %v11752
    %v12153 = vpop.f32.mrf.mxu0
    %v12154 = vadd.f32 %v12105, %v12153
    %v12155 = vpop.f32.mrf.mxu0
    %v12156 = vadd.f32 %v12107, %v12155
    %12157 = vmatmul.bf16.gmra.mxu0 %v11756
    %v12158 = vpop.f32.mrf.mxu0
    %v12159 = vadd.f32 %v12110, %v12158
    %v12160 = vpop.f32.mrf.mxu0
    %v12161 = vadd.f32 %v12112, %v12160
    %12162 = vmatmul.bf16.gmra.mxu0 %v11760
    %v12163 = vpop.f32.mrf.mxu0
    %v12164 = vadd.f32 %v12115, %v12163
    %v12165 = vpop.f32.mrf.mxu0
    %v12166 = vadd.f32 %v12117, %v12165
    %12167 = vmatmul.bf16.gmra.mxu0 %v11764
    %v12168 = vpop.f32.mrf.mxu0
    %v12169 = vadd.f32 %v12120, %v12168
    %v12170 = vpop.f32.mrf.mxu0
    %v12171 = vadd.f32 %v12122, %v12170
    %12172 = vdwg.mxu0
    %12173 = vmatpush.bf16.msra.mxu0 %v11993
    %12174 = vmatpush.bf16.msra.mxu0 %v11992
    %12175 = vmatpush.bf16.msra.mxu0 %v11991
    %12176 = vmatpush.bf16.msra.mxu0 %v11990
    %12177 = vmatpush.bf16.msra.mxu0 %v11989
    %12178 = vmatpush.bf16.msra.mxu0 %v11988
    %12179 = vmatpush.bf16.msra.mxu0 %v11987
    %12180 = vmatpush.bf16.msra.mxu0 %v11986
    %12181 = vmatmul.bf16.gmra.mxu0 %v11737
    %v12182 = vpop.f32.mrf.mxu0
    %v12183 = vadd.f32 %v12134, %v12182
    %v12184 = vpop.f32.mrf.mxu0
    %v12185 = vadd.f32 %v12136, %v12184
    %12186 = vmatmul.bf16.gmra.mxu0 %v11741
    %v12187 = vpop.f32.mrf.mxu0
    %v12188 = vadd.f32 %v12139, %v12187
    %v12189 = vpop.f32.mrf.mxu0
    %v12190 = vadd.f32 %v12141, %v12189
    %12191 = vmatmul.bf16.gmra.mxu0 %v11745
    %v12192 = vpop.f32.mrf.mxu0
    %v12193 = vadd.f32 %v12144, %v12192
    %v12194 = vpop.f32.mrf.mxu0
    %v12195 = vadd.f32 %v12146, %v12194
    %12196 = vmatmul.bf16.gmra.mxu0 %v11749
    %v12197 = vpop.f32.mrf.mxu0
    %v12198 = vadd.f32 %v12149, %v12197
    %v12199 = vpop.f32.mrf.mxu0
    %v12200 = vadd.f32 %v12151, %v12199
    %12201 = vmatmul.bf16.gmra.mxu0 %v11753
    %v12202 = vpop.f32.mrf.mxu0
    %v12203 = vadd.f32 %v12154, %v12202
    %v12204 = vpop.f32.mrf.mxu0
    %v12205 = vadd.f32 %v12156, %v12204
    %12206 = vmatmul.bf16.gmra.mxu0 %v11757
    %v12207 = vpop.f32.mrf.mxu0
    %v12208 = vadd.f32 %v12159, %v12207
    %v12209 = vpop.f32.mrf.mxu0
    %v12210 = vadd.f32 %v12161, %v12209
    %12211 = vmatmul.bf16.gmra.mxu0 %v11761
    %v12212 = vpop.f32.mrf.mxu0
    %v12213 = vadd.f32 %v12164, %v12212
    %v12214 = vpop.f32.mrf.mxu0
    %v12215 = vadd.f32 %v12166, %v12214
    %12216 = vmatmul.bf16.gmra.mxu0 %v11765
    %v12217 = vpop.f32.mrf.mxu0
    %v12218 = vadd.f32 %v12169, %v12217
    %v12219 = vpop.f32.mrf.mxu0
    %v12220 = vadd.f32 %v12171, %v12219
    %12221 = vdwg.mxu0
    %12222 = vst [vmem:[%s7] sm:$0xff] %v12183
    %12223 = vst [vmem:[%s7 + $0x8] sm:$0xff] %v12185
    %12224 = vst [vmem:[%s7 + $0x10] sm:$0xff] %v12188
    %12225 = vst [vmem:[%s7 + $0x18] sm:$0xff] %v12190
    %12226 = vst [vmem:[%s7 + $0x20] sm:$0xff] %v12193
    %12227 = vst [vmem:[%s7 + $0x28] sm:$0xff] %v12195
    %12228 = vst [vmem:[%s7 + $0x30] sm:$0xff] %v12198
    %12229 = vst [vmem:[%s7 + $0x38] sm:$0xff] %v12200
    %12230 = vst [vmem:[%s7 + $0x40] sm:$0xff] %v12203
    %12231 = vst [vmem:[%s7 + $0x48] sm:$0xff] %v12205
    %12232 = vst [vmem:[%s7 + $0x50] sm:$0xff] %v12208
    %12233 = vst [vmem:[%s7 + $0x58] sm:$0xff] %v12210
    %12234 = vst [vmem:[%s7 + $0x60] sm:$0xff] %v12213
    %12235 = vst [vmem:[%s7 + $0x68] sm:$0xff] %v12215
    %12236 = vst [vmem:[%s7 + $0x70] sm:$0xff] %v12218
    %12237 = vst [vmem:[%s7 + $0x78] sm:$0xff] %v12220
    // Predicated region
    $region54: #{_forward.1} parent=1 // pred_check
      _
    $region55: #{_forward.1} parent=1 // pred_check_branch
      %12239 = sbr.rel (0) target = $region57
    $region56: #{_forward.1} parent=1 // pred_region
      _
    $region57: #{_forward.1} parent=1 // pred_fallthru
      _
    // Predicated region
    $region58: #{_forward.1} parent=1 // pred_check
      _
    $region59: #{_forward.1} parent=1 // pred_check_branch
      %12241 = sbr.rel (0) target = $region61
    $region60: #{_forward.1} parent=1 // pred_region
      _
    $region61: #{_forward.1} parent=1 // pred_fallthru
      _
    %12242 = vsyncpa [#allocation3], 1
    %12243 = vsyncpa [#allocation5], 1
    %12244 = vsyncpa [#allocation8], 1
    %12245 = vsyncpa [#allocation11], 1

</llo_original>
